<compile_context>
chip_gen: v6e
topology: v6e:2x2x1
jax: 0.10.0
libtpu: 0.0.40
codegen_flags: <defaults>
</compile_context>

<pallas_src>
import functools

import jax
import jax.numpy as jnp
import numpy as np
from jax import lax
from jax.experimental import pallas as pl
from jax.experimental.pallas import tpu as pltpu


def _round_up(x, m):
    return (x + m - 1) // m * m


def _vmem_limit_bytes():
    # Re-derive the VMEM budget per generation instead of hard-coding it
    # (64 MiB physical on v7x vs 128 MiB on v5e/v6e).
    try:
        cap = pltpu.get_tpu_info().vmem_capacity_bytes
        return int(min(cap * 3 // 4, 112 * 1024 * 1024))
    except Exception:
        return 32 * 1024 * 1024


def _cparams(semantics, vmem_limit):
    return pltpu.CompilerParams(dimension_semantics=semantics,
                                vmem_limit_bytes=vmem_limit)


def _pick_tile_rows(R, W, Cp, Cmp, vmem_limit):
    """Rows per grid step, sized against the 3x3-conv pass's VMEM footprint."""
    halo = _round_up(W + 1, 8)                 # halo rows needed by the 3x3 taps
    # per-row VMEM bytes in pass 2 (the binding pass): double-buffered bf16 x/z
    # blocks, f32 y, bf16 im2col slab, headroom for masked f32 tap temporaries.
    per_row = (2 * Cp * 2) + (2 * Cp * 2) + Cmp * 4 + 9 * Cmp * 2 + 9 * Cmp * 4
    budget = max(vmem_limit // 4, 2 * 1024 * 1024)
    t = budget // per_row
    t = min(t, 2048)                           # keep several grid steps in flight
    t = max(halo, (t // halo) * halo)          # multiple of halo (and of 8)
    t = min(t, _round_up(R, halo))             # never bigger than the padded problem
    return int(t), int(halo)


# ------------- pass 1: 1x1 conv, BN1 partial stats only (no y written) -----------
def _bn1_stats_kernel(x_ref, w1_ref, st_ref):
    # x_ref: (T, Cp) bf16   w1_ref: (Cp, Cmp) bf16   st_ref: (1, 2, Cmp) f32
    y = jnp.dot(x_ref[...], w1_ref[...], preferred_element_type=jnp.float32)
    s = jnp.sum(y, axis=0, keepdims=True)          # zero-padded rows contribute 0
    sq = jnp.sum(y * y, axis=0, keepdims=True)
    st_ref[...] = jnp.concatenate([s, sq], axis=0)[None]


# - pass 2: recompute conv1 on halo'd tile + BN1 + lrelu + 3x3 conv + BN2 stats ----
def _conv_kernel(H, W, R, T, HALO, slope, mxu_dtype,
                 xt_ref, xm_ref, xb_ref, w1_ref, sc1_ref, sh1_ref, w2_ref,
                 z_ref, st_ref):
    HW = H * W
    # Halo'd rows [t*T - HALO, t*T + T + HALO).  Out-of-range halo rows hold
    # garbage (index-clamped neighbour blocks); every tap that would read them is
    # zero-masked below by the H/W boundary masks, so they are never consumed.
    xa = jnp.concatenate([xt_ref[...], xm_ref[...], xb_ref[...]], axis=0)
    y = jnp.dot(xa, w1_ref[...], preferred_element_type=jnp.float32)
    y = y * sc1_ref[...] + sh1_ref[...]            # BN1 (folded scale/shift), f32
    y = jnp.where(y > 0, y, slope * y)             # LeakyReLU, (T + 2*HALO, Cmp)

    # per-output-row image coordinates (global flattened row r = t*T + i)
    r = pl.program_id(0) * T + lax.broadcasted_iota(jnp.int32, (T, 1), 0)
    ri = r % HW                                    # row index within its image
    w = r % W                                      # column within the image row
    top_ok = ri >= W                               # h >= 1
    bot_ok = ri < HW - W                           # h <= H-2
    left_ok = w >= 1
    right_ok = w < W - 1

    # im2col: 9 statically shifted row-slices of the halo'd y, fused into one
    # (T, 9*Cmp) @ (9*Cmp, Cp) MXU matmul (contraction depth 9*Cmp).
    # TODO(synk): the 6 sublane-misaligned slices could use pltpu.roll (XLU slot).
    cols = []
    for oy in (-1, 0, 1):
        for ox in (-1, 0, 1):
            off = HALO + oy * W + ox
            sh = y[off:off + T, :]
            m = None
            if oy == -1:
                m = top_ok
            elif oy == 1:
                m = bot_ok
            if ox == -1:
                m = left_ok if m is None else jnp.logical_and(m, left_ok)
            elif ox == 1:
                m = right_ok if m is None else jnp.logical_and(m, right_ok)
            if m is not None:
                sh = jnp.where(m, sh, 0.0)
            cols.append(sh.astype(mxu_dtype))
    slab = jnp.concatenate(cols, axis=1)           # (T, 9*Cmp)

    z = jnp.dot(slab, w2_ref[...], preferred_element_type=jnp.float32)
    z_ref[...] = z.astype(z_ref.dtype)             # bf16 to HBM

    # BN2 partial stats over real rows only (global rows >= R are padding).
    zs = jnp.where(r < R, z, 0.0)
    s = jnp.sum(zs, axis=0, keepdims=True)
    sq = jnp.sum(zs * zs, axis=0, keepdims=True)
    st_ref[...] = jnp.concatenate([s, sq], axis=0)[None]


# ------------- pass 3: BN2-apply + LeakyReLU + residual add (pure VPU) ------------
def _bn2_residual_kernel(slope, z_ref, x_ref, sc2_ref, sh2_ref, o_ref):
    z = z_ref[...].astype(jnp.float32) * sc2_ref[...] + sh2_ref[...]
    z = jnp.where(z > 0, z, slope * z)
    o_ref[...] = (z + x_ref[...].astype(jnp.float32)).astype(o_ref.dtype)


def shortcut_block(x_nchw, params, *, eps=1e-5, slope=0.1, mxu_dtype=jnp.bfloat16):
    """ShortcutBlock forward (training-mode BatchNorm, like a fresh nn.Module).

    params = (w1_oihw (Cm,C,1,1), g1 (Cm,), b1 (Cm,),
              w2_oihw (C,Cm,3,3), g2 (C,),  b2 (C,))   -- PyTorch layouts.
    """
    w1_oihw, g1, b1, w2_oihw, g2, b2 = params
    N, C, H, W = x_nchw.shape
    assert C % 2 == 0
    Cm = C // 2
    HW = H * W
    R = N * HW

    Cp = _round_up(C, 128)          # lane-dense channel padding
    Cmp = _round_up(Cm, 128)
    vmem_limit = _vmem_limit_bytes()
    T, HALO = _pick_tile_rows(R, W, Cp, Cmp, vmem_limit)
    G = -(-R // T)                  # number of row tiles
    Rp = G * T                      # padded global row count
    K = T // HALO                   # halo blocks per tile
    NK = Rp // HALO                 # total halo blocks

    f32 = jnp.float32

    # --- layout prep: NCHW -> (Rp, Cp) bf16 rows, zero row/channel padding -------
    # TODO(synk): keep the surrounding graph channels-last so these two layout
    # passes over HBM (transpose in / transpose out) disappear.
    x_rows = jnp.transpose(x_nchw, (0, 2, 3, 1)).reshape(R, C)
    x_rows = jnp.pad(x_rows.astype(mxu_dtype), ((0, Rp - R), (0, Cp - C)))

    w1 = jnp.zeros((Cp, Cmp), f32).at[:C, :Cm].set(
        jnp.transpose(w1_oihw[:, :, 0, 0], (1, 0)).astype(f32)).astype(mxu_dtype)

    w2_t = jnp.transpose(w2_oihw, (2, 3, 1, 0)).reshape(9, Cm, C).astype(f32)
    w2 = jnp.zeros((9, Cmp, Cp), f32).at[:, :Cm, :C].set(w2_t)
    w2 = w2.reshape(9 * Cmp, Cp).astype(mxu_dtype)

    g1p = jnp.zeros((Cmp,), f32).at[:Cm].set(g1.astype(f32))
    b1p = jnp.zeros((Cmp,), f32).at[:Cm].set(b1.astype(f32))
    g2p = jnp.zeros((Cp,), f32).at[:C].set(g2.astype(f32))
    b2p = jnp.zeros((Cp,), f32).at[:C].set(b2.astype(f32))

    cnt = float(R)

    # ---------------- pass 1: BN1 partial stats ----------------
    st1p = pl.pallas_call(
        _bn1_stats_kernel,
        out_shape=jax.ShapeDtypeStruct((G, 2, Cmp), f32),
        grid=(G,),
        in_specs=[pl.BlockSpec((T, Cp), lambda i: (i, 0)),
                  pl.BlockSpec((Cp, Cmp), lambda i: (0, 0))],
        out_specs=pl.BlockSpec((1, 2, Cmp), lambda i: (i, 0, 0)),
        compiler_params=_cparams(("parallel",), vmem_limit),
    )(x_rows, w1)

    # NOTE: E[y^2]-E[y]^2 in f32; fine at these scales (see review note on Welford).
    st1 = jnp.sum(st1p, axis=0)                    # (2, Cmp)
    mean1 = st1[0] / cnt
    var1 = jnp.maximum(st1[1] / cnt - mean1 * mean1, 0.0)
    inv1 = g1p * lax.rsqrt(var1 + eps)
    sc1 = inv1.reshape(1, Cmp)
    sh1 = (b1p - mean1 * inv1).reshape(1, Cmp)

    # ------- pass 2: conv1 + BN1 + lrelu + 3x3 conv (im2col) + BN2 stats ---------
    conv2 = functools.partial(_conv_kernel, H, W, R, T, HALO, slope, mxu_dtype)
    z_pre, st2p = pl.pallas_call(
        conv2,
        out_shape=(jax.ShapeDtypeStruct((Rp, Cp), mxu_dtype),
                   jax.ShapeDtypeStruct((G, 2, Cp), f32)),
        grid=(G,),
        in_specs=[
            # previous / current / next halo blocks of the same x array
            pl.BlockSpec((HALO, Cp), lambda i: (jnp.maximum(i * K - 1, 0), 0)),
            pl.BlockSpec((T, Cp), lambda i: (i, 0)),
            pl.BlockSpec((HALO, Cp), lambda i: (jnp.minimum((i + 1) * K, NK - 1), 0)),
            pl.BlockSpec((Cp, Cmp), lambda i: (0, 0)),
            pl.BlockSpec((1, Cmp), lambda i: (0, 0)),
            pl.BlockSpec((1, Cmp), lambda i: (0, 0)),
            pl.BlockSpec((9 * Cmp, Cp), lambda i: (0, 0)),
        ],
        out_specs=(pl.BlockSpec((T, Cp), lambda i: (i, 0)),
                   pl.BlockSpec((1, 2, Cp), lambda i: (i, 0, 0))),
        compiler_params=_cparams(("parallel",), vmem_limit),
    )(x_rows, x_rows, x_rows, w1, sc1, sh1, w2)

    st2 = jnp.sum(st2p, axis=0)                    # (2, Cp)
    mean2 = st2[0] / cnt
    var2 = jnp.maximum(st2[1] / cnt - mean2 * mean2, 0.0)
    inv2 = g2p * lax.rsqrt(var2 + eps)
    sc2 = inv2.reshape(1, Cp)
    sh2 = (b2p - mean2 * inv2).reshape(1, Cp)

    # ---------------- pass 3: BN2 + lrelu + residual ----------------
    out_rows = pl.pallas_call(
        functools.partial(_bn2_residual_kernel, slope),
        out_shape=jax.ShapeDtypeStruct((Rp, Cp), x_nchw.dtype),
        grid=(G,),
        in_specs=[pl.BlockSpec((T, Cp), lambda i: (i, 0)),
                  pl.BlockSpec((T, Cp), lambda i: (i, 0)),
                  pl.BlockSpec((1, Cp), lambda i: (0, 0)),
                  pl.BlockSpec((1, Cp), lambda i: (0, 0))],
        out_specs=pl.BlockSpec((T, Cp), lambda i: (i, 0)),
        compiler_params=_cparams(("parallel",), vmem_limit),
    )(z_pre, x_rows, sc2, sh2)

    out = out_rows[:R, :C].reshape(N, H, W, C)
    return jnp.transpose(out, (0, 3, 1, 2)).astype(x_nchw.dtype)


def _reference(x, w1_oihw, g1, b1, w2_oihw, g2, b2, *, eps=1e-5, slope=0.1):
    """Pure-JAX NCHW reference matching the PyTorch module (training-mode BN)."""
    def bn(y, g, b):
        mu = jnp.mean(y, axis=(0, 2, 3), keepdims=True)
        var = jnp.mean((y - mu) ** 2, axis=(0, 2, 3), keepdims=True)
        return ((y - mu) / jnp.sqrt(var + eps) * g.reshape(1, -1, 1, 1)
                + b.reshape(1, -1, 1, 1))

    def lrelu(y):
        return jnp.where(y > 0, y, slope * y)

    dn = ('NCHW', 'OIHW', 'NCHW')
    y = lax.conv_general_dilated(x, w1_oihw, (1, 1), ((0, 0), (0, 0)),
                                 dimension_numbers=dn)
    y = lrelu(bn(y, g1, b1))
    y = lax.conv_general_dilated(y, w2_oihw, (1, 1), ((1, 1), (1, 1)),
                                 dimension_numbers=dn)
    y = lrelu(bn(y, g2, b2))
    return y + x


if __name__ == "__main__":
    key = jax.random.PRNGKey(0)
    N, C, H, W = 2, 4, 16, 16
    Cm = C // 2
    ks = jax.random.split(key, 7)

    x = jax.random.normal(ks[0], (N, C, H, W), jnp.float32)
    # deterministic synthetic parameters (PyTorch layouts)
    w1_oihw = jax.random.normal(ks[1], (Cm, C, 1, 1), jnp.float32) * 0.3
    w2_oihw = jax.random.normal(ks[2], (C, Cm, 3, 3), jnp.float32) * 0.3
    g1 = 1.0 + 0.1 * jax.random.normal(ks[3], (Cm,), jnp.float32)
    b1 = 0.1 * jax.random.normal(ks[4], (Cm,), jnp.float32)
    g2 = 1.0 + 0.1 * jax.random.normal(ks[5], (C,), jnp.float32)
    b2 = 0.1 * jax.random.normal(ks[6], (C,), jnp.float32)

    params = (w1_oihw, g1, b1, w2_oihw, g2, b2)

    out = jax.jit(shortcut_block)(x, params)
    out = jax.block_until_ready(out)

    ref = _reference(x, w1_oihw, g1, b1, w2_oihw, g2, b2)
    # bf16 MXU operands + bf16 HBM intermediates (f32 accumulate / f32 BN math)
    # -> relaxed tolerance vs the f32 reference.
    np.testing.assert_allclose(np.asarray(out), np.asarray(ref),
                               rtol=5e-2, atol=7e-2)
    print("KERNEL_OK")
</pallas_src>

<mosaic_0001>
module attributes {stable_mosaic.version = 11 : i64} {
  func.func @_bn1_stats_kernel(%arg0: i32, %arg1: memref<528x128xbf16, #tpu.memory_space<vmem>>, %arg2: memref<128x128xbf16, #tpu.memory_space<vmem>>, %arg3: memref<1x2x128xf32, #tpu.memory_space<vmem>>) attributes {dimension_semantics = [#tpu.dimension_semantics<parallel>], iteration_bounds = array<i64: 1>, scalar_prefetch = 0 : i64, scratch_operands = 0 : i64, tpu.core_type = #tpu.core_type<tc>, window_params = [{transform_indices = @transform_0, window_bounds = array<i64: 528, 128>}, {pipeline_mode = #tpu.pipeline_mode<synchronous>, transform_indices = @transform_1, window_bounds = array<i64: 128, 128>}, {transform_indices = @transform_2, window_bounds = array<i64: 1, 2, 128>}]} {
    %c0 = arith.constant 0 : index
    %c0_0 = arith.constant 0 : index
    %0 = vector.load %arg1[%c0, %c0_0] : memref<528x128xbf16, #tpu.memory_space<vmem>>, vector<528x128xbf16>
    %c0_1 = arith.constant 0 : index
    %c0_2 = arith.constant 0 : index
    %1 = vector.load %arg2[%c0_1, %c0_2] : memref<128x128xbf16, #tpu.memory_space<vmem>>, vector<128x128xbf16>
    %cst = arith.constant dense<0.000000e+00> : vector<528x128xf32>
    %2 = tpu.matmul %0, %1, %cst {dimension_numbers = #tpu.dot_dimension_numbers<[1], [0], [0], [1], [0, 0, 1, 1], [], []>} : vector<528x128xbf16>, vector<128x128xbf16>, vector<528x128xf32> -> vector<528x128xf32>
    %cst_3 = arith.constant dense<0.000000e+00> : vector<128xf32>
    %3 = vector.multi_reduction <add>, %2, %cst_3 [0] : vector<528x128xf32> to vector<128xf32>
    %4 = vector.shape_cast %3 : vector<128xf32> to vector<1x128xf32>
    %5 = arith.mulf %2, %2 : vector<528x128xf32>
    %cst_4 = arith.constant dense<0.000000e+00> : vector<128xf32>
    %6 = vector.multi_reduction <add>, %5, %cst_4 [0] : vector<528x128xf32> to vector<128xf32>
    %7 = vector.shape_cast %6 : vector<128xf32> to vector<1x128xf32>
    %8 = tpu.concatenate %4, %7 in 0 : vector<1x128xf32>, vector<1x128xf32> -> vector<2x128xf32>
    %9 = vector.shape_cast %8 : vector<2x128xf32> to vector<1x2x128xf32>
    %c0_5 = arith.constant 0 : index
    %c0_6 = arith.constant 0 : index
    %c0_7 = arith.constant 0 : index
    %10 = vector.load %arg3[%c0_5, %c0_6, %c0_7] : memref<1x2x128xf32, #tpu.memory_space<vmem>>, vector<1x2x128xf32>
    tpu.vector_store %arg3[%c0_5, %c0_6, %c0_7], %9 {strides = array<i32>} : memref<1x2x128xf32, #tpu.memory_space<vmem>>, vector<1x2x128xf32>,
    return
  }
  func.func @transform_0(%arg0: i32) -> (i32, i32) {
    %c0_i32 = arith.constant 0 : i32
    %c0_i32_0 = arith.constant 0 : i32
    return %arg0, %c0_i32 : i32, i32
  }
  func.func @transform_1(%arg0: i32) -> (i32, i32) {
    %c0_i32 = arith.constant 0 : i32
    %c0_i32_0 = arith.constant 0 : i32
    %c0_i32_1 = arith.constant 0 : i32
    return %c0_i32, %c0_i32_0 : i32, i32
  }
  func.func @transform_2(%arg0: i32) -> (i32, i32, i32) {
    %c0_i32 = arith.constant 0 : i32
    %c0_i32_0 = arith.constant 0 : i32
    %c0_i32_1 = arith.constant 0 : i32
    return %arg0, %c0_i32, %c0_i32_0 : i32, i32, i32
  }
}

module attributes {stable_mosaic.version = 11 : i64} {
  func.func @_conv_kernel(%arg0: i32, %arg1: memref<24x128xbf16, #tpu.memory_space<vmem>>, %arg2: memref<528x128xbf16, #tpu.memory_space<vmem>>, %arg3: memref<24x128xbf16, #tpu.memory_space<vmem>>, %arg4: memref<128x128xbf16, #tpu.memory_space<vmem>>, %arg5: memref<1x128xf32, #tpu.memory_space<vmem>>, %arg6: memref<1x128xf32, #tpu.memory_space<vmem>>, %arg7: memref<1152x128xbf16, #tpu.memory_space<vmem>>, %arg8: memref<528x128xbf16, #tpu.memory_space<vmem>>, %arg9: memref<1x2x128xf32, #tpu.memory_space<vmem>>) attributes {dimension_semantics = [#tpu.dimension_semantics<parallel>], iteration_bounds = array<i64: 1>, scalar_prefetch = 0 : i64, scratch_operands = 0 : i64, tpu.core_type = #tpu.core_type<tc>, window_params = [{transform_indices = @transform_0, window_bounds = array<i64: 24, 128>}, {transform_indices = @transform_1, window_bounds = array<i64: 528, 128>}, {transform_indices = @transform_2, window_bounds = array<i64: 24, 128>}, {pipeline_mode = #tpu.pipeline_mode<synchronous>, transform_indices = @transform_3, window_bounds = array<i64: 128, 128>}, {pipeline_mode = #tpu.pipeline_mode<synchronous>, transform_indices = @transform_4, window_bounds = array<i64: 1, 128>}, {pipeline_mode = #tpu.pipeline_mode<synchronous>, transform_indices = @transform_5, window_bounds = array<i64: 1, 128>}, {pipeline_mode = #tpu.pipeline_mode<synchronous>, transform_indices = @transform_6, window_bounds = array<i64: 1152, 128>}, {transform_indices = @transform_7, window_bounds = array<i64: 528, 128>}, {transform_indices = @transform_8, window_bounds = array<i64: 1, 2, 128>}]} {
    %c0 = arith.constant 0 : index
    %c0_0 = arith.constant 0 : index
    %0 = vector.load %arg1[%c0, %c0_0] : memref<24x128xbf16, #tpu.memory_space<vmem>>, vector<24x128xbf16>
    %c0_1 = arith.constant 0 : index
    %c0_2 = arith.constant 0 : index
    %1 = vector.load %arg2[%c0_1, %c0_2] : memref<528x128xbf16, #tpu.memory_space<vmem>>, vector<528x128xbf16>
    %c0_3 = arith.constant 0 : index
    %c0_4 = arith.constant 0 : index
    %2 = vector.load %arg3[%c0_3, %c0_4] : memref<24x128xbf16, #tpu.memory_space<vmem>>, vector<24x128xbf16>
    %3 = tpu.concatenate %0, %1, %2 in 0 : vector<24x128xbf16>, vector<528x128xbf16>, vector<24x128xbf16> -> vector<576x128xbf16>
    %c0_5 = arith.constant 0 : index
    %c0_6 = arith.constant 0 : index
    %4 = vector.load %arg4[%c0_5, %c0_6] : memref<128x128xbf16, #tpu.memory_space<vmem>>, vector<128x128xbf16>
    %cst = arith.constant dense<0.000000e+00> : vector<576x128xf32>
    %5 = tpu.matmul %3, %4, %cst {dimension_numbers = #tpu.dot_dimension_numbers<[1], [0], [0], [1], [0, 0, 1, 1], [], []>} : vector<576x128xbf16>, vector<128x128xbf16>, vector<576x128xf32> -> vector<576x128xf32>
    %c0_7 = arith.constant 0 : index
    %c0_8 = arith.constant 0 : index
    %6 = vector.load %arg5[%c0_7, %c0_8] : memref<1x128xf32, #tpu.memory_space<vmem>>, vector<1x128xf32>
    %7 = vector.broadcast %6 : vector<1x128xf32> to vector<576x128xf32>
    %8 = arith.mulf %5, %7 : vector<576x128xf32>
    %c0_9 = arith.constant 0 : index
    %c0_10 = arith.constant 0 : index
    %9 = vector.load %arg6[%c0_9, %c0_10] : memref<1x128xf32, #tpu.memory_space<vmem>>, vector<1x128xf32>
    %10 = vector.broadcast %9 : vector<1x128xf32> to vector<576x128xf32>
    %11 = arith.addf %8, %10 : vector<576x128xf32>
    %cst_11 = arith.constant 0.000000e+00 : f32
    %12 = vector.broadcast %cst_11 : f32 to vector<576x128xf32>
    %13 = arith.cmpf ogt, %11, %12 : vector<576x128xf32>
    %cst_12 = arith.constant 1.000000e-01 : f32
    %14 = vector.broadcast %cst_12 : f32 to vector<576x128xf32>
    %15 = arith.mulf %14, %11 : vector<576x128xf32>
    %16 = arith.select %13, %11, %15 : vector<576x128xi1>, vector<576x128xf32>
    %c528_i32 = arith.constant 528 : i32
    %17 = arith.muli %arg0, %c528_i32 : i32
    %18 = tpu.iota {dimensions = array<i32: 0>} : vector<528x1xi32>
    %19 = vector.broadcast %17 : i32 to vector<528x1xi32>
    %20 = arith.addi %19, %18 : vector<528x1xi32>
    %c256_i32 = arith.constant 256 : i32
    %c0_i32 = arith.constant 0 : i32
    %21 = arith.cmpi eq, %c256_i32, %c0_i32 : i32
    %c1_i32 = arith.constant 1 : i32
    %22 = arith.select %21, %c1_i32, %c256_i32 : i32
    %23 = vector.broadcast %22 : i32 to vector<528x1xi32>
    %24 = arith.remsi %20, %23 : vector<528x1xi32>
    %c0_i32_13 = arith.constant 0 : i32
    %25 = vector.broadcast %c0_i32_13 : i32 to vector<528x1xi32>
    %26 = arith.cmpi ne, %24, %25 : vector<528x1xi32>
    %c0_i32_14 = arith.constant 0 : i32
    %27 = vector.broadcast %c0_i32_14 : i32 to vector<528x1xi32>
    %28 = arith.cmpi slt, %24, %27 : vector<528x1xi32>
    %c0_i32_15 = arith.constant 0 : i32
    %29 = arith.cmpi slt, %22, %c0_i32_15 : i32
    %30 = vector.broadcast %29 : i1 to vector<528x1xi1>
    %31 = vector.broadcast %30 : vector<528x1xi1> to vector<528x1xi1>
    %32 = arith.xori %28, %31 : vector<528x1xi1>
    %33 = arith.andi %32, %26 : vector<528x1xi1>
    %34 = vector.broadcast %22 : i32 to vector<528x1xi32>
    %35 = arith.addi %24, %34 : vector<528x1xi32>
    %36 = arith.select %33, %35, %24 : vector<528x1xi1>, vector<528x1xi32>
    %c16_i32 = arith.constant 16 : i32
    %c0_i32_16 = arith.constant 0 : i32
    %37 = arith.cmpi eq, %c16_i32, %c0_i32_16 : i32
    %c1_i32_17 = arith.constant 1 : i32
    %38 = arith.select %37, %c1_i32_17, %c16_i32 : i32
    %39 = vector.broadcast %38 : i32 to vector<528x1xi32>
    %40 = arith.remsi %20, %39 : vector<528x1xi32>
    %c0_i32_18 = arith.constant 0 : i32
    %41 = vector.broadcast %c0_i32_18 : i32 to vector<528x1xi32>
    %42 = arith.cmpi ne, %40, %41 : vector<528x1xi32>
    %c0_i32_19 = arith.constant 0 : i32
    %43 = vector.broadcast %c0_i32_19 : i32 to vector<528x1xi32>
    %44 = arith.cmpi slt, %40, %43 : vector<528x1xi32>
    %c0_i32_20 = arith.constant 0 : i32
    %45 = arith.cmpi slt, %38, %c0_i32_20 : i32
    %46 = vector.broadcast %45 : i1 to vector<528x1xi1>
    %47 = vector.broadcast %46 : vector<528x1xi1> to vector<528x1xi1>
    %48 = arith.xori %44, %47 : vector<528x1xi1>
    %49 = arith.andi %48, %42 : vector<528x1xi1>
    %50 = vector.broadcast %38 : i32 to vector<528x1xi32>
    %51 = arith.addi %40, %50 : vector<528x1xi32>
    %52 = arith.select %49, %51, %40 : vector<528x1xi1>, vector<528x1xi32>
    %c16_i32_21 = arith.constant 16 : i32
    %53 = vector.broadcast %c16_i32_21 : i32 to vector<528x1xi32>
    %54 = arith.cmpi sge, %36, %53 : vector<528x1xi32>
    %c240_i32 = arith.constant 240 : i32
    %55 = vector.broadcast %c240_i32 : i32 to vector<528x1xi32>
    %56 = arith.cmpi slt, %36, %55 : vector<528x1xi32>
    %c1_i32_22 = arith.constant 1 : i32
    %57 = vector.broadcast %c1_i32_22 : i32 to vector<528x1xi32>
    %58 = arith.cmpi sge, %52, %57 : vector<528x1xi32>
    %c15_i32 = arith.constant 15 : i32
    %59 = vector.broadcast %c15_i32 : i32 to vector<528x1xi32>
    %60 = arith.cmpi slt, %52, %59 : vector<528x1xi32>
    %61 = vector.extract_strided_slice %16 {offsets = [7, 0], sizes = [528, 128], strides = [1, 1]} : vector<576x128xf32> to vector<528x128xf32>
    %62 = arith.andi %54, %58 : vector<528x1xi1>
    %cst_23 = arith.constant 0.000000e+00 : f32
    %63 = vector.shape_cast %62 : vector<528x1xi1> to vector<528x1xi1>
    %64 = vector.broadcast %63 : vector<528x1xi1> to vector<528x128xi1>
    %65 = vector.broadcast %cst_23 : f32 to vector<528x128xf32>
    %66 = arith.select %64, %61, %65 : vector<528x128xi1>, vector<528x128xf32>
    %67 = arith.truncf %66 : vector<528x128xf32> to vector<528x128xbf16>
    %68 = vector.extract_strided_slice %16 {offsets = [8, 0], sizes = [528, 128], strides = [1, 1]} : vector<576x128xf32> to vector<528x128xf32>
    %cst_24 = arith.constant 0.000000e+00 : f32
    %69 = vector.shape_cast %54 : vector<528x1xi1> to vector<528x1xi1>
    %70 = vector.broadcast %69 : vector<528x1xi1> to vector<528x128xi1>
    %71 = vector.broadcast %cst_24 : f32 to vector<528x128xf32>
    %72 = arith.select %70, %68, %71 : vector<528x128xi1>, vector<528x128xf32>
    %73 = arith.truncf %72 : vector<528x128xf32> to vector<528x128xbf16>
    %74 = vector.extract_strided_slice %16 {offsets = [9, 0], sizes = [528, 128], strides = [1, 1]} : vector<576x128xf32> to vector<528x128xf32>
    %75 = arith.andi %54, %60 : vector<528x1xi1>
    %cst_25 = arith.constant 0.000000e+00 : f32
    %76 = vector.shape_cast %75 : vector<528x1xi1> to vector<528x1xi1>
    %77 = vector.broadcast %76 : vector<528x1xi1> to vector<528x128xi1>
    %78 = vector.broadcast %cst_25 : f32 to vector<528x128xf32>
    %79 = arith.select %77, %74, %78 : vector<528x128xi1>, vector<528x128xf32>
    %80 = arith.truncf %79 : vector<528x128xf32> to vector<528x128xbf16>
    %81 = vector.extract_strided_slice %16 {offsets = [23, 0], sizes = [528, 128], strides = [1, 1]} : vector<576x128xf32> to vector<528x128xf32>
    %cst_26 = arith.constant 0.000000e+00 : f32
    %82 = vector.shape_cast %58 : vector<528x1xi1> to vector<528x1xi1>
    %83 = vector.broadcast %82 : vector<528x1xi1> to vector<528x128xi1>
    %84 = vector.broadcast %cst_26 : f32 to vector<528x128xf32>
    %85 = arith.select %83, %81, %84 : vector<528x128xi1>, vector<528x128xf32>
    %86 = arith.truncf %85 : vector<528x128xf32> to vector<528x128xbf16>
    %87 = vector.extract_strided_slice %16 {offsets = [24, 0], sizes = [528, 128], strides = [1, 1]} : vector<576x128xf32> to vector<528x128xf32>
    %88 = arith.truncf %87 : vector<528x128xf32> to vector<528x128xbf16>
    %89 = vector.extract_strided_slice %16 {offsets = [25, 0], sizes = [528, 128], strides = [1, 1]} : vector<576x128xf32> to vector<528x128xf32>
    %cst_27 = arith.constant 0.000000e+00 : f32
    %90 = vector.shape_cast %60 : vector<528x1xi1> to vector<528x1xi1>
    %91 = vector.broadcast %90 : vector<528x1xi1> to vector<528x128xi1>
    %92 = vector.broadcast %cst_27 : f32 to vector<528x128xf32>
    %93 = arith.select %91, %89, %92 : vector<528x128xi1>, vector<528x128xf32>
    %94 = arith.truncf %93 : vector<528x128xf32> to vector<528x128xbf16>
    %95 = vector.extract_strided_slice %16 {offsets = [39, 0], sizes = [528, 128], strides = [1, 1]} : vector<576x128xf32> to vector<528x128xf32>
    %96 = arith.andi %56, %58 : vector<528x1xi1>
    %cst_28 = arith.constant 0.000000e+00 : f32
    %97 = vector.shape_cast %96 : vector<528x1xi1> to vector<528x1xi1>
    %98 = vector.broadcast %97 : vector<528x1xi1> to vector<528x128xi1>
    %99 = vector.broadcast %cst_28 : f32 to vector<528x128xf32>
    %100 = arith.select %98, %95, %99 : vector<528x128xi1>, vector<528x128xf32>
    %101 = arith.truncf %100 : vector<528x128xf32> to vector<528x128xbf16>
    %102 = vector.extract_strided_slice %16 {offsets = [40, 0], sizes = [528, 128], strides = [1, 1]} : vector<576x128xf32> to vector<528x128xf32>
    %cst_29 = arith.constant 0.000000e+00 : f32
    %103 = vector.shape_cast %56 : vector<528x1xi1> to vector<528x1xi1>
    %104 = vector.broadcast %103 : vector<528x1xi1> to vector<528x128xi1>
    %105 = vector.broadcast %cst_29 : f32 to vector<528x128xf32>
    %106 = arith.select %104, %102, %105 : vector<528x128xi1>, vector<528x128xf32>
    %107 = arith.truncf %106 : vector<528x128xf32> to vector<528x128xbf16>
    %108 = vector.extract_strided_slice %16 {offsets = [41, 0], sizes = [528, 128], strides = [1, 1]} : vector<576x128xf32> to vector<528x128xf32>
    %109 = arith.andi %56, %60 : vector<528x1xi1>
    %cst_30 = arith.constant 0.000000e+00 : f32
    %110 = vector.shape_cast %109 : vector<528x1xi1> to vector<528x1xi1>
    %111 = vector.broadcast %110 : vector<528x1xi1> to vector<528x128xi1>
    %112 = vector.broadcast %cst_30 : f32 to vector<528x128xf32>
    %113 = arith.select %111, %108, %112 : vector<528x128xi1>, vector<528x128xf32>
    %114 = arith.truncf %113 : vector<528x128xf32> to vector<528x128xbf16>
    %115 = tpu.concatenate %67, %73, %80, %86, %88, %94, %101, %107, %114 in 1 : vector<528x128xbf16>, vector<528x128xbf16>, vector<528x128xbf16>, vector<528x128xbf16>, vector<528x128xbf16>, vector<528x128xbf16>, vector<528x128xbf16>, vector<528x128xbf16>, vector<528x128xbf16> -> vector<528x1152xbf16>
    %c0_31 = arith.constant 0 : index
    %c0_32 = arith.constant 0 : index
    %116 = vector.load %arg7[%c0_31, %c0_32] : memref<1152x128xbf16, #tpu.memory_space<vmem>>, vector<1152x128xbf16>
    %cst_33 = arith.constant dense<0.000000e+00> : vector<528x128xf32>
    %117 = tpu.matmul %115, %116, %cst_33 {dimension_numbers = #tpu.dot_dimension_numbers<[1], [0], [0], [1], [0, 0, 1, 1], [], []>} : vector<528x1152xbf16>, vector<1152x128xbf16>, vector<528x128xf32> -> vector<528x128xf32>
    %118 = arith.truncf %117 : vector<528x128xf32> to vector<528x128xbf16>
    %c0_34 = arith.constant 0 : index
    %c0_35 = arith.constant 0 : index
    %119 = vector.load %arg8[%c0_34, %c0_35] : memref<528x128xbf16, #tpu.memory_space<vmem>>, vector<528x128xbf16>
    tpu.vector_store %arg8[%c0_34, %c0_35], %118 {strides = array<i32>} : memref<528x128xbf16, #tpu.memory_space<vmem>>, vector<528x128xbf16>,
    %c512_i32 = arith.constant 512 : i32
    %120 = vector.broadcast %c512_i32 : i32 to vector<528x1xi32>
    %121 = arith.cmpi slt, %20, %120 : vector<528x1xi32>
    %cst_36 = arith.constant 0.000000e+00 : f32
    %122 = vector.shape_cast %121 : vector<528x1xi1> to vector<528x1xi1>
    %123 = vector.broadcast %122 : vector<528x1xi1> to vector<528x128xi1>
    %124 = vector.broadcast %cst_36 : f32 to vector<528x128xf32>
    %125 = arith.select %123, %117, %124 : vector<528x128xi1>, vector<528x128xf32>
    %cst_37 = arith.constant dense<0.000000e+00> : vector<128xf32>
    %126 = vector.multi_reduction <add>, %125, %cst_37 [0] : vector<528x128xf32> to vector<128xf32>
    %127 = vector.shape_cast %126 : vector<128xf32> to vector<1x128xf32>
    %128 = arith.mulf %125, %125 : vector<528x128xf32>
    %cst_38 = arith.constant dense<0.000000e+00> : vector<128xf32>
    %129 = vector.multi_reduction <add>, %128, %cst_38 [0] : vector<528x128xf32> to vector<128xf32>
    %130 = vector.shape_cast %129 : vector<128xf32> to vector<1x128xf32>
    %131 = tpu.concatenate %127, %130 in 0 : vector<1x128xf32>, vector<1x128xf32> -> vector<2x128xf32>
    %132 = vector.shape_cast %131 : vector<2x128xf32> to vector<1x2x128xf32>
    %c0_39 = arith.constant 0 : index
    %c0_40 = arith.constant 0 : index
    %c0_41 = arith.constant 0 : index
    %133 = vector.load %arg9[%c0_39, %c0_40, %c0_41] : memref<1x2x128xf32, #tpu.memory_space<vmem>>, vector<1x2x128xf32>
    tpu.vector_store %arg9[%c0_39, %c0_40, %c0_41], %132 {strides = array<i32>} : memref<1x2x128xf32, #tpu.memory_space<vmem>>, vector<1x2x128xf32>,
    return
  }
  func.func @transform_0(%arg0: i32) -> (i32, i32) {
    %c22_i32 = arith.constant 22 : i32
    %0 = arith.muli %arg0, %c22_i32 : i32
    %c1_i32 = arith.constant 1 : i32
    %1 = arith.subi %0, %c1_i32 : i32
    %c0_i32 = arith.constant 0 : i32
    %2 = arith.maxsi %1, %c0_i32 : i32
    %c0_i32_0 = arith.constant 0 : i32
    %c0_i32_1 = arith.constant 0 : i32
    return %2, %c0_i32_0 : i32, i32
  }
  func.func @transform_1(%arg0: i32) -> (i32, i32) {
    %c0_i32 = arith.constant 0 : i32
    %c0_i32_0 = arith.constant 0 : i32
    return %arg0, %c0_i32 : i32, i32
  }
  func.func @transform_2(%arg0: i32) -> (i32, i32) {
    %c1_i32 = arith.constant 1 : i32
    %0 = arith.addi %arg0, %c1_i32 : i32
    %c22_i32 = arith.constant 22 : i32
    %1 = arith.muli %0, %c22_i32 : i32
    %c21_i32 = arith.constant 21 : i32
    %2 = arith.minsi %1, %c21_i32 : i32
    %c0_i32 = arith.constant 0 : i32
    %c0_i32_0 = arith.constant 0 : i32
    return %2, %c0_i32 : i32, i32
  }
  func.func @transform_3(%arg0: i32) -> (i32, i32) {
    %c0_i32 = arith.constant 0 : i32
    %c0_i32_0 = arith.constant 0 : i32
    %c0_i32_1 = arith.constant 0 : i32
    return %c0_i32, %c0_i32_0 : i32, i32
  }
  func.func @transform_4(%arg0: i32) -> (i32, i32) {
    %c0_i32 = arith.constant 0 : i32
    %c0_i32_0 = arith.constant 0 : i32
    %c0_i32_1 = arith.constant 0 : i32
    return %c0_i32, %c0_i32_0 : i32, i32
  }
  func.func @transform_5(%arg0: i32) -> (i32, i32) {
    %c0_i32 = arith.constant 0 : i32
    %c0_i32_0 = arith.constant 0 : i32
    %c0_i32_1 = arith.constant 0 : i32
    return %c0_i32, %c0_i32_0 : i32, i32
  }
  func.func @transform_6(%arg0: i32) -> (i32, i32) {
    %c0_i32 = arith.constant 0 : i32
    %c0_i32_0 = arith.constant 0 : i32
    %c0_i32_1 = arith.constant 0 : i32
    return %c0_i32, %c0_i32_0 : i32, i32
  }
  func.func @transform_7(%arg0: i32) -> (i32, i32) {
    %c0_i32 = arith.constant 0 : i32
    %c0_i32_0 = arith.constant 0 : i32
    return %arg0, %c0_i32 : i32, i32
  }
  func.func @transform_8(%arg0: i32) -> (i32, i32, i32) {
    %c0_i32 = arith.constant 0 : i32
    %c0_i32_0 = arith.constant 0 : i32
    %c0_i32_1 = arith.constant 0 : i32
    return %arg0, %c0_i32, %c0_i32_0 : i32, i32, i32
  }
}

module attributes {stable_mosaic.version = 11 : i64} {
  func.func @_bn2_residual_kernel(%arg0: i32, %arg1: memref<528x128xbf16, #tpu.memory_space<vmem>>, %arg2: memref<528x128xbf16, #tpu.memory_space<vmem>>, %arg3: memref<1x128xf32, #tpu.memory_space<vmem>>, %arg4: memref<1x128xf32, #tpu.memory_space<vmem>>, %arg5: memref<528x128xf32, #tpu.memory_space<vmem>>) attributes {dimension_semantics = [#tpu.dimension_semantics<parallel>], iteration_bounds = array<i64: 1>, scalar_prefetch = 0 : i64, scratch_operands = 0 : i64, tpu.core_type = #tpu.core_type<tc>, window_params = [{transform_indices = @transform_0, window_bounds = array<i64: 528, 128>}, {transform_indices = @transform_1, window_bounds = array<i64: 528, 128>}, {pipeline_mode = #tpu.pipeline_mode<synchronous>, transform_indices = @transform_2, window_bounds = array<i64: 1, 128>}, {pipeline_mode = #tpu.pipeline_mode<synchronous>, transform_indices = @transform_3, window_bounds = array<i64: 1, 128>}, {transform_indices = @transform_4, window_bounds = array<i64: 528, 128>}]} {
    %c0 = arith.constant 0 : index
    %c0_0 = arith.constant 0 : index
    %0 = vector.load %arg1[%c0, %c0_0] : memref<528x128xbf16, #tpu.memory_space<vmem>>, vector<528x128xbf16>
    %1 = arith.extf %0 : vector<528x128xbf16> to vector<528x128xf32>
    %c0_1 = arith.constant 0 : index
    %c0_2 = arith.constant 0 : index
    %2 = vector.load %arg3[%c0_1, %c0_2] : memref<1x128xf32, #tpu.memory_space<vmem>>, vector<1x128xf32>
    %3 = vector.broadcast %2 : vector<1x128xf32> to vector<528x128xf32>
    %4 = arith.mulf %1, %3 : vector<528x128xf32>
    %c0_3 = arith.constant 0 : index
    %c0_4 = arith.constant 0 : index
    %5 = vector.load %arg4[%c0_3, %c0_4] : memref<1x128xf32, #tpu.memory_space<vmem>>, vector<1x128xf32>
    %6 = vector.broadcast %5 : vector<1x128xf32> to vector<528x128xf32>
    %7 = arith.addf %4, %6 : vector<528x128xf32>
    %cst = arith.constant 0.000000e+00 : f32
    %8 = vector.broadcast %cst : f32 to vector<528x128xf32>
    %9 = arith.cmpf ogt, %7, %8 : vector<528x128xf32>
    %cst_5 = arith.constant 1.000000e-01 : f32
    %10 = vector.broadcast %cst_5 : f32 to vector<528x128xf32>
    %11 = arith.mulf %10, %7 : vector<528x128xf32>
    %12 = arith.select %9, %7, %11 : vector<528x128xi1>, vector<528x128xf32>
    %c0_6 = arith.constant 0 : index
    %c0_7 = arith.constant 0 : index
    %13 = vector.load %arg2[%c0_6, %c0_7] : memref<528x128xbf16, #tpu.memory_space<vmem>>, vector<528x128xbf16>
    %14 = arith.extf %13 : vector<528x128xbf16> to vector<528x128xf32>
    %15 = arith.addf %12, %14 : vector<528x128xf32>
    %c0_8 = arith.constant 0 : index
    %c0_9 = arith.constant 0 : index
    %16 = vector.load %arg5[%c0_8, %c0_9] : memref<528x128xf32, #tpu.memory_space<vmem>>, vector<528x128xf32>
    tpu.vector_store %arg5[%c0_8, %c0_9], %15 {strides = array<i32>} : memref<528x128xf32, #tpu.memory_space<vmem>>, vector<528x128xf32>,
    return
  }
  func.func @transform_0(%arg0: i32) -> (i32, i32) {
    %c0_i32 = arith.constant 0 : i32
    %c0_i32_0 = arith.constant 0 : i32
    return %arg0, %c0_i32 : i32, i32
  }
  func.func @transform_1(%arg0: i32) -> (i32, i32) {
    %c0_i32 = arith.constant 0 : i32
    %c0_i32_0 = arith.constant 0 : i32
    return %arg0, %c0_i32 : i32, i32
  }
  func.func @transform_2(%arg0: i32) -> (i32, i32) {
    %c0_i32 = arith.constant 0 : i32
    %c0_i32_0 = arith.constant 0 : i32
    %c0_i32_1 = arith.constant 0 : i32
    return %c0_i32, %c0_i32_0 : i32, i32
  }
  func.func @transform_3(%arg0: i32) -> (i32, i32) {
    %c0_i32 = arith.constant 0 : i32
    %c0_i32_0 = arith.constant 0 : i32
    %c0_i32_1 = arith.constant 0 : i32
    return %c0_i32, %c0_i32_0 : i32, i32
  }
  func.func @transform_4(%arg0: i32) -> (i32, i32) {
    %c0_i32 = arith.constant 0 : i32
    %c0_i32_0 = arith.constant 0 : i32
    return %arg0, %c0_i32 : i32, i32
  }
}

</mosaic_0001>

<llo_original>
// kernel: shortcut_block.3
$region0: #{shortcut_block.3}
  #allocation0 [shape = 'u32[]', space=smem, size = 0x4, offset = 0x4, fixed_abs, tag = 'smem constant byte address 0x4 - core index']
  #allocation1 [shape = 'u32[144,128]{1,0:T(1,128)}', space=vmem, size = 0x12000, scoped, tag = 'internal scratch']
  %s0 = inlined_call_operand.vmem [shape: bf16[528,128], index: 0, kind: input, shape index: {}]
  %s1 = inlined_call_operand.vmem [shape: bf16[128,128], index: 1, kind: input, shape index: {}]
  %s2 = inlined_call_operand.vmem [shape: f32[1,2,128], index: 2, kind: output, shape index: {}]
  %s3 = sld [smem:[#allocation0]]
  $region18: #{shortcut_block.3} parent=0
    _
  %s5 = ssub.s32 1, %s3
  %s6 = scalar_select 0, %s5, %s3
  // Predicated region
  $region2: #{shortcut_block.3} parent=0 // pred_check
    _
  $region3: #{shortcut_block.3} parent=0 // pred_check_branch
    %8 = sbr.rel (0) target = $region5
  $region4: #{shortcut_block.3} parent=0 // pred_region
    _
  $region5: #{shortcut_block.3} parent=0 // pred_fallthru
    _
  // Predicated region
  $region6: #{shortcut_block.3} parent=0 // pred_check
    _
  $region7: #{shortcut_block.3} parent=0 // pred_check_branch
    %10 = sbr.rel (0) target = $region9
  $region8: #{shortcut_block.3} parent=0 // pred_region
    _
  $region9: #{shortcut_block.3} parent=0 // pred_fallthru
    _
  %v12 = vld [vmem:[%s0] sm:$0xf]
  %v13 = vld [vmem:[%s0 + $0x4] sm:$0xf]
  %v14 = vld [vmem:[%s0 + $0x8] sm:$0xf]
  %v15 = vld [vmem:[%s0 + $0xc] sm:$0xf]
  %v16 = vld [vmem:[%s0 + $0x10] sm:$0xf]
  %v17 = vld [vmem:[%s0 + $0x14] sm:$0xf]
  %v18 = vld [vmem:[%s0 + $0x18] sm:$0xf]
  %v19 = vld [vmem:[%s0 + $0x1c] sm:$0xf]
  %v20 = vld [vmem:[%s0 + $0x20] sm:$0xf]
  %v21 = vld [vmem:[%s0 + $0x24] sm:$0xf]
  %v22 = vld [vmem:[%s0 + $0x28] sm:$0xf]
  %v23 = vld [vmem:[%s0 + $0x2c] sm:$0xf]
  %v24 = vld [vmem:[%s0 + $0x30] sm:$0xf]
  %v25 = vld [vmem:[%s0 + $0x34] sm:$0xf]
  %v26 = vld [vmem:[%s0 + $0x38] sm:$0xf]
  %v27 = vld [vmem:[%s0 + $0x3c] sm:$0xf]
  %v28 = vld [vmem:[%s0 + $0x40] sm:$0xf]
  %v29 = vld [vmem:[%s0 + $0x44] sm:$0xf]
  %v30 = vld [vmem:[%s0 + $0x48] sm:$0xf]
  %v31 = vld [vmem:[%s0 + $0x4c] sm:$0xf]
  %v32 = vld [vmem:[%s0 + $0x50] sm:$0xf]
  %v33 = vld [vmem:[%s0 + $0x54] sm:$0xf]
  %v34 = vld [vmem:[%s0 + $0x58] sm:$0xf]
  %v35 = vld [vmem:[%s0 + $0x5c] sm:$0xf]
  %v36 = vld [vmem:[%s0 + $0x60] sm:$0xf]
  %v37 = vld [vmem:[%s0 + $0x64] sm:$0xf]
  %v38 = vld [vmem:[%s0 + $0x68] sm:$0xf]
  %v39 = vld [vmem:[%s0 + $0x6c] sm:$0xf]
  %v40 = vld [vmem:[%s0 + $0x70] sm:$0xf]
  %v41 = vld [vmem:[%s0 + $0x74] sm:$0xf]
  %v42 = vld [vmem:[%s0 + $0x78] sm:$0xf]
  %v43 = vld [vmem:[%s0 + $0x7c] sm:$0xf]
  %v44 = vld [vmem:[%s0 + $0x80] sm:$0xf]
  %v45 = vld [vmem:[%s0 + $0x84] sm:$0xf]
  %v46 = vld [vmem:[%s0 + $0x88] sm:$0xf]
  %v47 = vld [vmem:[%s0 + $0x8c] sm:$0xf]
  %v48 = vld [vmem:[%s0 + $0x90] sm:$0xf]
  %v49 = vld [vmem:[%s0 + $0x94] sm:$0xf]
  %v50 = vld [vmem:[%s0 + $0x98] sm:$0xf]
  %v51 = vld [vmem:[%s0 + $0x9c] sm:$0xf]
  %v52 = vld [vmem:[%s0 + $0xa0] sm:$0xf]
  %v53 = vld [vmem:[%s0 + $0xa4] sm:$0xf]
  %v54 = vld [vmem:[%s0 + $0xa8] sm:$0xf]
  %v55 = vld [vmem:[%s0 + $0xac] sm:$0xf]
  %v56 = vld [vmem:[%s0 + $0xb0] sm:$0xf]
  %v57 = vld [vmem:[%s0 + $0xb4] sm:$0xf]
  %v58 = vld [vmem:[%s0 + $0xb8] sm:$0xf]
  %v59 = vld [vmem:[%s0 + $0xbc] sm:$0xf]
  %v60 = vld [vmem:[%s0 + $0xc0] sm:$0xf]
  %v61 = vld [vmem:[%s0 + $0xc4] sm:$0xf]
  %v62 = vld [vmem:[%s0 + $0xc8] sm:$0xf]
  %v63 = vld [vmem:[%s0 + $0xcc] sm:$0xf]
  %v64 = vld [vmem:[%s0 + $0xd0] sm:$0xf]
  %v65 = vld [vmem:[%s0 + $0xd4] sm:$0xf]
  %v66 = vld [vmem:[%s0 + $0xd8] sm:$0xf]
  %v67 = vld [vmem:[%s0 + $0xdc] sm:$0xf]
  %v68 = vld [vmem:[%s0 + $0xe0] sm:$0xf]
  %v69 = vld [vmem:[%s0 + $0xe4] sm:$0xf]
  %v70 = vld [vmem:[%s0 + $0xe8] sm:$0xf]
  %v71 = vld [vmem:[%s0 + $0xec] sm:$0xf]
  %v72 = vld [vmem:[%s0 + $0xf0] sm:$0xf]
  %v73 = vld [vmem:[%s0 + $0xf4] sm:$0xf]
  %v74 = vld [vmem:[%s0 + $0xf8] sm:$0xf]
  %v75 = vld [vmem:[%s0 + $0xfc] sm:$0xf]
  %v76 = vld [vmem:[%s0 + $0x100] sm:$0xf]
  %v77 = vld [vmem:[%s0 + $0x104] sm:$0xf]
  %v78 = vld [vmem:[%s1] sm:$0xf]
  %v79 = vld [vmem:[%s1 + $0x4] sm:$0xf]
  %v80 = vld [vmem:[%s1 + $0x8] sm:$0xf]
  %v81 = vld [vmem:[%s1 + $0xc] sm:$0xf]
  %v82 = vld [vmem:[%s1 + $0x10] sm:$0xf]
  %v83 = vld [vmem:[%s1 + $0x14] sm:$0xf]
  %v84 = vld [vmem:[%s1 + $0x18] sm:$0xf]
  %v85 = vld [vmem:[%s1 + $0x1c] sm:$0xf]
  %v86 = vld [vmem:[%s1 + $0x20] sm:$0xf]
  %v87 = vld [vmem:[%s1 + $0x24] sm:$0xf]
  %v88 = vld [vmem:[%s1 + $0x28] sm:$0xf]
  %v89 = vld [vmem:[%s1 + $0x2c] sm:$0xf]
  %v90 = vld [vmem:[%s1 + $0x30] sm:$0xf]
  %v91 = vld [vmem:[%s1 + $0x34] sm:$0xf]
  %v92 = vld [vmem:[%s1 + $0x38] sm:$0xf]
  %v93 = vld [vmem:[%s1 + $0x3c] sm:$0xf]
  %v160 = vunpack.c.l.b16 %v12
  %v161 = vunpack.c.l.b16 %v13
  %v162 = vunpack.c.l.b16 %v14
  %v163 = vunpack.c.l.b16 %v15
  %v164 = vunpack.c.l.b16 %v16
  %v165 = vunpack.c.l.b16 %v17
  %v166 = vunpack.c.l.b16 %v18
  %v167 = vunpack.c.l.b16 %v19
  %v168 = vunpack.c.l.b16 %v20
  %v169 = vunpack.c.l.b16 %v21
  %v170 = vunpack.c.l.b16 %v22
  %v171 = vunpack.c.l.b16 %v23
  %v172 = vunpack.c.l.b16 %v24
  %v173 = vunpack.c.l.b16 %v25
  %v174 = vunpack.c.l.b16 %v26
  %v175 = vunpack.c.l.b16 %v27
  %v176 = vunpack.c.l.b16 %v28
  %v177 = vunpack.c.l.b16 %v29
  %v178 = vunpack.c.l.b16 %v30
  %v179 = vunpack.c.l.b16 %v31
  %v180 = vunpack.c.l.b16 %v32
  %v181 = vunpack.c.l.b16 %v33
  %v182 = vunpack.c.l.b16 %v34
  %v183 = vunpack.c.l.b16 %v35
  %v184 = vunpack.c.l.b16 %v36
  %v185 = vunpack.c.l.b16 %v37
  %v186 = vunpack.c.l.b16 %v38
  %v187 = vunpack.c.l.b16 %v39
  %v188 = vunpack.c.l.b16 %v40
  %v189 = vunpack.c.l.b16 %v41
  %v190 = vunpack.c.l.b16 %v42
  %v191 = vunpack.c.l.b16 %v43
  %v192 = vunpack.c.l.b16 %v44
  %v193 = vunpack.c.l.b16 %v45
  %v194 = vunpack.c.l.b16 %v46
  %v195 = vunpack.c.l.b16 %v47
  %v196 = vunpack.c.l.b16 %v48
  %v197 = vunpack.c.l.b16 %v49
  %v198 = vunpack.c.l.b16 %v50
  %v199 = vunpack.c.l.b16 %v51
  %v200 = vunpack.c.l.b16 %v52
  %v201 = vunpack.c.l.b16 %v53
  %v202 = vunpack.c.l.b16 %v54
  %v203 = vunpack.c.l.b16 %v55
  %v204 = vunpack.c.l.b16 %v56
  %v205 = vunpack.c.l.b16 %v57
  %v206 = vunpack.c.l.b16 %v58
  %v207 = vunpack.c.l.b16 %v59
  %v208 = vunpack.c.l.b16 %v60
  %v209 = vunpack.c.l.b16 %v61
  %v210 = vunpack.c.l.b16 %v62
  %v211 = vunpack.c.l.b16 %v63
  %v212 = vunpack.c.l.b16 %v64
  %v213 = vunpack.c.l.b16 %v65
  %v214 = vunpack.c.l.b16 %v66
  %v215 = vunpack.c.l.b16 %v67
  %v216 = vunpack.c.l.b16 %v68
  %v217 = vunpack.c.l.b16 %v69
  %v218 = vunpack.c.l.b16 %v70
  %v219 = vunpack.c.l.b16 %v71
  %v220 = vunpack.c.l.b16 %v72
  %v221 = vunpack.c.l.b16 %v73
  %v222 = vunpack.c.l.b16 %v74
  %v223 = vunpack.c.l.b16 %v75
  %v224 = vunpack.c.l.b16 %v76
  %v225 = vunpack.c.l.b16 %v77
  %v226 = vpack.c.b16 %v161, %v160
  %v227 = vpack.c.b16 %v163, %v162
  %v228 = vpack.c.b16 %v165, %v164
  %v229 = vpack.c.b16 %v167, %v166
  %v230 = vpack.c.b16 %v169, %v168
  %v231 = vpack.c.b16 %v171, %v170
  %v232 = vpack.c.b16 %v173, %v172
  %v233 = vpack.c.b16 %v175, %v174
  %v234 = vpack.c.b16 %v177, %v176
  %v235 = vpack.c.b16 %v179, %v178
  %v236 = vpack.c.b16 %v181, %v180
  %v237 = vpack.c.b16 %v183, %v182
  %v238 = vpack.c.b16 %v185, %v184
  %v239 = vpack.c.b16 %v187, %v186
  %v240 = vpack.c.b16 %v189, %v188
  %v241 = vpack.c.b16 %v191, %v190
  %v242 = vpack.c.b16 %v193, %v192
  %v243 = vpack.c.b16 %v195, %v194
  %v244 = vpack.c.b16 %v197, %v196
  %v245 = vpack.c.b16 %v199, %v198
  %v246 = vpack.c.b16 %v201, %v200
  %v247 = vpack.c.b16 %v203, %v202
  %v248 = vpack.c.b16 %v205, %v204
  %v249 = vpack.c.b16 %v207, %v206
  %v250 = vpack.c.b16 %v209, %v208
  %v251 = vpack.c.b16 %v211, %v210
  %v252 = vpack.c.b16 %v213, %v212
  %v253 = vpack.c.b16 %v215, %v214
  %v254 = vpack.c.b16 %v217, %v216
  %v255 = vpack.c.b16 %v219, %v218
  %v256 = vpack.c.b16 %v221, %v220
  %v257 = vpack.c.b16 %v223, %v222
  %v258 = vpack.c.b16 %v225, %v224
  %v308 = vunpack.c.l.b16 %v78
  %v309 = vunpack.c.l.b16 %v79
  %v310 = vunpack.c.l.b16 %v80
  %v311 = vunpack.c.l.b16 %v81
  %v312 = vunpack.c.l.b16 %v82
  %v313 = vunpack.c.l.b16 %v83
  %v314 = vunpack.c.l.b16 %v84
  %v315 = vunpack.c.l.b16 %v85
  %v316 = vunpack.c.l.b16 %v86
  %v317 = vunpack.c.l.b16 %v87
  %v318 = vunpack.c.l.b16 %v88
  %v319 = vunpack.c.l.b16 %v89
  %v320 = vunpack.c.l.b16 %v90
  %v321 = vunpack.c.l.b16 %v91
  %v322 = vunpack.c.l.b16 %v92
  %v323 = vunpack.c.l.b16 %v93
  %v324 = vpack.c.b16 %v309, %v308
  %v325 = vpack.c.b16 %v311, %v310
  %v326 = vpack.c.b16 %v313, %v312
  %v327 = vpack.c.b16 %v315, %v314
  %v328 = vpack.c.b16 %v317, %v316
  %v329 = vpack.c.b16 %v319, %v318
  %v330 = vpack.c.b16 %v321, %v320
  %v331 = vpack.c.b16 %v323, %v322
  %340 = vmatprep.subr.bf16.mxu0 0
  %341 = vmatpush1.bf16.msra.mxu0 %v331
  %342 = vmatprep.subr.bf16.mxu0 0
  %343 = vmatpush1.bf16.msra.mxu0 %v330
  %344 = vmatprep.subr.bf16.mxu0 0
  %345 = vmatpush1.bf16.msra.mxu0 %v329
  %346 = vmatprep.subr.bf16.mxu0 0
  %347 = vmatpush1.bf16.msra.mxu0 %v328
  %348 = vmatprep.subr.bf16.mxu0 0
  %349 = vmatpush1.bf16.msra.mxu0 %v327
  %350 = vmatprep.subr.bf16.mxu0 0
  %351 = vmatpush1.bf16.msra.mxu0 %v326
  %352 = vmatprep.subr.bf16.mxu0 0
  %353 = vmatpush1.bf16.msra.mxu0 %v325
  %354 = vmatprep.subr.bf16.mxu0 0
  %355 = vmatpush1.bf16.msra.mxu0 %v324
  %356 = vmatprep.subr.bf16.mxu0 0
  %357 = vmatpush2.bf16.msra.mxu0 0
  %358 = vmatprep.subr.bf16.mxu0 0
  %359 = vmatpush2.bf16.msra.mxu0 0
  %360 = vmatprep.subr.bf16.mxu0 0
  %361 = vmatpush2.bf16.msra.mxu0 0
  %362 = vmatprep.subr.bf16.mxu0 0
  %363 = vmatpush2.bf16.msra.mxu0 0
  %364 = vmatprep.subr.bf16.mxu0 0
  %365 = vmatpush2.bf16.msra.mxu0 0
  %366 = vmatprep.subr.bf16.mxu0 0
  %367 = vmatpush2.bf16.msra.mxu0 0
  %368 = vmatprep.subr.bf16.mxu0 0
  %369 = vmatpush2.bf16.msra.mxu0 0
  %370 = vmatprep.subr.bf16.mxu0 0
  %371 = vmatpush2.bf16.msra.mxu0 0
  %372 = vmatprep.mubr.bf16.mxu0 0
  %373 = vmatmul.mubr.bf16.gmra.mxu0 %v226
  %v374 = vpop.f32.mrf.mxu0
  %v375 = vadd.f32 0.0, %v374
  %v376 = vpop.f32.mrf.mxu0
  %v377 = vpop.f32.mrf.mxu0
  %v378 = vadd.f32 0.0, %v377
  %v379 = vpop.f32.mrf.mxu0
  %380 = vmatprep.mubr.bf16.mxu0 0
  %381 = vmatmul.mubr.bf16.gmra.mxu0 %v227
  %v382 = vpop.f32.mrf.mxu0
  %v383 = vadd.f32 0.0, %v382
  %v384 = vpop.f32.mrf.mxu0
  %v385 = vpop.f32.mrf.mxu0
  %v386 = vadd.f32 0.0, %v385
  %v387 = vpop.f32.mrf.mxu0
  %388 = vmatprep.mubr.bf16.mxu0 0
  %389 = vmatmul.mubr.bf16.gmra.mxu0 %v228
  %v390 = vpop.f32.mrf.mxu0
  %v391 = vadd.f32 0.0, %v390
  %v392 = vpop.f32.mrf.mxu0
  %v393 = vpop.f32.mrf.mxu0
  %v394 = vadd.f32 0.0, %v393
  %v395 = vpop.f32.mrf.mxu0
  %396 = vmatprep.mubr.bf16.mxu0 0
  %397 = vmatmul.mubr.bf16.gmra.mxu0 %v229
  %v398 = vpop.f32.mrf.mxu0
  %v399 = vadd.f32 0.0, %v398
  %v400 = vpop.f32.mrf.mxu0
  %v401 = vpop.f32.mrf.mxu0
  %v402 = vadd.f32 0.0, %v401
  %v403 = vpop.f32.mrf.mxu0
  %404 = vmatprep.mubr.bf16.mxu0 0
  %405 = vmatmul.mubr.bf16.gmra.mxu0 %v230
  %v406 = vpop.f32.mrf.mxu0
  %v407 = vadd.f32 0.0, %v406
  %v408 = vpop.f32.mrf.mxu0
  %v409 = vpop.f32.mrf.mxu0
  %v410 = vadd.f32 0.0, %v409
  %v411 = vpop.f32.mrf.mxu0
  %412 = vmatprep.mubr.bf16.mxu0 0
  %413 = vmatmul.mubr.bf16.gmra.mxu0 %v231
  %v414 = vpop.f32.mrf.mxu0
  %v415 = vadd.f32 0.0, %v414
  %v416 = vpop.f32.mrf.mxu0
  %v417 = vpop.f32.mrf.mxu0
  %v418 = vadd.f32 0.0, %v417
  %v419 = vpop.f32.mrf.mxu0
  %420 = vmatprep.mubr.bf16.mxu0 0
  %421 = vmatmul.mubr.bf16.gmra.mxu0 %v232
  %v422 = vpop.f32.mrf.mxu0
  %v423 = vadd.f32 0.0, %v422
  %v424 = vpop.f32.mrf.mxu0
  %v425 = vpop.f32.mrf.mxu0
  %v426 = vadd.f32 0.0, %v425
  %v427 = vpop.f32.mrf.mxu0
  %428 = vmatprep.mubr.bf16.mxu0 0
  %429 = vmatmul.mubr.bf16.gmra.mxu0 %v233
  %v430 = vpop.f32.mrf.mxu0
  %v431 = vadd.f32 0.0, %v430
  %v432 = vpop.f32.mrf.mxu0
  %v433 = vpop.f32.mrf.mxu0
  %v434 = vadd.f32 0.0, %v433
  %v435 = vpop.f32.mrf.mxu0
  %436 = vmatprep.mubr.bf16.mxu0 0
  %437 = vmatmul.mubr.bf16.gmra.mxu0 %v234
  %v438 = vpop.f32.mrf.mxu0
  %v439 = vadd.f32 0.0, %v438
  %v440 = vpop.f32.mrf.mxu0
  %v441 = vpop.f32.mrf.mxu0
  %v442 = vadd.f32 0.0, %v441
  %v443 = vpop.f32.mrf.mxu0
  %444 = vmatprep.mubr.bf16.mxu0 0
  %445 = vmatmul.mubr.bf16.gmra.mxu0 %v235
  %v446 = vpop.f32.mrf.mxu0
  %v447 = vadd.f32 0.0, %v446
  %v448 = vpop.f32.mrf.mxu0
  %v449 = vpop.f32.mrf.mxu0
  %v450 = vadd.f32 0.0, %v449
  %v451 = vpop.f32.mrf.mxu0
  %452 = vmatprep.mubr.bf16.mxu0 0
  %453 = vmatmul.mubr.bf16.gmra.mxu0 %v236
  %v454 = vpop.f32.mrf.mxu0
  %v455 = vadd.f32 0.0, %v454
  %v456 = vpop.f32.mrf.mxu0
  %v457 = vpop.f32.mrf.mxu0
  %v458 = vadd.f32 0.0, %v457
  %v459 = vpop.f32.mrf.mxu0
  %460 = vmatprep.mubr.bf16.mxu0 0
  %461 = vmatmul.mubr.bf16.gmra.mxu0 %v237
  %v462 = vpop.f32.mrf.mxu0
  %v463 = vadd.f32 0.0, %v462
  %v464 = vpop.f32.mrf.mxu0
  %v465 = vpop.f32.mrf.mxu0
  %v466 = vadd.f32 0.0, %v465
  %v467 = vpop.f32.mrf.mxu0
  %468 = vmatprep.mubr.bf16.mxu0 0
  %469 = vmatmul.mubr.bf16.gmra.mxu0 %v238
  %v470 = vpop.f32.mrf.mxu0
  %v471 = vadd.f32 0.0, %v470
  %v472 = vpop.f32.mrf.mxu0
  %v473 = vpop.f32.mrf.mxu0
  %v474 = vadd.f32 0.0, %v473
  %v475 = vpop.f32.mrf.mxu0
  %476 = vmatprep.mubr.bf16.mxu0 0
  %477 = vmatmul.mubr.bf16.gmra.mxu0 %v239
  %v478 = vpop.f32.mrf.mxu0
  %v479 = vadd.f32 0.0, %v478
  %v480 = vpop.f32.mrf.mxu0
  %v481 = vpop.f32.mrf.mxu0
  %v482 = vadd.f32 0.0, %v481
  %v483 = vpop.f32.mrf.mxu0
  %484 = vmatprep.mubr.bf16.mxu0 0
  %485 = vmatmul.mubr.bf16.gmra.mxu0 %v240
  %v486 = vpop.f32.mrf.mxu0
  %v487 = vadd.f32 0.0, %v486
  %v488 = vpop.f32.mrf.mxu0
  %v489 = vpop.f32.mrf.mxu0
  %v490 = vadd.f32 0.0, %v489
  %v491 = vpop.f32.mrf.mxu0
  %492 = vmatprep.mubr.bf16.mxu0 0
  %493 = vmatmul.mubr.bf16.gmra.mxu0 %v241
  %v494 = vpop.f32.mrf.mxu0
  %v495 = vadd.f32 0.0, %v494
  %v496 = vpop.f32.mrf.mxu0
  %v497 = vpop.f32.mrf.mxu0
  %v498 = vadd.f32 0.0, %v497
  %v499 = vpop.f32.mrf.mxu0
  %500 = vmatprep.mubr.bf16.mxu0 0
  %501 = vmatmul.mubr.bf16.gmra.mxu0 %v242
  %v502 = vpop.f32.mrf.mxu0
  %v503 = vadd.f32 0.0, %v502
  %v504 = vpop.f32.mrf.mxu0
  %v505 = vpop.f32.mrf.mxu0
  %v506 = vadd.f32 0.0, %v505
  %v507 = vpop.f32.mrf.mxu0
  %508 = vmatprep.mubr.bf16.mxu0 0
  %509 = vmatmul.mubr.bf16.gmra.mxu0 %v243
  %v510 = vpop.f32.mrf.mxu0
  %v511 = vadd.f32 0.0, %v510
  %v512 = vpop.f32.mrf.mxu0
  %v513 = vpop.f32.mrf.mxu0
  %v514 = vadd.f32 0.0, %v513
  %v515 = vpop.f32.mrf.mxu0
  %516 = vmatprep.mubr.bf16.mxu0 0
  %517 = vmatmul.mubr.bf16.gmra.mxu0 %v244
  %v518 = vpop.f32.mrf.mxu0
  %v519 = vadd.f32 0.0, %v518
  %v520 = vpop.f32.mrf.mxu0
  %v521 = vpop.f32.mrf.mxu0
  %v522 = vadd.f32 0.0, %v521
  %v523 = vpop.f32.mrf.mxu0
  %524 = vmatprep.mubr.bf16.mxu0 0
  %525 = vmatmul.mubr.bf16.gmra.mxu0 %v245
  %v526 = vpop.f32.mrf.mxu0
  %v527 = vadd.f32 0.0, %v526
  %v528 = vpop.f32.mrf.mxu0
  %v529 = vpop.f32.mrf.mxu0
  %v530 = vadd.f32 0.0, %v529
  %v531 = vpop.f32.mrf.mxu0
  %532 = vmatprep.mubr.bf16.mxu0 0
  %533 = vmatmul.mubr.bf16.gmra.mxu0 %v246
  %v534 = vpop.f32.mrf.mxu0
  %v535 = vadd.f32 0.0, %v534
  %v536 = vpop.f32.mrf.mxu0
  %v537 = vpop.f32.mrf.mxu0
  %v538 = vadd.f32 0.0, %v537
  %v539 = vpop.f32.mrf.mxu0
  %540 = vmatprep.mubr.bf16.mxu0 0
  %541 = vmatmul.mubr.bf16.gmra.mxu0 %v247
  %v542 = vpop.f32.mrf.mxu0
  %v543 = vadd.f32 0.0, %v542
  %v544 = vpop.f32.mrf.mxu0
  %v545 = vpop.f32.mrf.mxu0
  %v546 = vadd.f32 0.0, %v545
  %v547 = vpop.f32.mrf.mxu0
  %548 = vmatprep.mubr.bf16.mxu0 0
  %549 = vmatmul.mubr.bf16.gmra.mxu0 %v248
  %v550 = vpop.f32.mrf.mxu0
  %v551 = vadd.f32 0.0, %v550
  %v552 = vpop.f32.mrf.mxu0
  %v553 = vpop.f32.mrf.mxu0
  %v554 = vadd.f32 0.0, %v553
  %v555 = vpop.f32.mrf.mxu0
  %556 = vmatprep.mubr.bf16.mxu0 0
  %557 = vmatmul.mubr.bf16.gmra.mxu0 %v249
  %v558 = vpop.f32.mrf.mxu0
  %v559 = vadd.f32 0.0, %v558
  %v560 = vpop.f32.mrf.mxu0
  %v561 = vpop.f32.mrf.mxu0
  %v562 = vadd.f32 0.0, %v561
  %v563 = vpop.f32.mrf.mxu0
  %564 = vmatprep.mubr.bf16.mxu0 0
  %565 = vmatmul.mubr.bf16.gmra.mxu0 %v250
  %v566 = vpop.f32.mrf.mxu0
  %v567 = vadd.f32 0.0, %v566
  %v568 = vpop.f32.mrf.mxu0
  %v569 = vpop.f32.mrf.mxu0
  %v570 = vadd.f32 0.0, %v569
  %v571 = vpop.f32.mrf.mxu0
  %572 = vmatprep.mubr.bf16.mxu0 0
  %573 = vmatmul.mubr.bf16.gmra.mxu0 %v251
  %v574 = vpop.f32.mrf.mxu0
  %v575 = vadd.f32 0.0, %v574
  %v576 = vpop.f32.mrf.mxu0
  %v577 = vpop.f32.mrf.mxu0
  %v578 = vadd.f32 0.0, %v577
  %v579 = vpop.f32.mrf.mxu0
  %580 = vmatprep.mubr.bf16.mxu0 0
  %581 = vmatmul.mubr.bf16.gmra.mxu0 %v252
  %v582 = vpop.f32.mrf.mxu0
  %v583 = vadd.f32 0.0, %v582
  %v584 = vpop.f32.mrf.mxu0
  %v585 = vpop.f32.mrf.mxu0
  %v586 = vadd.f32 0.0, %v585
  %v587 = vpop.f32.mrf.mxu0
  %588 = vmatprep.mubr.bf16.mxu0 0
  %589 = vmatmul.mubr.bf16.gmra.mxu0 %v253
  %v590 = vpop.f32.mrf.mxu0
  %v591 = vadd.f32 0.0, %v590
  %v592 = vpop.f32.mrf.mxu0
  %v593 = vpop.f32.mrf.mxu0
  %v594 = vadd.f32 0.0, %v593
  %v595 = vpop.f32.mrf.mxu0
  %596 = vmatprep.mubr.bf16.mxu0 0
  %597 = vmatmul.mubr.bf16.gmra.mxu0 %v254
  %v598 = vpop.f32.mrf.mxu0
  %v599 = vadd.f32 0.0, %v598
  %v600 = vpop.f32.mrf.mxu0
  %v601 = vpop.f32.mrf.mxu0
  %v602 = vadd.f32 0.0, %v601
  %v603 = vpop.f32.mrf.mxu0
  %604 = vmatprep.mubr.bf16.mxu0 0
  %605 = vmatmul.mubr.bf16.gmra.mxu0 %v255
  %v606 = vpop.f32.mrf.mxu0
  %v607 = vadd.f32 0.0, %v606
  %v608 = vpop.f32.mrf.mxu0
  %v609 = vpop.f32.mrf.mxu0
  %v610 = vadd.f32 0.0, %v609
  %v611 = vpop.f32.mrf.mxu0
  %612 = vmatprep.mubr.bf16.mxu0 0
  %613 = vmatmul.mubr.bf16.gmra.mxu0 %v256
  %v614 = vpop.f32.mrf.mxu0
  %v615 = vadd.f32 0.0, %v614
  %v616 = vpop.f32.mrf.mxu0
  %v617 = vpop.f32.mrf.mxu0
  %v618 = vadd.f32 0.0, %v617
  %v619 = vpop.f32.mrf.mxu0
  %620 = vmatprep.mubr.bf16.mxu0 0
  %621 = vmatmul.mubr.bf16.gmra.mxu0 %v257
  %v622 = vpop.f32.mrf.mxu0
  %v623 = vadd.f32 0.0, %v622
  %v624 = vpop.f32.mrf.mxu0
  %v625 = vpop.f32.mrf.mxu0
  %v626 = vadd.f32 0.0, %v625
  %v627 = vpop.f32.mrf.mxu0
  %628 = vmatprep.mubr.bf16.mxu0 0
  %629 = vmatmul.mubr.bf16.gmra.mxu0 %v258
  %v630 = vpop.f32.mrf.mxu0
  %v631 = vadd.f32 0.0, %v630
  %v632 = vpop.f32.mrf.mxu0
  %v633 = vpop.f32.mrf.mxu0
  %v634 = vadd.f32 0.0, %v633
  %v635 = vpop.f32.mrf.mxu0
  %636 = vdwg.mxu0
  %v637 = vadd.f32 %v375, %v378
  %v638 = vadd.f32 %v637, %v383
  %v639 = vadd.f32 %v638, %v386
  %v640 = vadd.f32 %v639, %v391
  %v641 = vadd.f32 %v640, %v394
  %v642 = vadd.f32 %v641, %v399
  %v643 = vadd.f32 %v642, %v402
  %v644 = vadd.f32 %v643, %v407
  %v645 = vadd.f32 %v644, %v410
  %v646 = vadd.f32 %v645, %v415
  %v647 = vadd.f32 %v646, %v418
  %v648 = vadd.f32 %v647, %v423
  %v649 = vadd.f32 %v648, %v426
  %v650 = vadd.f32 %v649, %v431
  %v651 = vadd.f32 %v650, %v434
  %v652 = vadd.f32 %v651, %v439
  %v653 = vadd.f32 %v652, %v442
  %v654 = vadd.f32 %v653, %v447
  %v655 = vadd.f32 %v654, %v450
  %v656 = vadd.f32 %v655, %v455
  %v657 = vadd.f32 %v656, %v458
  %v658 = vadd.f32 %v657, %v463
  %v659 = vadd.f32 %v658, %v466
  %v660 = vadd.f32 %v659, %v471
  %v661 = vadd.f32 %v660, %v474
  %v662 = vadd.f32 %v661, %v479
  %v663 = vadd.f32 %v662, %v482
  %v664 = vadd.f32 %v663, %v487
  %v665 = vadd.f32 %v664, %v490
  %v666 = vadd.f32 %v665, %v495
  %v667 = vadd.f32 %v666, %v498
  %v668 = vadd.f32 %v667, %v503
  %v669 = vadd.f32 %v668, %v506
  %v670 = vadd.f32 %v669, %v511
  %v671 = vadd.f32 %v670, %v514
  %v672 = vadd.f32 %v671, %v519
  %v673 = vadd.f32 %v672, %v522
  %v674 = vadd.f32 %v673, %v527
  %v675 = vadd.f32 %v674, %v530
  %v676 = vadd.f32 %v675, %v535
  %v677 = vadd.f32 %v676, %v538
  %v678 = vadd.f32 %v677, %v543
  %v679 = vadd.f32 %v678, %v546
  %v680 = vadd.f32 %v679, %v551
  %v681 = vadd.f32 %v680, %v554
  %v682 = vadd.f32 %v681, %v559
  %v683 = vadd.f32 %v682, %v562
  %v684 = vadd.f32 %v683, %v567
  %v685 = vadd.f32 %v684, %v570
  %v686 = vadd.f32 %v685, %v575
  %v687 = vadd.f32 %v686, %v578
  %v688 = vadd.f32 %v687, %v583
  %v689 = vadd.f32 %v688, %v586
  %v690 = vadd.f32 %v689, %v591
  %v691 = vadd.f32 %v690, %v594
  %v692 = vadd.f32 %v691, %v599
  %v693 = vadd.f32 %v692, %v602
  %v694 = vadd.f32 %v693, %v607
  %v695 = vadd.f32 %v694, %v610
  %v696 = vadd.f32 %v695, %v615
  %v697 = vadd.f32 %v696, %v618
  %v698 = vadd.f32 %v697, %v623
  %v699 = vadd.f32 %v698, %v626
  %v700 = vadd.f32 %v699, %v631
  %v701 = vadd.f32 %v700, %v634
  %v702 = vrot.slane %v701, 4
  %v703 = vadd.f32 %v701, %v702
  %v704 = vrot.slane %v703, 2
  %v705 = vadd.f32 %v703, %v704
  %v706 = vrot.slane %v705, 1
  %v707 = vadd.f32 %v705, %v706
  %v708 = vmul.f32 %v375, %v375
  %v709 = vmul.f32 %v378, %v378
  %v710 = vmul.f32 %v383, %v383
  %v711 = vmul.f32 %v386, %v386
  %v712 = vmul.f32 %v391, %v391
  %v713 = vmul.f32 %v394, %v394
  %v714 = vmul.f32 %v399, %v399
  %v715 = vmul.f32 %v402, %v402
  %v716 = vmul.f32 %v407, %v407
  %v717 = vmul.f32 %v410, %v410
  %v718 = vmul.f32 %v415, %v415
  %v719 = vmul.f32 %v418, %v418
  %v720 = vmul.f32 %v423, %v423
  %v721 = vmul.f32 %v426, %v426
  %v722 = vmul.f32 %v431, %v431
  %v723 = vmul.f32 %v434, %v434
  %v724 = vmul.f32 %v439, %v439
  %v725 = vmul.f32 %v442, %v442
  %v726 = vmul.f32 %v447, %v447
  %v727 = vmul.f32 %v450, %v450
  %v728 = vmul.f32 %v455, %v455
  %v729 = vmul.f32 %v458, %v458
  %v730 = vmul.f32 %v463, %v463
  %v731 = vmul.f32 %v466, %v466
  %v732 = vmul.f32 %v471, %v471
  %v733 = vmul.f32 %v474, %v474
  %v734 = vmul.f32 %v479, %v479
  %v735 = vmul.f32 %v482, %v482
  %v736 = vmul.f32 %v487, %v487
  %v737 = vmul.f32 %v490, %v490
  %v738 = vmul.f32 %v495, %v495
  %v739 = vmul.f32 %v498, %v498
  %v740 = vmul.f32 %v503, %v503
  %v741 = vmul.f32 %v506, %v506
  %v742 = vmul.f32 %v511, %v511
  %v743 = vmul.f32 %v514, %v514
  %v744 = vmul.f32 %v519, %v519
  %v745 = vmul.f32 %v522, %v522
  %v746 = vmul.f32 %v527, %v527
  %v747 = vmul.f32 %v530, %v530
  %v748 = vmul.f32 %v535, %v535
  %v749 = vmul.f32 %v538, %v538
  %v750 = vmul.f32 %v543, %v543
  %v751 = vmul.f32 %v546, %v546
  %v752 = vmul.f32 %v551, %v551
  %v753 = vmul.f32 %v554, %v554
  %v754 = vmul.f32 %v559, %v559
  %v755 = vmul.f32 %v562, %v562
  %v756 = vmul.f32 %v567, %v567
  %v757 = vmul.f32 %v570, %v570
  %v758 = vmul.f32 %v575, %v575
  %v759 = vmul.f32 %v578, %v578
  %v760 = vmul.f32 %v583, %v583
  %v761 = vmul.f32 %v586, %v586
  %v762 = vmul.f32 %v591, %v591
  %v763 = vmul.f32 %v594, %v594
  %v764 = vmul.f32 %v599, %v599
  %v765 = vmul.f32 %v602, %v602
  %v766 = vmul.f32 %v607, %v607
  %v767 = vmul.f32 %v610, %v610
  %v768 = vmul.f32 %v615, %v615
  %v769 = vmul.f32 %v618, %v618
  %v770 = vmul.f32 %v623, %v623
  %v771 = vmul.f32 %v626, %v626
  %v772 = vmul.f32 %v631, %v631
  %v773 = vmul.f32 %v634, %v634
  %v774 = vadd.f32 %v708, %v709
  %v775 = vadd.f32 %v774, %v710
  %v776 = vadd.f32 %v775, %v711
  %v777 = vadd.f32 %v776, %v712
  %v778 = vadd.f32 %v777, %v713
  %v779 = vadd.f32 %v778, %v714
  %v780 = vadd.f32 %v779, %v715
  %v781 = vadd.f32 %v780, %v716
  %v782 = vadd.f32 %v781, %v717
  %v783 = vadd.f32 %v782, %v718
  %v784 = vadd.f32 %v783, %v719
  %v785 = vadd.f32 %v784, %v720
  %v786 = vadd.f32 %v785, %v721
  %v787 = vadd.f32 %v786, %v722
  %v788 = vadd.f32 %v787, %v723
  %v789 = vadd.f32 %v788, %v724
  %v790 = vadd.f32 %v789, %v725
  %v791 = vadd.f32 %v790, %v726
  %v792 = vadd.f32 %v791, %v727
  %v793 = vadd.f32 %v792, %v728
  %v794 = vadd.f32 %v793, %v729
  %v795 = vadd.f32 %v794, %v730
  %v796 = vadd.f32 %v795, %v731
  %v797 = vadd.f32 %v796, %v732
  %v798 = vadd.f32 %v797, %v733
  %v799 = vadd.f32 %v798, %v734
  %v800 = vadd.f32 %v799, %v735
  %v801 = vadd.f32 %v800, %v736
  %v802 = vadd.f32 %v801, %v737
  %v803 = vadd.f32 %v802, %v738
  %v804 = vadd.f32 %v803, %v739
  %v805 = vadd.f32 %v804, %v740
  %v806 = vadd.f32 %v805, %v741
  %v807 = vadd.f32 %v806, %v742
  %v808 = vadd.f32 %v807, %v743
  %v809 = vadd.f32 %v808, %v744
  %v810 = vadd.f32 %v809, %v745
  %v811 = vadd.f32 %v810, %v746
  %v812 = vadd.f32 %v811, %v747
  %v813 = vadd.f32 %v812, %v748
  %v814 = vadd.f32 %v813, %v749
  %v815 = vadd.f32 %v814, %v750
  %v816 = vadd.f32 %v815, %v751
  %v817 = vadd.f32 %v816, %v752
  %v818 = vadd.f32 %v817, %v753
  %v819 = vadd.f32 %v818, %v754
  %v820 = vadd.f32 %v819, %v755
  %v821 = vadd.f32 %v820, %v756
  %v822 = vadd.f32 %v821, %v757
  %v823 = vadd.f32 %v822, %v758
  %v824 = vadd.f32 %v823, %v759
  %v825 = vadd.f32 %v824, %v760
  %v826 = vadd.f32 %v825, %v761
  %v827 = vadd.f32 %v826, %v762
  %v828 = vadd.f32 %v827, %v763
  %v829 = vadd.f32 %v828, %v764
  %v830 = vadd.f32 %v829, %v765
  %v831 = vadd.f32 %v830, %v766
  %v832 = vadd.f32 %v831, %v767
  %v833 = vadd.f32 %v832, %v768
  %v834 = vadd.f32 %v833, %v769
  %v835 = vadd.f32 %v834, %v770
  %v836 = vadd.f32 %v835, %v771
  %v837 = vadd.f32 %v836, %v772
  %v838 = vadd.f32 %v837, %v773
  %v839 = vrot.slane %v838, 4
  %v840 = vadd.f32 %v838, %v839
  %v841 = vrot.slane %v840, 2
  %v842 = vadd.f32 %v840, %v841
  %v843 = vrot.slane %v842, 1
  %v844 = vadd.f32 %v842, %v843
  %vm845 = vcmask 1040384
  %v846 = vsel %vm845, %v707, %v844
  %847 = vst [vmem:[%s2] sm:$0x3] %v846
  // Predicated region
  $region10: #{shortcut_block.3} parent=0 // pred_check
    _
  $region11: #{shortcut_block.3} parent=0 // pred_check_branch
    %849 = sbr.rel (0) target = $region13
  $region12: #{shortcut_block.3} parent=0 // pred_region
    _
  $region13: #{shortcut_block.3} parent=0 // pred_fallthru
    _
  // Predicated region
  $region14: #{shortcut_block.3} parent=0 // pred_check
    _
  $region15: #{shortcut_block.3} parent=0 // pred_check_branch
    %851 = sbr.rel (0) target = $region17
  $region16: #{shortcut_block.3} parent=0 // pred_region
    _
  $region17: #{shortcut_block.3} parent=0 // pred_fallthru
    _

// kernel: shortcut_block.5
$region0: #{shortcut_block.5}
  #allocation0 [shape = 'u32[]', space=smem, size = 0x4, offset = 0x4, fixed_abs, tag = 'smem constant byte address 0x4 - core index']
  #allocation1 [shape = 'u32[144,128]{1,0:T(1,128)}', space=vmem, size = 0x12000, scoped, tag = 'internal scratch']
  %s0 = inlined_call_operand.vmem [shape: bf16[528,128], index: 0, kind: input, shape index: {}]
  %s1 = inlined_call_operand.vmem [shape: bf16[528,128], index: 1, kind: input, shape index: {}]
  %s2 = inlined_call_operand.vmem [shape: f32[1,128], index: 2, kind: input, shape index: {}]
  %s3 = inlined_call_operand.vmem [shape: f32[1,128], index: 3, kind: input, shape index: {}]
  %s4 = inlined_call_operand.vmem [shape: f32[528,128], index: 4, kind: output, shape index: {}]
  %s5 = sld [smem:[#allocation0]]
  $region26: #{shortcut_block.5} parent=0
    _
  %s7 = ssub.s32 1, %s5
  %s8 = scalar_select 0, %s7, %s5
  // Predicated region
  $region2: #{shortcut_block.5} parent=0 // pred_check
    _
  $region3: #{shortcut_block.5} parent=0 // pred_check_branch
    %10 = sbr.rel (0) target = $region5
  $region4: #{shortcut_block.5} parent=0 // pred_region
    _
  $region5: #{shortcut_block.5} parent=0 // pred_fallthru
    _
  // Predicated region
  $region6: #{shortcut_block.5} parent=0 // pred_check
    _
  $region7: #{shortcut_block.5} parent=0 // pred_check_branch
    %12 = sbr.rel (0) target = $region9
  $region8: #{shortcut_block.5} parent=0 // pred_region
    _
  $region9: #{shortcut_block.5} parent=0 // pred_fallthru
    _
  // Predicated region
  $region10: #{shortcut_block.5} parent=0 // pred_check
    _
  $region11: #{shortcut_block.5} parent=0 // pred_check_branch
    %14 = sbr.rel (0) target = $region13
  $region12: #{shortcut_block.5} parent=0 // pred_region
    _
  $region13: #{shortcut_block.5} parent=0 // pred_fallthru
    _
  // Predicated region
  $region14: #{shortcut_block.5} parent=0 // pred_check
    _
  $region15: #{shortcut_block.5} parent=0 // pred_check_branch
    %16 = sbr.rel (0) target = $region17
  $region16: #{shortcut_block.5} parent=0 // pred_region
    _
  $region17: #{shortcut_block.5} parent=0 // pred_fallthru
    _
  %v17 = vld [vmem:[%s0] sm:$0xf]
  %v18 = vld [vmem:[%s0 + $0x4] sm:$0xf]
  %v19 = vld [vmem:[%s0 + $0x8] sm:$0xf]
  %v20 = vld [vmem:[%s0 + $0xc] sm:$0xf]
  %v21 = vld [vmem:[%s0 + $0x10] sm:$0xf]
  %v22 = vld [vmem:[%s0 + $0x14] sm:$0xf]
  %v23 = vld [vmem:[%s0 + $0x18] sm:$0xf]
  %v24 = vld [vmem:[%s0 + $0x1c] sm:$0xf]
  %v25 = vld [vmem:[%s0 + $0x20] sm:$0xf]
  %v26 = vld [vmem:[%s0 + $0x24] sm:$0xf]
  %v27 = vld [vmem:[%s0 + $0x28] sm:$0xf]
  %v28 = vld [vmem:[%s0 + $0x2c] sm:$0xf]
  %v29 = vld [vmem:[%s0 + $0x30] sm:$0xf]
  %v30 = vld [vmem:[%s0 + $0x34] sm:$0xf]
  %v31 = vld [vmem:[%s0 + $0x38] sm:$0xf]
  %v32 = vld [vmem:[%s0 + $0x3c] sm:$0xf]
  %v33 = vld [vmem:[%s0 + $0x40] sm:$0xf]
  %v34 = vld [vmem:[%s0 + $0x44] sm:$0xf]
  %v35 = vld [vmem:[%s0 + $0x48] sm:$0xf]
  %v36 = vld [vmem:[%s0 + $0x4c] sm:$0xf]
  %v37 = vld [vmem:[%s0 + $0x50] sm:$0xf]
  %v38 = vld [vmem:[%s0 + $0x54] sm:$0xf]
  %v39 = vld [vmem:[%s0 + $0x58] sm:$0xf]
  %v40 = vld [vmem:[%s0 + $0x5c] sm:$0xf]
  %v41 = vld [vmem:[%s0 + $0x60] sm:$0xf]
  %v42 = vld [vmem:[%s0 + $0x64] sm:$0xf]
  %v43 = vld [vmem:[%s0 + $0x68] sm:$0xf]
  %v44 = vld [vmem:[%s0 + $0x6c] sm:$0xf]
  %v45 = vld [vmem:[%s0 + $0x70] sm:$0xf]
  %v46 = vld [vmem:[%s0 + $0x74] sm:$0xf]
  %v47 = vld [vmem:[%s0 + $0x78] sm:$0xf]
  %v48 = vld [vmem:[%s0 + $0x7c] sm:$0xf]
  %v49 = vld [vmem:[%s0 + $0x80] sm:$0xf]
  %v50 = vld [vmem:[%s0 + $0x84] sm:$0xf]
  %v51 = vld [vmem:[%s0 + $0x88] sm:$0xf]
  %v52 = vld [vmem:[%s0 + $0x8c] sm:$0xf]
  %v53 = vld [vmem:[%s0 + $0x90] sm:$0xf]
  %v54 = vld [vmem:[%s0 + $0x94] sm:$0xf]
  %v55 = vld [vmem:[%s0 + $0x98] sm:$0xf]
  %v56 = vld [vmem:[%s0 + $0x9c] sm:$0xf]
  %v57 = vld [vmem:[%s0 + $0xa0] sm:$0xf]
  %v58 = vld [vmem:[%s0 + $0xa4] sm:$0xf]
  %v59 = vld [vmem:[%s0 + $0xa8] sm:$0xf]
  %v60 = vld [vmem:[%s0 + $0xac] sm:$0xf]
  %v61 = vld [vmem:[%s0 + $0xb0] sm:$0xf]
  %v62 = vld [vmem:[%s0 + $0xb4] sm:$0xf]
  %v63 = vld [vmem:[%s0 + $0xb8] sm:$0xf]
  %v64 = vld [vmem:[%s0 + $0xbc] sm:$0xf]
  %v65 = vld [vmem:[%s0 + $0xc0] sm:$0xf]
  %v66 = vld [vmem:[%s0 + $0xc4] sm:$0xf]
  %v67 = vld [vmem:[%s0 + $0xc8] sm:$0xf]
  %v68 = vld [vmem:[%s0 + $0xcc] sm:$0xf]
  %v69 = vld [vmem:[%s0 + $0xd0] sm:$0xf]
  %v70 = vld [vmem:[%s0 + $0xd4] sm:$0xf]
  %v71 = vld [vmem:[%s0 + $0xd8] sm:$0xf]
  %v72 = vld [vmem:[%s0 + $0xdc] sm:$0xf]
  %v73 = vld [vmem:[%s0 + $0xe0] sm:$0xf]
  %v74 = vld [vmem:[%s0 + $0xe4] sm:$0xf]
  %v75 = vld [vmem:[%s0 + $0xe8] sm:$0xf]
  %v76 = vld [vmem:[%s0 + $0xec] sm:$0xf]
  %v77 = vld [vmem:[%s0 + $0xf0] sm:$0xf]
  %v78 = vld [vmem:[%s0 + $0xf4] sm:$0xf]
  %v79 = vld [vmem:[%s0 + $0xf8] sm:$0xf]
  %v80 = vld [vmem:[%s0 + $0xfc] sm:$0xf]
  %v81 = vld [vmem:[%s0 + $0x100] sm:$0xf]
  %v82 = vld [vmem:[%s0 + $0x104] sm:$0xf]
  %v83 = vunpack.c.l.bf16 %v17
  %v84 = vunpack.c.l.bf16 %v18
  %v85 = vunpack.c.l.bf16 %v19
  %v86 = vunpack.c.l.bf16 %v20
  %v87 = vunpack.c.l.bf16 %v21
  %v88 = vunpack.c.l.bf16 %v22
  %v89 = vunpack.c.l.bf16 %v23
  %v90 = vunpack.c.l.bf16 %v24
  %v91 = vunpack.c.l.bf16 %v25
  %v92 = vunpack.c.l.bf16 %v26
  %v93 = vunpack.c.l.bf16 %v27
  %v94 = vunpack.c.l.bf16 %v28
  %v95 = vunpack.c.l.bf16 %v29
  %v96 = vunpack.c.l.bf16 %v30
  %v97 = vunpack.c.l.bf16 %v31
  %v98 = vunpack.c.l.bf16 %v32
  %v99 = vunpack.c.l.bf16 %v33
  %v100 = vunpack.c.l.bf16 %v34
  %v101 = vunpack.c.l.bf16 %v35
  %v102 = vunpack.c.l.bf16 %v36
  %v103 = vunpack.c.l.bf16 %v37
  %v104 = vunpack.c.l.bf16 %v38
  %v105 = vunpack.c.l.bf16 %v39
  %v106 = vunpack.c.l.bf16 %v40
  %v107 = vunpack.c.l.bf16 %v41
  %v108 = vunpack.c.l.bf16 %v42
  %v109 = vunpack.c.l.bf16 %v43
  %v110 = vunpack.c.l.bf16 %v44
  %v111 = vunpack.c.l.bf16 %v45
  %v112 = vunpack.c.l.bf16 %v46
  %v113 = vunpack.c.l.bf16 %v47
  %v114 = vunpack.c.l.bf16 %v48
  %v115 = vunpack.c.l.bf16 %v49
  %v116 = vunpack.c.l.bf16 %v50
  %v117 = vunpack.c.l.bf16 %v51
  %v118 = vunpack.c.l.bf16 %v52
  %v119 = vunpack.c.l.bf16 %v53
  %v120 = vunpack.c.l.bf16 %v54
  %v121 = vunpack.c.l.bf16 %v55
  %v122 = vunpack.c.l.bf16 %v56
  %v123 = vunpack.c.l.bf16 %v57
  %v124 = vunpack.c.l.bf16 %v58
  %v125 = vunpack.c.l.bf16 %v59
  %v126 = vunpack.c.l.bf16 %v60
  %v127 = vunpack.c.l.bf16 %v61
  %v128 = vunpack.c.l.bf16 %v62
  %v129 = vunpack.c.l.bf16 %v63
  %v130 = vunpack.c.l.bf16 %v64
  %v131 = vunpack.c.l.bf16 %v65
  %v132 = vunpack.c.l.bf16 %v66
  %v133 = vunpack.c.l.bf16 %v67
  %v134 = vunpack.c.l.bf16 %v68
  %v135 = vunpack.c.l.bf16 %v69
  %v136 = vunpack.c.l.bf16 %v70
  %v137 = vunpack.c.l.bf16 %v71
  %v138 = vunpack.c.l.bf16 %v72
  %v139 = vunpack.c.l.bf16 %v73
  %v140 = vunpack.c.l.bf16 %v74
  %v141 = vunpack.c.l.bf16 %v75
  %v142 = vunpack.c.l.bf16 %v76
  %v143 = vunpack.c.l.bf16 %v77
  %v144 = vunpack.c.l.bf16 %v78
  %v145 = vunpack.c.l.bf16 %v79
  %v146 = vunpack.c.l.bf16 %v80
  %v147 = vunpack.c.l.bf16 %v81
  %v148 = vunpack.c.l.bf16 %v82
  %v149 = vld [vmem:[%s2] sm:$0x1]
  %v151 = vlaneseq
  %v152 = vshrl.u32 %v151, 7
  %v153 = vsub.s32 0, %v152
  %v154 = vrot.slane %v149, %v153
  %v156 = vmul.f32 %v83, %v154
  %v157 = vmul.f32 %v84, %v154
  %v158 = vmul.f32 %v85, %v154
  %v159 = vmul.f32 %v86, %v154
  %v160 = vmul.f32 %v87, %v154
  %v161 = vmul.f32 %v88, %v154
  %v162 = vmul.f32 %v89, %v154
  %v163 = vmul.f32 %v90, %v154
  %v164 = vmul.f32 %v91, %v154
  %v165 = vmul.f32 %v92, %v154
  %v166 = vmul.f32 %v93, %v154
  %v167 = vmul.f32 %v94, %v154
  %v168 = vmul.f32 %v95, %v154
  %v169 = vmul.f32 %v96, %v154
  %v170 = vmul.f32 %v97, %v154
  %v171 = vmul.f32 %v98, %v154
  %v172 = vmul.f32 %v99, %v154
  %v173 = vmul.f32 %v100, %v154
  %v174 = vmul.f32 %v101, %v154
  %v175 = vmul.f32 %v102, %v154
  %v176 = vmul.f32 %v103, %v154
  %v177 = vmul.f32 %v104, %v154
  %v178 = vmul.f32 %v105, %v154
  %v179 = vmul.f32 %v106, %v154
  %v180 = vmul.f32 %v107, %v154
  %v181 = vmul.f32 %v108, %v154
  %v182 = vmul.f32 %v109, %v154
  %v183 = vmul.f32 %v110, %v154
  %v184 = vmul.f32 %v111, %v154
  %v185 = vmul.f32 %v112, %v154
  %v186 = vmul.f32 %v113, %v154
  %v187 = vmul.f32 %v114, %v154
  %v188 = vmul.f32 %v115, %v154
  %v189 = vmul.f32 %v116, %v154
  %v190 = vmul.f32 %v117, %v154
  %v191 = vmul.f32 %v118, %v154
  %v192 = vmul.f32 %v119, %v154
  %v193 = vmul.f32 %v120, %v154
  %v194 = vmul.f32 %v121, %v154
  %v195 = vmul.f32 %v122, %v154
  %v196 = vmul.f32 %v123, %v154
  %v197 = vmul.f32 %v124, %v154
  %v198 = vmul.f32 %v125, %v154
  %v199 = vmul.f32 %v126, %v154
  %v200 = vmul.f32 %v127, %v154
  %v201 = vmul.f32 %v128, %v154
  %v202 = vmul.f32 %v129, %v154
  %v203 = vmul.f32 %v130, %v154
  %v204 = vmul.f32 %v131, %v154
  %v205 = vmul.f32 %v132, %v154
  %v206 = vmul.f32 %v133, %v154
  %v207 = vmul.f32 %v134, %v154
  %v208 = vmul.f32 %v135, %v154
  %v209 = vmul.f32 %v136, %v154
  %v210 = vmul.f32 %v137, %v154
  %v211 = vmul.f32 %v138, %v154
  %v212 = vmul.f32 %v139, %v154
  %v213 = vmul.f32 %v140, %v154
  %v214 = vmul.f32 %v141, %v154
  %v215 = vmul.f32 %v142, %v154
  %v216 = vmul.f32 %v143, %v154
  %v217 = vmul.f32 %v144, %v154
  %v218 = vmul.f32 %v145, %v154
  %v219 = vmul.f32 %v146, %v154
  %v220 = vmul.f32 %v147, %v154
  %v221 = vmul.f32 %v148, %v154
  %v222 = vld [vmem:[%s3] sm:$0x1]
  %v224 = vlaneseq
  %v225 = vshrl.u32 %v224, 7
  %v226 = vsub.s32 0, %v225
  %v227 = vrot.slane %v222, %v226
  %v229 = vadd.f32 %v156, %v227
  %v230 = vadd.f32 %v157, %v227
  %v231 = vadd.f32 %v158, %v227
  %v232 = vadd.f32 %v159, %v227
  %v233 = vadd.f32 %v160, %v227
  %v234 = vadd.f32 %v161, %v227
  %v235 = vadd.f32 %v162, %v227
  %v236 = vadd.f32 %v163, %v227
  %v237 = vadd.f32 %v164, %v227
  %v238 = vadd.f32 %v165, %v227
  %v239 = vadd.f32 %v166, %v227
  %v240 = vadd.f32 %v167, %v227
  %v241 = vadd.f32 %v168, %v227
  %v242 = vadd.f32 %v169, %v227
  %v243 = vadd.f32 %v170, %v227
  %v244 = vadd.f32 %v171, %v227
  %v245 = vadd.f32 %v172, %v227
  %v246 = vadd.f32 %v173, %v227
  %v247 = vadd.f32 %v174, %v227
  %v248 = vadd.f32 %v175, %v227
  %v249 = vadd.f32 %v176, %v227
  %v250 = vadd.f32 %v177, %v227
  %v251 = vadd.f32 %v178, %v227
  %v252 = vadd.f32 %v179, %v227
  %v253 = vadd.f32 %v180, %v227
  %v254 = vadd.f32 %v181, %v227
  %v255 = vadd.f32 %v182, %v227
  %v256 = vadd.f32 %v183, %v227
  %v257 = vadd.f32 %v184, %v227
  %v258 = vadd.f32 %v185, %v227
  %v259 = vadd.f32 %v186, %v227
  %v260 = vadd.f32 %v187, %v227
  %v261 = vadd.f32 %v188, %v227
  %v262 = vadd.f32 %v189, %v227
  %v263 = vadd.f32 %v190, %v227
  %v264 = vadd.f32 %v191, %v227
  %v265 = vadd.f32 %v192, %v227
  %v266 = vadd.f32 %v193, %v227
  %v267 = vadd.f32 %v194, %v227
  %v268 = vadd.f32 %v195, %v227
  %v269 = vadd.f32 %v196, %v227
  %v270 = vadd.f32 %v197, %v227
  %v271 = vadd.f32 %v198, %v227
  %v272 = vadd.f32 %v199, %v227
  %v273 = vadd.f32 %v200, %v227
  %v274 = vadd.f32 %v201, %v227
  %v275 = vadd.f32 %v202, %v227
  %v276 = vadd.f32 %v203, %v227
  %v277 = vadd.f32 %v204, %v227
  %v278 = vadd.f32 %v205, %v227
  %v279 = vadd.f32 %v206, %v227
  %v280 = vadd.f32 %v207, %v227
  %v281 = vadd.f32 %v208, %v227
  %v282 = vadd.f32 %v209, %v227
  %v283 = vadd.f32 %v210, %v227
  %v284 = vadd.f32 %v211, %v227
  %v285 = vadd.f32 %v212, %v227
  %v286 = vadd.f32 %v213, %v227
  %v287 = vadd.f32 %v214, %v227
  %v288 = vadd.f32 %v215, %v227
  %v289 = vadd.f32 %v216, %v227
  %v290 = vadd.f32 %v217, %v227
  %v291 = vadd.f32 %v218, %v227
  %v292 = vadd.f32 %v219, %v227
  %v293 = vadd.f32 %v220, %v227
  %v294 = vadd.f32 %v221, %v227
  %vm295 = vcmp.gt.f32.partialorder %v229, 0.0
  %vm296 = vcmp.gt.f32.partialorder %v230, 0.0
  %vm297 = vcmp.gt.f32.partialorder %v231, 0.0
  %vm298 = vcmp.gt.f32.partialorder %v232, 0.0
  %vm299 = vcmp.gt.f32.partialorder %v233, 0.0
  %vm300 = vcmp.gt.f32.partialorder %v234, 0.0
  %vm301 = vcmp.gt.f32.partialorder %v235, 0.0
  %vm302 = vcmp.gt.f32.partialorder %v236, 0.0
  %vm303 = vcmp.gt.f32.partialorder %v237, 0.0
  %vm304 = vcmp.gt.f32.partialorder %v238, 0.0
  %vm305 = vcmp.gt.f32.partialorder %v239, 0.0
  %vm306 = vcmp.gt.f32.partialorder %v240, 0.0
  %vm307 = vcmp.gt.f32.partialorder %v241, 0.0
  %vm308 = vcmp.gt.f32.partialorder %v242, 0.0
  %vm309 = vcmp.gt.f32.partialorder %v243, 0.0
  %vm310 = vcmp.gt.f32.partialorder %v244, 0.0
  %vm311 = vcmp.gt.f32.partialorder %v245, 0.0
  %vm312 = vcmp.gt.f32.partialorder %v246, 0.0
  %vm313 = vcmp.gt.f32.partialorder %v247, 0.0
  %vm314 = vcmp.gt.f32.partialorder %v248, 0.0
  %vm315 = vcmp.gt.f32.partialorder %v249, 0.0
  %vm316 = vcmp.gt.f32.partialorder %v250, 0.0
  %vm317 = vcmp.gt.f32.partialorder %v251, 0.0
  %vm318 = vcmp.gt.f32.partialorder %v252, 0.0
  %vm319 = vcmp.gt.f32.partialorder %v253, 0.0
  %vm320 = vcmp.gt.f32.partialorder %v254, 0.0
  %vm321 = vcmp.gt.f32.partialorder %v255, 0.0
  %vm322 = vcmp.gt.f32.partialorder %v256, 0.0
  %vm323 = vcmp.gt.f32.partialorder %v257, 0.0
  %vm324 = vcmp.gt.f32.partialorder %v258, 0.0
  %vm325 = vcmp.gt.f32.partialorder %v259, 0.0
  %vm326 = vcmp.gt.f32.partialorder %v260, 0.0
  %vm327 = vcmp.gt.f32.partialorder %v261, 0.0
  %vm328 = vcmp.gt.f32.partialorder %v262, 0.0
  %vm329 = vcmp.gt.f32.partialorder %v263, 0.0
  %vm330 = vcmp.gt.f32.partialorder %v264, 0.0
  %vm331 = vcmp.gt.f32.partialorder %v265, 0.0
  %vm332 = vcmp.gt.f32.partialorder %v266, 0.0
  %vm333 = vcmp.gt.f32.partialorder %v267, 0.0
  %vm334 = vcmp.gt.f32.partialorder %v268, 0.0
  %vm335 = vcmp.gt.f32.partialorder %v269, 0.0
  %vm336 = vcmp.gt.f32.partialorder %v270, 0.0
  %vm337 = vcmp.gt.f32.partialorder %v271, 0.0
  %vm338 = vcmp.gt.f32.partialorder %v272, 0.0
  %vm339 = vcmp.gt.f32.partialorder %v273, 0.0
  %vm340 = vcmp.gt.f32.partialorder %v274, 0.0
  %vm341 = vcmp.gt.f32.partialorder %v275, 0.0
  %vm342 = vcmp.gt.f32.partialorder %v276, 0.0
  %vm343 = vcmp.gt.f32.partialorder %v277, 0.0
  %vm344 = vcmp.gt.f32.partialorder %v278, 0.0
  %vm345 = vcmp.gt.f32.partialorder %v279, 0.0
  %vm346 = vcmp.gt.f32.partialorder %v280, 0.0
  %vm347 = vcmp.gt.f32.partialorder %v281, 0.0
  %vm348 = vcmp.gt.f32.partialorder %v282, 0.0
  %vm349 = vcmp.gt.f32.partialorder %v283, 0.0
  %vm350 = vcmp.gt.f32.partialorder %v284, 0.0
  %vm351 = vcmp.gt.f32.partialorder %v285, 0.0
  %vm352 = vcmp.gt.f32.partialorder %v286, 0.0
  %vm353 = vcmp.gt.f32.partialorder %v287, 0.0
  %vm354 = vcmp.gt.f32.partialorder %v288, 0.0
  %vm355 = vcmp.gt.f32.partialorder %v289, 0.0
  %vm356 = vcmp.gt.f32.partialorder %v290, 0.0
  %vm357 = vcmp.gt.f32.partialorder %v291, 0.0
  %vm358 = vcmp.gt.f32.partialorder %v292, 0.0
  %vm359 = vcmp.gt.f32.partialorder %v293, 0.0
  %vm360 = vcmp.gt.f32.partialorder %v294, 0.0
  %v361 = vmul.f32 %v229, 0.1
  %v362 = vmul.f32 %v230, 0.1
  %v363 = vmul.f32 %v231, 0.1
  %v364 = vmul.f32 %v232, 0.1
  %v365 = vmul.f32 %v233, 0.1
  %v366 = vmul.f32 %v234, 0.1
  %v367 = vmul.f32 %v235, 0.1
  %v368 = vmul.f32 %v236, 0.1
  %v369 = vmul.f32 %v237, 0.1
  %v370 = vmul.f32 %v238, 0.1
  %v371 = vmul.f32 %v239, 0.1
  %v372 = vmul.f32 %v240, 0.1
  %v373 = vmul.f32 %v241, 0.1
  %v374 = vmul.f32 %v242, 0.1
  %v375 = vmul.f32 %v243, 0.1
  %v376 = vmul.f32 %v244, 0.1
  %v377 = vmul.f32 %v245, 0.1
  %v378 = vmul.f32 %v246, 0.1
  %v379 = vmul.f32 %v247, 0.1
  %v380 = vmul.f32 %v248, 0.1
  %v381 = vmul.f32 %v249, 0.1
  %v382 = vmul.f32 %v250, 0.1
  %v383 = vmul.f32 %v251, 0.1
  %v384 = vmul.f32 %v252, 0.1
  %v385 = vmul.f32 %v253, 0.1
  %v386 = vmul.f32 %v254, 0.1
  %v387 = vmul.f32 %v255, 0.1
  %v388 = vmul.f32 %v256, 0.1
  %v389 = vmul.f32 %v257, 0.1
  %v390 = vmul.f32 %v258, 0.1
  %v391 = vmul.f32 %v259, 0.1
  %v392 = vmul.f32 %v260, 0.1
  %v393 = vmul.f32 %v261, 0.1
  %v394 = vmul.f32 %v262, 0.1
  %v395 = vmul.f32 %v263, 0.1
  %v396 = vmul.f32 %v264, 0.1
  %v397 = vmul.f32 %v265, 0.1
  %v398 = vmul.f32 %v266, 0.1
  %v399 = vmul.f32 %v267, 0.1
  %v400 = vmul.f32 %v268, 0.1
  %v401 = vmul.f32 %v269, 0.1
  %v402 = vmul.f32 %v270, 0.1
  %v403 = vmul.f32 %v271, 0.1
  %v404 = vmul.f32 %v272, 0.1
  %v405 = vmul.f32 %v273, 0.1
  %v406 = vmul.f32 %v274, 0.1
  %v407 = vmul.f32 %v275, 0.1
  %v408 = vmul.f32 %v276, 0.1
  %v409 = vmul.f32 %v277, 0.1
  %v410 = vmul.f32 %v278, 0.1
  %v411 = vmul.f32 %v279, 0.1
  %v412 = vmul.f32 %v280, 0.1
  %v413 = vmul.f32 %v281, 0.1
  %v414 = vmul.f32 %v282, 0.1
  %v415 = vmul.f32 %v283, 0.1
  %v416 = vmul.f32 %v284, 0.1
  %v417 = vmul.f32 %v285, 0.1
  %v418 = vmul.f32 %v286, 0.1
  %v419 = vmul.f32 %v287, 0.1
  %v420 = vmul.f32 %v288, 0.1
  %v421 = vmul.f32 %v289, 0.1
  %v422 = vmul.f32 %v290, 0.1
  %v423 = vmul.f32 %v291, 0.1
  %v424 = vmul.f32 %v292, 0.1
  %v425 = vmul.f32 %v293, 0.1
  %v426 = vmul.f32 %v294, 0.1
  %v427 = vsel %vm295, %v229, %v361
  %v428 = vsel %vm296, %v230, %v362
  %v429 = vsel %vm297, %v231, %v363
  %v430 = vsel %vm298, %v232, %v364
  %v431 = vsel %vm299, %v233, %v365
  %v432 = vsel %vm300, %v234, %v366
  %v433 = vsel %vm301, %v235, %v367
  %v434 = vsel %vm302, %v236, %v368
  %v435 = vsel %vm303, %v237, %v369
  %v436 = vsel %vm304, %v238, %v370
  %v437 = vsel %vm305, %v239, %v371
  %v438 = vsel %vm306, %v240, %v372
  %v439 = vsel %vm307, %v241, %v373
  %v440 = vsel %vm308, %v242, %v374
  %v441 = vsel %vm309, %v243, %v375
  %v442 = vsel %vm310, %v244, %v376
  %v443 = vsel %vm311, %v245, %v377
  %v444 = vsel %vm312, %v246, %v378
  %v445 = vsel %vm313, %v247, %v379
  %v446 = vsel %vm314, %v248, %v380
  %v447 = vsel %vm315, %v249, %v381
  %v448 = vsel %vm316, %v250, %v382
  %v449 = vsel %vm317, %v251, %v383
  %v450 = vsel %vm318, %v252, %v384
  %v451 = vsel %vm319, %v253, %v385
  %v452 = vsel %vm320, %v254, %v386
  %v453 = vsel %vm321, %v255, %v387
  %v454 = vsel %vm322, %v256, %v388
  %v455 = vsel %vm323, %v257, %v389
  %v456 = vsel %vm324, %v258, %v390
  %v457 = vsel %vm325, %v259, %v391
  %v458 = vsel %vm326, %v260, %v392
  %v459 = vsel %vm327, %v261, %v393
  %v460 = vsel %vm328, %v262, %v394
  %v461 = vsel %vm329, %v263, %v395
  %v462 = vsel %vm330, %v264, %v396
  %v463 = vsel %vm331, %v265, %v397
  %v464 = vsel %vm332, %v266, %v398
  %v465 = vsel %vm333, %v267, %v399
  %v466 = vsel %vm334, %v268, %v400
  %v467 = vsel %vm335, %v269, %v401
  %v468 = vsel %vm336, %v270, %v402
  %v469 = vsel %vm337, %v271, %v403
  %v470 = vsel %vm338, %v272, %v404
  %v471 = vsel %vm339, %v273, %v405
  %v472 = vsel %vm340, %v274, %v406
  %v473 = vsel %vm341, %v275, %v407
  %v474 = vsel %vm342, %v276, %v408
  %v475 = vsel %vm343, %v277, %v409
  %v476 = vsel %vm344, %v278, %v410
  %v477 = vsel %vm345, %v279, %v411
  %v478 = vsel %vm346, %v280, %v412
  %v479 = vsel %vm347, %v281, %v413
  %v480 = vsel %vm348, %v282, %v414
  %v481 = vsel %vm349, %v283, %v415
  %v482 = vsel %vm350, %v284, %v416
  %v483 = vsel %vm351, %v285, %v417
  %v484 = vsel %vm352, %v286, %v418
  %v485 = vsel %vm353, %v287, %v419
  %v486 = vsel %vm354, %v288, %v420
  %v487 = vsel %vm355, %v289, %v421
  %v488 = vsel %vm356, %v290, %v422
  %v489 = vsel %vm357, %v291, %v423
  %v490 = vsel %vm358, %v292, %v424
  %v491 = vsel %vm359, %v293, %v425
  %v492 = vsel %vm360, %v294, %v426
  %v493 = vld [vmem:[%s1] sm:$0xf]
  %v494 = vld [vmem:[%s1 + $0x4] sm:$0xf]
  %v495 = vld [vmem:[%s1 + $0x8] sm:$0xf]
  %v496 = vld [vmem:[%s1 + $0xc] sm:$0xf]
  %v497 = vld [vmem:[%s1 + $0x10] sm:$0xf]
  %v498 = vld [vmem:[%s1 + $0x14] sm:$0xf]
  %v499 = vld [vmem:[%s1 + $0x18] sm:$0xf]
  %v500 = vld [vmem:[%s1 + $0x1c] sm:$0xf]
  %v501 = vld [vmem:[%s1 + $0x20] sm:$0xf]
  %v502 = vld [vmem:[%s1 + $0x24] sm:$0xf]
  %v503 = vld [vmem:[%s1 + $0x28] sm:$0xf]
  %v504 = vld [vmem:[%s1 + $0x2c] sm:$0xf]
  %v505 = vld [vmem:[%s1 + $0x30] sm:$0xf]
  %v506 = vld [vmem:[%s1 + $0x34] sm:$0xf]
  %v507 = vld [vmem:[%s1 + $0x38] sm:$0xf]
  %v508 = vld [vmem:[%s1 + $0x3c] sm:$0xf]
  %v509 = vld [vmem:[%s1 + $0x40] sm:$0xf]
  %v510 = vld [vmem:[%s1 + $0x44] sm:$0xf]
  %v511 = vld [vmem:[%s1 + $0x48] sm:$0xf]
  %v512 = vld [vmem:[%s1 + $0x4c] sm:$0xf]
  %v513 = vld [vmem:[%s1 + $0x50] sm:$0xf]
  %v514 = vld [vmem:[%s1 + $0x54] sm:$0xf]
  %v515 = vld [vmem:[%s1 + $0x58] sm:$0xf]
  %v516 = vld [vmem:[%s1 + $0x5c] sm:$0xf]
  %v517 = vld [vmem:[%s1 + $0x60] sm:$0xf]
  %v518 = vld [vmem:[%s1 + $0x64] sm:$0xf]
  %v519 = vld [vmem:[%s1 + $0x68] sm:$0xf]
  %v520 = vld [vmem:[%s1 + $0x6c] sm:$0xf]
  %v521 = vld [vmem:[%s1 + $0x70] sm:$0xf]
  %v522 = vld [vmem:[%s1 + $0x74] sm:$0xf]
  %v523 = vld [vmem:[%s1 + $0x78] sm:$0xf]
  %v524 = vld [vmem:[%s1 + $0x7c] sm:$0xf]
  %v525 = vld [vmem:[%s1 + $0x80] sm:$0xf]
  %v526 = vld [vmem:[%s1 + $0x84] sm:$0xf]
  %v527 = vld [vmem:[%s1 + $0x88] sm:$0xf]
  %v528 = vld [vmem:[%s1 + $0x8c] sm:$0xf]
  %v529 = vld [vmem:[%s1 + $0x90] sm:$0xf]
  %v530 = vld [vmem:[%s1 + $0x94] sm:$0xf]
  %v531 = vld [vmem:[%s1 + $0x98] sm:$0xf]
  %v532 = vld [vmem:[%s1 + $0x9c] sm:$0xf]
  %v533 = vld [vmem:[%s1 + $0xa0] sm:$0xf]
  %v534 = vld [vmem:[%s1 + $0xa4] sm:$0xf]
  %v535 = vld [vmem:[%s1 + $0xa8] sm:$0xf]
  %v536 = vld [vmem:[%s1 + $0xac] sm:$0xf]
  %v537 = vld [vmem:[%s1 + $0xb0] sm:$0xf]
  %v538 = vld [vmem:[%s1 + $0xb4] sm:$0xf]
  %v539 = vld [vmem:[%s1 + $0xb8] sm:$0xf]
  %v540 = vld [vmem:[%s1 + $0xbc] sm:$0xf]
  %v541 = vld [vmem:[%s1 + $0xc0] sm:$0xf]
  %v542 = vld [vmem:[%s1 + $0xc4] sm:$0xf]
  %v543 = vld [vmem:[%s1 + $0xc8] sm:$0xf]
  %v544 = vld [vmem:[%s1 + $0xcc] sm:$0xf]
  %v545 = vld [vmem:[%s1 + $0xd0] sm:$0xf]
  %v546 = vld [vmem:[%s1 + $0xd4] sm:$0xf]
  %v547 = vld [vmem:[%s1 + $0xd8] sm:$0xf]
  %v548 = vld [vmem:[%s1 + $0xdc] sm:$0xf]
  %v549 = vld [vmem:[%s1 + $0xe0] sm:$0xf]
  %v550 = vld [vmem:[%s1 + $0xe4] sm:$0xf]
  %v551 = vld [vmem:[%s1 + $0xe8] sm:$0xf]
  %v552 = vld [vmem:[%s1 + $0xec] sm:$0xf]
  %v553 = vld [vmem:[%s1 + $0xf0] sm:$0xf]
  %v554 = vld [vmem:[%s1 + $0xf4] sm:$0xf]
  %v555 = vld [vmem:[%s1 + $0xf8] sm:$0xf]
  %v556 = vld [vmem:[%s1 + $0xfc] sm:$0xf]
  %v557 = vld [vmem:[%s1 + $0x100] sm:$0xf]
  %v558 = vld [vmem:[%s1 + $0x104] sm:$0xf]
  %v559 = vunpack.c.l.bf16 %v493
  %v560 = vunpack.c.l.bf16 %v494
  %v561 = vunpack.c.l.bf16 %v495
  %v562 = vunpack.c.l.bf16 %v496
  %v563 = vunpack.c.l.bf16 %v497
  %v564 = vunpack.c.l.bf16 %v498
  %v565 = vunpack.c.l.bf16 %v499
  %v566 = vunpack.c.l.bf16 %v500
  %v567 = vunpack.c.l.bf16 %v501
  %v568 = vunpack.c.l.bf16 %v502
  %v569 = vunpack.c.l.bf16 %v503
  %v570 = vunpack.c.l.bf16 %v504
  %v571 = vunpack.c.l.bf16 %v505
  %v572 = vunpack.c.l.bf16 %v506
  %v573 = vunpack.c.l.bf16 %v507
  %v574 = vunpack.c.l.bf16 %v508
  %v575 = vunpack.c.l.bf16 %v509
  %v576 = vunpack.c.l.bf16 %v510
  %v577 = vunpack.c.l.bf16 %v511
  %v578 = vunpack.c.l.bf16 %v512
  %v579 = vunpack.c.l.bf16 %v513
  %v580 = vunpack.c.l.bf16 %v514
  %v581 = vunpack.c.l.bf16 %v515
  %v582 = vunpack.c.l.bf16 %v516
  %v583 = vunpack.c.l.bf16 %v517
  %v584 = vunpack.c.l.bf16 %v518
  %v585 = vunpack.c.l.bf16 %v519
  %v586 = vunpack.c.l.bf16 %v520
  %v587 = vunpack.c.l.bf16 %v521
  %v588 = vunpack.c.l.bf16 %v522
  %v589 = vunpack.c.l.bf16 %v523
  %v590 = vunpack.c.l.bf16 %v524
  %v591 = vunpack.c.l.bf16 %v525
  %v592 = vunpack.c.l.bf16 %v526
  %v593 = vunpack.c.l.bf16 %v527
  %v594 = vunpack.c.l.bf16 %v528
  %v595 = vunpack.c.l.bf16 %v529
  %v596 = vunpack.c.l.bf16 %v530
  %v597 = vunpack.c.l.bf16 %v531
  %v598 = vunpack.c.l.bf16 %v532
  %v599 = vunpack.c.l.bf16 %v533
  %v600 = vunpack.c.l.bf16 %v534
  %v601 = vunpack.c.l.bf16 %v535
  %v602 = vunpack.c.l.bf16 %v536
  %v603 = vunpack.c.l.bf16 %v537
  %v604 = vunpack.c.l.bf16 %v538
  %v605 = vunpack.c.l.bf16 %v539
  %v606 = vunpack.c.l.bf16 %v540
  %v607 = vunpack.c.l.bf16 %v541
  %v608 = vunpack.c.l.bf16 %v542
  %v609 = vunpack.c.l.bf16 %v543
  %v610 = vunpack.c.l.bf16 %v544
  %v611 = vunpack.c.l.bf16 %v545
  %v612 = vunpack.c.l.bf16 %v546
  %v613 = vunpack.c.l.bf16 %v547
  %v614 = vunpack.c.l.bf16 %v548
  %v615 = vunpack.c.l.bf16 %v549
  %v616 = vunpack.c.l.bf16 %v550
  %v617 = vunpack.c.l.bf16 %v551
  %v618 = vunpack.c.l.bf16 %v552
  %v619 = vunpack.c.l.bf16 %v553
  %v620 = vunpack.c.l.bf16 %v554
  %v621 = vunpack.c.l.bf16 %v555
  %v622 = vunpack.c.l.bf16 %v556
  %v623 = vunpack.c.l.bf16 %v557
  %v624 = vunpack.c.l.bf16 %v558
  %v625 = vadd.f32 %v427, %v559
  %v626 = vadd.f32 %v428, %v560
  %v627 = vadd.f32 %v429, %v561
  %v628 = vadd.f32 %v430, %v562
  %v629 = vadd.f32 %v431, %v563
  %v630 = vadd.f32 %v432, %v564
  %v631 = vadd.f32 %v433, %v565
  %v632 = vadd.f32 %v434, %v566
  %v633 = vadd.f32 %v435, %v567
  %v634 = vadd.f32 %v436, %v568
  %v635 = vadd.f32 %v437, %v569
  %v636 = vadd.f32 %v438, %v570
  %v637 = vadd.f32 %v439, %v571
  %v638 = vadd.f32 %v440, %v572
  %v639 = vadd.f32 %v441, %v573
  %v640 = vadd.f32 %v442, %v574
  %v641 = vadd.f32 %v443, %v575
  %v642 = vadd.f32 %v444, %v576
  %v643 = vadd.f32 %v445, %v577
  %v644 = vadd.f32 %v446, %v578
  %v645 = vadd.f32 %v447, %v579
  %v646 = vadd.f32 %v448, %v580
  %v647 = vadd.f32 %v449, %v581
  %v648 = vadd.f32 %v450, %v582
  %v649 = vadd.f32 %v451, %v583
  %v650 = vadd.f32 %v452, %v584
  %v651 = vadd.f32 %v453, %v585
  %v652 = vadd.f32 %v454, %v586
  %v653 = vadd.f32 %v455, %v587
  %v654 = vadd.f32 %v456, %v588
  %v655 = vadd.f32 %v457, %v589
  %v656 = vadd.f32 %v458, %v590
  %v657 = vadd.f32 %v459, %v591
  %v658 = vadd.f32 %v460, %v592
  %v659 = vadd.f32 %v461, %v593
  %v660 = vadd.f32 %v462, %v594
  %v661 = vadd.f32 %v463, %v595
  %v662 = vadd.f32 %v464, %v596
  %v663 = vadd.f32 %v465, %v597
  %v664 = vadd.f32 %v466, %v598
  %v665 = vadd.f32 %v467, %v599
  %v666 = vadd.f32 %v468, %v600
  %v667 = vadd.f32 %v469, %v601
  %v668 = vadd.f32 %v470, %v602
  %v669 = vadd.f32 %v471, %v603
  %v670 = vadd.f32 %v472, %v604
  %v671 = vadd.f32 %v473, %v605
  %v672 = vadd.f32 %v474, %v606
  %v673 = vadd.f32 %v475, %v607
  %v674 = vadd.f32 %v476, %v608
  %v675 = vadd.f32 %v477, %v609
  %v676 = vadd.f32 %v478, %v610
  %v677 = vadd.f32 %v479, %v611
  %v678 = vadd.f32 %v480, %v612
  %v679 = vadd.f32 %v481, %v613
  %v680 = vadd.f32 %v482, %v614
  %v681 = vadd.f32 %v483, %v615
  %v682 = vadd.f32 %v484, %v616
  %v683 = vadd.f32 %v485, %v617
  %v684 = vadd.f32 %v486, %v618
  %v685 = vadd.f32 %v487, %v619
  %v686 = vadd.f32 %v488, %v620
  %v687 = vadd.f32 %v489, %v621
  %v688 = vadd.f32 %v490, %v622
  %v689 = vadd.f32 %v491, %v623
  %v690 = vadd.f32 %v492, %v624
  %691 = vst [vmem:[%s4] sm:$0xff] %v625
  %692 = vst [vmem:[%s4 + $0x8] sm:$0xff] %v626
  %693 = vst [vmem:[%s4 + $0x10] sm:$0xff] %v627
  %694 = vst [vmem:[%s4 + $0x18] sm:$0xff] %v628
  %695 = vst [vmem:[%s4 + $0x20] sm:$0xff] %v629
  %696 = vst [vmem:[%s4 + $0x28] sm:$0xff] %v630
  %697 = vst [vmem:[%s4 + $0x30] sm:$0xff] %v631
  %698 = vst [vmem:[%s4 + $0x38] sm:$0xff] %v632
  %699 = vst [vmem:[%s4 + $0x40] sm:$0xff] %v633
  %700 = vst [vmem:[%s4 + $0x48] sm:$0xff] %v634
  %701 = vst [vmem:[%s4 + $0x50] sm:$0xff] %v635
  %702 = vst [vmem:[%s4 + $0x58] sm:$0xff] %v636
  %703 = vst [vmem:[%s4 + $0x60] sm:$0xff] %v637
  %704 = vst [vmem:[%s4 + $0x68] sm:$0xff] %v638
  %705 = vst [vmem:[%s4 + $0x70] sm:$0xff] %v639
  %706 = vst [vmem:[%s4 + $0x78] sm:$0xff] %v640
  %707 = vst [vmem:[%s4 + $0x80] sm:$0xff] %v641
  %708 = vst [vmem:[%s4 + $0x88] sm:$0xff] %v642
  %709 = vst [vmem:[%s4 + $0x90] sm:$0xff] %v643
  %710 = vst [vmem:[%s4 + $0x98] sm:$0xff] %v644
  %711 = vst [vmem:[%s4 + $0xa0] sm:$0xff] %v645
  %712 = vst [vmem:[%s4 + $0xa8] sm:$0xff] %v646
  %713 = vst [vmem:[%s4 + $0xb0] sm:$0xff] %v647
  %714 = vst [vmem:[%s4 + $0xb8] sm:$0xff] %v648
  %715 = vst [vmem:[%s4 + $0xc0] sm:$0xff] %v649
  %716 = vst [vmem:[%s4 + $0xc8] sm:$0xff] %v650
  %717 = vst [vmem:[%s4 + $0xd0] sm:$0xff] %v651
  %718 = vst [vmem:[%s4 + $0xd8] sm:$0xff] %v652
  %719 = vst [vmem:[%s4 + $0xe0] sm:$0xff] %v653
  %720 = vst [vmem:[%s4 + $0xe8] sm:$0xff] %v654
  %721 = vst [vmem:[%s4 + $0xf0] sm:$0xff] %v655
  %722 = vst [vmem:[%s4 + $0xf8] sm:$0xff] %v656
  %723 = vst [vmem:[%s4 + $0x100] sm:$0xff] %v657
  %724 = vst [vmem:[%s4 + $0x108] sm:$0xff] %v658
  %725 = vst [vmem:[%s4 + $0x110] sm:$0xff] %v659
  %726 = vst [vmem:[%s4 + $0x118] sm:$0xff] %v660
  %727 = vst [vmem:[%s4 + $0x120] sm:$0xff] %v661
  %728 = vst [vmem:[%s4 + $0x128] sm:$0xff] %v662
  %729 = vst [vmem:[%s4 + $0x130] sm:$0xff] %v663
  %730 = vst [vmem:[%s4 + $0x138] sm:$0xff] %v664
  %731 = vst [vmem:[%s4 + $0x140] sm:$0xff] %v665
  %732 = vst [vmem:[%s4 + $0x148] sm:$0xff] %v666
  %733 = vst [vmem:[%s4 + $0x150] sm:$0xff] %v667
  %734 = vst [vmem:[%s4 + $0x158] sm:$0xff] %v668
  %735 = vst [vmem:[%s4 + $0x160] sm:$0xff] %v669
  %736 = vst [vmem:[%s4 + $0x168] sm:$0xff] %v670
  %737 = vst [vmem:[%s4 + $0x170] sm:$0xff] %v671
  %738 = vst [vmem:[%s4 + $0x178] sm:$0xff] %v672
  %739 = vst [vmem:[%s4 + $0x180] sm:$0xff] %v673
  %740 = vst [vmem:[%s4 + $0x188] sm:$0xff] %v674
  %741 = vst [vmem:[%s4 + $0x190] sm:$0xff] %v675
  %742 = vst [vmem:[%s4 + $0x198] sm:$0xff] %v676
  %743 = vst [vmem:[%s4 + $0x1a0] sm:$0xff] %v677
  %744 = vst [vmem:[%s4 + $0x1a8] sm:$0xff] %v678
  %745 = vst [vmem:[%s4 + $0x1b0] sm:$0xff] %v679
  %746 = vst [vmem:[%s4 + $0x1b8] sm:$0xff] %v680
  %747 = vst [vmem:[%s4 + $0x1c0] sm:$0xff] %v681
  %748 = vst [vmem:[%s4 + $0x1c8] sm:$0xff] %v682
  %749 = vst [vmem:[%s4 + $0x1d0] sm:$0xff] %v683
  %750 = vst [vmem:[%s4 + $0x1d8] sm:$0xff] %v684
  %751 = vst [vmem:[%s4 + $0x1e0] sm:$0xff] %v685
  %752 = vst [vmem:[%s4 + $0x1e8] sm:$0xff] %v686
  %753 = vst [vmem:[%s4 + $0x1f0] sm:$0xff] %v687
  %754 = vst [vmem:[%s4 + $0x1f8] sm:$0xff] %v688
  %755 = vst [vmem:[%s4 + $0x200] sm:$0xff] %v689
  %756 = vst [vmem:[%s4 + $0x208] sm:$0xff] %v690
  // Predicated region
  $region18: #{shortcut_block.5} parent=0 // pred_check
    _
  $region19: #{shortcut_block.5} parent=0 // pred_check_branch
    %758 = sbr.rel (0) target = $region21
  $region20: #{shortcut_block.5} parent=0 // pred_region
    _
  $region21: #{shortcut_block.5} parent=0 // pred_fallthru
    _
  // Predicated region
  $region22: #{shortcut_block.5} parent=0 // pred_check
    _
  $region23: #{shortcut_block.5} parent=0 // pred_check_branch
    %760 = sbr.rel (0) target = $region25
  $region24: #{shortcut_block.5} parent=0 // pred_region
    _
  $region25: #{shortcut_block.5} parent=0 // pred_fallthru
    _

// kernel: shortcut_block.4
$region0: #{shortcut_block.4}
  #allocation0 [shape = 'u32[]', space=smem, size = 0x4, offset = 0x4, fixed_abs, tag = 'smem constant byte address 0x4 - core index']
  #allocation1 [shape = 'u32[144,128]{1,0:T(1,128)}', space=vmem, size = 0x12000, scoped, tag = 'internal scratch']
  %s0 = inlined_call_operand.vmem [shape: bf16[528,128], index: 0, kind: input, shape index: {}, may-alias: {0,1,2}]
  %s1 = inlined_call_operand.vmem [shape: bf16[528,128], index: 1, kind: input, shape index: {}, may-alias: {0,1,2}]
  %s2 = inlined_call_operand.vmem [shape: bf16[528,128], index: 2, kind: input, shape index: {}, may-alias: {0,1,2}]
  %s3 = inlined_call_operand.vmem [shape: bf16[128,128], index: 3, kind: input, shape index: {}]
  %s4 = inlined_call_operand.vmem [shape: f32[1,128], index: 4, kind: input, shape index: {}]
  %s5 = inlined_call_operand.vmem [shape: f32[1,128], index: 5, kind: input, shape index: {}]
  %s6 = inlined_call_operand.vmem [shape: bf16[1152,128], index: 6, kind: input, shape index: {}]
  %s7 = inlined_call_operand.vmem [shape: bf16[528,128], index: 7, kind: output, shape index: {0}]
  %s8 = inlined_call_operand.vmem [shape: f32[1,2,128], index: 8, kind: output, shape index: {1}]
  %9 = xla_tuple %s7, %s8
  %s10 = sld [smem:[#allocation0]]
  $region46: #{shortcut_block.4} parent=0
    _
  %s12 = ssub.s32 1, %s10
  %s13 = scalar_select 0, %s12, %s10
  // Predicated region
  $region2: #{shortcut_block.4} parent=0 // pred_check
    _
  $region3: #{shortcut_block.4} parent=0 // pred_check_branch
    %15 = sbr.rel (0) target = $region5
  $region4: #{shortcut_block.4} parent=0 // pred_region
    %s16 = smul.u32 0, 22
    %s17 = ssub.s32 %s16, 1
    %p18 = scmp.gt.s32.totalorder %s17, 0
    %s19 = scalar_select %p18, %s17, 0
    %s20 = smul.u32 3, %s19
    %p21 = scmp.lt.s32.totalorder %s20, 65
    %s22 = scalar_select %p21, %s20, 65
    %s23 = smul.addr %s22, 4
    %s24 = scalar_lea.vmem %s0, %s23
    %s25 = smul.u32 0, 22
    %s26 = ssub.s32 %s25, 1
    %p27 = scmp.gt.s32.totalorder %s26, 0
    %s28 = scalar_select %p27, %s26, 0
    %s29 = smul.u32 3, %s28
  $region5: #{shortcut_block.4} parent=0 // pred_fallthru
    _
  // Predicated region
  $region6: #{shortcut_block.4} parent=0 // pred_check
    _
  $region7: #{shortcut_block.4} parent=0 // pred_check_branch
    %31 = sbr.rel (0) target = $region9
  $region8: #{shortcut_block.4} parent=0 // pred_region
    _
  $region9: #{shortcut_block.4} parent=0 // pred_fallthru
    _
  // Predicated region
  $region10: #{shortcut_block.4} parent=0 // pred_check
    _
  $region11: #{shortcut_block.4} parent=0 // pred_check_branch
    %33 = sbr.rel (0) target = $region13
  $region12: #{shortcut_block.4} parent=0 // pred_region
    %s34 = sadd.s32 0, 1
    %s35 = smul.u32 %s34, 22
    %p36 = scmp.lt.s32.totalorder %s35, 21
    %s37 = scalar_select %p36, %s35, 21
    %s38 = smul.u32 3, %s37
    %p39 = scmp.lt.s32.totalorder %s38, 65
    %s40 = scalar_select %p39, %s38, 65
    %s41 = smul.addr %s40, 4
    %s42 = scalar_lea.vmem %s2, %s41
    %s43 = sadd.s32 0, 1
    %s44 = smul.u32 %s43, 22
    %p45 = scmp.lt.s32.totalorder %s44, 21
    %s46 = scalar_select %p45, %s44, 21
    %s47 = smul.u32 3, %s46
  $region13: #{shortcut_block.4} parent=0 // pred_fallthru
    _
  // Predicated region
  $region14: #{shortcut_block.4} parent=0 // pred_check
    _
  $region15: #{shortcut_block.4} parent=0 // pred_check_branch
    %49 = sbr.rel (0) target = $region17
  $region16: #{shortcut_block.4} parent=0 // pred_region
    _
  $region17: #{shortcut_block.4} parent=0 // pred_fallthru
    _
  // Predicated region
  $region18: #{shortcut_block.4} parent=0 // pred_check
    _
  $region19: #{shortcut_block.4} parent=0 // pred_check_branch
    %51 = sbr.rel (0) target = $region21
  $region20: #{shortcut_block.4} parent=0 // pred_region
    _
  $region21: #{shortcut_block.4} parent=0 // pred_fallthru
    _
  // Predicated region
  $region22: #{shortcut_block.4} parent=0 // pred_check
    _
  $region23: #{shortcut_block.4} parent=0 // pred_check_branch
    %53 = sbr.rel (0) target = $region25
  $region24: #{shortcut_block.4} parent=0 // pred_region
    _
  $region25: #{shortcut_block.4} parent=0 // pred_fallthru
    _
  // Predicated region
  $region26: #{shortcut_block.4} parent=0 // pred_check
    _
  $region27: #{shortcut_block.4} parent=0 // pred_check_branch
    %55 = sbr.rel (0) target = $region29
  $region28: #{shortcut_block.4} parent=0 // pred_region
    _
  $region29: #{shortcut_block.4} parent=0 // pred_fallthru
    _
  %s56 = smul.u32 0, 22
  %s57 = ssub.s32 %s56, 1
  %p58 = scmp.gt.s32.totalorder %s57, 0
  %s59 = scalar_select %p58, %s57, 0
  %s60 = smul.u32 3, %s59
  %p61 = scmp.lt.s32.totalorder %s60, 65
  %s62 = scalar_select %p61, %s60, 65
  %s63 = smul.addr %s62, 4
  %s64 = scalar_lea.vmem %s0, %s63
  %s65 = sadd.s32 0, 1
  %s66 = smul.u32 %s65, 22
  %p67 = scmp.lt.s32.totalorder %s66, 21
  %s68 = scalar_select %p67, %s66, 21
  %s69 = smul.u32 3, %s68
  %p70 = scmp.lt.s32.totalorder %s69, 65
  %s71 = scalar_select %p70, %s69, 65
  %s72 = smul.addr %s71, 4
  %s73 = scalar_lea.vmem %s2, %s72
  %s74 = smul.u32 0, 22
  %s75 = ssub.s32 %s74, 1
  %p76 = scmp.gt.s32.totalorder %s75, 0
  %s77 = scalar_select %p76, %s75, 0
  %s78 = smul.u32 3, %s77
  %p79 = scmp.lt.s32.totalorder %s78, 65
  %s80 = scalar_select %p79, %s78, 65
  %s81 = smul.addr %s80, 4
  %s82 = scalar_lea.vmem %s0, %s81
  %s83 = smul.u32 0, 22
  %s84 = ssub.s32 %s83, 1
  %p85 = scmp.gt.s32.totalorder %s84, 0
  %s86 = scalar_select %p85, %s84, 0
  %s87 = smul.u32 3, %s86
  %s88 = sadd.s32 0, 1
  %s89 = smul.u32 %s88, 22
  %p90 = scmp.lt.s32.totalorder %s89, 21
  %s91 = scalar_select %p90, %s89, 21
  %s92 = smul.u32 3, %s91
  %p93 = scmp.lt.s32.totalorder %s92, 65
  %s94 = scalar_select %p93, %s92, 65
  %s95 = smul.addr %s94, 4
  %s96 = scalar_lea.vmem %s2, %s95
  %s97 = sadd.s32 0, 1
  %s98 = smul.u32 %s97, 22
  %p99 = scmp.lt.s32.totalorder %s98, 21
  %s100 = scalar_select %p99, %s98, 21
  %s101 = smul.u32 3, %s100
  %v103 = vld [vmem:[%s82] sm:$0xf]
  %v104 = vld [vmem:[%s82 + $0x4] sm:$0xf]
  %v105 = vld [vmem:[%s82 + $0x8] sm:$0xf]
  %v106 = vld [vmem:[%s1] sm:$0xf]
  %v107 = vld [vmem:[%s1 + $0x4] sm:$0xf]
  %v108 = vld [vmem:[%s1 + $0x8] sm:$0xf]
  %v109 = vld [vmem:[%s1 + $0xc] sm:$0xf]
  %v110 = vld [vmem:[%s1 + $0x10] sm:$0xf]
  %v111 = vld [vmem:[%s1 + $0x14] sm:$0xf]
  %v112 = vld [vmem:[%s1 + $0x18] sm:$0xf]
  %v113 = vld [vmem:[%s1 + $0x1c] sm:$0xf]
  %v114 = vld [vmem:[%s1 + $0x20] sm:$0xf]
  %v115 = vld [vmem:[%s1 + $0x24] sm:$0xf]
  %v116 = vld [vmem:[%s1 + $0x28] sm:$0xf]
  %v117 = vld [vmem:[%s1 + $0x2c] sm:$0xf]
  %v118 = vld [vmem:[%s1 + $0x30] sm:$0xf]
  %v119 = vld [vmem:[%s1 + $0x34] sm:$0xf]
  %v120 = vld [vmem:[%s1 + $0x38] sm:$0xf]
  %v121 = vld [vmem:[%s1 + $0x3c] sm:$0xf]
  %v122 = vld [vmem:[%s1 + $0x40] sm:$0xf]
  %v123 = vld [vmem:[%s1 + $0x44] sm:$0xf]
  %v124 = vld [vmem:[%s1 + $0x48] sm:$0xf]
  %v125 = vld [vmem:[%s1 + $0x4c] sm:$0xf]
  %v126 = vld [vmem:[%s1 + $0x50] sm:$0xf]
  %v127 = vld [vmem:[%s1 + $0x54] sm:$0xf]
  %v128 = vld [vmem:[%s1 + $0x58] sm:$0xf]
  %v129 = vld [vmem:[%s1 + $0x5c] sm:$0xf]
  %v130 = vld [vmem:[%s1 + $0x60] sm:$0xf]
  %v131 = vld [vmem:[%s1 + $0x64] sm:$0xf]
  %v132 = vld [vmem:[%s1 + $0x68] sm:$0xf]
  %v133 = vld [vmem:[%s1 + $0x6c] sm:$0xf]
  %v134 = vld [vmem:[%s1 + $0x70] sm:$0xf]
  %v135 = vld [vmem:[%s1 + $0x74] sm:$0xf]
  %v136 = vld [vmem:[%s1 + $0x78] sm:$0xf]
  %v137 = vld [vmem:[%s1 + $0x7c] sm:$0xf]
  %v138 = vld [vmem:[%s1 + $0x80] sm:$0xf]
  %v139 = vld [vmem:[%s1 + $0x84] sm:$0xf]
  %v140 = vld [vmem:[%s1 + $0x88] sm:$0xf]
  %v141 = vld [vmem:[%s1 + $0x8c] sm:$0xf]
  %v142 = vld [vmem:[%s1 + $0x90] sm:$0xf]
  %v143 = vld [vmem:[%s1 + $0x94] sm:$0xf]
  %v144 = vld [vmem:[%s1 + $0x98] sm:$0xf]
  %v145 = vld [vmem:[%s1 + $0x9c] sm:$0xf]
  %v146 = vld [vmem:[%s1 + $0xa0] sm:$0xf]
  %v147 = vld [vmem:[%s1 + $0xa4] sm:$0xf]
  %v148 = vld [vmem:[%s1 + $0xa8] sm:$0xf]
  %v149 = vld [vmem:[%s1 + $0xac] sm:$0xf]
  %v150 = vld [vmem:[%s1 + $0xb0] sm:$0xf]
  %v151 = vld [vmem:[%s1 + $0xb4] sm:$0xf]
  %v152 = vld [vmem:[%s1 + $0xb8] sm:$0xf]
  %v153 = vld [vmem:[%s1 + $0xbc] sm:$0xf]
  %v154 = vld [vmem:[%s1 + $0xc0] sm:$0xf]
  %v155 = vld [vmem:[%s1 + $0xc4] sm:$0xf]
  %v156 = vld [vmem:[%s1 + $0xc8] sm:$0xf]
  %v157 = vld [vmem:[%s1 + $0xcc] sm:$0xf]
  %v158 = vld [vmem:[%s1 + $0xd0] sm:$0xf]
  %v159 = vld [vmem:[%s1 + $0xd4] sm:$0xf]
  %v160 = vld [vmem:[%s1 + $0xd8] sm:$0xf]
  %v161 = vld [vmem:[%s1 + $0xdc] sm:$0xf]
  %v162 = vld [vmem:[%s1 + $0xe0] sm:$0xf]
  %v163 = vld [vmem:[%s1 + $0xe4] sm:$0xf]
  %v164 = vld [vmem:[%s1 + $0xe8] sm:$0xf]
  %v165 = vld [vmem:[%s1 + $0xec] sm:$0xf]
  %v166 = vld [vmem:[%s1 + $0xf0] sm:$0xf]
  %v167 = vld [vmem:[%s1 + $0xf4] sm:$0xf]
  %v168 = vld [vmem:[%s1 + $0xf8] sm:$0xf]
  %v169 = vld [vmem:[%s1 + $0xfc] sm:$0xf]
  %v170 = vld [vmem:[%s1 + $0x100] sm:$0xf]
  %v171 = vld [vmem:[%s1 + $0x104] sm:$0xf]
  %v172 = vld [vmem:[%s96] sm:$0xf]
  %v173 = vld [vmem:[%s96 + $0x4] sm:$0xf]
  %v174 = vld [vmem:[%s96 + $0x8] sm:$0xf]
  %v178 = vunpack.c.l.b16 %v103
  %v179 = vunpack.c.l.b16 %v104
  %v180 = vunpack.c.l.b16 %v105
  %v181 = vpack.c.b16 %v179, %v178
  %v182 = vpack.c.b16 %v180, %v180
  %v250 = vunpack.c.l.b16 %v106
  %v251 = vunpack.c.l.b16 %v107
  %v252 = vunpack.c.l.b16 %v108
  %v253 = vunpack.c.l.b16 %v109
  %v254 = vunpack.c.l.b16 %v110
  %v255 = vunpack.c.l.b16 %v111
  %v256 = vunpack.c.l.b16 %v112
  %v257 = vunpack.c.l.b16 %v113
  %v258 = vunpack.c.l.b16 %v114
  %v259 = vunpack.c.l.b16 %v115
  %v260 = vunpack.c.l.b16 %v116
  %v261 = vunpack.c.l.b16 %v117
  %v262 = vunpack.c.l.b16 %v118
  %v263 = vunpack.c.l.b16 %v119
  %v264 = vunpack.c.l.b16 %v120
  %v265 = vunpack.c.l.b16 %v121
  %v266 = vunpack.c.l.b16 %v122
  %v267 = vunpack.c.l.b16 %v123
  %v268 = vunpack.c.l.b16 %v124
  %v269 = vunpack.c.l.b16 %v125
  %v270 = vunpack.c.l.b16 %v126
  %v271 = vunpack.c.l.b16 %v127
  %v272 = vunpack.c.l.b16 %v128
  %v273 = vunpack.c.l.b16 %v129
  %v274 = vunpack.c.l.b16 %v130
  %v275 = vunpack.c.l.b16 %v131
  %v276 = vunpack.c.l.b16 %v132
  %v277 = vunpack.c.l.b16 %v133
  %v278 = vunpack.c.l.b16 %v134
  %v279 = vunpack.c.l.b16 %v135
  %v280 = vunpack.c.l.b16 %v136
  %v281 = vunpack.c.l.b16 %v137
  %v282 = vunpack.c.l.b16 %v138
  %v283 = vunpack.c.l.b16 %v139
  %v284 = vunpack.c.l.b16 %v140
  %v285 = vunpack.c.l.b16 %v141
  %v286 = vunpack.c.l.b16 %v142
  %v287 = vunpack.c.l.b16 %v143
  %v288 = vunpack.c.l.b16 %v144
  %v289 = vunpack.c.l.b16 %v145
  %v290 = vunpack.c.l.b16 %v146
  %v291 = vunpack.c.l.b16 %v147
  %v292 = vunpack.c.l.b16 %v148
  %v293 = vunpack.c.l.b16 %v149
  %v294 = vunpack.c.l.b16 %v150
  %v295 = vunpack.c.l.b16 %v151
  %v296 = vunpack.c.l.b16 %v152
  %v297 = vunpack.c.l.b16 %v153
  %v298 = vunpack.c.l.b16 %v154
  %v299 = vunpack.c.l.b16 %v155
  %v300 = vunpack.c.l.b16 %v156
  %v301 = vunpack.c.l.b16 %v157
  %v302 = vunpack.c.l.b16 %v158
  %v303 = vunpack.c.l.b16 %v159
  %v304 = vunpack.c.l.b16 %v160
  %v305 = vunpack.c.l.b16 %v161
  %v306 = vunpack.c.l.b16 %v162
  %v307 = vunpack.c.l.b16 %v163
  %v308 = vunpack.c.l.b16 %v164
  %v309 = vunpack.c.l.b16 %v165
  %v310 = vunpack.c.l.b16 %v166
  %v311 = vunpack.c.l.b16 %v167
  %v312 = vunpack.c.l.b16 %v168
  %v313 = vunpack.c.l.b16 %v169
  %v314 = vunpack.c.l.b16 %v170
  %v315 = vunpack.c.l.b16 %v171
  %v316 = vpack.c.b16 %v250, %v250
  %v317 = vpack.c.b16 %v252, %v251
  %v318 = vpack.c.b16 %v254, %v253
  %v319 = vpack.c.b16 %v256, %v255
  %v320 = vpack.c.b16 %v258, %v257
  %v321 = vpack.c.b16 %v260, %v259
  %v322 = vpack.c.b16 %v262, %v261
  %v323 = vpack.c.b16 %v264, %v263
  %v324 = vpack.c.b16 %v266, %v265
  %v325 = vpack.c.b16 %v268, %v267
  %v326 = vpack.c.b16 %v270, %v269
  %v327 = vpack.c.b16 %v272, %v271
  %v328 = vpack.c.b16 %v274, %v273
  %v329 = vpack.c.b16 %v276, %v275
  %v330 = vpack.c.b16 %v278, %v277
  %v331 = vpack.c.b16 %v280, %v279
  %v332 = vpack.c.b16 %v282, %v281
  %v333 = vpack.c.b16 %v284, %v283
  %v334 = vpack.c.b16 %v286, %v285
  %v335 = vpack.c.b16 %v288, %v287
  %v336 = vpack.c.b16 %v290, %v289
  %v337 = vpack.c.b16 %v292, %v291
  %v338 = vpack.c.b16 %v294, %v293
  %v339 = vpack.c.b16 %v296, %v295
  %v340 = vpack.c.b16 %v298, %v297
  %v341 = vpack.c.b16 %v300, %v299
  %v342 = vpack.c.b16 %v302, %v301
  %v343 = vpack.c.b16 %v304, %v303
  %v344 = vpack.c.b16 %v306, %v305
  %v345 = vpack.c.b16 %v308, %v307
  %v346 = vpack.c.b16 %v310, %v309
  %v347 = vpack.c.b16 %v312, %v311
  %v348 = vpack.c.b16 %v314, %v313
  %v349 = vpack.c.b16 %v315, %v315
  %v385 = vunpack.c.l.b16 %v172
  %v386 = vunpack.c.l.b16 %v173
  %v387 = vunpack.c.l.b16 %v174
  %v388 = vpack.c.b16 %v385, %v385
  %v389 = vpack.c.b16 %v387, %v386
  %vm391 = vcmask 1043456
  %v394 = vsel %vm391, %v182, %v316
  %v398 = vsel %vm391, %v349, %v388
  %v400 = vld [vmem:[%s3] sm:$0xf]
  %v401 = vld [vmem:[%s3 + $0x4] sm:$0xf]
  %v402 = vld [vmem:[%s3 + $0x8] sm:$0xf]
  %v403 = vld [vmem:[%s3 + $0xc] sm:$0xf]
  %v404 = vld [vmem:[%s3 + $0x10] sm:$0xf]
  %v405 = vld [vmem:[%s3 + $0x14] sm:$0xf]
  %v406 = vld [vmem:[%s3 + $0x18] sm:$0xf]
  %v407 = vld [vmem:[%s3 + $0x1c] sm:$0xf]
  %v408 = vld [vmem:[%s3 + $0x20] sm:$0xf]
  %v409 = vld [vmem:[%s3 + $0x24] sm:$0xf]
  %v410 = vld [vmem:[%s3 + $0x28] sm:$0xf]
  %v411 = vld [vmem:[%s3 + $0x2c] sm:$0xf]
  %v412 = vld [vmem:[%s3 + $0x30] sm:$0xf]
  %v413 = vld [vmem:[%s3 + $0x34] sm:$0xf]
  %v414 = vld [vmem:[%s3 + $0x38] sm:$0xf]
  %v415 = vld [vmem:[%s3 + $0x3c] sm:$0xf]
  %v432 = vunpack.c.l.b16 %v400
  %v433 = vunpack.c.l.b16 %v401
  %v434 = vunpack.c.l.b16 %v402
  %v435 = vunpack.c.l.b16 %v403
  %v436 = vunpack.c.l.b16 %v404
  %v437 = vunpack.c.l.b16 %v405
  %v438 = vunpack.c.l.b16 %v406
  %v439 = vunpack.c.l.b16 %v407
  %v440 = vunpack.c.l.b16 %v408
  %v441 = vunpack.c.l.b16 %v409
  %v442 = vunpack.c.l.b16 %v410
  %v443 = vunpack.c.l.b16 %v411
  %v444 = vunpack.c.l.b16 %v412
  %v445 = vunpack.c.l.b16 %v413
  %v446 = vunpack.c.l.b16 %v414
  %v447 = vunpack.c.l.b16 %v415
  %v448 = vpack.c.b16 %v433, %v432
  %v449 = vpack.c.b16 %v435, %v434
  %v450 = vpack.c.b16 %v437, %v436
  %v451 = vpack.c.b16 %v439, %v438
  %v452 = vpack.c.b16 %v441, %v440
  %v453 = vpack.c.b16 %v443, %v442
  %v454 = vpack.c.b16 %v445, %v444
  %v455 = vpack.c.b16 %v447, %v446
  %464 = vmatprep.subr.bf16.mxu0 0
  %465 = vmatpush1.bf16.msra.mxu0 %v455
  %466 = vmatprep.subr.bf16.mxu0 0
  %467 = vmatpush1.bf16.msra.mxu0 %v454
  %468 = vmatprep.subr.bf16.mxu0 0
  %469 = vmatpush1.bf16.msra.mxu0 %v453
  %470 = vmatprep.subr.bf16.mxu0 0
  %471 = vmatpush1.bf16.msra.mxu0 %v452
  %472 = vmatprep.subr.bf16.mxu0 0
  %473 = vmatpush1.bf16.msra.mxu0 %v451
  %474 = vmatprep.subr.bf16.mxu0 0
  %475 = vmatpush1.bf16.msra.mxu0 %v450
  %476 = vmatprep.subr.bf16.mxu0 0
  %477 = vmatpush1.bf16.msra.mxu0 %v449
  %478 = vmatprep.subr.bf16.mxu0 0
  %479 = vmatpush1.bf16.msra.mxu0 %v448
  %480 = vmatprep.subr.bf16.mxu0 0
  %481 = vmatpush2.bf16.msra.mxu0 0
  %482 = vmatprep.subr.bf16.mxu0 0
  %483 = vmatpush2.bf16.msra.mxu0 0
  %484 = vmatprep.subr.bf16.mxu0 0
  %485 = vmatpush2.bf16.msra.mxu0 0
  %486 = vmatprep.subr.bf16.mxu0 0
  %487 = vmatpush2.bf16.msra.mxu0 0
  %488 = vmatprep.subr.bf16.mxu0 0
  %489 = vmatpush2.bf16.msra.mxu0 0
  %490 = vmatprep.subr.bf16.mxu0 0
  %491 = vmatpush2.bf16.msra.mxu0 0
  %492 = vmatprep.subr.bf16.mxu0 0
  %493 = vmatpush2.bf16.msra.mxu0 0
  %494 = vmatprep.subr.bf16.mxu0 0
  %495 = vmatpush2.bf16.msra.mxu0 0
  %496 = vmatprep.mubr.bf16.mxu0 0
  %497 = vmatmul.mubr.bf16.gmra.mxu0 %v181
  %v498 = vpop.f32.mrf.mxu0
  %v499 = vadd.f32 0.0, %v498
  %v500 = vpop.f32.mrf.mxu0
  %v501 = vpop.f32.mrf.mxu0
  %v502 = vadd.f32 0.0, %v501
  %v503 = vpop.f32.mrf.mxu0
  %504 = vmatprep.mubr.bf16.mxu0 0
  %505 = vmatmul.mubr.bf16.gmra.mxu0 %v394
  %v506 = vpop.f32.mrf.mxu0
  %v507 = vadd.f32 0.0, %v506
  %v508 = vpop.f32.mrf.mxu0
  %v509 = vpop.f32.mrf.mxu0
  %v510 = vadd.f32 0.0, %v509
  %v511 = vpop.f32.mrf.mxu0
  %512 = vmatprep.mubr.bf16.mxu0 0
  %513 = vmatmul.mubr.bf16.gmra.mxu0 %v317
  %v514 = vpop.f32.mrf.mxu0
  %v515 = vadd.f32 0.0, %v514
  %v516 = vpop.f32.mrf.mxu0
  %v517 = vpop.f32.mrf.mxu0
  %v518 = vadd.f32 0.0, %v517
  %v519 = vpop.f32.mrf.mxu0
  %520 = vmatprep.mubr.bf16.mxu0 0
  %521 = vmatmul.mubr.bf16.gmra.mxu0 %v318
  %v522 = vpop.f32.mrf.mxu0
  %v523 = vadd.f32 0.0, %v522
  %v524 = vpop.f32.mrf.mxu0
  %v525 = vpop.f32.mrf.mxu0
  %v526 = vadd.f32 0.0, %v525
  %v527 = vpop.f32.mrf.mxu0
  %528 = vmatprep.mubr.bf16.mxu0 0
  %529 = vmatmul.mubr.bf16.gmra.mxu0 %v319
  %v530 = vpop.f32.mrf.mxu0
  %v531 = vadd.f32 0.0, %v530
  %v532 = vpop.f32.mrf.mxu0
  %v533 = vpop.f32.mrf.mxu0
  %v534 = vadd.f32 0.0, %v533
  %v535 = vpop.f32.mrf.mxu0
  %536 = vmatprep.mubr.bf16.mxu0 0
  %537 = vmatmul.mubr.bf16.gmra.mxu0 %v320
  %v538 = vpop.f32.mrf.mxu0
  %v539 = vadd.f32 0.0, %v538
  %v540 = vpop.f32.mrf.mxu0
  %v541 = vpop.f32.mrf.mxu0
  %v542 = vadd.f32 0.0, %v541
  %v543 = vpop.f32.mrf.mxu0
  %544 = vmatprep.mubr.bf16.mxu0 0
  %545 = vmatmul.mubr.bf16.gmra.mxu0 %v321
  %v546 = vpop.f32.mrf.mxu0
  %v547 = vadd.f32 0.0, %v546
  %v548 = vpop.f32.mrf.mxu0
  %v549 = vpop.f32.mrf.mxu0
  %v550 = vadd.f32 0.0, %v549
  %v551 = vpop.f32.mrf.mxu0
  %552 = vmatprep.mubr.bf16.mxu0 0
  %553 = vmatmul.mubr.bf16.gmra.mxu0 %v322
  %v554 = vpop.f32.mrf.mxu0
  %v555 = vadd.f32 0.0, %v554
  %v556 = vpop.f32.mrf.mxu0
  %v557 = vpop.f32.mrf.mxu0
  %v558 = vadd.f32 0.0, %v557
  %v559 = vpop.f32.mrf.mxu0
  %560 = vmatprep.mubr.bf16.mxu0 0
  %561 = vmatmul.mubr.bf16.gmra.mxu0 %v323
  %v562 = vpop.f32.mrf.mxu0
  %v563 = vadd.f32 0.0, %v562
  %v564 = vpop.f32.mrf.mxu0
  %v565 = vpop.f32.mrf.mxu0
  %v566 = vadd.f32 0.0, %v565
  %v567 = vpop.f32.mrf.mxu0
  %568 = vmatprep.mubr.bf16.mxu0 0
  %569 = vmatmul.mubr.bf16.gmra.mxu0 %v324
  %v570 = vpop.f32.mrf.mxu0
  %v571 = vadd.f32 0.0, %v570
  %v572 = vpop.f32.mrf.mxu0
  %v573 = vpop.f32.mrf.mxu0
  %v574 = vadd.f32 0.0, %v573
  %v575 = vpop.f32.mrf.mxu0
  %576 = vmatprep.mubr.bf16.mxu0 0
  %577 = vmatmul.mubr.bf16.gmra.mxu0 %v325
  %v578 = vpop.f32.mrf.mxu0
  %v579 = vadd.f32 0.0, %v578
  %v580 = vpop.f32.mrf.mxu0
  %v581 = vpop.f32.mrf.mxu0
  %v582 = vadd.f32 0.0, %v581
  %v583 = vpop.f32.mrf.mxu0
  %584 = vmatprep.mubr.bf16.mxu0 0
  %585 = vmatmul.mubr.bf16.gmra.mxu0 %v326
  %v586 = vpop.f32.mrf.mxu0
  %v587 = vadd.f32 0.0, %v586
  %v588 = vpop.f32.mrf.mxu0
  %v589 = vpop.f32.mrf.mxu0
  %v590 = vadd.f32 0.0, %v589
  %v591 = vpop.f32.mrf.mxu0
  %592 = vmatprep.mubr.bf16.mxu0 0
  %593 = vmatmul.mubr.bf16.gmra.mxu0 %v327
  %v594 = vpop.f32.mrf.mxu0
  %v595 = vadd.f32 0.0, %v594
  %v596 = vpop.f32.mrf.mxu0
  %v597 = vpop.f32.mrf.mxu0
  %v598 = vadd.f32 0.0, %v597
  %v599 = vpop.f32.mrf.mxu0
  %600 = vmatprep.mubr.bf16.mxu0 0
  %601 = vmatmul.mubr.bf16.gmra.mxu0 %v328
  %v602 = vpop.f32.mrf.mxu0
  %v603 = vadd.f32 0.0, %v602
  %v604 = vpop.f32.mrf.mxu0
  %v605 = vpop.f32.mrf.mxu0
  %v606 = vadd.f32 0.0, %v605
  %v607 = vpop.f32.mrf.mxu0
  %608 = vmatprep.mubr.bf16.mxu0 0
  %609 = vmatmul.mubr.bf16.gmra.mxu0 %v329
  %v610 = vpop.f32.mrf.mxu0
  %v611 = vadd.f32 0.0, %v610
  %v612 = vpop.f32.mrf.mxu0
  %v613 = vpop.f32.mrf.mxu0
  %v614 = vadd.f32 0.0, %v613
  %v615 = vpop.f32.mrf.mxu0
  %616 = vmatprep.mubr.bf16.mxu0 0
  %617 = vmatmul.mubr.bf16.gmra.mxu0 %v330
  %v618 = vpop.f32.mrf.mxu0
  %v619 = vadd.f32 0.0, %v618
  %v620 = vpop.f32.mrf.mxu0
  %v621 = vpop.f32.mrf.mxu0
  %v622 = vadd.f32 0.0, %v621
  %v623 = vpop.f32.mrf.mxu0
  %624 = vmatprep.mubr.bf16.mxu0 0
  %625 = vmatmul.mubr.bf16.gmra.mxu0 %v331
  %v626 = vpop.f32.mrf.mxu0
  %v627 = vadd.f32 0.0, %v626
  %v628 = vpop.f32.mrf.mxu0
  %v629 = vpop.f32.mrf.mxu0
  %v630 = vadd.f32 0.0, %v629
  %v631 = vpop.f32.mrf.mxu0
  %632 = vmatprep.mubr.bf16.mxu0 0
  %633 = vmatmul.mubr.bf16.gmra.mxu0 %v332
  %v634 = vpop.f32.mrf.mxu0
  %v635 = vadd.f32 0.0, %v634
  %v636 = vpop.f32.mrf.mxu0
  %v637 = vpop.f32.mrf.mxu0
  %v638 = vadd.f32 0.0, %v637
  %v639 = vpop.f32.mrf.mxu0
  %640 = vmatprep.mubr.bf16.mxu0 0
  %641 = vmatmul.mubr.bf16.gmra.mxu0 %v333
  %v642 = vpop.f32.mrf.mxu0
  %v643 = vadd.f32 0.0, %v642
  %v644 = vpop.f32.mrf.mxu0
  %v645 = vpop.f32.mrf.mxu0
  %v646 = vadd.f32 0.0, %v645
  %v647 = vpop.f32.mrf.mxu0
  %648 = vmatprep.mubr.bf16.mxu0 0
  %649 = vmatmul.mubr.bf16.gmra.mxu0 %v334
  %v650 = vpop.f32.mrf.mxu0
  %v651 = vadd.f32 0.0, %v650
  %v652 = vpop.f32.mrf.mxu0
  %v653 = vpop.f32.mrf.mxu0
  %v654 = vadd.f32 0.0, %v653
  %v655 = vpop.f32.mrf.mxu0
  %656 = vmatprep.mubr.bf16.mxu0 0
  %657 = vmatmul.mubr.bf16.gmra.mxu0 %v335
  %v658 = vpop.f32.mrf.mxu0
  %v659 = vadd.f32 0.0, %v658
  %v660 = vpop.f32.mrf.mxu0
  %v661 = vpop.f32.mrf.mxu0
  %v662 = vadd.f32 0.0, %v661
  %v663 = vpop.f32.mrf.mxu0
  %664 = vmatprep.mubr.bf16.mxu0 0
  %665 = vmatmul.mubr.bf16.gmra.mxu0 %v336
  %v666 = vpop.f32.mrf.mxu0
  %v667 = vadd.f32 0.0, %v666
  %v668 = vpop.f32.mrf.mxu0
  %v669 = vpop.f32.mrf.mxu0
  %v670 = vadd.f32 0.0, %v669
  %v671 = vpop.f32.mrf.mxu0
  %672 = vmatprep.mubr.bf16.mxu0 0
  %673 = vmatmul.mubr.bf16.gmra.mxu0 %v337
  %v674 = vpop.f32.mrf.mxu0
  %v675 = vadd.f32 0.0, %v674
  %v676 = vpop.f32.mrf.mxu0
  %v677 = vpop.f32.mrf.mxu0
  %v678 = vadd.f32 0.0, %v677
  %v679 = vpop.f32.mrf.mxu0
  %680 = vmatprep.mubr.bf16.mxu0 0
  %681 = vmatmul.mubr.bf16.gmra.mxu0 %v338
  %v682 = vpop.f32.mrf.mxu0
  %v683 = vadd.f32 0.0, %v682
  %v684 = vpop.f32.mrf.mxu0
  %v685 = vpop.f32.mrf.mxu0
  %v686 = vadd.f32 0.0, %v685
  %v687 = vpop.f32.mrf.mxu0
  %688 = vmatprep.mubr.bf16.mxu0 0
  %689 = vmatmul.mubr.bf16.gmra.mxu0 %v339
  %v690 = vpop.f32.mrf.mxu0
  %v691 = vadd.f32 0.0, %v690
  %v692 = vpop.f32.mrf.mxu0
  %v693 = vpop.f32.mrf.mxu0
  %v694 = vadd.f32 0.0, %v693
  %v695 = vpop.f32.mrf.mxu0
  %696 = vmatprep.mubr.bf16.mxu0 0
  %697 = vmatmul.mubr.bf16.gmra.mxu0 %v340
  %v698 = vpop.f32.mrf.mxu0
  %v699 = vadd.f32 0.0, %v698
  %v700 = vpop.f32.mrf.mxu0
  %v701 = vpop.f32.mrf.mxu0
  %v702 = vadd.f32 0.0, %v701
  %v703 = vpop.f32.mrf.mxu0
  %704 = vmatprep.mubr.bf16.mxu0 0
  %705 = vmatmul.mubr.bf16.gmra.mxu0 %v341
  %v706 = vpop.f32.mrf.mxu0
  %v707 = vadd.f32 0.0, %v706
  %v708 = vpop.f32.mrf.mxu0
  %v709 = vpop.f32.mrf.mxu0
  %v710 = vadd.f32 0.0, %v709
  %v711 = vpop.f32.mrf.mxu0
  %712 = vmatprep.mubr.bf16.mxu0 0
  %713 = vmatmul.mubr.bf16.gmra.mxu0 %v342
  %v714 = vpop.f32.mrf.mxu0
  %v715 = vadd.f32 0.0, %v714
  %v716 = vpop.f32.mrf.mxu0
  %v717 = vpop.f32.mrf.mxu0
  %v718 = vadd.f32 0.0, %v717
  %v719 = vpop.f32.mrf.mxu0
  %720 = vmatprep.mubr.bf16.mxu0 0
  %721 = vmatmul.mubr.bf16.gmra.mxu0 %v343
  %v722 = vpop.f32.mrf.mxu0
  %v723 = vadd.f32 0.0, %v722
  %v724 = vpop.f32.mrf.mxu0
  %v725 = vpop.f32.mrf.mxu0
  %v726 = vadd.f32 0.0, %v725
  %v727 = vpop.f32.mrf.mxu0
  %728 = vmatprep.mubr.bf16.mxu0 0
  %729 = vmatmul.mubr.bf16.gmra.mxu0 %v344
  %v730 = vpop.f32.mrf.mxu0
  %v731 = vadd.f32 0.0, %v730
  %v732 = vpop.f32.mrf.mxu0
  %v733 = vpop.f32.mrf.mxu0
  %v734 = vadd.f32 0.0, %v733
  %v735 = vpop.f32.mrf.mxu0
  %736 = vmatprep.mubr.bf16.mxu0 0
  %737 = vmatmul.mubr.bf16.gmra.mxu0 %v345
  %v738 = vpop.f32.mrf.mxu0
  %v739 = vadd.f32 0.0, %v738
  %v740 = vpop.f32.mrf.mxu0
  %v741 = vpop.f32.mrf.mxu0
  %v742 = vadd.f32 0.0, %v741
  %v743 = vpop.f32.mrf.mxu0
  %744 = vmatprep.mubr.bf16.mxu0 0
  %745 = vmatmul.mubr.bf16.gmra.mxu0 %v346
  %v746 = vpop.f32.mrf.mxu0
  %v747 = vadd.f32 0.0, %v746
  %v748 = vpop.f32.mrf.mxu0
  %v749 = vpop.f32.mrf.mxu0
  %v750 = vadd.f32 0.0, %v749
  %v751 = vpop.f32.mrf.mxu0
  %752 = vmatprep.mubr.bf16.mxu0 0
  %753 = vmatmul.mubr.bf16.gmra.mxu0 %v347
  %v754 = vpop.f32.mrf.mxu0
  %v755 = vadd.f32 0.0, %v754
  %v756 = vpop.f32.mrf.mxu0
  %v757 = vpop.f32.mrf.mxu0
  %v758 = vadd.f32 0.0, %v757
  %v759 = vpop.f32.mrf.mxu0
  %760 = vmatprep.mubr.bf16.mxu0 0
  %761 = vmatmul.mubr.bf16.gmra.mxu0 %v348
  %v762 = vpop.f32.mrf.mxu0
  %v763 = vadd.f32 0.0, %v762
  %v764 = vpop.f32.mrf.mxu0
  %v765 = vpop.f32.mrf.mxu0
  %v766 = vadd.f32 0.0, %v765
  %v767 = vpop.f32.mrf.mxu0
  %768 = vmatprep.mubr.bf16.mxu0 0
  %769 = vmatmul.mubr.bf16.gmra.mxu0 %v398
  %v770 = vpop.f32.mrf.mxu0
  %v771 = vadd.f32 0.0, %v770
  %v772 = vpop.f32.mrf.mxu0
  %v773 = vpop.f32.mrf.mxu0
  %v774 = vadd.f32 0.0, %v773
  %v775 = vpop.f32.mrf.mxu0
  %776 = vmatprep.mubr.bf16.mxu0 0
  %777 = vmatmul.mubr.bf16.gmra.mxu0 %v389
  %v778 = vpop.f32.mrf.mxu0
  %v779 = vadd.f32 0.0, %v778
  %v780 = vpop.f32.mrf.mxu0
  %v781 = vpop.f32.mrf.mxu0
  %v782 = vadd.f32 0.0, %v781
  %v783 = vpop.f32.mrf.mxu0
  %784 = vdwg.mxu0
  %v785 = vld [vmem:[%s4] sm:$0x1]
  %v787 = vlaneseq
  %v788 = vshrl.u32 %v787, 7
  %v789 = vsub.s32 0, %v788
  %v790 = vrot.slane %v785, %v789
  %v792 = vmul.f32 %v499, %v790
  %v793 = vmul.f32 %v502, %v790
  %v794 = vmul.f32 %v507, %v790
  %v795 = vmul.f32 %v510, %v790
  %v796 = vmul.f32 %v515, %v790
  %v797 = vmul.f32 %v518, %v790
  %v798 = vmul.f32 %v523, %v790
  %v799 = vmul.f32 %v526, %v790
  %v800 = vmul.f32 %v531, %v790
  %v801 = vmul.f32 %v534, %v790
  %v802 = vmul.f32 %v539, %v790
  %v803 = vmul.f32 %v542, %v790
  %v804 = vmul.f32 %v547, %v790
  %v805 = vmul.f32 %v550, %v790
  %v806 = vmul.f32 %v555, %v790
  %v807 = vmul.f32 %v558, %v790
  %v808 = vmul.f32 %v563, %v790
  %v809 = vmul.f32 %v566, %v790
  %v810 = vmul.f32 %v571, %v790
  %v811 = vmul.f32 %v574, %v790
  %v812 = vmul.f32 %v579, %v790
  %v813 = vmul.f32 %v582, %v790
  %v814 = vmul.f32 %v587, %v790
  %v815 = vmul.f32 %v590, %v790
  %v816 = vmul.f32 %v595, %v790
  %v817 = vmul.f32 %v598, %v790
  %v818 = vmul.f32 %v603, %v790
  %v819 = vmul.f32 %v606, %v790
  %v820 = vmul.f32 %v611, %v790
  %v821 = vmul.f32 %v614, %v790
  %v822 = vmul.f32 %v619, %v790
  %v823 = vmul.f32 %v622, %v790
  %v824 = vmul.f32 %v627, %v790
  %v825 = vmul.f32 %v630, %v790
  %v826 = vmul.f32 %v635, %v790
  %v827 = vmul.f32 %v638, %v790
  %v828 = vmul.f32 %v643, %v790
  %v829 = vmul.f32 %v646, %v790
  %v830 = vmul.f32 %v651, %v790
  %v831 = vmul.f32 %v654, %v790
  %v832 = vmul.f32 %v659, %v790
  %v833 = vmul.f32 %v662, %v790
  %v834 = vmul.f32 %v667, %v790
  %v835 = vmul.f32 %v670, %v790
  %v836 = vmul.f32 %v675, %v790
  %v837 = vmul.f32 %v678, %v790
  %v838 = vmul.f32 %v683, %v790
  %v839 = vmul.f32 %v686, %v790
  %v840 = vmul.f32 %v691, %v790
  %v841 = vmul.f32 %v694, %v790
  %v842 = vmul.f32 %v699, %v790
  %v843 = vmul.f32 %v702, %v790
  %v844 = vmul.f32 %v707, %v790
  %v845 = vmul.f32 %v710, %v790
  %v846 = vmul.f32 %v715, %v790
  %v847 = vmul.f32 %v718, %v790
  %v848 = vmul.f32 %v723, %v790
  %v849 = vmul.f32 %v726, %v790
  %v850 = vmul.f32 %v731, %v790
  %v851 = vmul.f32 %v734, %v790
  %v852 = vmul.f32 %v739, %v790
  %v853 = vmul.f32 %v742, %v790
  %v854 = vmul.f32 %v747, %v790
  %v855 = vmul.f32 %v750, %v790
  %v856 = vmul.f32 %v755, %v790
  %v857 = vmul.f32 %v758, %v790
  %v858 = vmul.f32 %v763, %v790
  %v859 = vmul.f32 %v766, %v790
  %v860 = vmul.f32 %v771, %v790
  %v861 = vmul.f32 %v774, %v790
  %v862 = vmul.f32 %v779, %v790
  %v863 = vmul.f32 %v782, %v790
  %v864 = vld [vmem:[%s5] sm:$0x1]
  %v866 = vlaneseq
  %v867 = vshrl.u32 %v866, 7
  %v868 = vsub.s32 0, %v867
  %v869 = vrot.slane %v864, %v868
  %v871 = vadd.f32 %v792, %v869
  %v872 = vadd.f32 %v793, %v869
  %v873 = vadd.f32 %v794, %v869
  %v874 = vadd.f32 %v795, %v869
  %v875 = vadd.f32 %v796, %v869
  %v876 = vadd.f32 %v797, %v869
  %v877 = vadd.f32 %v798, %v869
  %v878 = vadd.f32 %v799, %v869
  %v879 = vadd.f32 %v800, %v869
  %v880 = vadd.f32 %v801, %v869
  %v881 = vadd.f32 %v802, %v869
  %v882 = vadd.f32 %v803, %v869
  %v883 = vadd.f32 %v804, %v869
  %v884 = vadd.f32 %v805, %v869
  %v885 = vadd.f32 %v806, %v869
  %v886 = vadd.f32 %v807, %v869
  %v887 = vadd.f32 %v808, %v869
  %v888 = vadd.f32 %v809, %v869
  %v889 = vadd.f32 %v810, %v869
  %v890 = vadd.f32 %v811, %v869
  %v891 = vadd.f32 %v812, %v869
  %v892 = vadd.f32 %v813, %v869
  %v893 = vadd.f32 %v814, %v869
  %v894 = vadd.f32 %v815, %v869
  %v895 = vadd.f32 %v816, %v869
  %v896 = vadd.f32 %v817, %v869
  %v897 = vadd.f32 %v818, %v869
  %v898 = vadd.f32 %v819, %v869
  %v899 = vadd.f32 %v820, %v869
  %v900 = vadd.f32 %v821, %v869
  %v901 = vadd.f32 %v822, %v869
  %v902 = vadd.f32 %v823, %v869
  %v903 = vadd.f32 %v824, %v869
  %v904 = vadd.f32 %v825, %v869
  %v905 = vadd.f32 %v826, %v869
  %v906 = vadd.f32 %v827, %v869
  %v907 = vadd.f32 %v828, %v869
  %v908 = vadd.f32 %v829, %v869
  %v909 = vadd.f32 %v830, %v869
  %v910 = vadd.f32 %v831, %v869
  %v911 = vadd.f32 %v832, %v869
  %v912 = vadd.f32 %v833, %v869
  %v913 = vadd.f32 %v834, %v869
  %v914 = vadd.f32 %v835, %v869
  %v915 = vadd.f32 %v836, %v869
  %v916 = vadd.f32 %v837, %v869
  %v917 = vadd.f32 %v838, %v869
  %v918 = vadd.f32 %v839, %v869
  %v919 = vadd.f32 %v840, %v869
  %v920 = vadd.f32 %v841, %v869
  %v921 = vadd.f32 %v842, %v869
  %v922 = vadd.f32 %v843, %v869
  %v923 = vadd.f32 %v844, %v869
  %v924 = vadd.f32 %v845, %v869
  %v925 = vadd.f32 %v846, %v869
  %v926 = vadd.f32 %v847, %v869
  %v927 = vadd.f32 %v848, %v869
  %v928 = vadd.f32 %v849, %v869
  %v929 = vadd.f32 %v850, %v869
  %v930 = vadd.f32 %v851, %v869
  %v931 = vadd.f32 %v852, %v869
  %v932 = vadd.f32 %v853, %v869
  %v933 = vadd.f32 %v854, %v869
  %v934 = vadd.f32 %v855, %v869
  %v935 = vadd.f32 %v856, %v869
  %v936 = vadd.f32 %v857, %v869
  %v937 = vadd.f32 %v858, %v869
  %v938 = vadd.f32 %v859, %v869
  %v939 = vadd.f32 %v860, %v869
  %v940 = vadd.f32 %v861, %v869
  %v941 = vadd.f32 %v862, %v869
  %v942 = vadd.f32 %v863, %v869
  %vm943 = vcmp.gt.f32.partialorder %v871, 0.0
  %vm944 = vcmp.gt.f32.partialorder %v872, 0.0
  %vm945 = vcmp.gt.f32.partialorder %v873, 0.0
  %vm946 = vcmp.gt.f32.partialorder %v874, 0.0
  %vm947 = vcmp.gt.f32.partialorder %v875, 0.0
  %vm948 = vcmp.gt.f32.partialorder %v876, 0.0
  %vm949 = vcmp.gt.f32.partialorder %v877, 0.0
  %vm950 = vcmp.gt.f32.partialorder %v878, 0.0
  %vm951 = vcmp.gt.f32.partialorder %v879, 0.0
  %vm952 = vcmp.gt.f32.partialorder %v880, 0.0
  %vm953 = vcmp.gt.f32.partialorder %v881, 0.0
  %vm954 = vcmp.gt.f32.partialorder %v882, 0.0
  %vm955 = vcmp.gt.f32.partialorder %v883, 0.0
  %vm956 = vcmp.gt.f32.partialorder %v884, 0.0
  %vm957 = vcmp.gt.f32.partialorder %v885, 0.0
  %vm958 = vcmp.gt.f32.partialorder %v886, 0.0
  %vm959 = vcmp.gt.f32.partialorder %v887, 0.0
  %vm960 = vcmp.gt.f32.partialorder %v888, 0.0
  %vm961 = vcmp.gt.f32.partialorder %v889, 0.0
  %vm962 = vcmp.gt.f32.partialorder %v890, 0.0
  %vm963 = vcmp.gt.f32.partialorder %v891, 0.0
  %vm964 = vcmp.gt.f32.partialorder %v892, 0.0
  %vm965 = vcmp.gt.f32.partialorder %v893, 0.0
  %vm966 = vcmp.gt.f32.partialorder %v894, 0.0
  %vm967 = vcmp.gt.f32.partialorder %v895, 0.0
  %vm968 = vcmp.gt.f32.partialorder %v896, 0.0
  %vm969 = vcmp.gt.f32.partialorder %v897, 0.0
  %vm970 = vcmp.gt.f32.partialorder %v898, 0.0
  %vm971 = vcmp.gt.f32.partialorder %v899, 0.0
  %vm972 = vcmp.gt.f32.partialorder %v900, 0.0
  %vm973 = vcmp.gt.f32.partialorder %v901, 0.0
  %vm974 = vcmp.gt.f32.partialorder %v902, 0.0
  %vm975 = vcmp.gt.f32.partialorder %v903, 0.0
  %vm976 = vcmp.gt.f32.partialorder %v904, 0.0
  %vm977 = vcmp.gt.f32.partialorder %v905, 0.0
  %vm978 = vcmp.gt.f32.partialorder %v906, 0.0
  %vm979 = vcmp.gt.f32.partialorder %v907, 0.0
  %vm980 = vcmp.gt.f32.partialorder %v908, 0.0
  %vm981 = vcmp.gt.f32.partialorder %v909, 0.0
  %vm982 = vcmp.gt.f32.partialorder %v910, 0.0
  %vm983 = vcmp.gt.f32.partialorder %v911, 0.0
  %vm984 = vcmp.gt.f32.partialorder %v912, 0.0
  %vm985 = vcmp.gt.f32.partialorder %v913, 0.0
  %vm986 = vcmp.gt.f32.partialorder %v914, 0.0
  %vm987 = vcmp.gt.f32.partialorder %v915, 0.0
  %vm988 = vcmp.gt.f32.partialorder %v916, 0.0
  %vm989 = vcmp.gt.f32.partialorder %v917, 0.0
  %vm990 = vcmp.gt.f32.partialorder %v918, 0.0
  %vm991 = vcmp.gt.f32.partialorder %v919, 0.0
  %vm992 = vcmp.gt.f32.partialorder %v920, 0.0
  %vm993 = vcmp.gt.f32.partialorder %v921, 0.0
  %vm994 = vcmp.gt.f32.partialorder %v922, 0.0
  %vm995 = vcmp.gt.f32.partialorder %v923, 0.0
  %vm996 = vcmp.gt.f32.partialorder %v924, 0.0
  %vm997 = vcmp.gt.f32.partialorder %v925, 0.0
  %vm998 = vcmp.gt.f32.partialorder %v926, 0.0
  %vm999 = vcmp.gt.f32.partialorder %v927, 0.0
  %vm1000 = vcmp.gt.f32.partialorder %v928, 0.0
  %vm1001 = vcmp.gt.f32.partialorder %v929, 0.0
  %vm1002 = vcmp.gt.f32.partialorder %v930, 0.0
  %vm1003 = vcmp.gt.f32.partialorder %v931, 0.0
  %vm1004 = vcmp.gt.f32.partialorder %v932, 0.0
  %vm1005 = vcmp.gt.f32.partialorder %v933, 0.0
  %vm1006 = vcmp.gt.f32.partialorder %v934, 0.0
  %vm1007 = vcmp.gt.f32.partialorder %v935, 0.0
  %vm1008 = vcmp.gt.f32.partialorder %v936, 0.0
  %vm1009 = vcmp.gt.f32.partialorder %v937, 0.0
  %vm1010 = vcmp.gt.f32.partialorder %v938, 0.0
  %vm1011 = vcmp.gt.f32.partialorder %v939, 0.0
  %vm1012 = vcmp.gt.f32.partialorder %v940, 0.0
  %vm1013 = vcmp.gt.f32.partialorder %v941, 0.0
  %vm1014 = vcmp.gt.f32.partialorder %v942, 0.0
  %v1015 = vmul.f32 %v871, 0.1
  %v1016 = vmul.f32 %v872, 0.1
  %v1017 = vmul.f32 %v873, 0.1
  %v1018 = vmul.f32 %v874, 0.1
  %v1019 = vmul.f32 %v875, 0.1
  %v1020 = vmul.f32 %v876, 0.1
  %v1021 = vmul.f32 %v877, 0.1
  %v1022 = vmul.f32 %v878, 0.1
  %v1023 = vmul.f32 %v879, 0.1
  %v1024 = vmul.f32 %v880, 0.1
  %v1025 = vmul.f32 %v881, 0.1
  %v1026 = vmul.f32 %v882, 0.1
  %v1027 = vmul.f32 %v883, 0.1
  %v1028 = vmul.f32 %v884, 0.1
  %v1029 = vmul.f32 %v885, 0.1
  %v1030 = vmul.f32 %v886, 0.1
  %v1031 = vmul.f32 %v887, 0.1
  %v1032 = vmul.f32 %v888, 0.1
  %v1033 = vmul.f32 %v889, 0.1
  %v1034 = vmul.f32 %v890, 0.1
  %v1035 = vmul.f32 %v891, 0.1
  %v1036 = vmul.f32 %v892, 0.1
  %v1037 = vmul.f32 %v893, 0.1
  %v1038 = vmul.f32 %v894, 0.1
  %v1039 = vmul.f32 %v895, 0.1
  %v1040 = vmul.f32 %v896, 0.1
  %v1041 = vmul.f32 %v897, 0.1
  %v1042 = vmul.f32 %v898, 0.1
  %v1043 = vmul.f32 %v899, 0.1
  %v1044 = vmul.f32 %v900, 0.1
  %v1045 = vmul.f32 %v901, 0.1
  %v1046 = vmul.f32 %v902, 0.1
  %v1047 = vmul.f32 %v903, 0.1
  %v1048 = vmul.f32 %v904, 0.1
  %v1049 = vmul.f32 %v905, 0.1
  %v1050 = vmul.f32 %v906, 0.1
  %v1051 = vmul.f32 %v907, 0.1
  %v1052 = vmul.f32 %v908, 0.1
  %v1053 = vmul.f32 %v909, 0.1
  %v1054 = vmul.f32 %v910, 0.1
  %v1055 = vmul.f32 %v911, 0.1
  %v1056 = vmul.f32 %v912, 0.1
  %v1057 = vmul.f32 %v913, 0.1
  %v1058 = vmul.f32 %v914, 0.1
  %v1059 = vmul.f32 %v915, 0.1
  %v1060 = vmul.f32 %v916, 0.1
  %v1061 = vmul.f32 %v917, 0.1
  %v1062 = vmul.f32 %v918, 0.1
  %v1063 = vmul.f32 %v919, 0.1
  %v1064 = vmul.f32 %v920, 0.1
  %v1065 = vmul.f32 %v921, 0.1
  %v1066 = vmul.f32 %v922, 0.1
  %v1067 = vmul.f32 %v923, 0.1
  %v1068 = vmul.f32 %v924, 0.1
  %v1069 = vmul.f32 %v925, 0.1
  %v1070 = vmul.f32 %v926, 0.1
  %v1071 = vmul.f32 %v927, 0.1
  %v1072 = vmul.f32 %v928, 0.1
  %v1073 = vmul.f32 %v929, 0.1
  %v1074 = vmul.f32 %v930, 0.1
  %v1075 = vmul.f32 %v931, 0.1
  %v1076 = vmul.f32 %v932, 0.1
  %v1077 = vmul.f32 %v933, 0.1
  %v1078 = vmul.f32 %v934, 0.1
  %v1079 = vmul.f32 %v935, 0.1
  %v1080 = vmul.f32 %v936, 0.1
  %v1081 = vmul.f32 %v937, 0.1
  %v1082 = vmul.f32 %v938, 0.1
  %v1083 = vmul.f32 %v939, 0.1
  %v1084 = vmul.f32 %v940, 0.1
  %v1085 = vmul.f32 %v941, 0.1
  %v1086 = vmul.f32 %v942, 0.1
  %v1087 = vsel %vm943, %v871, %v1015
  %v1088 = vsel %vm944, %v872, %v1016
  %v1089 = vsel %vm945, %v873, %v1017
  %v1090 = vsel %vm946, %v874, %v1018
  %v1091 = vsel %vm947, %v875, %v1019
  %v1092 = vsel %vm948, %v876, %v1020
  %v1093 = vsel %vm949, %v877, %v1021
  %v1094 = vsel %vm950, %v878, %v1022
  %v1095 = vsel %vm951, %v879, %v1023
  %v1096 = vsel %vm952, %v880, %v1024
  %v1097 = vsel %vm953, %v881, %v1025
  %v1098 = vsel %vm954, %v882, %v1026
  %v1099 = vsel %vm955, %v883, %v1027
  %v1100 = vsel %vm956, %v884, %v1028
  %v1101 = vsel %vm957, %v885, %v1029
  %v1102 = vsel %vm958, %v886, %v1030
  %v1103 = vsel %vm959, %v887, %v1031
  %v1104 = vsel %vm960, %v888, %v1032
  %v1105 = vsel %vm961, %v889, %v1033
  %v1106 = vsel %vm962, %v890, %v1034
  %v1107 = vsel %vm963, %v891, %v1035
  %v1108 = vsel %vm964, %v892, %v1036
  %v1109 = vsel %vm965, %v893, %v1037
  %v1110 = vsel %vm966, %v894, %v1038
  %v1111 = vsel %vm967, %v895, %v1039
  %v1112 = vsel %vm968, %v896, %v1040
  %v1113 = vsel %vm969, %v897, %v1041
  %v1114 = vsel %vm970, %v898, %v1042
  %v1115 = vsel %vm971, %v899, %v1043
  %v1116 = vsel %vm972, %v900, %v1044
  %v1117 = vsel %vm973, %v901, %v1045
  %v1118 = vsel %vm974, %v902, %v1046
  %v1119 = vsel %vm975, %v903, %v1047
  %v1120 = vsel %vm976, %v904, %v1048
  %v1121 = vsel %vm977, %v905, %v1049
  %v1122 = vsel %vm978, %v906, %v1050
  %v1123 = vsel %vm979, %v907, %v1051
  %v1124 = vsel %vm980, %v908, %v1052
  %v1125 = vsel %vm981, %v909, %v1053
  %v1126 = vsel %vm982, %v910, %v1054
  %v1127 = vsel %vm983, %v911, %v1055
  %v1128 = vsel %vm984, %v912, %v1056
  %v1129 = vsel %vm985, %v913, %v1057
  %v1130 = vsel %vm986, %v914, %v1058
  %v1131 = vsel %vm987, %v915, %v1059
  %v1132 = vsel %vm988, %v916, %v1060
  %v1133 = vsel %vm989, %v917, %v1061
  %v1134 = vsel %vm990, %v918, %v1062
  %v1135 = vsel %vm991, %v919, %v1063
  %v1136 = vsel %vm992, %v920, %v1064
  %v1137 = vsel %vm993, %v921, %v1065
  %v1138 = vsel %vm994, %v922, %v1066
  %v1139 = vsel %vm995, %v923, %v1067
  %v1140 = vsel %vm996, %v924, %v1068
  %v1141 = vsel %vm997, %v925, %v1069
  %v1142 = vsel %vm998, %v926, %v1070
  %v1143 = vsel %vm999, %v927, %v1071
  %v1144 = vsel %vm1000, %v928, %v1072
  %v1145 = vsel %vm1001, %v929, %v1073
  %v1146 = vsel %vm1002, %v930, %v1074
  %v1147 = vsel %vm1003, %v931, %v1075
  %v1148 = vsel %vm1004, %v932, %v1076
  %v1149 = vsel %vm1005, %v933, %v1077
  %v1150 = vsel %vm1006, %v934, %v1078
  %v1151 = vsel %vm1007, %v935, %v1079
  %v1152 = vsel %vm1008, %v936, %v1080
  %v1153 = vsel %vm1009, %v937, %v1081
  %v1154 = vsel %vm1010, %v938, %v1082
  %v1155 = vsel %vm1011, %v939, %v1083
  %v1156 = vsel %vm1012, %v940, %v1084
  %v1157 = vsel %vm1013, %v941, %v1085
  %v1158 = vsel %vm1014, %v942, %v1086
  %s1159 = smul.u32 0, 528
  %v1160 = vlaneseq
  %v1161 = vshrl.u32 %v1160, 7
  %v1162 = vadd.s32 %v1161, 8
  %v1163 = vadd.s32 %v1161, 16
  %v1164 = vadd.s32 %v1161, 24
  %v1165 = vadd.s32 %v1161, 32
  %v1166 = vadd.s32 %v1161, 40
  %v1167 = vadd.s32 %v1161, 48
  %v1168 = vadd.s32 %v1161, 56
  %v1169 = vadd.s32 %v1161, 64
  %v1170 = vadd.s32 %v1161, 72
  %v1171 = vadd.s32 %v1161, 80
  %v1172 = vadd.s32 %v1161, 88
  %v1173 = vadd.s32 %v1161, 96
  %v1174 = vadd.s32 %v1161, 104
  %v1175 = vadd.s32 %v1161, 112
  %v1176 = vadd.s32 %v1161, 120
  %v1177 = vadd.s32 %v1161, 128
  %v1178 = vadd.s32 %v1161, 136
  %v1179 = vadd.s32 %v1161, 144
  %v1180 = vadd.s32 %v1161, 152
  %v1181 = vadd.s32 %v1161, 160
  %v1182 = vadd.s32 %v1161, 168
  %v1183 = vadd.s32 %v1161, 176
  %v1184 = vadd.s32 %v1161, 184
  %v1185 = vadd.s32 %v1161, 192
  %v1186 = vadd.s32 %v1161, 200
  %v1187 = vadd.s32 %v1161, 208
  %v1188 = vadd.s32 %v1161, 216
  %v1189 = vadd.s32 %v1161, 224
  %v1190 = vadd.s32 %v1161, 232
  %v1191 = vadd.s32 %v1161, 240
  %v1192 = vadd.s32 %v1161, 248
  %v1193 = vadd.s32 %v1161, 256
  %v1194 = vadd.s32 %v1161, 264
  %v1195 = vadd.s32 %v1161, 272
  %v1196 = vadd.s32 %v1161, 280
  %v1197 = vadd.s32 %v1161, 288
  %v1198 = vadd.s32 %v1161, 296
  %v1199 = vadd.s32 %v1161, 304
  %v1200 = vadd.s32 %v1161, 312
  %v1201 = vadd.s32 %v1161, 320
  %v1202 = vadd.s32 %v1161, 328
  %v1203 = vadd.s32 %v1161, 336
  %v1204 = vadd.s32 %v1161, 344
  %v1205 = vadd.s32 %v1161, 352
  %v1206 = vadd.s32 %v1161, 360
  %v1207 = vadd.s32 %v1161, 368
  %v1208 = vadd.s32 %v1161, 376
  %v1209 = vadd.s32 %v1161, 384
  %v1210 = vadd.s32 %v1161, 392
  %v1211 = vadd.s32 %v1161, 400
  %v1212 = vadd.s32 %v1161, 408
  %v1213 = vadd.s32 %v1161, 416
  %v1214 = vadd.s32 %v1161, 424
  %v1215 = vadd.s32 %v1161, 432
  %v1216 = vadd.s32 %v1161, 440
  %v1217 = vadd.s32 %v1161, 448
  %v1218 = vadd.s32 %v1161, 456
  %v1219 = vadd.s32 %v1161, 464
  %v1220 = vadd.s32 %v1161, 472
  %v1221 = vadd.s32 %v1161, 480
  %v1222 = vadd.s32 %v1161, 488
  %v1223 = vadd.s32 %v1161, 496
  %v1224 = vadd.s32 %v1161, 504
  %v1225 = vadd.s32 %v1161, 512
  %v1226 = vadd.s32 %v1161, 520
  %v1227 = vstv %s1159
  %v1228 = vadd.s32 %v1227, %v1161
  %v1229 = vadd.s32 %v1227, %v1162
  %v1230 = vadd.s32 %v1227, %v1163
  %v1231 = vadd.s32 %v1227, %v1164
  %v1232 = vadd.s32 %v1227, %v1165
  %v1233 = vadd.s32 %v1227, %v1166
  %v1234 = vadd.s32 %v1227, %v1167
  %v1235 = vadd.s32 %v1227, %v1168
  %v1236 = vadd.s32 %v1227, %v1169
  %v1237 = vadd.s32 %v1227, %v1170
  %v1238 = vadd.s32 %v1227, %v1171
  %v1239 = vadd.s32 %v1227, %v1172
  %v1240 = vadd.s32 %v1227, %v1173
  %v1241 = vadd.s32 %v1227, %v1174
  %v1242 = vadd.s32 %v1227, %v1175
  %v1243 = vadd.s32 %v1227, %v1176
  %v1244 = vadd.s32 %v1227, %v1177
  %v1245 = vadd.s32 %v1227, %v1178
  %v1246 = vadd.s32 %v1227, %v1179
  %v1247 = vadd.s32 %v1227, %v1180
  %v1248 = vadd.s32 %v1227, %v1181
  %v1249 = vadd.s32 %v1227, %v1182
  %v1250 = vadd.s32 %v1227, %v1183
  %v1251 = vadd.s32 %v1227, %v1184
  %v1252 = vadd.s32 %v1227, %v1185
  %v1253 = vadd.s32 %v1227, %v1186
  %v1254 = vadd.s32 %v1227, %v1187
  %v1255 = vadd.s32 %v1227, %v1188
  %v1256 = vadd.s32 %v1227, %v1189
  %v1257 = vadd.s32 %v1227, %v1190
  %v1258 = vadd.s32 %v1227, %v1191
  %v1259 = vadd.s32 %v1227, %v1192
  %v1260 = vadd.s32 %v1227, %v1193
  %v1261 = vadd.s32 %v1227, %v1194
  %v1262 = vadd.s32 %v1227, %v1195
  %v1263 = vadd.s32 %v1227, %v1196
  %v1264 = vadd.s32 %v1227, %v1197
  %v1265 = vadd.s32 %v1227, %v1198
  %v1266 = vadd.s32 %v1227, %v1199
  %v1267 = vadd.s32 %v1227, %v1200
  %v1268 = vadd.s32 %v1227, %v1201
  %v1269 = vadd.s32 %v1227, %v1202
  %v1270 = vadd.s32 %v1227, %v1203
  %v1271 = vadd.s32 %v1227, %v1204
  %v1272 = vadd.s32 %v1227, %v1205
  %v1273 = vadd.s32 %v1227, %v1206
  %v1274 = vadd.s32 %v1227, %v1207
  %v1275 = vadd.s32 %v1227, %v1208
  %v1276 = vadd.s32 %v1227, %v1209
  %v1277 = vadd.s32 %v1227, %v1210
  %v1278 = vadd.s32 %v1227, %v1211
  %v1279 = vadd.s32 %v1227, %v1212
  %v1280 = vadd.s32 %v1227, %v1213
  %v1281 = vadd.s32 %v1227, %v1214
  %v1282 = vadd.s32 %v1227, %v1215
  %v1283 = vadd.s32 %v1227, %v1216
  %v1284 = vadd.s32 %v1227, %v1217
  %v1285 = vadd.s32 %v1227, %v1218
  %v1286 = vadd.s32 %v1227, %v1219
  %v1287 = vadd.s32 %v1227, %v1220
  %v1288 = vadd.s32 %v1227, %v1221
  %v1289 = vadd.s32 %v1227, %v1222
  %v1290 = vadd.s32 %v1227, %v1223
  %v1291 = vadd.s32 %v1227, %v1224
  %v1292 = vadd.s32 %v1227, %v1225
  %v1293 = vadd.s32 %v1227, %v1226
  %vm1294 = vcmp.lt.s32.totalorder %v1228, 0
  %v1295 = vsub.s32 0, %v1228
  %v1296 = vsel %vm1294, %v1295, %v1228
  %v1297 = vshrl.u32 %v1296, 8
  %v1298 = vand.u32 %v1296, 255
  %v1299 = vsub.s32 0, %v1298
  %v1300 = vsel %vm1294, %v1299, %v1298
  %vm1301 = vcmp.lt.s32.totalorder %v1229, 0
  %v1302 = vsub.s32 0, %v1229
  %v1303 = vsel %vm1301, %v1302, %v1229
  %v1304 = vshrl.u32 %v1303, 8
  %v1305 = vand.u32 %v1303, 255
  %v1306 = vsub.s32 0, %v1305
  %v1307 = vsel %vm1301, %v1306, %v1305
  %vm1308 = vcmp.lt.s32.totalorder %v1230, 0
  %v1309 = vsub.s32 0, %v1230
  %v1310 = vsel %vm1308, %v1309, %v1230
  %v1311 = vshrl.u32 %v1310, 8
  %v1312 = vand.u32 %v1310, 255
  %v1313 = vsub.s32 0, %v1312
  %v1314 = vsel %vm1308, %v1313, %v1312
  %vm1315 = vcmp.lt.s32.totalorder %v1231, 0
  %v1316 = vsub.s32 0, %v1231
  %v1317 = vsel %vm1315, %v1316, %v1231
  %v1318 = vshrl.u32 %v1317, 8
  %v1319 = vand.u32 %v1317, 255
  %v1320 = vsub.s32 0, %v1319
  %v1321 = vsel %vm1315, %v1320, %v1319
  %vm1322 = vcmp.lt.s32.totalorder %v1232, 0
  %v1323 = vsub.s32 0, %v1232
  %v1324 = vsel %vm1322, %v1323, %v1232
  %v1325 = vshrl.u32 %v1324, 8
  %v1326 = vand.u32 %v1324, 255
  %v1327 = vsub.s32 0, %v1326
  %v1328 = vsel %vm1322, %v1327, %v1326
  %vm1329 = vcmp.lt.s32.totalorder %v1233, 0
  %v1330 = vsub.s32 0, %v1233
  %v1331 = vsel %vm1329, %v1330, %v1233
  %v1332 = vshrl.u32 %v1331, 8
  %v1333 = vand.u32 %v1331, 255
  %v1334 = vsub.s32 0, %v1333
  %v1335 = vsel %vm1329, %v1334, %v1333
  %vm1336 = vcmp.lt.s32.totalorder %v1234, 0
  %v1337 = vsub.s32 0, %v1234
  %v1338 = vsel %vm1336, %v1337, %v1234
  %v1339 = vshrl.u32 %v1338, 8
  %v1340 = vand.u32 %v1338, 255
  %v1341 = vsub.s32 0, %v1340
  %v1342 = vsel %vm1336, %v1341, %v1340
  %vm1343 = vcmp.lt.s32.totalorder %v1235, 0
  %v1344 = vsub.s32 0, %v1235
  %v1345 = vsel %vm1343, %v1344, %v1235
  %v1346 = vshrl.u32 %v1345, 8
  %v1347 = vand.u32 %v1345, 255
  %v1348 = vsub.s32 0, %v1347
  %v1349 = vsel %vm1343, %v1348, %v1347
  %vm1350 = vcmp.lt.s32.totalorder %v1236, 0
  %v1351 = vsub.s32 0, %v1236
  %v1352 = vsel %vm1350, %v1351, %v1236
  %v1353 = vshrl.u32 %v1352, 8
  %v1354 = vand.u32 %v1352, 255
  %v1355 = vsub.s32 0, %v1354
  %v1356 = vsel %vm1350, %v1355, %v1354
  %vm1357 = vcmp.lt.s32.totalorder %v1237, 0
  %v1358 = vsub.s32 0, %v1237
  %v1359 = vsel %vm1357, %v1358, %v1237
  %v1360 = vshrl.u32 %v1359, 8
  %v1361 = vand.u32 %v1359, 255
  %v1362 = vsub.s32 0, %v1361
  %v1363 = vsel %vm1357, %v1362, %v1361
  %vm1364 = vcmp.lt.s32.totalorder %v1238, 0
  %v1365 = vsub.s32 0, %v1238
  %v1366 = vsel %vm1364, %v1365, %v1238
  %v1367 = vshrl.u32 %v1366, 8
  %v1368 = vand.u32 %v1366, 255
  %v1369 = vsub.s32 0, %v1368
  %v1370 = vsel %vm1364, %v1369, %v1368
  %vm1371 = vcmp.lt.s32.totalorder %v1239, 0
  %v1372 = vsub.s32 0, %v1239
  %v1373 = vsel %vm1371, %v1372, %v1239
  %v1374 = vshrl.u32 %v1373, 8
  %v1375 = vand.u32 %v1373, 255
  %v1376 = vsub.s32 0, %v1375
  %v1377 = vsel %vm1371, %v1376, %v1375
  %vm1378 = vcmp.lt.s32.totalorder %v1240, 0
  %v1379 = vsub.s32 0, %v1240
  %v1380 = vsel %vm1378, %v1379, %v1240
  %v1381 = vshrl.u32 %v1380, 8
  %v1382 = vand.u32 %v1380, 255
  %v1383 = vsub.s32 0, %v1382
  %v1384 = vsel %vm1378, %v1383, %v1382
  %vm1385 = vcmp.lt.s32.totalorder %v1241, 0
  %v1386 = vsub.s32 0, %v1241
  %v1387 = vsel %vm1385, %v1386, %v1241
  %v1388 = vshrl.u32 %v1387, 8
  %v1389 = vand.u32 %v1387, 255
  %v1390 = vsub.s32 0, %v1389
  %v1391 = vsel %vm1385, %v1390, %v1389
  %vm1392 = vcmp.lt.s32.totalorder %v1242, 0
  %v1393 = vsub.s32 0, %v1242
  %v1394 = vsel %vm1392, %v1393, %v1242
  %v1395 = vshrl.u32 %v1394, 8
  %v1396 = vand.u32 %v1394, 255
  %v1397 = vsub.s32 0, %v1396
  %v1398 = vsel %vm1392, %v1397, %v1396
  %vm1399 = vcmp.lt.s32.totalorder %v1243, 0
  %v1400 = vsub.s32 0, %v1243
  %v1401 = vsel %vm1399, %v1400, %v1243
  %v1402 = vshrl.u32 %v1401, 8
  %v1403 = vand.u32 %v1401, 255
  %v1404 = vsub.s32 0, %v1403
  %v1405 = vsel %vm1399, %v1404, %v1403
  %vm1406 = vcmp.lt.s32.totalorder %v1244, 0
  %v1407 = vsub.s32 0, %v1244
  %v1408 = vsel %vm1406, %v1407, %v1244
  %v1409 = vshrl.u32 %v1408, 8
  %v1410 = vand.u32 %v1408, 255
  %v1411 = vsub.s32 0, %v1410
  %v1412 = vsel %vm1406, %v1411, %v1410
  %vm1413 = vcmp.lt.s32.totalorder %v1245, 0
  %v1414 = vsub.s32 0, %v1245
  %v1415 = vsel %vm1413, %v1414, %v1245
  %v1416 = vshrl.u32 %v1415, 8
  %v1417 = vand.u32 %v1415, 255
  %v1418 = vsub.s32 0, %v1417
  %v1419 = vsel %vm1413, %v1418, %v1417
  %vm1420 = vcmp.lt.s32.totalorder %v1246, 0
  %v1421 = vsub.s32 0, %v1246
  %v1422 = vsel %vm1420, %v1421, %v1246
  %v1423 = vshrl.u32 %v1422, 8
  %v1424 = vand.u32 %v1422, 255
  %v1425 = vsub.s32 0, %v1424
  %v1426 = vsel %vm1420, %v1425, %v1424
  %vm1427 = vcmp.lt.s32.totalorder %v1247, 0
  %v1428 = vsub.s32 0, %v1247
  %v1429 = vsel %vm1427, %v1428, %v1247
  %v1430 = vshrl.u32 %v1429, 8
  %v1431 = vand.u32 %v1429, 255
  %v1432 = vsub.s32 0, %v1431
  %v1433 = vsel %vm1427, %v1432, %v1431
  %vm1434 = vcmp.lt.s32.totalorder %v1248, 0
  %v1435 = vsub.s32 0, %v1248
  %v1436 = vsel %vm1434, %v1435, %v1248
  %v1437 = vshrl.u32 %v1436, 8
  %v1438 = vand.u32 %v1436, 255
  %v1439 = vsub.s32 0, %v1438
  %v1440 = vsel %vm1434, %v1439, %v1438
  %vm1441 = vcmp.lt.s32.totalorder %v1249, 0
  %v1442 = vsub.s32 0, %v1249
  %v1443 = vsel %vm1441, %v1442, %v1249
  %v1444 = vshrl.u32 %v1443, 8
  %v1445 = vand.u32 %v1443, 255
  %v1446 = vsub.s32 0, %v1445
  %v1447 = vsel %vm1441, %v1446, %v1445
  %vm1448 = vcmp.lt.s32.totalorder %v1250, 0
  %v1449 = vsub.s32 0, %v1250
  %v1450 = vsel %vm1448, %v1449, %v1250
  %v1451 = vshrl.u32 %v1450, 8
  %v1452 = vand.u32 %v1450, 255
  %v1453 = vsub.s32 0, %v1452
  %v1454 = vsel %vm1448, %v1453, %v1452
  %vm1455 = vcmp.lt.s32.totalorder %v1251, 0
  %v1456 = vsub.s32 0, %v1251
  %v1457 = vsel %vm1455, %v1456, %v1251
  %v1458 = vshrl.u32 %v1457, 8
  %v1459 = vand.u32 %v1457, 255
  %v1460 = vsub.s32 0, %v1459
  %v1461 = vsel %vm1455, %v1460, %v1459
  %vm1462 = vcmp.lt.s32.totalorder %v1252, 0
  %v1463 = vsub.s32 0, %v1252
  %v1464 = vsel %vm1462, %v1463, %v1252
  %v1465 = vshrl.u32 %v1464, 8
  %v1466 = vand.u32 %v1464, 255
  %v1467 = vsub.s32 0, %v1466
  %v1468 = vsel %vm1462, %v1467, %v1466
  %vm1469 = vcmp.lt.s32.totalorder %v1253, 0
  %v1470 = vsub.s32 0, %v1253
  %v1471 = vsel %vm1469, %v1470, %v1253
  %v1472 = vshrl.u32 %v1471, 8
  %v1473 = vand.u32 %v1471, 255
  %v1474 = vsub.s32 0, %v1473
  %v1475 = vsel %vm1469, %v1474, %v1473
  %vm1476 = vcmp.lt.s32.totalorder %v1254, 0
  %v1477 = vsub.s32 0, %v1254
  %v1478 = vsel %vm1476, %v1477, %v1254
  %v1479 = vshrl.u32 %v1478, 8
  %v1480 = vand.u32 %v1478, 255
  %v1481 = vsub.s32 0, %v1480
  %v1482 = vsel %vm1476, %v1481, %v1480
  %vm1483 = vcmp.lt.s32.totalorder %v1255, 0
  %v1484 = vsub.s32 0, %v1255
  %v1485 = vsel %vm1483, %v1484, %v1255
  %v1486 = vshrl.u32 %v1485, 8
  %v1487 = vand.u32 %v1485, 255
  %v1488 = vsub.s32 0, %v1487
  %v1489 = vsel %vm1483, %v1488, %v1487
  %vm1490 = vcmp.lt.s32.totalorder %v1256, 0
  %v1491 = vsub.s32 0, %v1256
  %v1492 = vsel %vm1490, %v1491, %v1256
  %v1493 = vshrl.u32 %v1492, 8
  %v1494 = vand.u32 %v1492, 255
  %v1495 = vsub.s32 0, %v1494
  %v1496 = vsel %vm1490, %v1495, %v1494
  %vm1497 = vcmp.lt.s32.totalorder %v1257, 0
  %v1498 = vsub.s32 0, %v1257
  %v1499 = vsel %vm1497, %v1498, %v1257
  %v1500 = vshrl.u32 %v1499, 8
  %v1501 = vand.u32 %v1499, 255
  %v1502 = vsub.s32 0, %v1501
  %v1503 = vsel %vm1497, %v1502, %v1501
  %vm1504 = vcmp.lt.s32.totalorder %v1258, 0
  %v1505 = vsub.s32 0, %v1258
  %v1506 = vsel %vm1504, %v1505, %v1258
  %v1507 = vshrl.u32 %v1506, 8
  %v1508 = vand.u32 %v1506, 255
  %v1509 = vsub.s32 0, %v1508
  %v1510 = vsel %vm1504, %v1509, %v1508
  %vm1511 = vcmp.lt.s32.totalorder %v1259, 0
  %v1512 = vsub.s32 0, %v1259
  %v1513 = vsel %vm1511, %v1512, %v1259
  %v1514 = vshrl.u32 %v1513, 8
  %v1515 = vand.u32 %v1513, 255
  %v1516 = vsub.s32 0, %v1515
  %v1517 = vsel %vm1511, %v1516, %v1515
  %vm1518 = vcmp.lt.s32.totalorder %v1260, 0
  %v1519 = vsub.s32 0, %v1260
  %v1520 = vsel %vm1518, %v1519, %v1260
  %v1521 = vshrl.u32 %v1520, 8
  %v1522 = vand.u32 %v1520, 255
  %v1523 = vsub.s32 0, %v1522
  %v1524 = vsel %vm1518, %v1523, %v1522
  %vm1525 = vcmp.lt.s32.totalorder %v1261, 0
  %v1526 = vsub.s32 0, %v1261
  %v1527 = vsel %vm1525, %v1526, %v1261
  %v1528 = vshrl.u32 %v1527, 8
  %v1529 = vand.u32 %v1527, 255
  %v1530 = vsub.s32 0, %v1529
  %v1531 = vsel %vm1525, %v1530, %v1529
  %vm1532 = vcmp.lt.s32.totalorder %v1262, 0
  %v1533 = vsub.s32 0, %v1262
  %v1534 = vsel %vm1532, %v1533, %v1262
  %v1535 = vshrl.u32 %v1534, 8
  %v1536 = vand.u32 %v1534, 255
  %v1537 = vsub.s32 0, %v1536
  %v1538 = vsel %vm1532, %v1537, %v1536
  %vm1539 = vcmp.lt.s32.totalorder %v1263, 0
  %v1540 = vsub.s32 0, %v1263
  %v1541 = vsel %vm1539, %v1540, %v1263
  %v1542 = vshrl.u32 %v1541, 8
  %v1543 = vand.u32 %v1541, 255
  %v1544 = vsub.s32 0, %v1543
  %v1545 = vsel %vm1539, %v1544, %v1543
  %vm1546 = vcmp.lt.s32.totalorder %v1264, 0
  %v1547 = vsub.s32 0, %v1264
  %v1548 = vsel %vm1546, %v1547, %v1264
  %v1549 = vshrl.u32 %v1548, 8
  %v1550 = vand.u32 %v1548, 255
  %v1551 = vsub.s32 0, %v1550
  %v1552 = vsel %vm1546, %v1551, %v1550
  %vm1553 = vcmp.lt.s32.totalorder %v1265, 0
  %v1554 = vsub.s32 0, %v1265
  %v1555 = vsel %vm1553, %v1554, %v1265
  %v1556 = vshrl.u32 %v1555, 8
  %v1557 = vand.u32 %v1555, 255
  %v1558 = vsub.s32 0, %v1557
  %v1559 = vsel %vm1553, %v1558, %v1557
  %vm1560 = vcmp.lt.s32.totalorder %v1266, 0
  %v1561 = vsub.s32 0, %v1266
  %v1562 = vsel %vm1560, %v1561, %v1266
  %v1563 = vshrl.u32 %v1562, 8
  %v1564 = vand.u32 %v1562, 255
  %v1565 = vsub.s32 0, %v1564
  %v1566 = vsel %vm1560, %v1565, %v1564
  %vm1567 = vcmp.lt.s32.totalorder %v1267, 0
  %v1568 = vsub.s32 0, %v1267
  %v1569 = vsel %vm1567, %v1568, %v1267
  %v1570 = vshrl.u32 %v1569, 8
  %v1571 = vand.u32 %v1569, 255
  %v1572 = vsub.s32 0, %v1571
  %v1573 = vsel %vm1567, %v1572, %v1571
  %vm1574 = vcmp.lt.s32.totalorder %v1268, 0
  %v1575 = vsub.s32 0, %v1268
  %v1576 = vsel %vm1574, %v1575, %v1268
  %v1577 = vshrl.u32 %v1576, 8
  %v1578 = vand.u32 %v1576, 255
  %v1579 = vsub.s32 0, %v1578
  %v1580 = vsel %vm1574, %v1579, %v1578
  %vm1581 = vcmp.lt.s32.totalorder %v1269, 0
  %v1582 = vsub.s32 0, %v1269
  %v1583 = vsel %vm1581, %v1582, %v1269
  %v1584 = vshrl.u32 %v1583, 8
  %v1585 = vand.u32 %v1583, 255
  %v1586 = vsub.s32 0, %v1585
  %v1587 = vsel %vm1581, %v1586, %v1585
  %vm1588 = vcmp.lt.s32.totalorder %v1270, 0
  %v1589 = vsub.s32 0, %v1270
  %v1590 = vsel %vm1588, %v1589, %v1270
  %v1591 = vshrl.u32 %v1590, 8
  %v1592 = vand.u32 %v1590, 255
  %v1593 = vsub.s32 0, %v1592
  %v1594 = vsel %vm1588, %v1593, %v1592
  %vm1595 = vcmp.lt.s32.totalorder %v1271, 0
  %v1596 = vsub.s32 0, %v1271
  %v1597 = vsel %vm1595, %v1596, %v1271
  %v1598 = vshrl.u32 %v1597, 8
  %v1599 = vand.u32 %v1597, 255
  %v1600 = vsub.s32 0, %v1599
  %v1601 = vsel %vm1595, %v1600, %v1599
  %vm1602 = vcmp.lt.s32.totalorder %v1272, 0
  %v1603 = vsub.s32 0, %v1272
  %v1604 = vsel %vm1602, %v1603, %v1272
  %v1605 = vshrl.u32 %v1604, 8
  %v1606 = vand.u32 %v1604, 255
  %v1607 = vsub.s32 0, %v1606
  %v1608 = vsel %vm1602, %v1607, %v1606
  %vm1609 = vcmp.lt.s32.totalorder %v1273, 0
  %v1610 = vsub.s32 0, %v1273
  %v1611 = vsel %vm1609, %v1610, %v1273
  %v1612 = vshrl.u32 %v1611, 8
  %v1613 = vand.u32 %v1611, 255
  %v1614 = vsub.s32 0, %v1613
  %v1615 = vsel %vm1609, %v1614, %v1613
  %vm1616 = vcmp.lt.s32.totalorder %v1274, 0
  %v1617 = vsub.s32 0, %v1274
  %v1618 = vsel %vm1616, %v1617, %v1274
  %v1619 = vshrl.u32 %v1618, 8
  %v1620 = vand.u32 %v1618, 255
  %v1621 = vsub.s32 0, %v1620
  %v1622 = vsel %vm1616, %v1621, %v1620
  %vm1623 = vcmp.lt.s32.totalorder %v1275, 0
  %v1624 = vsub.s32 0, %v1275
  %v1625 = vsel %vm1623, %v1624, %v1275
  %v1626 = vshrl.u32 %v1625, 8
  %v1627 = vand.u32 %v1625, 255
  %v1628 = vsub.s32 0, %v1627
  %v1629 = vsel %vm1623, %v1628, %v1627
  %vm1630 = vcmp.lt.s32.totalorder %v1276, 0
  %v1631 = vsub.s32 0, %v1276
  %v1632 = vsel %vm1630, %v1631, %v1276
  %v1633 = vshrl.u32 %v1632, 8
  %v1634 = vand.u32 %v1632, 255
  %v1635 = vsub.s32 0, %v1634
  %v1636 = vsel %vm1630, %v1635, %v1634
  %vm1637 = vcmp.lt.s32.totalorder %v1277, 0
  %v1638 = vsub.s32 0, %v1277
  %v1639 = vsel %vm1637, %v1638, %v1277
  %v1640 = vshrl.u32 %v1639, 8
  %v1641 = vand.u32 %v1639, 255
  %v1642 = vsub.s32 0, %v1641
  %v1643 = vsel %vm1637, %v1642, %v1641
  %vm1644 = vcmp.lt.s32.totalorder %v1278, 0
  %v1645 = vsub.s32 0, %v1278
  %v1646 = vsel %vm1644, %v1645, %v1278
  %v1647 = vshrl.u32 %v1646, 8
  %v1648 = vand.u32 %v1646, 255
  %v1649 = vsub.s32 0, %v1648
  %v1650 = vsel %vm1644, %v1649, %v1648
  %vm1651 = vcmp.lt.s32.totalorder %v1279, 0
  %v1652 = vsub.s32 0, %v1279
  %v1653 = vsel %vm1651, %v1652, %v1279
  %v1654 = vshrl.u32 %v1653, 8
  %v1655 = vand.u32 %v1653, 255
  %v1656 = vsub.s32 0, %v1655
  %v1657 = vsel %vm1651, %v1656, %v1655
  %vm1658 = vcmp.lt.s32.totalorder %v1280, 0
  %v1659 = vsub.s32 0, %v1280
  %v1660 = vsel %vm1658, %v1659, %v1280
  %v1661 = vshrl.u32 %v1660, 8
  %v1662 = vand.u32 %v1660, 255
  %v1663 = vsub.s32 0, %v1662
  %v1664 = vsel %vm1658, %v1663, %v1662
  %vm1665 = vcmp.lt.s32.totalorder %v1281, 0
  %v1666 = vsub.s32 0, %v1281
  %v1667 = vsel %vm1665, %v1666, %v1281
  %v1668 = vshrl.u32 %v1667, 8
  %v1669 = vand.u32 %v1667, 255
  %v1670 = vsub.s32 0, %v1669
  %v1671 = vsel %vm1665, %v1670, %v1669
  %vm1672 = vcmp.lt.s32.totalorder %v1282, 0
  %v1673 = vsub.s32 0, %v1282
  %v1674 = vsel %vm1672, %v1673, %v1282
  %v1675 = vshrl.u32 %v1674, 8
  %v1676 = vand.u32 %v1674, 255
  %v1677 = vsub.s32 0, %v1676
  %v1678 = vsel %vm1672, %v1677, %v1676
  %vm1679 = vcmp.lt.s32.totalorder %v1283, 0
  %v1680 = vsub.s32 0, %v1283
  %v1681 = vsel %vm1679, %v1680, %v1283
  %v1682 = vshrl.u32 %v1681, 8
  %v1683 = vand.u32 %v1681, 255
  %v1684 = vsub.s32 0, %v1683
  %v1685 = vsel %vm1679, %v1684, %v1683
  %vm1686 = vcmp.lt.s32.totalorder %v1284, 0
  %v1687 = vsub.s32 0, %v1284
  %v1688 = vsel %vm1686, %v1687, %v1284
  %v1689 = vshrl.u32 %v1688, 8
  %v1690 = vand.u32 %v1688, 255
  %v1691 = vsub.s32 0, %v1690
  %v1692 = vsel %vm1686, %v1691, %v1690
  %vm1693 = vcmp.lt.s32.totalorder %v1285, 0
  %v1694 = vsub.s32 0, %v1285
  %v1695 = vsel %vm1693, %v1694, %v1285
  %v1696 = vshrl.u32 %v1695, 8
  %v1697 = vand.u32 %v1695, 255
  %v1698 = vsub.s32 0, %v1697
  %v1699 = vsel %vm1693, %v1698, %v1697
  %vm1700 = vcmp.lt.s32.totalorder %v1286, 0
  %v1701 = vsub.s32 0, %v1286
  %v1702 = vsel %vm1700, %v1701, %v1286
  %v1703 = vshrl.u32 %v1702, 8
  %v1704 = vand.u32 %v1702, 255
  %v1705 = vsub.s32 0, %v1704
  %v1706 = vsel %vm1700, %v1705, %v1704
  %vm1707 = vcmp.lt.s32.totalorder %v1287, 0
  %v1708 = vsub.s32 0, %v1287
  %v1709 = vsel %vm1707, %v1708, %v1287
  %v1710 = vshrl.u32 %v1709, 8
  %v1711 = vand.u32 %v1709, 255
  %v1712 = vsub.s32 0, %v1711
  %v1713 = vsel %vm1707, %v1712, %v1711
  %vm1714 = vcmp.lt.s32.totalorder %v1288, 0
  %v1715 = vsub.s32 0, %v1288
  %v1716 = vsel %vm1714, %v1715, %v1288
  %v1717 = vshrl.u32 %v1716, 8
  %v1718 = vand.u32 %v1716, 255
  %v1719 = vsub.s32 0, %v1718
  %v1720 = vsel %vm1714, %v1719, %v1718
  %vm1721 = vcmp.lt.s32.totalorder %v1289, 0
  %v1722 = vsub.s32 0, %v1289
  %v1723 = vsel %vm1721, %v1722, %v1289
  %v1724 = vshrl.u32 %v1723, 8
  %v1725 = vand.u32 %v1723, 255
  %v1726 = vsub.s32 0, %v1725
  %v1727 = vsel %vm1721, %v1726, %v1725
  %vm1728 = vcmp.lt.s32.totalorder %v1290, 0
  %v1729 = vsub.s32 0, %v1290
  %v1730 = vsel %vm1728, %v1729, %v1290
  %v1731 = vshrl.u32 %v1730, 8
  %v1732 = vand.u32 %v1730, 255
  %v1733 = vsub.s32 0, %v1732
  %v1734 = vsel %vm1728, %v1733, %v1732
  %vm1735 = vcmp.lt.s32.totalorder %v1291, 0
  %v1736 = vsub.s32 0, %v1291
  %v1737 = vsel %vm1735, %v1736, %v1291
  %v1738 = vshrl.u32 %v1737, 8
  %v1739 = vand.u32 %v1737, 255
  %v1740 = vsub.s32 0, %v1739
  %v1741 = vsel %vm1735, %v1740, %v1739
  %vm1742 = vcmp.lt.s32.totalorder %v1292, 0
  %v1743 = vsub.s32 0, %v1292
  %v1744 = vsel %vm1742, %v1743, %v1292
  %v1745 = vshrl.u32 %v1744, 8
  %v1746 = vand.u32 %v1744, 255
  %v1747 = vsub.s32 0, %v1746
  %v1748 = vsel %vm1742, %v1747, %v1746
  %vm1749 = vcmp.lt.s32.totalorder %v1293, 0
  %v1750 = vsub.s32 0, %v1293
  %v1751 = vsel %vm1749, %v1750, %v1293
  %v1752 = vshrl.u32 %v1751, 8
  %v1753 = vand.u32 %v1751, 255
  %v1754 = vsub.s32 0, %v1753
  %v1755 = vsel %vm1749, %v1754, %v1753
  %vm1756 = vcmp.ne.s32.totalorder %v1300, 0
  %vm1757 = vcmp.ne.s32.totalorder %v1307, 0
  %vm1758 = vcmp.ne.s32.totalorder %v1314, 0
  %vm1759 = vcmp.ne.s32.totalorder %v1321, 0
  %vm1760 = vcmp.ne.s32.totalorder %v1328, 0
  %vm1761 = vcmp.ne.s32.totalorder %v1335, 0
  %vm1762 = vcmp.ne.s32.totalorder %v1342, 0
  %vm1763 = vcmp.ne.s32.totalorder %v1349, 0
  %vm1764 = vcmp.ne.s32.totalorder %v1356, 0
  %vm1765 = vcmp.ne.s32.totalorder %v1363, 0
  %vm1766 = vcmp.ne.s32.totalorder %v1370, 0
  %vm1767 = vcmp.ne.s32.totalorder %v1377, 0
  %vm1768 = vcmp.ne.s32.totalorder %v1384, 0
  %vm1769 = vcmp.ne.s32.totalorder %v1391, 0
  %vm1770 = vcmp.ne.s32.totalorder %v1398, 0
  %vm1771 = vcmp.ne.s32.totalorder %v1405, 0
  %vm1772 = vcmp.ne.s32.totalorder %v1412, 0
  %vm1773 = vcmp.ne.s32.totalorder %v1419, 0
  %vm1774 = vcmp.ne.s32.totalorder %v1426, 0
  %vm1775 = vcmp.ne.s32.totalorder %v1433, 0
  %vm1776 = vcmp.ne.s32.totalorder %v1440, 0
  %vm1777 = vcmp.ne.s32.totalorder %v1447, 0
  %vm1778 = vcmp.ne.s32.totalorder %v1454, 0
  %vm1779 = vcmp.ne.s32.totalorder %v1461, 0
  %vm1780 = vcmp.ne.s32.totalorder %v1468, 0
  %vm1781 = vcmp.ne.s32.totalorder %v1475, 0
  %vm1782 = vcmp.ne.s32.totalorder %v1482, 0
  %vm1783 = vcmp.ne.s32.totalorder %v1489, 0
  %vm1784 = vcmp.ne.s32.totalorder %v1496, 0
  %vm1785 = vcmp.ne.s32.totalorder %v1503, 0
  %vm1786 = vcmp.ne.s32.totalorder %v1510, 0
  %vm1787 = vcmp.ne.s32.totalorder %v1517, 0
  %vm1788 = vcmp.ne.s32.totalorder %v1524, 0
  %vm1789 = vcmp.ne.s32.totalorder %v1531, 0
  %vm1790 = vcmp.ne.s32.totalorder %v1538, 0
  %vm1791 = vcmp.ne.s32.totalorder %v1545, 0
  %vm1792 = vcmp.ne.s32.totalorder %v1552, 0
  %vm1793 = vcmp.ne.s32.totalorder %v1559, 0
  %vm1794 = vcmp.ne.s32.totalorder %v1566, 0
  %vm1795 = vcmp.ne.s32.totalorder %v1573, 0
  %vm1796 = vcmp.ne.s32.totalorder %v1580, 0
  %vm1797 = vcmp.ne.s32.totalorder %v1587, 0
  %vm1798 = vcmp.ne.s32.totalorder %v1594, 0
  %vm1799 = vcmp.ne.s32.totalorder %v1601, 0
  %vm1800 = vcmp.ne.s32.totalorder %v1608, 0
  %vm1801 = vcmp.ne.s32.totalorder %v1615, 0
  %vm1802 = vcmp.ne.s32.totalorder %v1622, 0
  %vm1803 = vcmp.ne.s32.totalorder %v1629, 0
  %vm1804 = vcmp.ne.s32.totalorder %v1636, 0
  %vm1805 = vcmp.ne.s32.totalorder %v1643, 0
  %vm1806 = vcmp.ne.s32.totalorder %v1650, 0
  %vm1807 = vcmp.ne.s32.totalorder %v1657, 0
  %vm1808 = vcmp.ne.s32.totalorder %v1664, 0
  %vm1809 = vcmp.ne.s32.totalorder %v1671, 0
  %vm1810 = vcmp.ne.s32.totalorder %v1678, 0
  %vm1811 = vcmp.ne.s32.totalorder %v1685, 0
  %vm1812 = vcmp.ne.s32.totalorder %v1692, 0
  %vm1813 = vcmp.ne.s32.totalorder %v1699, 0
  %vm1814 = vcmp.ne.s32.totalorder %v1706, 0
  %vm1815 = vcmp.ne.s32.totalorder %v1713, 0
  %vm1816 = vcmp.ne.s32.totalorder %v1720, 0
  %vm1817 = vcmp.ne.s32.totalorder %v1727, 0
  %vm1818 = vcmp.ne.s32.totalorder %v1734, 0
  %vm1819 = vcmp.ne.s32.totalorder %v1741, 0
  %vm1820 = vcmp.ne.s32.totalorder %v1748, 0
  %vm1821 = vcmp.ne.s32.totalorder %v1755, 0
  %vm1822 = vcmp.lt.s32.totalorder %v1300, 0
  %vm1823 = vcmp.lt.s32.totalorder %v1307, 0
  %vm1824 = vcmp.lt.s32.totalorder %v1314, 0
  %vm1825 = vcmp.lt.s32.totalorder %v1321, 0
  %vm1826 = vcmp.lt.s32.totalorder %v1328, 0
  %vm1827 = vcmp.lt.s32.totalorder %v1335, 0
  %vm1828 = vcmp.lt.s32.totalorder %v1342, 0
  %vm1829 = vcmp.lt.s32.totalorder %v1349, 0
  %vm1830 = vcmp.lt.s32.totalorder %v1356, 0
  %vm1831 = vcmp.lt.s32.totalorder %v1363, 0
  %vm1832 = vcmp.lt.s32.totalorder %v1370, 0
  %vm1833 = vcmp.lt.s32.totalorder %v1377, 0
  %vm1834 = vcmp.lt.s32.totalorder %v1384, 0
  %vm1835 = vcmp.lt.s32.totalorder %v1391, 0
  %vm1836 = vcmp.lt.s32.totalorder %v1398, 0
  %vm1837 = vcmp.lt.s32.totalorder %v1405, 0
  %vm1838 = vcmp.lt.s32.totalorder %v1412, 0
  %vm1839 = vcmp.lt.s32.totalorder %v1419, 0
  %vm1840 = vcmp.lt.s32.totalorder %v1426, 0
  %vm1841 = vcmp.lt.s32.totalorder %v1433, 0
  %vm1842 = vcmp.lt.s32.totalorder %v1440, 0
  %vm1843 = vcmp.lt.s32.totalorder %v1447, 0
  %vm1844 = vcmp.lt.s32.totalorder %v1454, 0
  %vm1845 = vcmp.lt.s32.totalorder %v1461, 0
  %vm1846 = vcmp.lt.s32.totalorder %v1468, 0
  %vm1847 = vcmp.lt.s32.totalorder %v1475, 0
  %vm1848 = vcmp.lt.s32.totalorder %v1482, 0
  %vm1849 = vcmp.lt.s32.totalorder %v1489, 0
  %vm1850 = vcmp.lt.s32.totalorder %v1496, 0
  %vm1851 = vcmp.lt.s32.totalorder %v1503, 0
  %vm1852 = vcmp.lt.s32.totalorder %v1510, 0
  %vm1853 = vcmp.lt.s32.totalorder %v1517, 0
  %vm1854 = vcmp.lt.s32.totalorder %v1524, 0
  %vm1855 = vcmp.lt.s32.totalorder %v1531, 0
  %vm1856 = vcmp.lt.s32.totalorder %v1538, 0
  %vm1857 = vcmp.lt.s32.totalorder %v1545, 0
  %vm1858 = vcmp.lt.s32.totalorder %v1552, 0
  %vm1859 = vcmp.lt.s32.totalorder %v1559, 0
  %vm1860 = vcmp.lt.s32.totalorder %v1566, 0
  %vm1861 = vcmp.lt.s32.totalorder %v1573, 0
  %vm1862 = vcmp.lt.s32.totalorder %v1580, 0
  %vm1863 = vcmp.lt.s32.totalorder %v1587, 0
  %vm1864 = vcmp.lt.s32.totalorder %v1594, 0
  %vm1865 = vcmp.lt.s32.totalorder %v1601, 0
  %vm1866 = vcmp.lt.s32.totalorder %v1608, 0
  %vm1867 = vcmp.lt.s32.totalorder %v1615, 0
  %vm1868 = vcmp.lt.s32.totalorder %v1622, 0
  %vm1869 = vcmp.lt.s32.totalorder %v1629, 0
  %vm1870 = vcmp.lt.s32.totalorder %v1636, 0
  %vm1871 = vcmp.lt.s32.totalorder %v1643, 0
  %vm1872 = vcmp.lt.s32.totalorder %v1650, 0
  %vm1873 = vcmp.lt.s32.totalorder %v1657, 0
  %vm1874 = vcmp.lt.s32.totalorder %v1664, 0
  %vm1875 = vcmp.lt.s32.totalorder %v1671, 0
  %vm1876 = vcmp.lt.s32.totalorder %v1678, 0
  %vm1877 = vcmp.lt.s32.totalorder %v1685, 0
  %vm1878 = vcmp.lt.s32.totalorder %v1692, 0
  %vm1879 = vcmp.lt.s32.totalorder %v1699, 0
  %vm1880 = vcmp.lt.s32.totalorder %v1706, 0
  %vm1881 = vcmp.lt.s32.totalorder %v1713, 0
  %vm1882 = vcmp.lt.s32.totalorder %v1720, 0
  %vm1883 = vcmp.lt.s32.totalorder %v1727, 0
  %vm1884 = vcmp.lt.s32.totalorder %v1734, 0
  %vm1885 = vcmp.lt.s32.totalorder %v1741, 0
  %vm1886 = vcmp.lt.s32.totalorder %v1748, 0
  %vm1887 = vcmp.lt.s32.totalorder %v1755, 0
  %vm1888 = vmand %vm1822, %vm1756
  %vm1889 = vmand %vm1823, %vm1757
  %vm1890 = vmand %vm1824, %vm1758
  %vm1891 = vmand %vm1825, %vm1759
  %vm1892 = vmand %vm1826, %vm1760
  %vm1893 = vmand %vm1827, %vm1761
  %vm1894 = vmand %vm1828, %vm1762
  %vm1895 = vmand %vm1829, %vm1763
  %vm1896 = vmand %vm1830, %vm1764
  %vm1897 = vmand %vm1831, %vm1765
  %vm1898 = vmand %vm1832, %vm1766
  %vm1899 = vmand %vm1833, %vm1767
  %vm1900 = vmand %vm1834, %vm1768
  %vm1901 = vmand %vm1835, %vm1769
  %vm1902 = vmand %vm1836, %vm1770
  %vm1903 = vmand %vm1837, %vm1771
  %vm1904 = vmand %vm1838, %vm1772
  %vm1905 = vmand %vm1839, %vm1773
  %vm1906 = vmand %vm1840, %vm1774
  %vm1907 = vmand %vm1841, %vm1775
  %vm1908 = vmand %vm1842, %vm1776
  %vm1909 = vmand %vm1843, %vm1777
  %vm1910 = vmand %vm1844, %vm1778
  %vm1911 = vmand %vm1845, %vm1779
  %vm1912 = vmand %vm1846, %vm1780
  %vm1913 = vmand %vm1847, %vm1781
  %vm1914 = vmand %vm1848, %vm1782
  %vm1915 = vmand %vm1849, %vm1783
  %vm1916 = vmand %vm1850, %vm1784
  %vm1917 = vmand %vm1851, %vm1785
  %vm1918 = vmand %vm1852, %vm1786
  %vm1919 = vmand %vm1853, %vm1787
  %vm1920 = vmand %vm1854, %vm1788
  %vm1921 = vmand %vm1855, %vm1789
  %vm1922 = vmand %vm1856, %vm1790
  %vm1923 = vmand %vm1857, %vm1791
  %vm1924 = vmand %vm1858, %vm1792
  %vm1925 = vmand %vm1859, %vm1793
  %vm1926 = vmand %vm1860, %vm1794
  %vm1927 = vmand %vm1861, %vm1795
  %vm1928 = vmand %vm1862, %vm1796
  %vm1929 = vmand %vm1863, %vm1797
  %vm1930 = vmand %vm1864, %vm1798
  %vm1931 = vmand %vm1865, %vm1799
  %vm1932 = vmand %vm1866, %vm1800
  %vm1933 = vmand %vm1867, %vm1801
  %vm1934 = vmand %vm1868, %vm1802
  %vm1935 = vmand %vm1869, %vm1803
  %vm1936 = vmand %vm1870, %vm1804
  %vm1937 = vmand %vm1871, %vm1805
  %vm1938 = vmand %vm1872, %vm1806
  %vm1939 = vmand %vm1873, %vm1807
  %vm1940 = vmand %vm1874, %vm1808
  %vm1941 = vmand %vm1875, %vm1809
  %vm1942 = vmand %vm1876, %vm1810
  %vm1943 = vmand %vm1877, %vm1811
  %vm1944 = vmand %vm1878, %vm1812
  %vm1945 = vmand %vm1879, %vm1813
  %vm1946 = vmand %vm1880, %vm1814
  %vm1947 = vmand %vm1881, %vm1815
  %vm1948 = vmand %vm1882, %vm1816
  %vm1949 = vmand %vm1883, %vm1817
  %vm1950 = vmand %vm1884, %vm1818
  %vm1951 = vmand %vm1885, %vm1819
  %vm1952 = vmand %vm1886, %vm1820
  %vm1953 = vmand %vm1887, %vm1821
  %v1954 = vadd.s32 %v1300, 256
  %v1955 = vadd.s32 %v1307, 256
  %v1956 = vadd.s32 %v1314, 256
  %v1957 = vadd.s32 %v1321, 256
  %v1958 = vadd.s32 %v1328, 256
  %v1959 = vadd.s32 %v1335, 256
  %v1960 = vadd.s32 %v1342, 256
  %v1961 = vadd.s32 %v1349, 256
  %v1962 = vadd.s32 %v1356, 256
  %v1963 = vadd.s32 %v1363, 256
  %v1964 = vadd.s32 %v1370, 256
  %v1965 = vadd.s32 %v1377, 256
  %v1966 = vadd.s32 %v1384, 256
  %v1967 = vadd.s32 %v1391, 256
  %v1968 = vadd.s32 %v1398, 256
  %v1969 = vadd.s32 %v1405, 256
  %v1970 = vadd.s32 %v1412, 256
  %v1971 = vadd.s32 %v1419, 256
  %v1972 = vadd.s32 %v1426, 256
  %v1973 = vadd.s32 %v1433, 256
  %v1974 = vadd.s32 %v1440, 256
  %v1975 = vadd.s32 %v1447, 256
  %v1976 = vadd.s32 %v1454, 256
  %v1977 = vadd.s32 %v1461, 256
  %v1978 = vadd.s32 %v1468, 256
  %v1979 = vadd.s32 %v1475, 256
  %v1980 = vadd.s32 %v1482, 256
  %v1981 = vadd.s32 %v1489, 256
  %v1982 = vadd.s32 %v1496, 256
  %v1983 = vadd.s32 %v1503, 256
  %v1984 = vadd.s32 %v1510, 256
  %v1985 = vadd.s32 %v1517, 256
  %v1986 = vadd.s32 %v1524, 256
  %v1987 = vadd.s32 %v1531, 256
  %v1988 = vadd.s32 %v1538, 256
  %v1989 = vadd.s32 %v1545, 256
  %v1990 = vadd.s32 %v1552, 256
  %v1991 = vadd.s32 %v1559, 256
  %v1992 = vadd.s32 %v1566, 256
  %v1993 = vadd.s32 %v1573, 256
  %v1994 = vadd.s32 %v1580, 256
  %v1995 = vadd.s32 %v1587, 256
  %v1996 = vadd.s32 %v1594, 256
  %v1997 = vadd.s32 %v1601, 256
  %v1998 = vadd.s32 %v1608, 256
  %v1999 = vadd.s32 %v1615, 256
  %v2000 = vadd.s32 %v1622, 256
  %v2001 = vadd.s32 %v1629, 256
  %v2002 = vadd.s32 %v1636, 256
  %v2003 = vadd.s32 %v1643, 256
  %v2004 = vadd.s32 %v1650, 256
  %v2005 = vadd.s32 %v1657, 256
  %v2006 = vadd.s32 %v1664, 256
  %v2007 = vadd.s32 %v1671, 256
  %v2008 = vadd.s32 %v1678, 256
  %v2009 = vadd.s32 %v1685, 256
  %v2010 = vadd.s32 %v1692, 256
  %v2011 = vadd.s32 %v1699, 256
  %v2012 = vadd.s32 %v1706, 256
  %v2013 = vadd.s32 %v1713, 256
  %v2014 = vadd.s32 %v1720, 256
  %v2015 = vadd.s32 %v1727, 256
  %v2016 = vadd.s32 %v1734, 256
  %v2017 = vadd.s32 %v1741, 256
  %v2018 = vadd.s32 %v1748, 256
  %v2019 = vadd.s32 %v1755, 256
  %v2020 = vsel %vm1888, %v1954, %v1300
  %v2021 = vsel %vm1889, %v1955, %v1307
  %v2022 = vsel %vm1890, %v1956, %v1314
  %v2023 = vsel %vm1891, %v1957, %v1321
  %v2024 = vsel %vm1892, %v1958, %v1328
  %v2025 = vsel %vm1893, %v1959, %v1335
  %v2026 = vsel %vm1894, %v1960, %v1342
  %v2027 = vsel %vm1895, %v1961, %v1349
  %v2028 = vsel %vm1896, %v1962, %v1356
  %v2029 = vsel %vm1897, %v1963, %v1363
  %v2030 = vsel %vm1898, %v1964, %v1370
  %v2031 = vsel %vm1899, %v1965, %v1377
  %v2032 = vsel %vm1900, %v1966, %v1384
  %v2033 = vsel %vm1901, %v1967, %v1391
  %v2034 = vsel %vm1902, %v1968, %v1398
  %v2035 = vsel %vm1903, %v1969, %v1405
  %v2036 = vsel %vm1904, %v1970, %v1412
  %v2037 = vsel %vm1905, %v1971, %v1419
  %v2038 = vsel %vm1906, %v1972, %v1426
  %v2039 = vsel %vm1907, %v1973, %v1433
  %v2040 = vsel %vm1908, %v1974, %v1440
  %v2041 = vsel %vm1909, %v1975, %v1447
  %v2042 = vsel %vm1910, %v1976, %v1454
  %v2043 = vsel %vm1911, %v1977, %v1461
  %v2044 = vsel %vm1912, %v1978, %v1468
  %v2045 = vsel %vm1913, %v1979, %v1475
  %v2046 = vsel %vm1914, %v1980, %v1482
  %v2047 = vsel %vm1915, %v1981, %v1489
  %v2048 = vsel %vm1916, %v1982, %v1496
  %v2049 = vsel %vm1917, %v1983, %v1503
  %v2050 = vsel %vm1918, %v1984, %v1510
  %v2051 = vsel %vm1919, %v1985, %v1517
  %v2052 = vsel %vm1920, %v1986, %v1524
  %v2053 = vsel %vm1921, %v1987, %v1531
  %v2054 = vsel %vm1922, %v1988, %v1538
  %v2055 = vsel %vm1923, %v1989, %v1545
  %v2056 = vsel %vm1924, %v1990, %v1552
  %v2057 = vsel %vm1925, %v1991, %v1559
  %v2058 = vsel %vm1926, %v1992, %v1566
  %v2059 = vsel %vm1927, %v1993, %v1573
  %v2060 = vsel %vm1928, %v1994, %v1580
  %v2061 = vsel %vm1929, %v1995, %v1587
  %v2062 = vsel %vm1930, %v1996, %v1594
  %v2063 = vsel %vm1931, %v1997, %v1601
  %v2064 = vsel %vm1932, %v1998, %v1608
  %v2065 = vsel %vm1933, %v1999, %v1615
  %v2066 = vsel %vm1934, %v2000, %v1622
  %v2067 = vsel %vm1935, %v2001, %v1629
  %v2068 = vsel %vm1936, %v2002, %v1636
  %v2069 = vsel %vm1937, %v2003, %v1643
  %v2070 = vsel %vm1938, %v2004, %v1650
  %v2071 = vsel %vm1939, %v2005, %v1657
  %v2072 = vsel %vm1940, %v2006, %v1664
  %v2073 = vsel %vm1941, %v2007, %v1671
  %v2074 = vsel %vm1942, %v2008, %v1678
  %v2075 = vsel %vm1943, %v2009, %v1685
  %v2076 = vsel %vm1944, %v2010, %v1692
  %v2077 = vsel %vm1945, %v2011, %v1699
  %v2078 = vsel %vm1946, %v2012, %v1706
  %v2079 = vsel %vm1947, %v2013, %v1713
  %v2080 = vsel %vm1948, %v2014, %v1720
  %v2081 = vsel %vm1949, %v2015, %v1727
  %v2082 = vsel %vm1950, %v2016, %v1734
  %v2083 = vsel %vm1951, %v2017, %v1741
  %v2084 = vsel %vm1952, %v2018, %v1748
  %v2085 = vsel %vm1953, %v2019, %v1755
  %vm2086 = vcmp.lt.s32.totalorder %v1228, 0
  %v2087 = vsub.s32 0, %v1228
  %v2088 = vsel %vm2086, %v2087, %v1228
  %v2089 = vshrl.u32 %v2088, 4
  %v2090 = vand.u32 %v2088, 15
  %v2091 = vsub.s32 0, %v2090
  %v2092 = vsel %vm2086, %v2091, %v2090
  %vm2093 = vcmp.lt.s32.totalorder %v1229, 0
  %v2094 = vsub.s32 0, %v1229
  %v2095 = vsel %vm2093, %v2094, %v1229
  %v2096 = vshrl.u32 %v2095, 4
  %v2097 = vand.u32 %v2095, 15
  %v2098 = vsub.s32 0, %v2097
  %v2099 = vsel %vm2093, %v2098, %v2097
  %vm2100 = vcmp.lt.s32.totalorder %v1230, 0
  %v2101 = vsub.s32 0, %v1230
  %v2102 = vsel %vm2100, %v2101, %v1230
  %v2103 = vshrl.u32 %v2102, 4
  %v2104 = vand.u32 %v2102, 15
  %v2105 = vsub.s32 0, %v2104
  %v2106 = vsel %vm2100, %v2105, %v2104
  %vm2107 = vcmp.lt.s32.totalorder %v1231, 0
  %v2108 = vsub.s32 0, %v1231
  %v2109 = vsel %vm2107, %v2108, %v1231
  %v2110 = vshrl.u32 %v2109, 4
  %v2111 = vand.u32 %v2109, 15
  %v2112 = vsub.s32 0, %v2111
  %v2113 = vsel %vm2107, %v2112, %v2111
  %vm2114 = vcmp.lt.s32.totalorder %v1232, 0
  %v2115 = vsub.s32 0, %v1232
  %v2116 = vsel %vm2114, %v2115, %v1232
  %v2117 = vshrl.u32 %v2116, 4
  %v2118 = vand.u32 %v2116, 15
  %v2119 = vsub.s32 0, %v2118
  %v2120 = vsel %vm2114, %v2119, %v2118
  %vm2121 = vcmp.lt.s32.totalorder %v1233, 0
  %v2122 = vsub.s32 0, %v1233
  %v2123 = vsel %vm2121, %v2122, %v1233
  %v2124 = vshrl.u32 %v2123, 4
  %v2125 = vand.u32 %v2123, 15
  %v2126 = vsub.s32 0, %v2125
  %v2127 = vsel %vm2121, %v2126, %v2125
  %vm2128 = vcmp.lt.s32.totalorder %v1234, 0
  %v2129 = vsub.s32 0, %v1234
  %v2130 = vsel %vm2128, %v2129, %v1234
  %v2131 = vshrl.u32 %v2130, 4
  %v2132 = vand.u32 %v2130, 15
  %v2133 = vsub.s32 0, %v2132
  %v2134 = vsel %vm2128, %v2133, %v2132
  %vm2135 = vcmp.lt.s32.totalorder %v1235, 0
  %v2136 = vsub.s32 0, %v1235
  %v2137 = vsel %vm2135, %v2136, %v1235
  %v2138 = vshrl.u32 %v2137, 4
  %v2139 = vand.u32 %v2137, 15
  %v2140 = vsub.s32 0, %v2139
  %v2141 = vsel %vm2135, %v2140, %v2139
  %vm2142 = vcmp.lt.s32.totalorder %v1236, 0
  %v2143 = vsub.s32 0, %v1236
  %v2144 = vsel %vm2142, %v2143, %v1236
  %v2145 = vshrl.u32 %v2144, 4
  %v2146 = vand.u32 %v2144, 15
  %v2147 = vsub.s32 0, %v2146
  %v2148 = vsel %vm2142, %v2147, %v2146
  %vm2149 = vcmp.lt.s32.totalorder %v1237, 0
  %v2150 = vsub.s32 0, %v1237
  %v2151 = vsel %vm2149, %v2150, %v1237
  %v2152 = vshrl.u32 %v2151, 4
  %v2153 = vand.u32 %v2151, 15
  %v2154 = vsub.s32 0, %v2153
  %v2155 = vsel %vm2149, %v2154, %v2153
  %vm2156 = vcmp.lt.s32.totalorder %v1238, 0
  %v2157 = vsub.s32 0, %v1238
  %v2158 = vsel %vm2156, %v2157, %v1238
  %v2159 = vshrl.u32 %v2158, 4
  %v2160 = vand.u32 %v2158, 15
  %v2161 = vsub.s32 0, %v2160
  %v2162 = vsel %vm2156, %v2161, %v2160
  %vm2163 = vcmp.lt.s32.totalorder %v1239, 0
  %v2164 = vsub.s32 0, %v1239
  %v2165 = vsel %vm2163, %v2164, %v1239
  %v2166 = vshrl.u32 %v2165, 4
  %v2167 = vand.u32 %v2165, 15
  %v2168 = vsub.s32 0, %v2167
  %v2169 = vsel %vm2163, %v2168, %v2167
  %vm2170 = vcmp.lt.s32.totalorder %v1240, 0
  %v2171 = vsub.s32 0, %v1240
  %v2172 = vsel %vm2170, %v2171, %v1240
  %v2173 = vshrl.u32 %v2172, 4
  %v2174 = vand.u32 %v2172, 15
  %v2175 = vsub.s32 0, %v2174
  %v2176 = vsel %vm2170, %v2175, %v2174
  %vm2177 = vcmp.lt.s32.totalorder %v1241, 0
  %v2178 = vsub.s32 0, %v1241
  %v2179 = vsel %vm2177, %v2178, %v1241
  %v2180 = vshrl.u32 %v2179, 4
  %v2181 = vand.u32 %v2179, 15
  %v2182 = vsub.s32 0, %v2181
  %v2183 = vsel %vm2177, %v2182, %v2181
  %vm2184 = vcmp.lt.s32.totalorder %v1242, 0
  %v2185 = vsub.s32 0, %v1242
  %v2186 = vsel %vm2184, %v2185, %v1242
  %v2187 = vshrl.u32 %v2186, 4
  %v2188 = vand.u32 %v2186, 15
  %v2189 = vsub.s32 0, %v2188
  %v2190 = vsel %vm2184, %v2189, %v2188
  %vm2191 = vcmp.lt.s32.totalorder %v1243, 0
  %v2192 = vsub.s32 0, %v1243
  %v2193 = vsel %vm2191, %v2192, %v1243
  %v2194 = vshrl.u32 %v2193, 4
  %v2195 = vand.u32 %v2193, 15
  %v2196 = vsub.s32 0, %v2195
  %v2197 = vsel %vm2191, %v2196, %v2195
  %vm2198 = vcmp.lt.s32.totalorder %v1244, 0
  %v2199 = vsub.s32 0, %v1244
  %v2200 = vsel %vm2198, %v2199, %v1244
  %v2201 = vshrl.u32 %v2200, 4
  %v2202 = vand.u32 %v2200, 15
  %v2203 = vsub.s32 0, %v2202
  %v2204 = vsel %vm2198, %v2203, %v2202
  %vm2205 = vcmp.lt.s32.totalorder %v1245, 0
  %v2206 = vsub.s32 0, %v1245
  %v2207 = vsel %vm2205, %v2206, %v1245
  %v2208 = vshrl.u32 %v2207, 4
  %v2209 = vand.u32 %v2207, 15
  %v2210 = vsub.s32 0, %v2209
  %v2211 = vsel %vm2205, %v2210, %v2209
  %vm2212 = vcmp.lt.s32.totalorder %v1246, 0
  %v2213 = vsub.s32 0, %v1246
  %v2214 = vsel %vm2212, %v2213, %v1246
  %v2215 = vshrl.u32 %v2214, 4
  %v2216 = vand.u32 %v2214, 15
  %v2217 = vsub.s32 0, %v2216
  %v2218 = vsel %vm2212, %v2217, %v2216
  %vm2219 = vcmp.lt.s32.totalorder %v1247, 0
  %v2220 = vsub.s32 0, %v1247
  %v2221 = vsel %vm2219, %v2220, %v1247
  %v2222 = vshrl.u32 %v2221, 4
  %v2223 = vand.u32 %v2221, 15
  %v2224 = vsub.s32 0, %v2223
  %v2225 = vsel %vm2219, %v2224, %v2223
  %vm2226 = vcmp.lt.s32.totalorder %v1248, 0
  %v2227 = vsub.s32 0, %v1248
  %v2228 = vsel %vm2226, %v2227, %v1248
  %v2229 = vshrl.u32 %v2228, 4
  %v2230 = vand.u32 %v2228, 15
  %v2231 = vsub.s32 0, %v2230
  %v2232 = vsel %vm2226, %v2231, %v2230
  %vm2233 = vcmp.lt.s32.totalorder %v1249, 0
  %v2234 = vsub.s32 0, %v1249
  %v2235 = vsel %vm2233, %v2234, %v1249
  %v2236 = vshrl.u32 %v2235, 4
  %v2237 = vand.u32 %v2235, 15
  %v2238 = vsub.s32 0, %v2237
  %v2239 = vsel %vm2233, %v2238, %v2237
  %vm2240 = vcmp.lt.s32.totalorder %v1250, 0
  %v2241 = vsub.s32 0, %v1250
  %v2242 = vsel %vm2240, %v2241, %v1250
  %v2243 = vshrl.u32 %v2242, 4
  %v2244 = vand.u32 %v2242, 15
  %v2245 = vsub.s32 0, %v2244
  %v2246 = vsel %vm2240, %v2245, %v2244
  %vm2247 = vcmp.lt.s32.totalorder %v1251, 0
  %v2248 = vsub.s32 0, %v1251
  %v2249 = vsel %vm2247, %v2248, %v1251
  %v2250 = vshrl.u32 %v2249, 4
  %v2251 = vand.u32 %v2249, 15
  %v2252 = vsub.s32 0, %v2251
  %v2253 = vsel %vm2247, %v2252, %v2251
  %vm2254 = vcmp.lt.s32.totalorder %v1252, 0
  %v2255 = vsub.s32 0, %v1252
  %v2256 = vsel %vm2254, %v2255, %v1252
  %v2257 = vshrl.u32 %v2256, 4
  %v2258 = vand.u32 %v2256, 15
  %v2259 = vsub.s32 0, %v2258
  %v2260 = vsel %vm2254, %v2259, %v2258
  %vm2261 = vcmp.lt.s32.totalorder %v1253, 0
  %v2262 = vsub.s32 0, %v1253
  %v2263 = vsel %vm2261, %v2262, %v1253
  %v2264 = vshrl.u32 %v2263, 4
  %v2265 = vand.u32 %v2263, 15
  %v2266 = vsub.s32 0, %v2265
  %v2267 = vsel %vm2261, %v2266, %v2265
  %vm2268 = vcmp.lt.s32.totalorder %v1254, 0
  %v2269 = vsub.s32 0, %v1254
  %v2270 = vsel %vm2268, %v2269, %v1254
  %v2271 = vshrl.u32 %v2270, 4
  %v2272 = vand.u32 %v2270, 15
  %v2273 = vsub.s32 0, %v2272
  %v2274 = vsel %vm2268, %v2273, %v2272
  %vm2275 = vcmp.lt.s32.totalorder %v1255, 0
  %v2276 = vsub.s32 0, %v1255
  %v2277 = vsel %vm2275, %v2276, %v1255
  %v2278 = vshrl.u32 %v2277, 4
  %v2279 = vand.u32 %v2277, 15
  %v2280 = vsub.s32 0, %v2279
  %v2281 = vsel %vm2275, %v2280, %v2279
  %vm2282 = vcmp.lt.s32.totalorder %v1256, 0
  %v2283 = vsub.s32 0, %v1256
  %v2284 = vsel %vm2282, %v2283, %v1256
  %v2285 = vshrl.u32 %v2284, 4
  %v2286 = vand.u32 %v2284, 15
  %v2287 = vsub.s32 0, %v2286
  %v2288 = vsel %vm2282, %v2287, %v2286
  %vm2289 = vcmp.lt.s32.totalorder %v1257, 0
  %v2290 = vsub.s32 0, %v1257
  %v2291 = vsel %vm2289, %v2290, %v1257
  %v2292 = vshrl.u32 %v2291, 4
  %v2293 = vand.u32 %v2291, 15
  %v2294 = vsub.s32 0, %v2293
  %v2295 = vsel %vm2289, %v2294, %v2293
  %vm2296 = vcmp.lt.s32.totalorder %v1258, 0
  %v2297 = vsub.s32 0, %v1258
  %v2298 = vsel %vm2296, %v2297, %v1258
  %v2299 = vshrl.u32 %v2298, 4
  %v2300 = vand.u32 %v2298, 15
  %v2301 = vsub.s32 0, %v2300
  %v2302 = vsel %vm2296, %v2301, %v2300
  %vm2303 = vcmp.lt.s32.totalorder %v1259, 0
  %v2304 = vsub.s32 0, %v1259
  %v2305 = vsel %vm2303, %v2304, %v1259
  %v2306 = vshrl.u32 %v2305, 4
  %v2307 = vand.u32 %v2305, 15
  %v2308 = vsub.s32 0, %v2307
  %v2309 = vsel %vm2303, %v2308, %v2307
  %vm2310 = vcmp.lt.s32.totalorder %v1260, 0
  %v2311 = vsub.s32 0, %v1260
  %v2312 = vsel %vm2310, %v2311, %v1260
  %v2313 = vshrl.u32 %v2312, 4
  %v2314 = vand.u32 %v2312, 15
  %v2315 = vsub.s32 0, %v2314
  %v2316 = vsel %vm2310, %v2315, %v2314
  %vm2317 = vcmp.lt.s32.totalorder %v1261, 0
  %v2318 = vsub.s32 0, %v1261
  %v2319 = vsel %vm2317, %v2318, %v1261
  %v2320 = vshrl.u32 %v2319, 4
  %v2321 = vand.u32 %v2319, 15
  %v2322 = vsub.s32 0, %v2321
  %v2323 = vsel %vm2317, %v2322, %v2321
  %vm2324 = vcmp.lt.s32.totalorder %v1262, 0
  %v2325 = vsub.s32 0, %v1262
  %v2326 = vsel %vm2324, %v2325, %v1262
  %v2327 = vshrl.u32 %v2326, 4
  %v2328 = vand.u32 %v2326, 15
  %v2329 = vsub.s32 0, %v2328
  %v2330 = vsel %vm2324, %v2329, %v2328
  %vm2331 = vcmp.lt.s32.totalorder %v1263, 0
  %v2332 = vsub.s32 0, %v1263
  %v2333 = vsel %vm2331, %v2332, %v1263
  %v2334 = vshrl.u32 %v2333, 4
  %v2335 = vand.u32 %v2333, 15
  %v2336 = vsub.s32 0, %v2335
  %v2337 = vsel %vm2331, %v2336, %v2335
  %vm2338 = vcmp.lt.s32.totalorder %v1264, 0
  %v2339 = vsub.s32 0, %v1264
  %v2340 = vsel %vm2338, %v2339, %v1264
  %v2341 = vshrl.u32 %v2340, 4
  %v2342 = vand.u32 %v2340, 15
  %v2343 = vsub.s32 0, %v2342
  %v2344 = vsel %vm2338, %v2343, %v2342
  %vm2345 = vcmp.lt.s32.totalorder %v1265, 0
  %v2346 = vsub.s32 0, %v1265
  %v2347 = vsel %vm2345, %v2346, %v1265
  %v2348 = vshrl.u32 %v2347, 4
  %v2349 = vand.u32 %v2347, 15
  %v2350 = vsub.s32 0, %v2349
  %v2351 = vsel %vm2345, %v2350, %v2349
  %vm2352 = vcmp.lt.s32.totalorder %v1266, 0
  %v2353 = vsub.s32 0, %v1266
  %v2354 = vsel %vm2352, %v2353, %v1266
  %v2355 = vshrl.u32 %v2354, 4
  %v2356 = vand.u32 %v2354, 15
  %v2357 = vsub.s32 0, %v2356
  %v2358 = vsel %vm2352, %v2357, %v2356
  %vm2359 = vcmp.lt.s32.totalorder %v1267, 0
  %v2360 = vsub.s32 0, %v1267
  %v2361 = vsel %vm2359, %v2360, %v1267
  %v2362 = vshrl.u32 %v2361, 4
  %v2363 = vand.u32 %v2361, 15
  %v2364 = vsub.s32 0, %v2363
  %v2365 = vsel %vm2359, %v2364, %v2363
  %vm2366 = vcmp.lt.s32.totalorder %v1268, 0
  %v2367 = vsub.s32 0, %v1268
  %v2368 = vsel %vm2366, %v2367, %v1268
  %v2369 = vshrl.u32 %v2368, 4
  %v2370 = vand.u32 %v2368, 15
  %v2371 = vsub.s32 0, %v2370
  %v2372 = vsel %vm2366, %v2371, %v2370
  %vm2373 = vcmp.lt.s32.totalorder %v1269, 0
  %v2374 = vsub.s32 0, %v1269
  %v2375 = vsel %vm2373, %v2374, %v1269
  %v2376 = vshrl.u32 %v2375, 4
  %v2377 = vand.u32 %v2375, 15
  %v2378 = vsub.s32 0, %v2377
  %v2379 = vsel %vm2373, %v2378, %v2377
  %vm2380 = vcmp.lt.s32.totalorder %v1270, 0
  %v2381 = vsub.s32 0, %v1270
  %v2382 = vsel %vm2380, %v2381, %v1270
  %v2383 = vshrl.u32 %v2382, 4
  %v2384 = vand.u32 %v2382, 15
  %v2385 = vsub.s32 0, %v2384
  %v2386 = vsel %vm2380, %v2385, %v2384
  %vm2387 = vcmp.lt.s32.totalorder %v1271, 0
  %v2388 = vsub.s32 0, %v1271
  %v2389 = vsel %vm2387, %v2388, %v1271
  %v2390 = vshrl.u32 %v2389, 4
  %v2391 = vand.u32 %v2389, 15
  %v2392 = vsub.s32 0, %v2391
  %v2393 = vsel %vm2387, %v2392, %v2391
  %vm2394 = vcmp.lt.s32.totalorder %v1272, 0
  %v2395 = vsub.s32 0, %v1272
  %v2396 = vsel %vm2394, %v2395, %v1272
  %v2397 = vshrl.u32 %v2396, 4
  %v2398 = vand.u32 %v2396, 15
  %v2399 = vsub.s32 0, %v2398
  %v2400 = vsel %vm2394, %v2399, %v2398
  %vm2401 = vcmp.lt.s32.totalorder %v1273, 0
  %v2402 = vsub.s32 0, %v1273
  %v2403 = vsel %vm2401, %v2402, %v1273
  %v2404 = vshrl.u32 %v2403, 4
  %v2405 = vand.u32 %v2403, 15
  %v2406 = vsub.s32 0, %v2405
  %v2407 = vsel %vm2401, %v2406, %v2405
  %vm2408 = vcmp.lt.s32.totalorder %v1274, 0
  %v2409 = vsub.s32 0, %v1274
  %v2410 = vsel %vm2408, %v2409, %v1274
  %v2411 = vshrl.u32 %v2410, 4
  %v2412 = vand.u32 %v2410, 15
  %v2413 = vsub.s32 0, %v2412
  %v2414 = vsel %vm2408, %v2413, %v2412
  %vm2415 = vcmp.lt.s32.totalorder %v1275, 0
  %v2416 = vsub.s32 0, %v1275
  %v2417 = vsel %vm2415, %v2416, %v1275
  %v2418 = vshrl.u32 %v2417, 4
  %v2419 = vand.u32 %v2417, 15
  %v2420 = vsub.s32 0, %v2419
  %v2421 = vsel %vm2415, %v2420, %v2419
  %vm2422 = vcmp.lt.s32.totalorder %v1276, 0
  %v2423 = vsub.s32 0, %v1276
  %v2424 = vsel %vm2422, %v2423, %v1276
  %v2425 = vshrl.u32 %v2424, 4
  %v2426 = vand.u32 %v2424, 15
  %v2427 = vsub.s32 0, %v2426
  %v2428 = vsel %vm2422, %v2427, %v2426
  %vm2429 = vcmp.lt.s32.totalorder %v1277, 0
  %v2430 = vsub.s32 0, %v1277
  %v2431 = vsel %vm2429, %v2430, %v1277
  %v2432 = vshrl.u32 %v2431, 4
  %v2433 = vand.u32 %v2431, 15
  %v2434 = vsub.s32 0, %v2433
  %v2435 = vsel %vm2429, %v2434, %v2433
  %vm2436 = vcmp.lt.s32.totalorder %v1278, 0
  %v2437 = vsub.s32 0, %v1278
  %v2438 = vsel %vm2436, %v2437, %v1278
  %v2439 = vshrl.u32 %v2438, 4
  %v2440 = vand.u32 %v2438, 15
  %v2441 = vsub.s32 0, %v2440
  %v2442 = vsel %vm2436, %v2441, %v2440
  %vm2443 = vcmp.lt.s32.totalorder %v1279, 0
  %v2444 = vsub.s32 0, %v1279
  %v2445 = vsel %vm2443, %v2444, %v1279
  %v2446 = vshrl.u32 %v2445, 4
  %v2447 = vand.u32 %v2445, 15
  %v2448 = vsub.s32 0, %v2447
  %v2449 = vsel %vm2443, %v2448, %v2447
  %vm2450 = vcmp.lt.s32.totalorder %v1280, 0
  %v2451 = vsub.s32 0, %v1280
  %v2452 = vsel %vm2450, %v2451, %v1280
  %v2453 = vshrl.u32 %v2452, 4
  %v2454 = vand.u32 %v2452, 15
  %v2455 = vsub.s32 0, %v2454
  %v2456 = vsel %vm2450, %v2455, %v2454
  %vm2457 = vcmp.lt.s32.totalorder %v1281, 0
  %v2458 = vsub.s32 0, %v1281
  %v2459 = vsel %vm2457, %v2458, %v1281
  %v2460 = vshrl.u32 %v2459, 4
  %v2461 = vand.u32 %v2459, 15
  %v2462 = vsub.s32 0, %v2461
  %v2463 = vsel %vm2457, %v2462, %v2461
  %vm2464 = vcmp.lt.s32.totalorder %v1282, 0
  %v2465 = vsub.s32 0, %v1282
  %v2466 = vsel %vm2464, %v2465, %v1282
  %v2467 = vshrl.u32 %v2466, 4
  %v2468 = vand.u32 %v2466, 15
  %v2469 = vsub.s32 0, %v2468
  %v2470 = vsel %vm2464, %v2469, %v2468
  %vm2471 = vcmp.lt.s32.totalorder %v1283, 0
  %v2472 = vsub.s32 0, %v1283
  %v2473 = vsel %vm2471, %v2472, %v1283
  %v2474 = vshrl.u32 %v2473, 4
  %v2475 = vand.u32 %v2473, 15
  %v2476 = vsub.s32 0, %v2475
  %v2477 = vsel %vm2471, %v2476, %v2475
  %vm2478 = vcmp.lt.s32.totalorder %v1284, 0
  %v2479 = vsub.s32 0, %v1284
  %v2480 = vsel %vm2478, %v2479, %v1284
  %v2481 = vshrl.u32 %v2480, 4
  %v2482 = vand.u32 %v2480, 15
  %v2483 = vsub.s32 0, %v2482
  %v2484 = vsel %vm2478, %v2483, %v2482
  %vm2485 = vcmp.lt.s32.totalorder %v1285, 0
  %v2486 = vsub.s32 0, %v1285
  %v2487 = vsel %vm2485, %v2486, %v1285
  %v2488 = vshrl.u32 %v2487, 4
  %v2489 = vand.u32 %v2487, 15
  %v2490 = vsub.s32 0, %v2489
  %v2491 = vsel %vm2485, %v2490, %v2489
  %vm2492 = vcmp.lt.s32.totalorder %v1286, 0
  %v2493 = vsub.s32 0, %v1286
  %v2494 = vsel %vm2492, %v2493, %v1286
  %v2495 = vshrl.u32 %v2494, 4
  %v2496 = vand.u32 %v2494, 15
  %v2497 = vsub.s32 0, %v2496
  %v2498 = vsel %vm2492, %v2497, %v2496
  %vm2499 = vcmp.lt.s32.totalorder %v1287, 0
  %v2500 = vsub.s32 0, %v1287
  %v2501 = vsel %vm2499, %v2500, %v1287
  %v2502 = vshrl.u32 %v2501, 4
  %v2503 = vand.u32 %v2501, 15
  %v2504 = vsub.s32 0, %v2503
  %v2505 = vsel %vm2499, %v2504, %v2503
  %vm2506 = vcmp.lt.s32.totalorder %v1288, 0
  %v2507 = vsub.s32 0, %v1288
  %v2508 = vsel %vm2506, %v2507, %v1288
  %v2509 = vshrl.u32 %v2508, 4
  %v2510 = vand.u32 %v2508, 15
  %v2511 = vsub.s32 0, %v2510
  %v2512 = vsel %vm2506, %v2511, %v2510
  %vm2513 = vcmp.lt.s32.totalorder %v1289, 0
  %v2514 = vsub.s32 0, %v1289
  %v2515 = vsel %vm2513, %v2514, %v1289
  %v2516 = vshrl.u32 %v2515, 4
  %v2517 = vand.u32 %v2515, 15
  %v2518 = vsub.s32 0, %v2517
  %v2519 = vsel %vm2513, %v2518, %v2517
  %vm2520 = vcmp.lt.s32.totalorder %v1290, 0
  %v2521 = vsub.s32 0, %v1290
  %v2522 = vsel %vm2520, %v2521, %v1290
  %v2523 = vshrl.u32 %v2522, 4
  %v2524 = vand.u32 %v2522, 15
  %v2525 = vsub.s32 0, %v2524
  %v2526 = vsel %vm2520, %v2525, %v2524
  %vm2527 = vcmp.lt.s32.totalorder %v1291, 0
  %v2528 = vsub.s32 0, %v1291
  %v2529 = vsel %vm2527, %v2528, %v1291
  %v2530 = vshrl.u32 %v2529, 4
  %v2531 = vand.u32 %v2529, 15
  %v2532 = vsub.s32 0, %v2531
  %v2533 = vsel %vm2527, %v2532, %v2531
  %vm2534 = vcmp.lt.s32.totalorder %v1292, 0
  %v2535 = vsub.s32 0, %v1292
  %v2536 = vsel %vm2534, %v2535, %v1292
  %v2537 = vshrl.u32 %v2536, 4
  %v2538 = vand.u32 %v2536, 15
  %v2539 = vsub.s32 0, %v2538
  %v2540 = vsel %vm2534, %v2539, %v2538
  %vm2541 = vcmp.lt.s32.totalorder %v1293, 0
  %v2542 = vsub.s32 0, %v1293
  %v2543 = vsel %vm2541, %v2542, %v1293
  %v2544 = vshrl.u32 %v2543, 4
  %v2545 = vand.u32 %v2543, 15
  %v2546 = vsub.s32 0, %v2545
  %v2547 = vsel %vm2541, %v2546, %v2545
  %vm2548 = vcmp.ne.s32.totalorder %v2092, 0
  %vm2549 = vcmp.ne.s32.totalorder %v2099, 0
  %vm2550 = vcmp.ne.s32.totalorder %v2106, 0
  %vm2551 = vcmp.ne.s32.totalorder %v2113, 0
  %vm2552 = vcmp.ne.s32.totalorder %v2120, 0
  %vm2553 = vcmp.ne.s32.totalorder %v2127, 0
  %vm2554 = vcmp.ne.s32.totalorder %v2134, 0
  %vm2555 = vcmp.ne.s32.totalorder %v2141, 0
  %vm2556 = vcmp.ne.s32.totalorder %v2148, 0
  %vm2557 = vcmp.ne.s32.totalorder %v2155, 0
  %vm2558 = vcmp.ne.s32.totalorder %v2162, 0
  %vm2559 = vcmp.ne.s32.totalorder %v2169, 0
  %vm2560 = vcmp.ne.s32.totalorder %v2176, 0
  %vm2561 = vcmp.ne.s32.totalorder %v2183, 0
  %vm2562 = vcmp.ne.s32.totalorder %v2190, 0
  %vm2563 = vcmp.ne.s32.totalorder %v2197, 0
  %vm2564 = vcmp.ne.s32.totalorder %v2204, 0
  %vm2565 = vcmp.ne.s32.totalorder %v2211, 0
  %vm2566 = vcmp.ne.s32.totalorder %v2218, 0
  %vm2567 = vcmp.ne.s32.totalorder %v2225, 0
  %vm2568 = vcmp.ne.s32.totalorder %v2232, 0
  %vm2569 = vcmp.ne.s32.totalorder %v2239, 0
  %vm2570 = vcmp.ne.s32.totalorder %v2246, 0
  %vm2571 = vcmp.ne.s32.totalorder %v2253, 0
  %vm2572 = vcmp.ne.s32.totalorder %v2260, 0
  %vm2573 = vcmp.ne.s32.totalorder %v2267, 0
  %vm2574 = vcmp.ne.s32.totalorder %v2274, 0
  %vm2575 = vcmp.ne.s32.totalorder %v2281, 0
  %vm2576 = vcmp.ne.s32.totalorder %v2288, 0
  %vm2577 = vcmp.ne.s32.totalorder %v2295, 0
  %vm2578 = vcmp.ne.s32.totalorder %v2302, 0
  %vm2579 = vcmp.ne.s32.totalorder %v2309, 0
  %vm2580 = vcmp.ne.s32.totalorder %v2316, 0
  %vm2581 = vcmp.ne.s32.totalorder %v2323, 0
  %vm2582 = vcmp.ne.s32.totalorder %v2330, 0
  %vm2583 = vcmp.ne.s32.totalorder %v2337, 0
  %vm2584 = vcmp.ne.s32.totalorder %v2344, 0
  %vm2585 = vcmp.ne.s32.totalorder %v2351, 0
  %vm2586 = vcmp.ne.s32.totalorder %v2358, 0
  %vm2587 = vcmp.ne.s32.totalorder %v2365, 0
  %vm2588 = vcmp.ne.s32.totalorder %v2372, 0
  %vm2589 = vcmp.ne.s32.totalorder %v2379, 0
  %vm2590 = vcmp.ne.s32.totalorder %v2386, 0
  %vm2591 = vcmp.ne.s32.totalorder %v2393, 0
  %vm2592 = vcmp.ne.s32.totalorder %v2400, 0
  %vm2593 = vcmp.ne.s32.totalorder %v2407, 0
  %vm2594 = vcmp.ne.s32.totalorder %v2414, 0
  %vm2595 = vcmp.ne.s32.totalorder %v2421, 0
  %vm2596 = vcmp.ne.s32.totalorder %v2428, 0
  %vm2597 = vcmp.ne.s32.totalorder %v2435, 0
  %vm2598 = vcmp.ne.s32.totalorder %v2442, 0
  %vm2599 = vcmp.ne.s32.totalorder %v2449, 0
  %vm2600 = vcmp.ne.s32.totalorder %v2456, 0
  %vm2601 = vcmp.ne.s32.totalorder %v2463, 0
  %vm2602 = vcmp.ne.s32.totalorder %v2470, 0
  %vm2603 = vcmp.ne.s32.totalorder %v2477, 0
  %vm2604 = vcmp.ne.s32.totalorder %v2484, 0
  %vm2605 = vcmp.ne.s32.totalorder %v2491, 0
  %vm2606 = vcmp.ne.s32.totalorder %v2498, 0
  %vm2607 = vcmp.ne.s32.totalorder %v2505, 0
  %vm2608 = vcmp.ne.s32.totalorder %v2512, 0
  %vm2609 = vcmp.ne.s32.totalorder %v2519, 0
  %vm2610 = vcmp.ne.s32.totalorder %v2526, 0
  %vm2611 = vcmp.ne.s32.totalorder %v2533, 0
  %vm2612 = vcmp.ne.s32.totalorder %v2540, 0
  %vm2613 = vcmp.ne.s32.totalorder %v2547, 0
  %vm2614 = vcmp.lt.s32.totalorder %v2092, 0
  %vm2615 = vcmp.lt.s32.totalorder %v2099, 0
  %vm2616 = vcmp.lt.s32.totalorder %v2106, 0
  %vm2617 = vcmp.lt.s32.totalorder %v2113, 0
  %vm2618 = vcmp.lt.s32.totalorder %v2120, 0
  %vm2619 = vcmp.lt.s32.totalorder %v2127, 0
  %vm2620 = vcmp.lt.s32.totalorder %v2134, 0
  %vm2621 = vcmp.lt.s32.totalorder %v2141, 0
  %vm2622 = vcmp.lt.s32.totalorder %v2148, 0
  %vm2623 = vcmp.lt.s32.totalorder %v2155, 0
  %vm2624 = vcmp.lt.s32.totalorder %v2162, 0
  %vm2625 = vcmp.lt.s32.totalorder %v2169, 0
  %vm2626 = vcmp.lt.s32.totalorder %v2176, 0
  %vm2627 = vcmp.lt.s32.totalorder %v2183, 0
  %vm2628 = vcmp.lt.s32.totalorder %v2190, 0
  %vm2629 = vcmp.lt.s32.totalorder %v2197, 0
  %vm2630 = vcmp.lt.s32.totalorder %v2204, 0
  %vm2631 = vcmp.lt.s32.totalorder %v2211, 0
  %vm2632 = vcmp.lt.s32.totalorder %v2218, 0
  %vm2633 = vcmp.lt.s32.totalorder %v2225, 0
  %vm2634 = vcmp.lt.s32.totalorder %v2232, 0
  %vm2635 = vcmp.lt.s32.totalorder %v2239, 0
  %vm2636 = vcmp.lt.s32.totalorder %v2246, 0
  %vm2637 = vcmp.lt.s32.totalorder %v2253, 0
  %vm2638 = vcmp.lt.s32.totalorder %v2260, 0
  %vm2639 = vcmp.lt.s32.totalorder %v2267, 0
  %vm2640 = vcmp.lt.s32.totalorder %v2274, 0
  %vm2641 = vcmp.lt.s32.totalorder %v2281, 0
  %vm2642 = vcmp.lt.s32.totalorder %v2288, 0
  %vm2643 = vcmp.lt.s32.totalorder %v2295, 0
  %vm2644 = vcmp.lt.s32.totalorder %v2302, 0
  %vm2645 = vcmp.lt.s32.totalorder %v2309, 0
  %vm2646 = vcmp.lt.s32.totalorder %v2316, 0
  %vm2647 = vcmp.lt.s32.totalorder %v2323, 0
  %vm2648 = vcmp.lt.s32.totalorder %v2330, 0
  %vm2649 = vcmp.lt.s32.totalorder %v2337, 0
  %vm2650 = vcmp.lt.s32.totalorder %v2344, 0
  %vm2651 = vcmp.lt.s32.totalorder %v2351, 0
  %vm2652 = vcmp.lt.s32.totalorder %v2358, 0
  %vm2653 = vcmp.lt.s32.totalorder %v2365, 0
  %vm2654 = vcmp.lt.s32.totalorder %v2372, 0
  %vm2655 = vcmp.lt.s32.totalorder %v2379, 0
  %vm2656 = vcmp.lt.s32.totalorder %v2386, 0
  %vm2657 = vcmp.lt.s32.totalorder %v2393, 0
  %vm2658 = vcmp.lt.s32.totalorder %v2400, 0
  %vm2659 = vcmp.lt.s32.totalorder %v2407, 0
  %vm2660 = vcmp.lt.s32.totalorder %v2414, 0
  %vm2661 = vcmp.lt.s32.totalorder %v2421, 0
  %vm2662 = vcmp.lt.s32.totalorder %v2428, 0
  %vm2663 = vcmp.lt.s32.totalorder %v2435, 0
  %vm2664 = vcmp.lt.s32.totalorder %v2442, 0
  %vm2665 = vcmp.lt.s32.totalorder %v2449, 0
  %vm2666 = vcmp.lt.s32.totalorder %v2456, 0
  %vm2667 = vcmp.lt.s32.totalorder %v2463, 0
  %vm2668 = vcmp.lt.s32.totalorder %v2470, 0
  %vm2669 = vcmp.lt.s32.totalorder %v2477, 0
  %vm2670 = vcmp.lt.s32.totalorder %v2484, 0
  %vm2671 = vcmp.lt.s32.totalorder %v2491, 0
  %vm2672 = vcmp.lt.s32.totalorder %v2498, 0
  %vm2673 = vcmp.lt.s32.totalorder %v2505, 0
  %vm2674 = vcmp.lt.s32.totalorder %v2512, 0
  %vm2675 = vcmp.lt.s32.totalorder %v2519, 0
  %vm2676 = vcmp.lt.s32.totalorder %v2526, 0
  %vm2677 = vcmp.lt.s32.totalorder %v2533, 0
  %vm2678 = vcmp.lt.s32.totalorder %v2540, 0
  %vm2679 = vcmp.lt.s32.totalorder %v2547, 0
  %vm2680 = vmand %vm2614, %vm2548
  %vm2681 = vmand %vm2615, %vm2549
  %vm2682 = vmand %vm2616, %vm2550
  %vm2683 = vmand %vm2617, %vm2551
  %vm2684 = vmand %vm2618, %vm2552
  %vm2685 = vmand %vm2619, %vm2553
  %vm2686 = vmand %vm2620, %vm2554
  %vm2687 = vmand %vm2621, %vm2555
  %vm2688 = vmand %vm2622, %vm2556
  %vm2689 = vmand %vm2623, %vm2557
  %vm2690 = vmand %vm2624, %vm2558
  %vm2691 = vmand %vm2625, %vm2559
  %vm2692 = vmand %vm2626, %vm2560
  %vm2693 = vmand %vm2627, %vm2561
  %vm2694 = vmand %vm2628, %vm2562
  %vm2695 = vmand %vm2629, %vm2563
  %vm2696 = vmand %vm2630, %vm2564
  %vm2697 = vmand %vm2631, %vm2565
  %vm2698 = vmand %vm2632, %vm2566
  %vm2699 = vmand %vm2633, %vm2567
  %vm2700 = vmand %vm2634, %vm2568
  %vm2701 = vmand %vm2635, %vm2569
  %vm2702 = vmand %vm2636, %vm2570
  %vm2703 = vmand %vm2637, %vm2571
  %vm2704 = vmand %vm2638, %vm2572
  %vm2705 = vmand %vm2639, %vm2573
  %vm2706 = vmand %vm2640, %vm2574
  %vm2707 = vmand %vm2641, %vm2575
  %vm2708 = vmand %vm2642, %vm2576
  %vm2709 = vmand %vm2643, %vm2577
  %vm2710 = vmand %vm2644, %vm2578
  %vm2711 = vmand %vm2645, %vm2579
  %vm2712 = vmand %vm2646, %vm2580
  %vm2713 = vmand %vm2647, %vm2581
  %vm2714 = vmand %vm2648, %vm2582
  %vm2715 = vmand %vm2649, %vm2583
  %vm2716 = vmand %vm2650, %vm2584
  %vm2717 = vmand %vm2651, %vm2585
  %vm2718 = vmand %vm2652, %vm2586
  %vm2719 = vmand %vm2653, %vm2587
  %vm2720 = vmand %vm2654, %vm2588
  %vm2721 = vmand %vm2655, %vm2589
  %vm2722 = vmand %vm2656, %vm2590
  %vm2723 = vmand %vm2657, %vm2591
  %vm2724 = vmand %vm2658, %vm2592
  %vm2725 = vmand %vm2659, %vm2593
  %vm2726 = vmand %vm2660, %vm2594
  %vm2727 = vmand %vm2661, %vm2595
  %vm2728 = vmand %vm2662, %vm2596
  %vm2729 = vmand %vm2663, %vm2597
  %vm2730 = vmand %vm2664, %vm2598
  %vm2731 = vmand %vm2665, %vm2599
  %vm2732 = vmand %vm2666, %vm2600
  %vm2733 = vmand %vm2667, %vm2601
  %vm2734 = vmand %vm2668, %vm2602
  %vm2735 = vmand %vm2669, %vm2603
  %vm2736 = vmand %vm2670, %vm2604
  %vm2737 = vmand %vm2671, %vm2605
  %vm2738 = vmand %vm2672, %vm2606
  %vm2739 = vmand %vm2673, %vm2607
  %vm2740 = vmand %vm2674, %vm2608
  %vm2741 = vmand %vm2675, %vm2609
  %vm2742 = vmand %vm2676, %vm2610
  %vm2743 = vmand %vm2677, %vm2611
  %vm2744 = vmand %vm2678, %vm2612
  %vm2745 = vmand %vm2679, %vm2613
  %v2746 = vadd.s32 %v2092, 16
  %v2747 = vadd.s32 %v2099, 16
  %v2748 = vadd.s32 %v2106, 16
  %v2749 = vadd.s32 %v2113, 16
  %v2750 = vadd.s32 %v2120, 16
  %v2751 = vadd.s32 %v2127, 16
  %v2752 = vadd.s32 %v2134, 16
  %v2753 = vadd.s32 %v2141, 16
  %v2754 = vadd.s32 %v2148, 16
  %v2755 = vadd.s32 %v2155, 16
  %v2756 = vadd.s32 %v2162, 16
  %v2757 = vadd.s32 %v2169, 16
  %v2758 = vadd.s32 %v2176, 16
  %v2759 = vadd.s32 %v2183, 16
  %v2760 = vadd.s32 %v2190, 16
  %v2761 = vadd.s32 %v2197, 16
  %v2762 = vadd.s32 %v2204, 16
  %v2763 = vadd.s32 %v2211, 16
  %v2764 = vadd.s32 %v2218, 16
  %v2765 = vadd.s32 %v2225, 16
  %v2766 = vadd.s32 %v2232, 16
  %v2767 = vadd.s32 %v2239, 16
  %v2768 = vadd.s32 %v2246, 16
  %v2769 = vadd.s32 %v2253, 16
  %v2770 = vadd.s32 %v2260, 16
  %v2771 = vadd.s32 %v2267, 16
  %v2772 = vadd.s32 %v2274, 16
  %v2773 = vadd.s32 %v2281, 16
  %v2774 = vadd.s32 %v2288, 16
  %v2775 = vadd.s32 %v2295, 16
  %v2776 = vadd.s32 %v2302, 16
  %v2777 = vadd.s32 %v2309, 16
  %v2778 = vadd.s32 %v2316, 16
  %v2779 = vadd.s32 %v2323, 16
  %v2780 = vadd.s32 %v2330, 16
  %v2781 = vadd.s32 %v2337, 16
  %v2782 = vadd.s32 %v2344, 16
  %v2783 = vadd.s32 %v2351, 16
  %v2784 = vadd.s32 %v2358, 16
  %v2785 = vadd.s32 %v2365, 16
  %v2786 = vadd.s32 %v2372, 16
  %v2787 = vadd.s32 %v2379, 16
  %v2788 = vadd.s32 %v2386, 16
  %v2789 = vadd.s32 %v2393, 16
  %v2790 = vadd.s32 %v2400, 16
  %v2791 = vadd.s32 %v2407, 16
  %v2792 = vadd.s32 %v2414, 16
  %v2793 = vadd.s32 %v2421, 16
  %v2794 = vadd.s32 %v2428, 16
  %v2795 = vadd.s32 %v2435, 16
  %v2796 = vadd.s32 %v2442, 16
  %v2797 = vadd.s32 %v2449, 16
  %v2798 = vadd.s32 %v2456, 16
  %v2799 = vadd.s32 %v2463, 16
  %v2800 = vadd.s32 %v2470, 16
  %v2801 = vadd.s32 %v2477, 16
  %v2802 = vadd.s32 %v2484, 16
  %v2803 = vadd.s32 %v2491, 16
  %v2804 = vadd.s32 %v2498, 16
  %v2805 = vadd.s32 %v2505, 16
  %v2806 = vadd.s32 %v2512, 16
  %v2807 = vadd.s32 %v2519, 16
  %v2808 = vadd.s32 %v2526, 16
  %v2809 = vadd.s32 %v2533, 16
  %v2810 = vadd.s32 %v2540, 16
  %v2811 = vadd.s32 %v2547, 16
  %v2812 = vsel %vm2680, %v2746, %v2092
  %v2813 = vsel %vm2681, %v2747, %v2099
  %v2814 = vsel %vm2682, %v2748, %v2106
  %v2815 = vsel %vm2683, %v2749, %v2113
  %v2816 = vsel %vm2684, %v2750, %v2120
  %v2817 = vsel %vm2685, %v2751, %v2127
  %v2818 = vsel %vm2686, %v2752, %v2134
  %v2819 = vsel %vm2687, %v2753, %v2141
  %v2820 = vsel %vm2688, %v2754, %v2148
  %v2821 = vsel %vm2689, %v2755, %v2155
  %v2822 = vsel %vm2690, %v2756, %v2162
  %v2823 = vsel %vm2691, %v2757, %v2169
  %v2824 = vsel %vm2692, %v2758, %v2176
  %v2825 = vsel %vm2693, %v2759, %v2183
  %v2826 = vsel %vm2694, %v2760, %v2190
  %v2827 = vsel %vm2695, %v2761, %v2197
  %v2828 = vsel %vm2696, %v2762, %v2204
  %v2829 = vsel %vm2697, %v2763, %v2211
  %v2830 = vsel %vm2698, %v2764, %v2218
  %v2831 = vsel %vm2699, %v2765, %v2225
  %v2832 = vsel %vm2700, %v2766, %v2232
  %v2833 = vsel %vm2701, %v2767, %v2239
  %v2834 = vsel %vm2702, %v2768, %v2246
  %v2835 = vsel %vm2703, %v2769, %v2253
  %v2836 = vsel %vm2704, %v2770, %v2260
  %v2837 = vsel %vm2705, %v2771, %v2267
  %v2838 = vsel %vm2706, %v2772, %v2274
  %v2839 = vsel %vm2707, %v2773, %v2281
  %v2840 = vsel %vm2708, %v2774, %v2288
  %v2841 = vsel %vm2709, %v2775, %v2295
  %v2842 = vsel %vm2710, %v2776, %v2302
  %v2843 = vsel %vm2711, %v2777, %v2309
  %v2844 = vsel %vm2712, %v2778, %v2316
  %v2845 = vsel %vm2713, %v2779, %v2323
  %v2846 = vsel %vm2714, %v2780, %v2330
  %v2847 = vsel %vm2715, %v2781, %v2337
  %v2848 = vsel %vm2716, %v2782, %v2344
  %v2849 = vsel %vm2717, %v2783, %v2351
  %v2850 = vsel %vm2718, %v2784, %v2358
  %v2851 = vsel %vm2719, %v2785, %v2365
  %v2852 = vsel %vm2720, %v2786, %v2372
  %v2853 = vsel %vm2721, %v2787, %v2379
  %v2854 = vsel %vm2722, %v2788, %v2386
  %v2855 = vsel %vm2723, %v2789, %v2393
  %v2856 = vsel %vm2724, %v2790, %v2400
  %v2857 = vsel %vm2725, %v2791, %v2407
  %v2858 = vsel %vm2726, %v2792, %v2414
  %v2859 = vsel %vm2727, %v2793, %v2421
  %v2860 = vsel %vm2728, %v2794, %v2428
  %v2861 = vsel %vm2729, %v2795, %v2435
  %v2862 = vsel %vm2730, %v2796, %v2442
  %v2863 = vsel %vm2731, %v2797, %v2449
  %v2864 = vsel %vm2732, %v2798, %v2456
  %v2865 = vsel %vm2733, %v2799, %v2463
  %v2866 = vsel %vm2734, %v2800, %v2470
  %v2867 = vsel %vm2735, %v2801, %v2477
  %v2868 = vsel %vm2736, %v2802, %v2484
  %v2869 = vsel %vm2737, %v2803, %v2491
  %v2870 = vsel %vm2738, %v2804, %v2498
  %v2871 = vsel %vm2739, %v2805, %v2505
  %v2872 = vsel %vm2740, %v2806, %v2512
  %v2873 = vsel %vm2741, %v2807, %v2519
  %v2874 = vsel %vm2742, %v2808, %v2526
  %v2875 = vsel %vm2743, %v2809, %v2533
  %v2876 = vsel %vm2744, %v2810, %v2540
  %v2877 = vsel %vm2745, %v2811, %v2547
  %vm2878 = vcmp.ge.s32.totalorder %v2020, 16
  %vm2879 = vcmp.ge.s32.totalorder %v2021, 16
  %vm2880 = vcmp.ge.s32.totalorder %v2022, 16
  %vm2881 = vcmp.ge.s32.totalorder %v2023, 16
  %vm2882 = vcmp.ge.s32.totalorder %v2024, 16
  %vm2883 = vcmp.ge.s32.totalorder %v2025, 16
  %vm2884 = vcmp.ge.s32.totalorder %v2026, 16
  %vm2885 = vcmp.ge.s32.totalorder %v2027, 16
  %vm2886 = vcmp.ge.s32.totalorder %v2028, 16
  %vm2887 = vcmp.ge.s32.totalorder %v2029, 16
  %vm2888 = vcmp.ge.s32.totalorder %v2030, 16
  %vm2889 = vcmp.ge.s32.totalorder %v2031, 16
  %vm2890 = vcmp.ge.s32.totalorder %v2032, 16
  %vm2891 = vcmp.ge.s32.totalorder %v2033, 16
  %vm2892 = vcmp.ge.s32.totalorder %v2034, 16
  %vm2893 = vcmp.ge.s32.totalorder %v2035, 16
  %vm2894 = vcmp.ge.s32.totalorder %v2036, 16
  %vm2895 = vcmp.ge.s32.totalorder %v2037, 16
  %vm2896 = vcmp.ge.s32.totalorder %v2038, 16
  %vm2897 = vcmp.ge.s32.totalorder %v2039, 16
  %vm2898 = vcmp.ge.s32.totalorder %v2040, 16
  %vm2899 = vcmp.ge.s32.totalorder %v2041, 16
  %vm2900 = vcmp.ge.s32.totalorder %v2042, 16
  %vm2901 = vcmp.ge.s32.totalorder %v2043, 16
  %vm2902 = vcmp.ge.s32.totalorder %v2044, 16
  %vm2903 = vcmp.ge.s32.totalorder %v2045, 16
  %vm2904 = vcmp.ge.s32.totalorder %v2046, 16
  %vm2905 = vcmp.ge.s32.totalorder %v2047, 16
  %vm2906 = vcmp.ge.s32.totalorder %v2048, 16
  %vm2907 = vcmp.ge.s32.totalorder %v2049, 16
  %vm2908 = vcmp.ge.s32.totalorder %v2050, 16
  %vm2909 = vcmp.ge.s32.totalorder %v2051, 16
  %vm2910 = vcmp.ge.s32.totalorder %v2052, 16
  %vm2911 = vcmp.ge.s32.totalorder %v2053, 16
  %vm2912 = vcmp.ge.s32.totalorder %v2054, 16
  %vm2913 = vcmp.ge.s32.totalorder %v2055, 16
  %vm2914 = vcmp.ge.s32.totalorder %v2056, 16
  %vm2915 = vcmp.ge.s32.totalorder %v2057, 16
  %vm2916 = vcmp.ge.s32.totalorder %v2058, 16
  %vm2917 = vcmp.ge.s32.totalorder %v2059, 16
  %vm2918 = vcmp.ge.s32.totalorder %v2060, 16
  %vm2919 = vcmp.ge.s32.totalorder %v2061, 16
  %vm2920 = vcmp.ge.s32.totalorder %v2062, 16
  %vm2921 = vcmp.ge.s32.totalorder %v2063, 16
  %vm2922 = vcmp.ge.s32.totalorder %v2064, 16
  %vm2923 = vcmp.ge.s32.totalorder %v2065, 16
  %vm2924 = vcmp.ge.s32.totalorder %v2066, 16
  %vm2925 = vcmp.ge.s32.totalorder %v2067, 16
  %vm2926 = vcmp.ge.s32.totalorder %v2068, 16
  %vm2927 = vcmp.ge.s32.totalorder %v2069, 16
  %vm2928 = vcmp.ge.s32.totalorder %v2070, 16
  %vm2929 = vcmp.ge.s32.totalorder %v2071, 16
  %vm2930 = vcmp.ge.s32.totalorder %v2072, 16
  %vm2931 = vcmp.ge.s32.totalorder %v2073, 16
  %vm2932 = vcmp.ge.s32.totalorder %v2074, 16
  %vm2933 = vcmp.ge.s32.totalorder %v2075, 16
  %vm2934 = vcmp.ge.s32.totalorder %v2076, 16
  %vm2935 = vcmp.ge.s32.totalorder %v2077, 16
  %vm2936 = vcmp.ge.s32.totalorder %v2078, 16
  %vm2937 = vcmp.ge.s32.totalorder %v2079, 16
  %vm2938 = vcmp.ge.s32.totalorder %v2080, 16
  %vm2939 = vcmp.ge.s32.totalorder %v2081, 16
  %vm2940 = vcmp.ge.s32.totalorder %v2082, 16
  %vm2941 = vcmp.ge.s32.totalorder %v2083, 16
  %vm2942 = vcmp.ge.s32.totalorder %v2084, 16
  %vm2943 = vcmp.ge.s32.totalorder %v2085, 16
  %vm2944 = vcmp.lt.s32.totalorder %v2020, 240
  %vm2945 = vcmp.lt.s32.totalorder %v2021, 240
  %vm2946 = vcmp.lt.s32.totalorder %v2022, 240
  %vm2947 = vcmp.lt.s32.totalorder %v2023, 240
  %vm2948 = vcmp.lt.s32.totalorder %v2024, 240
  %vm2949 = vcmp.lt.s32.totalorder %v2025, 240
  %vm2950 = vcmp.lt.s32.totalorder %v2026, 240
  %vm2951 = vcmp.lt.s32.totalorder %v2027, 240
  %vm2952 = vcmp.lt.s32.totalorder %v2028, 240
  %vm2953 = vcmp.lt.s32.totalorder %v2029, 240
  %vm2954 = vcmp.lt.s32.totalorder %v2030, 240
  %vm2955 = vcmp.lt.s32.totalorder %v2031, 240
  %vm2956 = vcmp.lt.s32.totalorder %v2032, 240
  %vm2957 = vcmp.lt.s32.totalorder %v2033, 240
  %vm2958 = vcmp.lt.s32.totalorder %v2034, 240
  %vm2959 = vcmp.lt.s32.totalorder %v2035, 240
  %vm2960 = vcmp.lt.s32.totalorder %v2036, 240
  %vm2961 = vcmp.lt.s32.totalorder %v2037, 240
  %vm2962 = vcmp.lt.s32.totalorder %v2038, 240
  %vm2963 = vcmp.lt.s32.totalorder %v2039, 240
  %vm2964 = vcmp.lt.s32.totalorder %v2040, 240
  %vm2965 = vcmp.lt.s32.totalorder %v2041, 240
  %vm2966 = vcmp.lt.s32.totalorder %v2042, 240
  %vm2967 = vcmp.lt.s32.totalorder %v2043, 240
  %vm2968 = vcmp.lt.s32.totalorder %v2044, 240
  %vm2969 = vcmp.lt.s32.totalorder %v2045, 240
  %vm2970 = vcmp.lt.s32.totalorder %v2046, 240
  %vm2971 = vcmp.lt.s32.totalorder %v2047, 240
  %vm2972 = vcmp.lt.s32.totalorder %v2048, 240
  %vm2973 = vcmp.lt.s32.totalorder %v2049, 240
  %vm2974 = vcmp.lt.s32.totalorder %v2050, 240
  %vm2975 = vcmp.lt.s32.totalorder %v2051, 240
  %vm2976 = vcmp.lt.s32.totalorder %v2052, 240
  %vm2977 = vcmp.lt.s32.totalorder %v2053, 240
  %vm2978 = vcmp.lt.s32.totalorder %v2054, 240
  %vm2979 = vcmp.lt.s32.totalorder %v2055, 240
  %vm2980 = vcmp.lt.s32.totalorder %v2056, 240
  %vm2981 = vcmp.lt.s32.totalorder %v2057, 240
  %vm2982 = vcmp.lt.s32.totalorder %v2058, 240
  %vm2983 = vcmp.lt.s32.totalorder %v2059, 240
  %vm2984 = vcmp.lt.s32.totalorder %v2060, 240
  %vm2985 = vcmp.lt.s32.totalorder %v2061, 240
  %vm2986 = vcmp.lt.s32.totalorder %v2062, 240
  %vm2987 = vcmp.lt.s32.totalorder %v2063, 240
  %vm2988 = vcmp.lt.s32.totalorder %v2064, 240
  %vm2989 = vcmp.lt.s32.totalorder %v2065, 240
  %vm2990 = vcmp.lt.s32.totalorder %v2066, 240
  %vm2991 = vcmp.lt.s32.totalorder %v2067, 240
  %vm2992 = vcmp.lt.s32.totalorder %v2068, 240
  %vm2993 = vcmp.lt.s32.totalorder %v2069, 240
  %vm2994 = vcmp.lt.s32.totalorder %v2070, 240
  %vm2995 = vcmp.lt.s32.totalorder %v2071, 240
  %vm2996 = vcmp.lt.s32.totalorder %v2072, 240
  %vm2997 = vcmp.lt.s32.totalorder %v2073, 240
  %vm2998 = vcmp.lt.s32.totalorder %v2074, 240
  %vm2999 = vcmp.lt.s32.totalorder %v2075, 240
  %vm3000 = vcmp.lt.s32.totalorder %v2076, 240
  %vm3001 = vcmp.lt.s32.totalorder %v2077, 240
  %vm3002 = vcmp.lt.s32.totalorder %v2078, 240
  %vm3003 = vcmp.lt.s32.totalorder %v2079, 240
  %vm3004 = vcmp.lt.s32.totalorder %v2080, 240
  %vm3005 = vcmp.lt.s32.totalorder %v2081, 240
  %vm3006 = vcmp.lt.s32.totalorder %v2082, 240
  %vm3007 = vcmp.lt.s32.totalorder %v2083, 240
  %vm3008 = vcmp.lt.s32.totalorder %v2084, 240
  %vm3009 = vcmp.lt.s32.totalorder %v2085, 240
  %vm3010 = vcmp.ge.s32.totalorder %v2812, 1
  %vm3011 = vcmp.ge.s32.totalorder %v2813, 1
  %vm3012 = vcmp.ge.s32.totalorder %v2814, 1
  %vm3013 = vcmp.ge.s32.totalorder %v2815, 1
  %vm3014 = vcmp.ge.s32.totalorder %v2816, 1
  %vm3015 = vcmp.ge.s32.totalorder %v2817, 1
  %vm3016 = vcmp.ge.s32.totalorder %v2818, 1
  %vm3017 = vcmp.ge.s32.totalorder %v2819, 1
  %vm3018 = vcmp.ge.s32.totalorder %v2820, 1
  %vm3019 = vcmp.ge.s32.totalorder %v2821, 1
  %vm3020 = vcmp.ge.s32.totalorder %v2822, 1
  %vm3021 = vcmp.ge.s32.totalorder %v2823, 1
  %vm3022 = vcmp.ge.s32.totalorder %v2824, 1
  %vm3023 = vcmp.ge.s32.totalorder %v2825, 1
  %vm3024 = vcmp.ge.s32.totalorder %v2826, 1
  %vm3025 = vcmp.ge.s32.totalorder %v2827, 1
  %vm3026 = vcmp.ge.s32.totalorder %v2828, 1
  %vm3027 = vcmp.ge.s32.totalorder %v2829, 1
  %vm3028 = vcmp.ge.s32.totalorder %v2830, 1
  %vm3029 = vcmp.ge.s32.totalorder %v2831, 1
  %vm3030 = vcmp.ge.s32.totalorder %v2832, 1
  %vm3031 = vcmp.ge.s32.totalorder %v2833, 1
  %vm3032 = vcmp.ge.s32.totalorder %v2834, 1
  %vm3033 = vcmp.ge.s32.totalorder %v2835, 1
  %vm3034 = vcmp.ge.s32.totalorder %v2836, 1
  %vm3035 = vcmp.ge.s32.totalorder %v2837, 1
  %vm3036 = vcmp.ge.s32.totalorder %v2838, 1
  %vm3037 = vcmp.ge.s32.totalorder %v2839, 1
  %vm3038 = vcmp.ge.s32.totalorder %v2840, 1
  %vm3039 = vcmp.ge.s32.totalorder %v2841, 1
  %vm3040 = vcmp.ge.s32.totalorder %v2842, 1
  %vm3041 = vcmp.ge.s32.totalorder %v2843, 1
  %vm3042 = vcmp.ge.s32.totalorder %v2844, 1
  %vm3043 = vcmp.ge.s32.totalorder %v2845, 1
  %vm3044 = vcmp.ge.s32.totalorder %v2846, 1
  %vm3045 = vcmp.ge.s32.totalorder %v2847, 1
  %vm3046 = vcmp.ge.s32.totalorder %v2848, 1
  %vm3047 = vcmp.ge.s32.totalorder %v2849, 1
  %vm3048 = vcmp.ge.s32.totalorder %v2850, 1
  %vm3049 = vcmp.ge.s32.totalorder %v2851, 1
  %vm3050 = vcmp.ge.s32.totalorder %v2852, 1
  %vm3051 = vcmp.ge.s32.totalorder %v2853, 1
  %vm3052 = vcmp.ge.s32.totalorder %v2854, 1
  %vm3053 = vcmp.ge.s32.totalorder %v2855, 1
  %vm3054 = vcmp.ge.s32.totalorder %v2856, 1
  %vm3055 = vcmp.ge.s32.totalorder %v2857, 1
  %vm3056 = vcmp.ge.s32.totalorder %v2858, 1
  %vm3057 = vcmp.ge.s32.totalorder %v2859, 1
  %vm3058 = vcmp.ge.s32.totalorder %v2860, 1
  %vm3059 = vcmp.ge.s32.totalorder %v2861, 1
  %vm3060 = vcmp.ge.s32.totalorder %v2862, 1
  %vm3061 = vcmp.ge.s32.totalorder %v2863, 1
  %vm3062 = vcmp.ge.s32.totalorder %v2864, 1
  %vm3063 = vcmp.ge.s32.totalorder %v2865, 1
  %vm3064 = vcmp.ge.s32.totalorder %v2866, 1
  %vm3065 = vcmp.ge.s32.totalorder %v2867, 1
  %vm3066 = vcmp.ge.s32.totalorder %v2868, 1
  %vm3067 = vcmp.ge.s32.totalorder %v2869, 1
  %vm3068 = vcmp.ge.s32.totalorder %v2870, 1
  %vm3069 = vcmp.ge.s32.totalorder %v2871, 1
  %vm3070 = vcmp.ge.s32.totalorder %v2872, 1
  %vm3071 = vcmp.ge.s32.totalorder %v2873, 1
  %vm3072 = vcmp.ge.s32.totalorder %v2874, 1
  %vm3073 = vcmp.ge.s32.totalorder %v2875, 1
  %vm3074 = vcmp.ge.s32.totalorder %v2876, 1
  %vm3075 = vcmp.ge.s32.totalorder %v2877, 1
  %vm3076 = vcmp.lt.s32.totalorder %v2812, 15
  %vm3077 = vcmp.lt.s32.totalorder %v2813, 15
  %vm3078 = vcmp.lt.s32.totalorder %v2814, 15
  %vm3079 = vcmp.lt.s32.totalorder %v2815, 15
  %vm3080 = vcmp.lt.s32.totalorder %v2816, 15
  %vm3081 = vcmp.lt.s32.totalorder %v2817, 15
  %vm3082 = vcmp.lt.s32.totalorder %v2818, 15
  %vm3083 = vcmp.lt.s32.totalorder %v2819, 15
  %vm3084 = vcmp.lt.s32.totalorder %v2820, 15
  %vm3085 = vcmp.lt.s32.totalorder %v2821, 15
  %vm3086 = vcmp.lt.s32.totalorder %v2822, 15
  %vm3087 = vcmp.lt.s32.totalorder %v2823, 15
  %vm3088 = vcmp.lt.s32.totalorder %v2824, 15
  %vm3089 = vcmp.lt.s32.totalorder %v2825, 15
  %vm3090 = vcmp.lt.s32.totalorder %v2826, 15
  %vm3091 = vcmp.lt.s32.totalorder %v2827, 15
  %vm3092 = vcmp.lt.s32.totalorder %v2828, 15
  %vm3093 = vcmp.lt.s32.totalorder %v2829, 15
  %vm3094 = vcmp.lt.s32.totalorder %v2830, 15
  %vm3095 = vcmp.lt.s32.totalorder %v2831, 15
  %vm3096 = vcmp.lt.s32.totalorder %v2832, 15
  %vm3097 = vcmp.lt.s32.totalorder %v2833, 15
  %vm3098 = vcmp.lt.s32.totalorder %v2834, 15
  %vm3099 = vcmp.lt.s32.totalorder %v2835, 15
  %vm3100 = vcmp.lt.s32.totalorder %v2836, 15
  %vm3101 = vcmp.lt.s32.totalorder %v2837, 15
  %vm3102 = vcmp.lt.s32.totalorder %v2838, 15
  %vm3103 = vcmp.lt.s32.totalorder %v2839, 15
  %vm3104 = vcmp.lt.s32.totalorder %v2840, 15
  %vm3105 = vcmp.lt.s32.totalorder %v2841, 15
  %vm3106 = vcmp.lt.s32.totalorder %v2842, 15
  %vm3107 = vcmp.lt.s32.totalorder %v2843, 15
  %vm3108 = vcmp.lt.s32.totalorder %v2844, 15
  %vm3109 = vcmp.lt.s32.totalorder %v2845, 15
  %vm3110 = vcmp.lt.s32.totalorder %v2846, 15
  %vm3111 = vcmp.lt.s32.totalorder %v2847, 15
  %vm3112 = vcmp.lt.s32.totalorder %v2848, 15
  %vm3113 = vcmp.lt.s32.totalorder %v2849, 15
  %vm3114 = vcmp.lt.s32.totalorder %v2850, 15
  %vm3115 = vcmp.lt.s32.totalorder %v2851, 15
  %vm3116 = vcmp.lt.s32.totalorder %v2852, 15
  %vm3117 = vcmp.lt.s32.totalorder %v2853, 15
  %vm3118 = vcmp.lt.s32.totalorder %v2854, 15
  %vm3119 = vcmp.lt.s32.totalorder %v2855, 15
  %vm3120 = vcmp.lt.s32.totalorder %v2856, 15
  %vm3121 = vcmp.lt.s32.totalorder %v2857, 15
  %vm3122 = vcmp.lt.s32.totalorder %v2858, 15
  %vm3123 = vcmp.lt.s32.totalorder %v2859, 15
  %vm3124 = vcmp.lt.s32.totalorder %v2860, 15
  %vm3125 = vcmp.lt.s32.totalorder %v2861, 15
  %vm3126 = vcmp.lt.s32.totalorder %v2862, 15
  %vm3127 = vcmp.lt.s32.totalorder %v2863, 15
  %vm3128 = vcmp.lt.s32.totalorder %v2864, 15
  %vm3129 = vcmp.lt.s32.totalorder %v2865, 15
  %vm3130 = vcmp.lt.s32.totalorder %v2866, 15
  %vm3131 = vcmp.lt.s32.totalorder %v2867, 15
  %vm3132 = vcmp.lt.s32.totalorder %v2868, 15
  %vm3133 = vcmp.lt.s32.totalorder %v2869, 15
  %vm3134 = vcmp.lt.s32.totalorder %v2870, 15
  %vm3135 = vcmp.lt.s32.totalorder %v2871, 15
  %vm3136 = vcmp.lt.s32.totalorder %v2872, 15
  %vm3137 = vcmp.lt.s32.totalorder %v2873, 15
  %vm3138 = vcmp.lt.s32.totalorder %v2874, 15
  %vm3139 = vcmp.lt.s32.totalorder %v2875, 15
  %vm3140 = vcmp.lt.s32.totalorder %v2876, 15
  %vm3141 = vcmp.lt.s32.totalorder %v2877, 15
  %vm3142 = vmand %vm2878, %vm3010
  %vm3143 = vmand %vm2879, %vm3011
  %vm3144 = vmand %vm2880, %vm3012
  %vm3145 = vmand %vm2881, %vm3013
  %vm3146 = vmand %vm2882, %vm3014
  %vm3147 = vmand %vm2883, %vm3015
  %vm3148 = vmand %vm2884, %vm3016
  %vm3149 = vmand %vm2885, %vm3017
  %vm3150 = vmand %vm2886, %vm3018
  %vm3151 = vmand %vm2887, %vm3019
  %vm3152 = vmand %vm2888, %vm3020
  %vm3153 = vmand %vm2889, %vm3021
  %vm3154 = vmand %vm2890, %vm3022
  %vm3155 = vmand %vm2891, %vm3023
  %vm3156 = vmand %vm2892, %vm3024
  %vm3157 = vmand %vm2893, %vm3025
  %vm3158 = vmand %vm2894, %vm3026
  %vm3159 = vmand %vm2895, %vm3027
  %vm3160 = vmand %vm2896, %vm3028
  %vm3161 = vmand %vm2897, %vm3029
  %vm3162 = vmand %vm2898, %vm3030
  %vm3163 = vmand %vm2899, %vm3031
  %vm3164 = vmand %vm2900, %vm3032
  %vm3165 = vmand %vm2901, %vm3033
  %vm3166 = vmand %vm2902, %vm3034
  %vm3167 = vmand %vm2903, %vm3035
  %vm3168 = vmand %vm2904, %vm3036
  %vm3169 = vmand %vm2905, %vm3037
  %vm3170 = vmand %vm2906, %vm3038
  %vm3171 = vmand %vm2907, %vm3039
  %vm3172 = vmand %vm2908, %vm3040
  %vm3173 = vmand %vm2909, %vm3041
  %vm3174 = vmand %vm2910, %vm3042
  %vm3175 = vmand %vm2911, %vm3043
  %vm3176 = vmand %vm2912, %vm3044
  %vm3177 = vmand %vm2913, %vm3045
  %vm3178 = vmand %vm2914, %vm3046
  %vm3179 = vmand %vm2915, %vm3047
  %vm3180 = vmand %vm2916, %vm3048
  %vm3181 = vmand %vm2917, %vm3049
  %vm3182 = vmand %vm2918, %vm3050
  %vm3183 = vmand %vm2919, %vm3051
  %vm3184 = vmand %vm2920, %vm3052
  %vm3185 = vmand %vm2921, %vm3053
  %vm3186 = vmand %vm2922, %vm3054
  %vm3187 = vmand %vm2923, %vm3055
  %vm3188 = vmand %vm2924, %vm3056
  %vm3189 = vmand %vm2925, %vm3057
  %vm3190 = vmand %vm2926, %vm3058
  %vm3191 = vmand %vm2927, %vm3059
  %vm3192 = vmand %vm2928, %vm3060
  %vm3193 = vmand %vm2929, %vm3061
  %vm3194 = vmand %vm2930, %vm3062
  %vm3195 = vmand %vm2931, %vm3063
  %vm3196 = vmand %vm2932, %vm3064
  %vm3197 = vmand %vm2933, %vm3065
  %vm3198 = vmand %vm2934, %vm3066
  %vm3199 = vmand %vm2935, %vm3067
  %vm3200 = vmand %vm2936, %vm3068
  %vm3201 = vmand %vm2937, %vm3069
  %vm3202 = vmand %vm2938, %vm3070
  %vm3203 = vmand %vm2939, %vm3071
  %vm3204 = vmand %vm2940, %vm3072
  %vm3205 = vmand %vm2941, %vm3073
  %vm3206 = vmand %vm2942, %vm3074
  %vm3207 = vmand %vm2943, %vm3075
  %v3208 = vsel %vm3142, 1, 0
  %v3209 = vsel %vm3143, 1, 0
  %v3210 = vsel %vm3144, 1, 0
  %v3211 = vsel %vm3145, 1, 0
  %v3212 = vsel %vm3146, 1, 0
  %v3213 = vsel %vm3147, 1, 0
  %v3214 = vsel %vm3148, 1, 0
  %v3215 = vsel %vm3149, 1, 0
  %v3216 = vsel %vm3150, 1, 0
  %v3217 = vsel %vm3151, 1, 0
  %v3218 = vsel %vm3152, 1, 0
  %v3219 = vsel %vm3153, 1, 0
  %v3220 = vsel %vm3154, 1, 0
  %v3221 = vsel %vm3155, 1, 0
  %v3222 = vsel %vm3156, 1, 0
  %v3223 = vsel %vm3157, 1, 0
  %v3224 = vsel %vm3158, 1, 0
  %v3225 = vsel %vm3159, 1, 0
  %v3226 = vsel %vm3160, 1, 0
  %v3227 = vsel %vm3161, 1, 0
  %v3228 = vsel %vm3162, 1, 0
  %v3229 = vsel %vm3163, 1, 0
  %v3230 = vsel %vm3164, 1, 0
  %v3231 = vsel %vm3165, 1, 0
  %v3232 = vsel %vm3166, 1, 0
  %v3233 = vsel %vm3167, 1, 0
  %v3234 = vsel %vm3168, 1, 0
  %v3235 = vsel %vm3169, 1, 0
  %v3236 = vsel %vm3170, 1, 0
  %v3237 = vsel %vm3171, 1, 0
  %v3238 = vsel %vm3172, 1, 0
  %v3239 = vsel %vm3173, 1, 0
  %v3240 = vsel %vm3174, 1, 0
  %v3241 = vsel %vm3175, 1, 0
  %v3242 = vsel %vm3176, 1, 0
  %v3243 = vsel %vm3177, 1, 0
  %v3244 = vsel %vm3178, 1, 0
  %v3245 = vsel %vm3179, 1, 0
  %v3246 = vsel %vm3180, 1, 0
  %v3247 = vsel %vm3181, 1, 0
  %v3248 = vsel %vm3182, 1, 0
  %v3249 = vsel %vm3183, 1, 0
  %v3250 = vsel %vm3184, 1, 0
  %v3251 = vsel %vm3185, 1, 0
  %v3252 = vsel %vm3186, 1, 0
  %v3253 = vsel %vm3187, 1, 0
  %v3254 = vsel %vm3188, 1, 0
  %v3255 = vsel %vm3189, 1, 0
  %v3256 = vsel %vm3190, 1, 0
  %v3257 = vsel %vm3191, 1, 0
  %v3258 = vsel %vm3192, 1, 0
  %v3259 = vsel %vm3193, 1, 0
  %v3260 = vsel %vm3194, 1, 0
  %v3261 = vsel %vm3195, 1, 0
  %v3262 = vsel %vm3196, 1, 0
  %v3263 = vsel %vm3197, 1, 0
  %v3264 = vsel %vm3198, 1, 0
  %v3265 = vsel %vm3199, 1, 0
  %v3266 = vsel %vm3200, 1, 0
  %v3267 = vsel %vm3201, 1, 0
  %v3268 = vsel %vm3202, 1, 0
  %v3269 = vsel %vm3203, 1, 0
  %v3270 = vsel %vm3204, 1, 0
  %v3271 = vsel %vm3205, 1, 0
  %v3272 = vsel %vm3206, 1, 0
  %v3273 = vsel %vm3207, 1, 0
  %vm3274 = vcmp.eq.s32.totalorder %v3208, 1
  %vm3275 = vcmp.eq.s32.totalorder %v3209, 1
  %vm3276 = vcmp.eq.s32.totalorder %v3210, 1
  %vm3277 = vcmp.eq.s32.totalorder %v3211, 1
  %vm3278 = vcmp.eq.s32.totalorder %v3212, 1
  %vm3279 = vcmp.eq.s32.totalorder %v3213, 1
  %vm3280 = vcmp.eq.s32.totalorder %v3214, 1
  %vm3281 = vcmp.eq.s32.totalorder %v3215, 1
  %vm3282 = vcmp.eq.s32.totalorder %v3216, 1
  %vm3283 = vcmp.eq.s32.totalorder %v3217, 1
  %vm3284 = vcmp.eq.s32.totalorder %v3218, 1
  %vm3285 = vcmp.eq.s32.totalorder %v3219, 1
  %vm3286 = vcmp.eq.s32.totalorder %v3220, 1
  %vm3287 = vcmp.eq.s32.totalorder %v3221, 1
  %vm3288 = vcmp.eq.s32.totalorder %v3222, 1
  %vm3289 = vcmp.eq.s32.totalorder %v3223, 1
  %vm3290 = vcmp.eq.s32.totalorder %v3224, 1
  %vm3291 = vcmp.eq.s32.totalorder %v3225, 1
  %vm3292 = vcmp.eq.s32.totalorder %v3226, 1
  %vm3293 = vcmp.eq.s32.totalorder %v3227, 1
  %vm3294 = vcmp.eq.s32.totalorder %v3228, 1
  %vm3295 = vcmp.eq.s32.totalorder %v3229, 1
  %vm3296 = vcmp.eq.s32.totalorder %v3230, 1
  %vm3297 = vcmp.eq.s32.totalorder %v3231, 1
  %vm3298 = vcmp.eq.s32.totalorder %v3232, 1
  %vm3299 = vcmp.eq.s32.totalorder %v3233, 1
  %vm3300 = vcmp.eq.s32.totalorder %v3234, 1
  %vm3301 = vcmp.eq.s32.totalorder %v3235, 1
  %vm3302 = vcmp.eq.s32.totalorder %v3236, 1
  %vm3303 = vcmp.eq.s32.totalorder %v3237, 1
  %vm3304 = vcmp.eq.s32.totalorder %v3238, 1
  %vm3305 = vcmp.eq.s32.totalorder %v3239, 1
  %vm3306 = vcmp.eq.s32.totalorder %v3240, 1
  %vm3307 = vcmp.eq.s32.totalorder %v3241, 1
  %vm3308 = vcmp.eq.s32.totalorder %v3242, 1
  %vm3309 = vcmp.eq.s32.totalorder %v3243, 1
  %vm3310 = vcmp.eq.s32.totalorder %v3244, 1
  %vm3311 = vcmp.eq.s32.totalorder %v3245, 1
  %vm3312 = vcmp.eq.s32.totalorder %v3246, 1
  %vm3313 = vcmp.eq.s32.totalorder %v3247, 1
  %vm3314 = vcmp.eq.s32.totalorder %v3248, 1
  %vm3315 = vcmp.eq.s32.totalorder %v3249, 1
  %vm3316 = vcmp.eq.s32.totalorder %v3250, 1
  %vm3317 = vcmp.eq.s32.totalorder %v3251, 1
  %vm3318 = vcmp.eq.s32.totalorder %v3252, 1
  %vm3319 = vcmp.eq.s32.totalorder %v3253, 1
  %vm3320 = vcmp.eq.s32.totalorder %v3254, 1
  %vm3321 = vcmp.eq.s32.totalorder %v3255, 1
  %vm3322 = vcmp.eq.s32.totalorder %v3256, 1
  %vm3323 = vcmp.eq.s32.totalorder %v3257, 1
  %vm3324 = vcmp.eq.s32.totalorder %v3258, 1
  %vm3325 = vcmp.eq.s32.totalorder %v3259, 1
  %vm3326 = vcmp.eq.s32.totalorder %v3260, 1
  %vm3327 = vcmp.eq.s32.totalorder %v3261, 1
  %vm3328 = vcmp.eq.s32.totalorder %v3262, 1
  %vm3329 = vcmp.eq.s32.totalorder %v3263, 1
  %vm3330 = vcmp.eq.s32.totalorder %v3264, 1
  %vm3331 = vcmp.eq.s32.totalorder %v3265, 1
  %vm3332 = vcmp.eq.s32.totalorder %v3266, 1
  %vm3333 = vcmp.eq.s32.totalorder %v3267, 1
  %vm3334 = vcmp.eq.s32.totalorder %v3268, 1
  %vm3335 = vcmp.eq.s32.totalorder %v3269, 1
  %vm3336 = vcmp.eq.s32.totalorder %v3270, 1
  %vm3337 = vcmp.eq.s32.totalorder %v3271, 1
  %vm3338 = vcmp.eq.s32.totalorder %v3272, 1
  %vm3339 = vcmp.eq.s32.totalorder %v3273, 1
  %vm3407 = vcmask 1040384
  %v3408 = vrot.slane %v1087, 7
  %v3409 = vrot.slane %v1088, 7
  %v3410 = vsel %vm3407, %v3408, %v3409
  %v3411 = vrot.slane %v1089, 7
  %v3412 = vsel %vm3407, %v3409, %v3411
  %v3413 = vrot.slane %v1090, 7
  %v3414 = vsel %vm3407, %v3411, %v3413
  %v3415 = vrot.slane %v1091, 7
  %v3416 = vsel %vm3407, %v3413, %v3415
  %v3417 = vrot.slane %v1092, 7
  %v3418 = vsel %vm3407, %v3415, %v3417
  %v3419 = vrot.slane %v1093, 7
  %v3420 = vsel %vm3407, %v3417, %v3419
  %v3421 = vrot.slane %v1094, 7
  %v3422 = vsel %vm3407, %v3419, %v3421
  %v3423 = vrot.slane %v1095, 7
  %v3424 = vsel %vm3407, %v3421, %v3423
  %v3425 = vrot.slane %v1096, 7
  %v3426 = vsel %vm3407, %v3423, %v3425
  %v3427 = vrot.slane %v1097, 7
  %v3428 = vsel %vm3407, %v3425, %v3427
  %v3429 = vrot.slane %v1098, 7
  %v3430 = vsel %vm3407, %v3427, %v3429
  %v3431 = vrot.slane %v1099, 7
  %v3432 = vsel %vm3407, %v3429, %v3431
  %v3433 = vrot.slane %v1100, 7
  %v3434 = vsel %vm3407, %v3431, %v3433
  %v3435 = vrot.slane %v1101, 7
  %v3436 = vsel %vm3407, %v3433, %v3435
  %v3437 = vrot.slane %v1102, 7
  %v3438 = vsel %vm3407, %v3435, %v3437
  %v3439 = vrot.slane %v1103, 7
  %v3440 = vsel %vm3407, %v3437, %v3439
  %v3441 = vrot.slane %v1104, 7
  %v3442 = vsel %vm3407, %v3439, %v3441
  %v3443 = vrot.slane %v1105, 7
  %v3444 = vsel %vm3407, %v3441, %v3443
  %v3445 = vrot.slane %v1106, 7
  %v3446 = vsel %vm3407, %v3443, %v3445
  %v3447 = vrot.slane %v1107, 7
  %v3448 = vsel %vm3407, %v3445, %v3447
  %v3449 = vrot.slane %v1108, 7
  %v3450 = vsel %vm3407, %v3447, %v3449
  %v3451 = vrot.slane %v1109, 7
  %v3452 = vsel %vm3407, %v3449, %v3451
  %v3453 = vrot.slane %v1110, 7
  %v3454 = vsel %vm3407, %v3451, %v3453
  %v3455 = vrot.slane %v1111, 7
  %v3456 = vsel %vm3407, %v3453, %v3455
  %v3457 = vrot.slane %v1112, 7
  %v3458 = vsel %vm3407, %v3455, %v3457
  %v3459 = vrot.slane %v1113, 7
  %v3460 = vsel %vm3407, %v3457, %v3459
  %v3461 = vrot.slane %v1114, 7
  %v3462 = vsel %vm3407, %v3459, %v3461
  %v3463 = vrot.slane %v1115, 7
  %v3464 = vsel %vm3407, %v3461, %v3463
  %v3465 = vrot.slane %v1116, 7
  %v3466 = vsel %vm3407, %v3463, %v3465
  %v3467 = vrot.slane %v1117, 7
  %v3468 = vsel %vm3407, %v3465, %v3467
  %v3469 = vrot.slane %v1118, 7
  %v3470 = vsel %vm3407, %v3467, %v3469
  %v3471 = vrot.slane %v1119, 7
  %v3472 = vsel %vm3407, %v3469, %v3471
  %v3473 = vrot.slane %v1120, 7
  %v3474 = vsel %vm3407, %v3471, %v3473
  %v3475 = vrot.slane %v1121, 7
  %v3476 = vsel %vm3407, %v3473, %v3475
  %v3477 = vrot.slane %v1122, 7
  %v3478 = vsel %vm3407, %v3475, %v3477
  %v3479 = vrot.slane %v1123, 7
  %v3480 = vsel %vm3407, %v3477, %v3479
  %v3481 = vrot.slane %v1124, 7
  %v3482 = vsel %vm3407, %v3479, %v3481
  %v3483 = vrot.slane %v1125, 7
  %v3484 = vsel %vm3407, %v3481, %v3483
  %v3485 = vrot.slane %v1126, 7
  %v3486 = vsel %vm3407, %v3483, %v3485
  %v3487 = vrot.slane %v1127, 7
  %v3488 = vsel %vm3407, %v3485, %v3487
  %v3489 = vrot.slane %v1128, 7
  %v3490 = vsel %vm3407, %v3487, %v3489
  %v3491 = vrot.slane %v1129, 7
  %v3492 = vsel %vm3407, %v3489, %v3491
  %v3493 = vrot.slane %v1130, 7
  %v3494 = vsel %vm3407, %v3491, %v3493
  %v3495 = vrot.slane %v1131, 7
  %v3496 = vsel %vm3407, %v3493, %v3495
  %v3497 = vrot.slane %v1132, 7
  %v3498 = vsel %vm3407, %v3495, %v3497
  %v3499 = vrot.slane %v1133, 7
  %v3500 = vsel %vm3407, %v3497, %v3499
  %v3501 = vrot.slane %v1134, 7
  %v3502 = vsel %vm3407, %v3499, %v3501
  %v3503 = vrot.slane %v1135, 7
  %v3504 = vsel %vm3407, %v3501, %v3503
  %v3505 = vrot.slane %v1136, 7
  %v3506 = vsel %vm3407, %v3503, %v3505
  %v3507 = vrot.slane %v1137, 7
  %v3508 = vsel %vm3407, %v3505, %v3507
  %v3509 = vrot.slane %v1138, 7
  %v3510 = vsel %vm3407, %v3507, %v3509
  %v3511 = vrot.slane %v1139, 7
  %v3512 = vsel %vm3407, %v3509, %v3511
  %v3513 = vrot.slane %v1140, 7
  %v3514 = vsel %vm3407, %v3511, %v3513
  %v3515 = vrot.slane %v1141, 7
  %v3516 = vsel %vm3407, %v3513, %v3515
  %v3517 = vrot.slane %v1142, 7
  %v3518 = vsel %vm3407, %v3515, %v3517
  %v3519 = vrot.slane %v1143, 7
  %v3520 = vsel %vm3407, %v3517, %v3519
  %v3521 = vrot.slane %v1144, 7
  %v3522 = vsel %vm3407, %v3519, %v3521
  %v3523 = vrot.slane %v1145, 7
  %v3524 = vsel %vm3407, %v3521, %v3523
  %v3525 = vrot.slane %v1146, 7
  %v3526 = vsel %vm3407, %v3523, %v3525
  %v3527 = vrot.slane %v1147, 7
  %v3528 = vsel %vm3407, %v3525, %v3527
  %v3529 = vrot.slane %v1148, 7
  %v3530 = vsel %vm3407, %v3527, %v3529
  %v3531 = vrot.slane %v1149, 7
  %v3532 = vsel %vm3407, %v3529, %v3531
  %v3533 = vrot.slane %v1150, 7
  %v3534 = vsel %vm3407, %v3531, %v3533
  %v3535 = vrot.slane %v1151, 7
  %v3536 = vsel %vm3407, %v3533, %v3535
  %v3537 = vrot.slane %v1152, 7
  %v3538 = vsel %vm3407, %v3535, %v3537
  %v3539 = vrot.slane %v1153, 7
  %v3540 = vsel %vm3407, %v3537, %v3539
  %v3607 = vsel %vm3274, %v3410, 0.0
  %v3608 = vsel %vm3275, %v3412, 0.0
  %v3609 = vsel %vm3276, %v3414, 0.0
  %v3610 = vsel %vm3277, %v3416, 0.0
  %v3611 = vsel %vm3278, %v3418, 0.0
  %v3612 = vsel %vm3279, %v3420, 0.0
  %v3613 = vsel %vm3280, %v3422, 0.0
  %v3614 = vsel %vm3281, %v3424, 0.0
  %v3615 = vsel %vm3282, %v3426, 0.0
  %v3616 = vsel %vm3283, %v3428, 0.0
  %v3617 = vsel %vm3284, %v3430, 0.0
  %v3618 = vsel %vm3285, %v3432, 0.0
  %v3619 = vsel %vm3286, %v3434, 0.0
  %v3620 = vsel %vm3287, %v3436, 0.0
  %v3621 = vsel %vm3288, %v3438, 0.0
  %v3622 = vsel %vm3289, %v3440, 0.0
  %v3623 = vsel %vm3290, %v3442, 0.0
  %v3624 = vsel %vm3291, %v3444, 0.0
  %v3625 = vsel %vm3292, %v3446, 0.0
  %v3626 = vsel %vm3293, %v3448, 0.0
  %v3627 = vsel %vm3294, %v3450, 0.0
  %v3628 = vsel %vm3295, %v3452, 0.0
  %v3629 = vsel %vm3296, %v3454, 0.0
  %v3630 = vsel %vm3297, %v3456, 0.0
  %v3631 = vsel %vm3298, %v3458, 0.0
  %v3632 = vsel %vm3299, %v3460, 0.0
  %v3633 = vsel %vm3300, %v3462, 0.0
  %v3634 = vsel %vm3301, %v3464, 0.0
  %v3635 = vsel %vm3302, %v3466, 0.0
  %v3636 = vsel %vm3303, %v3468, 0.0
  %v3637 = vsel %vm3304, %v3470, 0.0
  %v3638 = vsel %vm3305, %v3472, 0.0
  %v3639 = vsel %vm3306, %v3474, 0.0
  %v3640 = vsel %vm3307, %v3476, 0.0
  %v3641 = vsel %vm3308, %v3478, 0.0
  %v3642 = vsel %vm3309, %v3480, 0.0
  %v3643 = vsel %vm3310, %v3482, 0.0
  %v3644 = vsel %vm3311, %v3484, 0.0
  %v3645 = vsel %vm3312, %v3486, 0.0
  %v3646 = vsel %vm3313, %v3488, 0.0
  %v3647 = vsel %vm3314, %v3490, 0.0
  %v3648 = vsel %vm3315, %v3492, 0.0
  %v3649 = vsel %vm3316, %v3494, 0.0
  %v3650 = vsel %vm3317, %v3496, 0.0
  %v3651 = vsel %vm3318, %v3498, 0.0
  %v3652 = vsel %vm3319, %v3500, 0.0
  %v3653 = vsel %vm3320, %v3502, 0.0
  %v3654 = vsel %vm3321, %v3504, 0.0
  %v3655 = vsel %vm3322, %v3506, 0.0
  %v3656 = vsel %vm3323, %v3508, 0.0
  %v3657 = vsel %vm3324, %v3510, 0.0
  %v3658 = vsel %vm3325, %v3512, 0.0
  %v3659 = vsel %vm3326, %v3514, 0.0
  %v3660 = vsel %vm3327, %v3516, 0.0
  %v3661 = vsel %vm3328, %v3518, 0.0
  %v3662 = vsel %vm3329, %v3520, 0.0
  %v3663 = vsel %vm3330, %v3522, 0.0
  %v3664 = vsel %vm3331, %v3524, 0.0
  %v3665 = vsel %vm3332, %v3526, 0.0
  %v3666 = vsel %vm3333, %v3528, 0.0
  %v3667 = vsel %vm3334, %v3530, 0.0
  %v3668 = vsel %vm3335, %v3532, 0.0
  %v3669 = vsel %vm3336, %v3534, 0.0
  %v3670 = vsel %vm3337, %v3536, 0.0
  %v3671 = vsel %vm3338, %v3538, 0.0
  %v3672 = vsel %vm3339, %v3540, 0.0
  %v3673 = vpack.c.bf16 %v3608, %v3607
  %v3674 = vpack.c.bf16 %v3610, %v3609
  %v3675 = vpack.c.bf16 %v3612, %v3611
  %v3676 = vpack.c.bf16 %v3614, %v3613
  %v3677 = vpack.c.bf16 %v3616, %v3615
  %v3678 = vpack.c.bf16 %v3618, %v3617
  %v3679 = vpack.c.bf16 %v3620, %v3619
  %v3680 = vpack.c.bf16 %v3622, %v3621
  %v3681 = vpack.c.bf16 %v3624, %v3623
  %v3682 = vpack.c.bf16 %v3626, %v3625
  %v3683 = vpack.c.bf16 %v3628, %v3627
  %v3684 = vpack.c.bf16 %v3630, %v3629
  %v3685 = vpack.c.bf16 %v3632, %v3631
  %v3686 = vpack.c.bf16 %v3634, %v3633
  %v3687 = vpack.c.bf16 %v3636, %v3635
  %v3688 = vpack.c.bf16 %v3638, %v3637
  %v3689 = vpack.c.bf16 %v3640, %v3639
  %v3690 = vpack.c.bf16 %v3642, %v3641
  %v3691 = vpack.c.bf16 %v3644, %v3643
  %v3692 = vpack.c.bf16 %v3646, %v3645
  %v3693 = vpack.c.bf16 %v3648, %v3647
  %v3694 = vpack.c.bf16 %v3650, %v3649
  %v3695 = vpack.c.bf16 %v3652, %v3651
  %v3696 = vpack.c.bf16 %v3654, %v3653
  %v3697 = vpack.c.bf16 %v3656, %v3655
  %v3698 = vpack.c.bf16 %v3658, %v3657
  %v3699 = vpack.c.bf16 %v3660, %v3659
  %v3700 = vpack.c.bf16 %v3662, %v3661
  %v3701 = vpack.c.bf16 %v3664, %v3663
  %v3702 = vpack.c.bf16 %v3666, %v3665
  %v3703 = vpack.c.bf16 %v3668, %v3667
  %v3704 = vpack.c.bf16 %v3670, %v3669
  %v3705 = vpack.c.bf16 %v3672, %v3671
  %v3706 = vsel %vm2878, 1, 0
  %v3707 = vsel %vm2879, 1, 0
  %v3708 = vsel %vm2880, 1, 0
  %v3709 = vsel %vm2881, 1, 0
  %v3710 = vsel %vm2882, 1, 0
  %v3711 = vsel %vm2883, 1, 0
  %v3712 = vsel %vm2884, 1, 0
  %v3713 = vsel %vm2885, 1, 0
  %v3714 = vsel %vm2886, 1, 0
  %v3715 = vsel %vm2887, 1, 0
  %v3716 = vsel %vm2888, 1, 0
  %v3717 = vsel %vm2889, 1, 0
  %v3718 = vsel %vm2890, 1, 0
  %v3719 = vsel %vm2891, 1, 0
  %v3720 = vsel %vm2892, 1, 0
  %v3721 = vsel %vm2893, 1, 0
  %v3722 = vsel %vm2894, 1, 0
  %v3723 = vsel %vm2895, 1, 0
  %v3724 = vsel %vm2896, 1, 0
  %v3725 = vsel %vm2897, 1, 0
  %v3726 = vsel %vm2898, 1, 0
  %v3727 = vsel %vm2899, 1, 0
  %v3728 = vsel %vm2900, 1, 0
  %v3729 = vsel %vm2901, 1, 0
  %v3730 = vsel %vm2902, 1, 0
  %v3731 = vsel %vm2903, 1, 0
  %v3732 = vsel %vm2904, 1, 0
  %v3733 = vsel %vm2905, 1, 0
  %v3734 = vsel %vm2906, 1, 0
  %v3735 = vsel %vm2907, 1, 0
  %v3736 = vsel %vm2908, 1, 0
  %v3737 = vsel %vm2909, 1, 0
  %v3738 = vsel %vm2910, 1, 0
  %v3739 = vsel %vm2911, 1, 0
  %v3740 = vsel %vm2912, 1, 0
  %v3741 = vsel %vm2913, 1, 0
  %v3742 = vsel %vm2914, 1, 0
  %v3743 = vsel %vm2915, 1, 0
  %v3744 = vsel %vm2916, 1, 0
  %v3745 = vsel %vm2917, 1, 0
  %v3746 = vsel %vm2918, 1, 0
  %v3747 = vsel %vm2919, 1, 0
  %v3748 = vsel %vm2920, 1, 0
  %v3749 = vsel %vm2921, 1, 0
  %v3750 = vsel %vm2922, 1, 0
  %v3751 = vsel %vm2923, 1, 0
  %v3752 = vsel %vm2924, 1, 0
  %v3753 = vsel %vm2925, 1, 0
  %v3754 = vsel %vm2926, 1, 0
  %v3755 = vsel %vm2927, 1, 0
  %v3756 = vsel %vm2928, 1, 0
  %v3757 = vsel %vm2929, 1, 0
  %v3758 = vsel %vm2930, 1, 0
  %v3759 = vsel %vm2931, 1, 0
  %v3760 = vsel %vm2932, 1, 0
  %v3761 = vsel %vm2933, 1, 0
  %v3762 = vsel %vm2934, 1, 0
  %v3763 = vsel %vm2935, 1, 0
  %v3764 = vsel %vm2936, 1, 0
  %v3765 = vsel %vm2937, 1, 0
  %v3766 = vsel %vm2938, 1, 0
  %v3767 = vsel %vm2939, 1, 0
  %v3768 = vsel %vm2940, 1, 0
  %v3769 = vsel %vm2941, 1, 0
  %v3770 = vsel %vm2942, 1, 0
  %v3771 = vsel %vm2943, 1, 0
  %vm3772 = vcmp.eq.s32.totalorder %v3706, 1
  %vm3773 = vcmp.eq.s32.totalorder %v3707, 1
  %vm3774 = vcmp.eq.s32.totalorder %v3708, 1
  %vm3775 = vcmp.eq.s32.totalorder %v3709, 1
  %vm3776 = vcmp.eq.s32.totalorder %v3710, 1
  %vm3777 = vcmp.eq.s32.totalorder %v3711, 1
  %vm3778 = vcmp.eq.s32.totalorder %v3712, 1
  %vm3779 = vcmp.eq.s32.totalorder %v3713, 1
  %vm3780 = vcmp.eq.s32.totalorder %v3714, 1
  %vm3781 = vcmp.eq.s32.totalorder %v3715, 1
  %vm3782 = vcmp.eq.s32.totalorder %v3716, 1
  %vm3783 = vcmp.eq.s32.totalorder %v3717, 1
  %vm3784 = vcmp.eq.s32.totalorder %v3718, 1
  %vm3785 = vcmp.eq.s32.totalorder %v3719, 1
  %vm3786 = vcmp.eq.s32.totalorder %v3720, 1
  %vm3787 = vcmp.eq.s32.totalorder %v3721, 1
  %vm3788 = vcmp.eq.s32.totalorder %v3722, 1
  %vm3789 = vcmp.eq.s32.totalorder %v3723, 1
  %vm3790 = vcmp.eq.s32.totalorder %v3724, 1
  %vm3791 = vcmp.eq.s32.totalorder %v3725, 1
  %vm3792 = vcmp.eq.s32.totalorder %v3726, 1
  %vm3793 = vcmp.eq.s32.totalorder %v3727, 1
  %vm3794 = vcmp.eq.s32.totalorder %v3728, 1
  %vm3795 = vcmp.eq.s32.totalorder %v3729, 1
  %vm3796 = vcmp.eq.s32.totalorder %v3730, 1
  %vm3797 = vcmp.eq.s32.totalorder %v3731, 1
  %vm3798 = vcmp.eq.s32.totalorder %v3732, 1
  %vm3799 = vcmp.eq.s32.totalorder %v3733, 1
  %vm3800 = vcmp.eq.s32.totalorder %v3734, 1
  %vm3801 = vcmp.eq.s32.totalorder %v3735, 1
  %vm3802 = vcmp.eq.s32.totalorder %v3736, 1
  %vm3803 = vcmp.eq.s32.totalorder %v3737, 1
  %vm3804 = vcmp.eq.s32.totalorder %v3738, 1
  %vm3805 = vcmp.eq.s32.totalorder %v3739, 1
  %vm3806 = vcmp.eq.s32.totalorder %v3740, 1
  %vm3807 = vcmp.eq.s32.totalorder %v3741, 1
  %vm3808 = vcmp.eq.s32.totalorder %v3742, 1
  %vm3809 = vcmp.eq.s32.totalorder %v3743, 1
  %vm3810 = vcmp.eq.s32.totalorder %v3744, 1
  %vm3811 = vcmp.eq.s32.totalorder %v3745, 1
  %vm3812 = vcmp.eq.s32.totalorder %v3746, 1
  %vm3813 = vcmp.eq.s32.totalorder %v3747, 1
  %vm3814 = vcmp.eq.s32.totalorder %v3748, 1
  %vm3815 = vcmp.eq.s32.totalorder %v3749, 1
  %vm3816 = vcmp.eq.s32.totalorder %v3750, 1
  %vm3817 = vcmp.eq.s32.totalorder %v3751, 1
  %vm3818 = vcmp.eq.s32.totalorder %v3752, 1
  %vm3819 = vcmp.eq.s32.totalorder %v3753, 1
  %vm3820 = vcmp.eq.s32.totalorder %v3754, 1
  %vm3821 = vcmp.eq.s32.totalorder %v3755, 1
  %vm3822 = vcmp.eq.s32.totalorder %v3756, 1
  %vm3823 = vcmp.eq.s32.totalorder %v3757, 1
  %vm3824 = vcmp.eq.s32.totalorder %v3758, 1
  %vm3825 = vcmp.eq.s32.totalorder %v3759, 1
  %vm3826 = vcmp.eq.s32.totalorder %v3760, 1
  %vm3827 = vcmp.eq.s32.totalorder %v3761, 1
  %vm3828 = vcmp.eq.s32.totalorder %v3762, 1
  %vm3829 = vcmp.eq.s32.totalorder %v3763, 1
  %vm3830 = vcmp.eq.s32.totalorder %v3764, 1
  %vm3831 = vcmp.eq.s32.totalorder %v3765, 1
  %vm3832 = vcmp.eq.s32.totalorder %v3766, 1
  %vm3833 = vcmp.eq.s32.totalorder %v3767, 1
  %vm3834 = vcmp.eq.s32.totalorder %v3768, 1
  %vm3835 = vcmp.eq.s32.totalorder %v3769, 1
  %vm3836 = vcmp.eq.s32.totalorder %v3770, 1
  %vm3837 = vcmp.eq.s32.totalorder %v3771, 1
  %v3838 = vsel %vm3772, %v1088, 0.0
  %v3839 = vsel %vm3773, %v1089, 0.0
  %v3840 = vsel %vm3774, %v1090, 0.0
  %v3841 = vsel %vm3775, %v1091, 0.0
  %v3842 = vsel %vm3776, %v1092, 0.0
  %v3843 = vsel %vm3777, %v1093, 0.0
  %v3844 = vsel %vm3778, %v1094, 0.0
  %v3845 = vsel %vm3779, %v1095, 0.0
  %v3846 = vsel %vm3780, %v1096, 0.0
  %v3847 = vsel %vm3781, %v1097, 0.0
  %v3848 = vsel %vm3782, %v1098, 0.0
  %v3849 = vsel %vm3783, %v1099, 0.0
  %v3850 = vsel %vm3784, %v1100, 0.0
  %v3851 = vsel %vm3785, %v1101, 0.0
  %v3852 = vsel %vm3786, %v1102, 0.0
  %v3853 = vsel %vm3787, %v1103, 0.0
  %v3854 = vsel %vm3788, %v1104, 0.0
  %v3855 = vsel %vm3789, %v1105, 0.0
  %v3856 = vsel %vm3790, %v1106, 0.0
  %v3857 = vsel %vm3791, %v1107, 0.0
  %v3858 = vsel %vm3792, %v1108, 0.0
  %v3859 = vsel %vm3793, %v1109, 0.0
  %v3860 = vsel %vm3794, %v1110, 0.0
  %v3861 = vsel %vm3795, %v1111, 0.0
  %v3862 = vsel %vm3796, %v1112, 0.0
  %v3863 = vsel %vm3797, %v1113, 0.0
  %v3864 = vsel %vm3798, %v1114, 0.0
  %v3865 = vsel %vm3799, %v1115, 0.0
  %v3866 = vsel %vm3800, %v1116, 0.0
  %v3867 = vsel %vm3801, %v1117, 0.0
  %v3868 = vsel %vm3802, %v1118, 0.0
  %v3869 = vsel %vm3803, %v1119, 0.0
  %v3870 = vsel %vm3804, %v1120, 0.0
  %v3871 = vsel %vm3805, %v1121, 0.0
  %v3872 = vsel %vm3806, %v1122, 0.0
  %v3873 = vsel %vm3807, %v1123, 0.0
  %v3874 = vsel %vm3808, %v1124, 0.0
  %v3875 = vsel %vm3809, %v1125, 0.0
  %v3876 = vsel %vm3810, %v1126, 0.0
  %v3877 = vsel %vm3811, %v1127, 0.0
  %v3878 = vsel %vm3812, %v1128, 0.0
  %v3879 = vsel %vm3813, %v1129, 0.0
  %v3880 = vsel %vm3814, %v1130, 0.0
  %v3881 = vsel %vm3815, %v1131, 0.0
  %v3882 = vsel %vm3816, %v1132, 0.0
  %v3883 = vsel %vm3817, %v1133, 0.0
  %v3884 = vsel %vm3818, %v1134, 0.0
  %v3885 = vsel %vm3819, %v1135, 0.0
  %v3886 = vsel %vm3820, %v1136, 0.0
  %v3887 = vsel %vm3821, %v1137, 0.0
  %v3888 = vsel %vm3822, %v1138, 0.0
  %v3889 = vsel %vm3823, %v1139, 0.0
  %v3890 = vsel %vm3824, %v1140, 0.0
  %v3891 = vsel %vm3825, %v1141, 0.0
  %v3892 = vsel %vm3826, %v1142, 0.0
  %v3893 = vsel %vm3827, %v1143, 0.0
  %v3894 = vsel %vm3828, %v1144, 0.0
  %v3895 = vsel %vm3829, %v1145, 0.0
  %v3896 = vsel %vm3830, %v1146, 0.0
  %v3897 = vsel %vm3831, %v1147, 0.0
  %v3898 = vsel %vm3832, %v1148, 0.0
  %v3899 = vsel %vm3833, %v1149, 0.0
  %v3900 = vsel %vm3834, %v1150, 0.0
  %v3901 = vsel %vm3835, %v1151, 0.0
  %v3902 = vsel %vm3836, %v1152, 0.0
  %v3903 = vsel %vm3837, %v1153, 0.0
  %v3904 = vpack.c.bf16 %v3839, %v3838
  %v3905 = vpack.c.bf16 %v3841, %v3840
  %v3906 = vpack.c.bf16 %v3843, %v3842
  %v3907 = vpack.c.bf16 %v3845, %v3844
  %v3908 = vpack.c.bf16 %v3847, %v3846
  %v3909 = vpack.c.bf16 %v3849, %v3848
  %v3910 = vpack.c.bf16 %v3851, %v3850
  %v3911 = vpack.c.bf16 %v3853, %v3852
  %v3912 = vpack.c.bf16 %v3855, %v3854
  %v3913 = vpack.c.bf16 %v3857, %v3856
  %v3914 = vpack.c.bf16 %v3859, %v3858
  %v3915 = vpack.c.bf16 %v3861, %v3860
  %v3916 = vpack.c.bf16 %v3863, %v3862
  %v3917 = vpack.c.bf16 %v3865, %v3864
  %v3918 = vpack.c.bf16 %v3867, %v3866
  %v3919 = vpack.c.bf16 %v3869, %v3868
  %v3920 = vpack.c.bf16 %v3871, %v3870
  %v3921 = vpack.c.bf16 %v3873, %v3872
  %v3922 = vpack.c.bf16 %v3875, %v3874
  %v3923 = vpack.c.bf16 %v3877, %v3876
  %v3924 = vpack.c.bf16 %v3879, %v3878
  %v3925 = vpack.c.bf16 %v3881, %v3880
  %v3926 = vpack.c.bf16 %v3883, %v3882
  %v3927 = vpack.c.bf16 %v3885, %v3884
  %v3928 = vpack.c.bf16 %v3887, %v3886
  %v3929 = vpack.c.bf16 %v3889, %v3888
  %v3930 = vpack.c.bf16 %v3891, %v3890
  %v3931 = vpack.c.bf16 %v3893, %v3892
  %v3932 = vpack.c.bf16 %v3895, %v3894
  %v3933 = vpack.c.bf16 %v3897, %v3896
  %v3934 = vpack.c.bf16 %v3899, %v3898
  %v3935 = vpack.c.bf16 %v3901, %v3900
  %v3936 = vpack.c.bf16 %v3903, %v3902
  %vm3937 = vmand %vm2878, %vm3076
  %vm3938 = vmand %vm2879, %vm3077
  %vm3939 = vmand %vm2880, %vm3078
  %vm3940 = vmand %vm2881, %vm3079
  %vm3941 = vmand %vm2882, %vm3080
  %vm3942 = vmand %vm2883, %vm3081
  %vm3943 = vmand %vm2884, %vm3082
  %vm3944 = vmand %vm2885, %vm3083
  %vm3945 = vmand %vm2886, %vm3084
  %vm3946 = vmand %vm2887, %vm3085
  %vm3947 = vmand %vm2888, %vm3086
  %vm3948 = vmand %vm2889, %vm3087
  %vm3949 = vmand %vm2890, %vm3088
  %vm3950 = vmand %vm2891, %vm3089
  %vm3951 = vmand %vm2892, %vm3090
  %vm3952 = vmand %vm2893, %vm3091
  %vm3953 = vmand %vm2894, %vm3092
  %vm3954 = vmand %vm2895, %vm3093
  %vm3955 = vmand %vm2896, %vm3094
  %vm3956 = vmand %vm2897, %vm3095
  %vm3957 = vmand %vm2898, %vm3096
  %vm3958 = vmand %vm2899, %vm3097
  %vm3959 = vmand %vm2900, %vm3098
  %vm3960 = vmand %vm2901, %vm3099
  %vm3961 = vmand %vm2902, %vm3100
  %vm3962 = vmand %vm2903, %vm3101
  %vm3963 = vmand %vm2904, %vm3102
  %vm3964 = vmand %vm2905, %vm3103
  %vm3965 = vmand %vm2906, %vm3104
  %vm3966 = vmand %vm2907, %vm3105
  %vm3967 = vmand %vm2908, %vm3106
  %vm3968 = vmand %vm2909, %vm3107
  %vm3969 = vmand %vm2910, %vm3108
  %vm3970 = vmand %vm2911, %vm3109
  %vm3971 = vmand %vm2912, %vm3110
  %vm3972 = vmand %vm2913, %vm3111
  %vm3973 = vmand %vm2914, %vm3112
  %vm3974 = vmand %vm2915, %vm3113
  %vm3975 = vmand %vm2916, %vm3114
  %vm3976 = vmand %vm2917, %vm3115
  %vm3977 = vmand %vm2918, %vm3116
  %vm3978 = vmand %vm2919, %vm3117
  %vm3979 = vmand %vm2920, %vm3118
  %vm3980 = vmand %vm2921, %vm3119
  %vm3981 = vmand %vm2922, %vm3120
  %vm3982 = vmand %vm2923, %vm3121
  %vm3983 = vmand %vm2924, %vm3122
  %vm3984 = vmand %vm2925, %vm3123
  %vm3985 = vmand %vm2926, %vm3124
  %vm3986 = vmand %vm2927, %vm3125
  %vm3987 = vmand %vm2928, %vm3126
  %vm3988 = vmand %vm2929, %vm3127
  %vm3989 = vmand %vm2930, %vm3128
  %vm3990 = vmand %vm2931, %vm3129
  %vm3991 = vmand %vm2932, %vm3130
  %vm3992 = vmand %vm2933, %vm3131
  %vm3993 = vmand %vm2934, %vm3132
  %vm3994 = vmand %vm2935, %vm3133
  %vm3995 = vmand %vm2936, %vm3134
  %vm3996 = vmand %vm2937, %vm3135
  %vm3997 = vmand %vm2938, %vm3136
  %vm3998 = vmand %vm2939, %vm3137
  %vm3999 = vmand %vm2940, %vm3138
  %vm4000 = vmand %vm2941, %vm3139
  %vm4001 = vmand %vm2942, %vm3140
  %vm4002 = vmand %vm2943, %vm3141
  %v4003 = vsel %vm3937, 1, 0
  %v4004 = vsel %vm3938, 1, 0
  %v4005 = vsel %vm3939, 1, 0
  %v4006 = vsel %vm3940, 1, 0
  %v4007 = vsel %vm3941, 1, 0
  %v4008 = vsel %vm3942, 1, 0
  %v4009 = vsel %vm3943, 1, 0
  %v4010 = vsel %vm3944, 1, 0
  %v4011 = vsel %vm3945, 1, 0
  %v4012 = vsel %vm3946, 1, 0
  %v4013 = vsel %vm3947, 1, 0
  %v4014 = vsel %vm3948, 1, 0
  %v4015 = vsel %vm3949, 1, 0
  %v4016 = vsel %vm3950, 1, 0
  %v4017 = vsel %vm3951, 1, 0
  %v4018 = vsel %vm3952, 1, 0
  %v4019 = vsel %vm3953, 1, 0
  %v4020 = vsel %vm3954, 1, 0
  %v4021 = vsel %vm3955, 1, 0
  %v4022 = vsel %vm3956, 1, 0
  %v4023 = vsel %vm3957, 1, 0
  %v4024 = vsel %vm3958, 1, 0
  %v4025 = vsel %vm3959, 1, 0
  %v4026 = vsel %vm3960, 1, 0
  %v4027 = vsel %vm3961, 1, 0
  %v4028 = vsel %vm3962, 1, 0
  %v4029 = vsel %vm3963, 1, 0
  %v4030 = vsel %vm3964, 1, 0
  %v4031 = vsel %vm3965, 1, 0
  %v4032 = vsel %vm3966, 1, 0
  %v4033 = vsel %vm3967, 1, 0
  %v4034 = vsel %vm3968, 1, 0
  %v4035 = vsel %vm3969, 1, 0
  %v4036 = vsel %vm3970, 1, 0
  %v4037 = vsel %vm3971, 1, 0
  %v4038 = vsel %vm3972, 1, 0
  %v4039 = vsel %vm3973, 1, 0
  %v4040 = vsel %vm3974, 1, 0
  %v4041 = vsel %vm3975, 1, 0
  %v4042 = vsel %vm3976, 1, 0
  %v4043 = vsel %vm3977, 1, 0
  %v4044 = vsel %vm3978, 1, 0
  %v4045 = vsel %vm3979, 1, 0
  %v4046 = vsel %vm3980, 1, 0
  %v4047 = vsel %vm3981, 1, 0
  %v4048 = vsel %vm3982, 1, 0
  %v4049 = vsel %vm3983, 1, 0
  %v4050 = vsel %vm3984, 1, 0
  %v4051 = vsel %vm3985, 1, 0
  %v4052 = vsel %vm3986, 1, 0
  %v4053 = vsel %vm3987, 1, 0
  %v4054 = vsel %vm3988, 1, 0
  %v4055 = vsel %vm3989, 1, 0
  %v4056 = vsel %vm3990, 1, 0
  %v4057 = vsel %vm3991, 1, 0
  %v4058 = vsel %vm3992, 1, 0
  %v4059 = vsel %vm3993, 1, 0
  %v4060 = vsel %vm3994, 1, 0
  %v4061 = vsel %vm3995, 1, 0
  %v4062 = vsel %vm3996, 1, 0
  %v4063 = vsel %vm3997, 1, 0
  %v4064 = vsel %vm3998, 1, 0
  %v4065 = vsel %vm3999, 1, 0
  %v4066 = vsel %vm4000, 1, 0
  %v4067 = vsel %vm4001, 1, 0
  %v4068 = vsel %vm4002, 1, 0
  %vm4069 = vcmp.eq.s32.totalorder %v4003, 1
  %vm4070 = vcmp.eq.s32.totalorder %v4004, 1
  %vm4071 = vcmp.eq.s32.totalorder %v4005, 1
  %vm4072 = vcmp.eq.s32.totalorder %v4006, 1
  %vm4073 = vcmp.eq.s32.totalorder %v4007, 1
  %vm4074 = vcmp.eq.s32.totalorder %v4008, 1
  %vm4075 = vcmp.eq.s32.totalorder %v4009, 1
  %vm4076 = vcmp.eq.s32.totalorder %v4010, 1
  %vm4077 = vcmp.eq.s32.totalorder %v4011, 1
  %vm4078 = vcmp.eq.s32.totalorder %v4012, 1
  %vm4079 = vcmp.eq.s32.totalorder %v4013, 1
  %vm4080 = vcmp.eq.s32.totalorder %v4014, 1
  %vm4081 = vcmp.eq.s32.totalorder %v4015, 1
  %vm4082 = vcmp.eq.s32.totalorder %v4016, 1
  %vm4083 = vcmp.eq.s32.totalorder %v4017, 1
  %vm4084 = vcmp.eq.s32.totalorder %v4018, 1
  %vm4085 = vcmp.eq.s32.totalorder %v4019, 1
  %vm4086 = vcmp.eq.s32.totalorder %v4020, 1
  %vm4087 = vcmp.eq.s32.totalorder %v4021, 1
  %vm4088 = vcmp.eq.s32.totalorder %v4022, 1
  %vm4089 = vcmp.eq.s32.totalorder %v4023, 1
  %vm4090 = vcmp.eq.s32.totalorder %v4024, 1
  %vm4091 = vcmp.eq.s32.totalorder %v4025, 1
  %vm4092 = vcmp.eq.s32.totalorder %v4026, 1
  %vm4093 = vcmp.eq.s32.totalorder %v4027, 1
  %vm4094 = vcmp.eq.s32.totalorder %v4028, 1
  %vm4095 = vcmp.eq.s32.totalorder %v4029, 1
  %vm4096 = vcmp.eq.s32.totalorder %v4030, 1
  %vm4097 = vcmp.eq.s32.totalorder %v4031, 1
  %vm4098 = vcmp.eq.s32.totalorder %v4032, 1
  %vm4099 = vcmp.eq.s32.totalorder %v4033, 1
  %vm4100 = vcmp.eq.s32.totalorder %v4034, 1
  %vm4101 = vcmp.eq.s32.totalorder %v4035, 1
  %vm4102 = vcmp.eq.s32.totalorder %v4036, 1
  %vm4103 = vcmp.eq.s32.totalorder %v4037, 1
  %vm4104 = vcmp.eq.s32.totalorder %v4038, 1
  %vm4105 = vcmp.eq.s32.totalorder %v4039, 1
  %vm4106 = vcmp.eq.s32.totalorder %v4040, 1
  %vm4107 = vcmp.eq.s32.totalorder %v4041, 1
  %vm4108 = vcmp.eq.s32.totalorder %v4042, 1
  %vm4109 = vcmp.eq.s32.totalorder %v4043, 1
  %vm4110 = vcmp.eq.s32.totalorder %v4044, 1
  %vm4111 = vcmp.eq.s32.totalorder %v4045, 1
  %vm4112 = vcmp.eq.s32.totalorder %v4046, 1
  %vm4113 = vcmp.eq.s32.totalorder %v4047, 1
  %vm4114 = vcmp.eq.s32.totalorder %v4048, 1
  %vm4115 = vcmp.eq.s32.totalorder %v4049, 1
  %vm4116 = vcmp.eq.s32.totalorder %v4050, 1
  %vm4117 = vcmp.eq.s32.totalorder %v4051, 1
  %vm4118 = vcmp.eq.s32.totalorder %v4052, 1
  %vm4119 = vcmp.eq.s32.totalorder %v4053, 1
  %vm4120 = vcmp.eq.s32.totalorder %v4054, 1
  %vm4121 = vcmp.eq.s32.totalorder %v4055, 1
  %vm4122 = vcmp.eq.s32.totalorder %v4056, 1
  %vm4123 = vcmp.eq.s32.totalorder %v4057, 1
  %vm4124 = vcmp.eq.s32.totalorder %v4058, 1
  %vm4125 = vcmp.eq.s32.totalorder %v4059, 1
  %vm4126 = vcmp.eq.s32.totalorder %v4060, 1
  %vm4127 = vcmp.eq.s32.totalorder %v4061, 1
  %vm4128 = vcmp.eq.s32.totalorder %v4062, 1
  %vm4129 = vcmp.eq.s32.totalorder %v4063, 1
  %vm4130 = vcmp.eq.s32.totalorder %v4064, 1
  %vm4131 = vcmp.eq.s32.totalorder %v4065, 1
  %vm4132 = vcmp.eq.s32.totalorder %v4066, 1
  %vm4133 = vcmp.eq.s32.totalorder %v4067, 1
  %vm4134 = vcmp.eq.s32.totalorder %v4068, 1
  %vm4136 = vcmask 1046528
  %v4137 = vrot.slane %v1088, 1
  %v4138 = vrot.slane %v1089, 1
  %v4139 = vsel %vm4136, %v4137, %v4138
  %v4140 = vrot.slane %v1090, 1
  %v4141 = vsel %vm4136, %v4138, %v4140
  %v4142 = vrot.slane %v1091, 1
  %v4143 = vsel %vm4136, %v4140, %v4142
  %v4144 = vrot.slane %v1092, 1
  %v4145 = vsel %vm4136, %v4142, %v4144
  %v4146 = vrot.slane %v1093, 1
  %v4147 = vsel %vm4136, %v4144, %v4146
  %v4148 = vrot.slane %v1094, 1
  %v4149 = vsel %vm4136, %v4146, %v4148
  %v4150 = vrot.slane %v1095, 1
  %v4151 = vsel %vm4136, %v4148, %v4150
  %v4152 = vrot.slane %v1096, 1
  %v4153 = vsel %vm4136, %v4150, %v4152
  %v4154 = vrot.slane %v1097, 1
  %v4155 = vsel %vm4136, %v4152, %v4154
  %v4156 = vrot.slane %v1098, 1
  %v4157 = vsel %vm4136, %v4154, %v4156
  %v4158 = vrot.slane %v1099, 1
  %v4159 = vsel %vm4136, %v4156, %v4158
  %v4160 = vrot.slane %v1100, 1
  %v4161 = vsel %vm4136, %v4158, %v4160
  %v4162 = vrot.slane %v1101, 1
  %v4163 = vsel %vm4136, %v4160, %v4162
  %v4164 = vrot.slane %v1102, 1
  %v4165 = vsel %vm4136, %v4162, %v4164
  %v4166 = vrot.slane %v1103, 1
  %v4167 = vsel %vm4136, %v4164, %v4166
  %v4168 = vrot.slane %v1104, 1
  %v4169 = vsel %vm4136, %v4166, %v4168
  %v4170 = vrot.slane %v1105, 1
  %v4171 = vsel %vm4136, %v4168, %v4170
  %v4172 = vrot.slane %v1106, 1
  %v4173 = vsel %vm4136, %v4170, %v4172
  %v4174 = vrot.slane %v1107, 1
  %v4175 = vsel %vm4136, %v4172, %v4174
  %v4176 = vrot.slane %v1108, 1
  %v4177 = vsel %vm4136, %v4174, %v4176
  %v4178 = vrot.slane %v1109, 1
  %v4179 = vsel %vm4136, %v4176, %v4178
  %v4180 = vrot.slane %v1110, 1
  %v4181 = vsel %vm4136, %v4178, %v4180
  %v4182 = vrot.slane %v1111, 1
  %v4183 = vsel %vm4136, %v4180, %v4182
  %v4184 = vrot.slane %v1112, 1
  %v4185 = vsel %vm4136, %v4182, %v4184
  %v4186 = vrot.slane %v1113, 1
  %v4187 = vsel %vm4136, %v4184, %v4186
  %v4188 = vrot.slane %v1114, 1
  %v4189 = vsel %vm4136, %v4186, %v4188
  %v4190 = vrot.slane %v1115, 1
  %v4191 = vsel %vm4136, %v4188, %v4190
  %v4192 = vrot.slane %v1116, 1
  %v4193 = vsel %vm4136, %v4190, %v4192
  %v4194 = vrot.slane %v1117, 1
  %v4195 = vsel %vm4136, %v4192, %v4194
  %v4196 = vrot.slane %v1118, 1
  %v4197 = vsel %vm4136, %v4194, %v4196
  %v4198 = vrot.slane %v1119, 1
  %v4199 = vsel %vm4136, %v4196, %v4198
  %v4200 = vrot.slane %v1120, 1
  %v4201 = vsel %vm4136, %v4198, %v4200
  %v4202 = vrot.slane %v1121, 1
  %v4203 = vsel %vm4136, %v4200, %v4202
  %v4204 = vrot.slane %v1122, 1
  %v4205 = vsel %vm4136, %v4202, %v4204
  %v4206 = vrot.slane %v1123, 1
  %v4207 = vsel %vm4136, %v4204, %v4206
  %v4208 = vrot.slane %v1124, 1
  %v4209 = vsel %vm4136, %v4206, %v4208
  %v4210 = vrot.slane %v1125, 1
  %v4211 = vsel %vm4136, %v4208, %v4210
  %v4212 = vrot.slane %v1126, 1
  %v4213 = vsel %vm4136, %v4210, %v4212
  %v4214 = vrot.slane %v1127, 1
  %v4215 = vsel %vm4136, %v4212, %v4214
  %v4216 = vrot.slane %v1128, 1
  %v4217 = vsel %vm4136, %v4214, %v4216
  %v4218 = vrot.slane %v1129, 1
  %v4219 = vsel %vm4136, %v4216, %v4218
  %v4220 = vrot.slane %v1130, 1
  %v4221 = vsel %vm4136, %v4218, %v4220
  %v4222 = vrot.slane %v1131, 1
  %v4223 = vsel %vm4136, %v4220, %v4222
  %v4224 = vrot.slane %v1132, 1
  %v4225 = vsel %vm4136, %v4222, %v4224
  %v4226 = vrot.slane %v1133, 1
  %v4227 = vsel %vm4136, %v4224, %v4226
  %v4228 = vrot.slane %v1134, 1
  %v4229 = vsel %vm4136, %v4226, %v4228
  %v4230 = vrot.slane %v1135, 1
  %v4231 = vsel %vm4136, %v4228, %v4230
  %v4232 = vrot.slane %v1136, 1
  %v4233 = vsel %vm4136, %v4230, %v4232
  %v4234 = vrot.slane %v1137, 1
  %v4235 = vsel %vm4136, %v4232, %v4234
  %v4236 = vrot.slane %v1138, 1
  %v4237 = vsel %vm4136, %v4234, %v4236
  %v4238 = vrot.slane %v1139, 1
  %v4239 = vsel %vm4136, %v4236, %v4238
  %v4240 = vrot.slane %v1140, 1
  %v4241 = vsel %vm4136, %v4238, %v4240
  %v4242 = vrot.slane %v1141, 1
  %v4243 = vsel %vm4136, %v4240, %v4242
  %v4244 = vrot.slane %v1142, 1
  %v4245 = vsel %vm4136, %v4242, %v4244
  %v4246 = vrot.slane %v1143, 1
  %v4247 = vsel %vm4136, %v4244, %v4246
  %v4248 = vrot.slane %v1144, 1
  %v4249 = vsel %vm4136, %v4246, %v4248
  %v4250 = vrot.slane %v1145, 1
  %v4251 = vsel %vm4136, %v4248, %v4250
  %v4252 = vrot.slane %v1146, 1
  %v4253 = vsel %vm4136, %v4250, %v4252
  %v4254 = vrot.slane %v1147, 1
  %v4255 = vsel %vm4136, %v4252, %v4254
  %v4256 = vrot.slane %v1148, 1
  %v4257 = vsel %vm4136, %v4254, %v4256
  %v4258 = vrot.slane %v1149, 1
  %v4259 = vsel %vm4136, %v4256, %v4258
  %v4260 = vrot.slane %v1150, 1
  %v4261 = vsel %vm4136, %v4258, %v4260
  %v4262 = vrot.slane %v1151, 1
  %v4263 = vsel %vm4136, %v4260, %v4262
  %v4264 = vrot.slane %v1152, 1
  %v4265 = vsel %vm4136, %v4262, %v4264
  %v4266 = vrot.slane %v1153, 1
  %v4267 = vsel %vm4136, %v4264, %v4266
  %v4268 = vrot.slane %v1154, 1
  %v4269 = vsel %vm4136, %v4266, %v4268
  %v4336 = vsel %vm4069, %v4139, 0.0
  %v4337 = vsel %vm4070, %v4141, 0.0
  %v4338 = vsel %vm4071, %v4143, 0.0
  %v4339 = vsel %vm4072, %v4145, 0.0
  %v4340 = vsel %vm4073, %v4147, 0.0
  %v4341 = vsel %vm4074, %v4149, 0.0
  %v4342 = vsel %vm4075, %v4151, 0.0
  %v4343 = vsel %vm4076, %v4153, 0.0
  %v4344 = vsel %vm4077, %v4155, 0.0
  %v4345 = vsel %vm4078, %v4157, 0.0
  %v4346 = vsel %vm4079, %v4159, 0.0
  %v4347 = vsel %vm4080, %v4161, 0.0
  %v4348 = vsel %vm4081, %v4163, 0.0
  %v4349 = vsel %vm4082, %v4165, 0.0
  %v4350 = vsel %vm4083, %v4167, 0.0
  %v4351 = vsel %vm4084, %v4169, 0.0
  %v4352 = vsel %vm4085, %v4171, 0.0
  %v4353 = vsel %vm4086, %v4173, 0.0
  %v4354 = vsel %vm4087, %v4175, 0.0
  %v4355 = vsel %vm4088, %v4177, 0.0
  %v4356 = vsel %vm4089, %v4179, 0.0
  %v4357 = vsel %vm4090, %v4181, 0.0
  %v4358 = vsel %vm4091, %v4183, 0.0
  %v4359 = vsel %vm4092, %v4185, 0.0
  %v4360 = vsel %vm4093, %v4187, 0.0
  %v4361 = vsel %vm4094, %v4189, 0.0
  %v4362 = vsel %vm4095, %v4191, 0.0
  %v4363 = vsel %vm4096, %v4193, 0.0
  %v4364 = vsel %vm4097, %v4195, 0.0
  %v4365 = vsel %vm4098, %v4197, 0.0
  %v4366 = vsel %vm4099, %v4199, 0.0
  %v4367 = vsel %vm4100, %v4201, 0.0
  %v4368 = vsel %vm4101, %v4203, 0.0
  %v4369 = vsel %vm4102, %v4205, 0.0
  %v4370 = vsel %vm4103, %v4207, 0.0
  %v4371 = vsel %vm4104, %v4209, 0.0
  %v4372 = vsel %vm4105, %v4211, 0.0
  %v4373 = vsel %vm4106, %v4213, 0.0
  %v4374 = vsel %vm4107, %v4215, 0.0
  %v4375 = vsel %vm4108, %v4217, 0.0
  %v4376 = vsel %vm4109, %v4219, 0.0
  %v4377 = vsel %vm4110, %v4221, 0.0
  %v4378 = vsel %vm4111, %v4223, 0.0
  %v4379 = vsel %vm4112, %v4225, 0.0
  %v4380 = vsel %vm4113, %v4227, 0.0
  %v4381 = vsel %vm4114, %v4229, 0.0
  %v4382 = vsel %vm4115, %v4231, 0.0
  %v4383 = vsel %vm4116, %v4233, 0.0
  %v4384 = vsel %vm4117, %v4235, 0.0
  %v4385 = vsel %vm4118, %v4237, 0.0
  %v4386 = vsel %vm4119, %v4239, 0.0
  %v4387 = vsel %vm4120, %v4241, 0.0
  %v4388 = vsel %vm4121, %v4243, 0.0
  %v4389 = vsel %vm4122, %v4245, 0.0
  %v4390 = vsel %vm4123, %v4247, 0.0
  %v4391 = vsel %vm4124, %v4249, 0.0
  %v4392 = vsel %vm4125, %v4251, 0.0
  %v4393 = vsel %vm4126, %v4253, 0.0
  %v4394 = vsel %vm4127, %v4255, 0.0
  %v4395 = vsel %vm4128, %v4257, 0.0
  %v4396 = vsel %vm4129, %v4259, 0.0
  %v4397 = vsel %vm4130, %v4261, 0.0
  %v4398 = vsel %vm4131, %v4263, 0.0
  %v4399 = vsel %vm4132, %v4265, 0.0
  %v4400 = vsel %vm4133, %v4267, 0.0
  %v4401 = vsel %vm4134, %v4269, 0.0
  %v4402 = vpack.c.bf16 %v4337, %v4336
  %v4403 = vpack.c.bf16 %v4339, %v4338
  %v4404 = vpack.c.bf16 %v4341, %v4340
  %v4405 = vpack.c.bf16 %v4343, %v4342
  %v4406 = vpack.c.bf16 %v4345, %v4344
  %v4407 = vpack.c.bf16 %v4347, %v4346
  %v4408 = vpack.c.bf16 %v4349, %v4348
  %v4409 = vpack.c.bf16 %v4351, %v4350
  %v4410 = vpack.c.bf16 %v4353, %v4352
  %v4411 = vpack.c.bf16 %v4355, %v4354
  %v4412 = vpack.c.bf16 %v4357, %v4356
  %v4413 = vpack.c.bf16 %v4359, %v4358
  %v4414 = vpack.c.bf16 %v4361, %v4360
  %v4415 = vpack.c.bf16 %v4363, %v4362
  %v4416 = vpack.c.bf16 %v4365, %v4364
  %v4417 = vpack.c.bf16 %v4367, %v4366
  %v4418 = vpack.c.bf16 %v4369, %v4368
  %v4419 = vpack.c.bf16 %v4371, %v4370
  %v4420 = vpack.c.bf16 %v4373, %v4372
  %v4421 = vpack.c.bf16 %v4375, %v4374
  %v4422 = vpack.c.bf16 %v4377, %v4376
  %v4423 = vpack.c.bf16 %v4379, %v4378
  %v4424 = vpack.c.bf16 %v4381, %v4380
  %v4425 = vpack.c.bf16 %v4383, %v4382
  %v4426 = vpack.c.bf16 %v4385, %v4384
  %v4427 = vpack.c.bf16 %v4387, %v4386
  %v4428 = vpack.c.bf16 %v4389, %v4388
  %v4429 = vpack.c.bf16 %v4391, %v4390
  %v4430 = vpack.c.bf16 %v4393, %v4392
  %v4431 = vpack.c.bf16 %v4395, %v4394
  %v4432 = vpack.c.bf16 %v4397, %v4396
  %v4433 = vpack.c.bf16 %v4399, %v4398
  %v4434 = vpack.c.bf16 %v4401, %v4400
  %v4435 = vsel %vm3010, 1, 0
  %v4436 = vsel %vm3011, 1, 0
  %v4437 = vsel %vm3012, 1, 0
  %v4438 = vsel %vm3013, 1, 0
  %v4439 = vsel %vm3014, 1, 0
  %v4440 = vsel %vm3015, 1, 0
  %v4441 = vsel %vm3016, 1, 0
  %v4442 = vsel %vm3017, 1, 0
  %v4443 = vsel %vm3018, 1, 0
  %v4444 = vsel %vm3019, 1, 0
  %v4445 = vsel %vm3020, 1, 0
  %v4446 = vsel %vm3021, 1, 0
  %v4447 = vsel %vm3022, 1, 0
  %v4448 = vsel %vm3023, 1, 0
  %v4449 = vsel %vm3024, 1, 0
  %v4450 = vsel %vm3025, 1, 0
  %v4451 = vsel %vm3026, 1, 0
  %v4452 = vsel %vm3027, 1, 0
  %v4453 = vsel %vm3028, 1, 0
  %v4454 = vsel %vm3029, 1, 0
  %v4455 = vsel %vm3030, 1, 0
  %v4456 = vsel %vm3031, 1, 0
  %v4457 = vsel %vm3032, 1, 0
  %v4458 = vsel %vm3033, 1, 0
  %v4459 = vsel %vm3034, 1, 0
  %v4460 = vsel %vm3035, 1, 0
  %v4461 = vsel %vm3036, 1, 0
  %v4462 = vsel %vm3037, 1, 0
  %v4463 = vsel %vm3038, 1, 0
  %v4464 = vsel %vm3039, 1, 0
  %v4465 = vsel %vm3040, 1, 0
  %v4466 = vsel %vm3041, 1, 0
  %v4467 = vsel %vm3042, 1, 0
  %v4468 = vsel %vm3043, 1, 0
  %v4469 = vsel %vm3044, 1, 0
  %v4470 = vsel %vm3045, 1, 0
  %v4471 = vsel %vm3046, 1, 0
  %v4472 = vsel %vm3047, 1, 0
  %v4473 = vsel %vm3048, 1, 0
  %v4474 = vsel %vm3049, 1, 0
  %v4475 = vsel %vm3050, 1, 0
  %v4476 = vsel %vm3051, 1, 0
  %v4477 = vsel %vm3052, 1, 0
  %v4478 = vsel %vm3053, 1, 0
  %v4479 = vsel %vm3054, 1, 0
  %v4480 = vsel %vm3055, 1, 0
  %v4481 = vsel %vm3056, 1, 0
  %v4482 = vsel %vm3057, 1, 0
  %v4483 = vsel %vm3058, 1, 0
  %v4484 = vsel %vm3059, 1, 0
  %v4485 = vsel %vm3060, 1, 0
  %v4486 = vsel %vm3061, 1, 0
  %v4487 = vsel %vm3062, 1, 0
  %v4488 = vsel %vm3063, 1, 0
  %v4489 = vsel %vm3064, 1, 0
  %v4490 = vsel %vm3065, 1, 0
  %v4491 = vsel %vm3066, 1, 0
  %v4492 = vsel %vm3067, 1, 0
  %v4493 = vsel %vm3068, 1, 0
  %v4494 = vsel %vm3069, 1, 0
  %v4495 = vsel %vm3070, 1, 0
  %v4496 = vsel %vm3071, 1, 0
  %v4497 = vsel %vm3072, 1, 0
  %v4498 = vsel %vm3073, 1, 0
  %v4499 = vsel %vm3074, 1, 0
  %v4500 = vsel %vm3075, 1, 0
  %vm4501 = vcmp.eq.s32.totalorder %v4435, 1
  %vm4502 = vcmp.eq.s32.totalorder %v4436, 1
  %vm4503 = vcmp.eq.s32.totalorder %v4437, 1
  %vm4504 = vcmp.eq.s32.totalorder %v4438, 1
  %vm4505 = vcmp.eq.s32.totalorder %v4439, 1
  %vm4506 = vcmp.eq.s32.totalorder %v4440, 1
  %vm4507 = vcmp.eq.s32.totalorder %v4441, 1
  %vm4508 = vcmp.eq.s32.totalorder %v4442, 1
  %vm4509 = vcmp.eq.s32.totalorder %v4443, 1
  %vm4510 = vcmp.eq.s32.totalorder %v4444, 1
  %vm4511 = vcmp.eq.s32.totalorder %v4445, 1
  %vm4512 = vcmp.eq.s32.totalorder %v4446, 1
  %vm4513 = vcmp.eq.s32.totalorder %v4447, 1
  %vm4514 = vcmp.eq.s32.totalorder %v4448, 1
  %vm4515 = vcmp.eq.s32.totalorder %v4449, 1
  %vm4516 = vcmp.eq.s32.totalorder %v4450, 1
  %vm4517 = vcmp.eq.s32.totalorder %v4451, 1
  %vm4518 = vcmp.eq.s32.totalorder %v4452, 1
  %vm4519 = vcmp.eq.s32.totalorder %v4453, 1
  %vm4520 = vcmp.eq.s32.totalorder %v4454, 1
  %vm4521 = vcmp.eq.s32.totalorder %v4455, 1
  %vm4522 = vcmp.eq.s32.totalorder %v4456, 1
  %vm4523 = vcmp.eq.s32.totalorder %v4457, 1
  %vm4524 = vcmp.eq.s32.totalorder %v4458, 1
  %vm4525 = vcmp.eq.s32.totalorder %v4459, 1
  %vm4526 = vcmp.eq.s32.totalorder %v4460, 1
  %vm4527 = vcmp.eq.s32.totalorder %v4461, 1
  %vm4528 = vcmp.eq.s32.totalorder %v4462, 1
  %vm4529 = vcmp.eq.s32.totalorder %v4463, 1
  %vm4530 = vcmp.eq.s32.totalorder %v4464, 1
  %vm4531 = vcmp.eq.s32.totalorder %v4465, 1
  %vm4532 = vcmp.eq.s32.totalorder %v4466, 1
  %vm4533 = vcmp.eq.s32.totalorder %v4467, 1
  %vm4534 = vcmp.eq.s32.totalorder %v4468, 1
  %vm4535 = vcmp.eq.s32.totalorder %v4469, 1
  %vm4536 = vcmp.eq.s32.totalorder %v4470, 1
  %vm4537 = vcmp.eq.s32.totalorder %v4471, 1
  %vm4538 = vcmp.eq.s32.totalorder %v4472, 1
  %vm4539 = vcmp.eq.s32.totalorder %v4473, 1
  %vm4540 = vcmp.eq.s32.totalorder %v4474, 1
  %vm4541 = vcmp.eq.s32.totalorder %v4475, 1
  %vm4542 = vcmp.eq.s32.totalorder %v4476, 1
  %vm4543 = vcmp.eq.s32.totalorder %v4477, 1
  %vm4544 = vcmp.eq.s32.totalorder %v4478, 1
  %vm4545 = vcmp.eq.s32.totalorder %v4479, 1
  %vm4546 = vcmp.eq.s32.totalorder %v4480, 1
  %vm4547 = vcmp.eq.s32.totalorder %v4481, 1
  %vm4548 = vcmp.eq.s32.totalorder %v4482, 1
  %vm4549 = vcmp.eq.s32.totalorder %v4483, 1
  %vm4550 = vcmp.eq.s32.totalorder %v4484, 1
  %vm4551 = vcmp.eq.s32.totalorder %v4485, 1
  %vm4552 = vcmp.eq.s32.totalorder %v4486, 1
  %vm4553 = vcmp.eq.s32.totalorder %v4487, 1
  %vm4554 = vcmp.eq.s32.totalorder %v4488, 1
  %vm4555 = vcmp.eq.s32.totalorder %v4489, 1
  %vm4556 = vcmp.eq.s32.totalorder %v4490, 1
  %vm4557 = vcmp.eq.s32.totalorder %v4491, 1
  %vm4558 = vcmp.eq.s32.totalorder %v4492, 1
  %vm4559 = vcmp.eq.s32.totalorder %v4493, 1
  %vm4560 = vcmp.eq.s32.totalorder %v4494, 1
  %vm4561 = vcmp.eq.s32.totalorder %v4495, 1
  %vm4562 = vcmp.eq.s32.totalorder %v4496, 1
  %vm4563 = vcmp.eq.s32.totalorder %v4497, 1
  %vm4564 = vcmp.eq.s32.totalorder %v4498, 1
  %vm4565 = vcmp.eq.s32.totalorder %v4499, 1
  %vm4566 = vcmp.eq.s32.totalorder %v4500, 1
  %v4568 = vrot.slane %v1154, 7
  %v4569 = vsel %vm3407, %v3539, %v4568
  %v4570 = vrot.slane %v1155, 7
  %v4571 = vsel %vm3407, %v4568, %v4570
  %v4574 = vsel %vm4501, %v3414, 0.0
  %v4575 = vsel %vm4502, %v3416, 0.0
  %v4576 = vsel %vm4503, %v3418, 0.0
  %v4577 = vsel %vm4504, %v3420, 0.0
  %v4578 = vsel %vm4505, %v3422, 0.0
  %v4579 = vsel %vm4506, %v3424, 0.0
  %v4580 = vsel %vm4507, %v3426, 0.0
  %v4581 = vsel %vm4508, %v3428, 0.0
  %v4582 = vsel %vm4509, %v3430, 0.0
  %v4583 = vsel %vm4510, %v3432, 0.0
  %v4584 = vsel %vm4511, %v3434, 0.0
  %v4585 = vsel %vm4512, %v3436, 0.0
  %v4586 = vsel %vm4513, %v3438, 0.0
  %v4587 = vsel %vm4514, %v3440, 0.0
  %v4588 = vsel %vm4515, %v3442, 0.0
  %v4589 = vsel %vm4516, %v3444, 0.0
  %v4590 = vsel %vm4517, %v3446, 0.0
  %v4591 = vsel %vm4518, %v3448, 0.0
  %v4592 = vsel %vm4519, %v3450, 0.0
  %v4593 = vsel %vm4520, %v3452, 0.0
  %v4594 = vsel %vm4521, %v3454, 0.0
  %v4595 = vsel %vm4522, %v3456, 0.0
  %v4596 = vsel %vm4523, %v3458, 0.0
  %v4597 = vsel %vm4524, %v3460, 0.0
  %v4598 = vsel %vm4525, %v3462, 0.0
  %v4599 = vsel %vm4526, %v3464, 0.0
  %v4600 = vsel %vm4527, %v3466, 0.0
  %v4601 = vsel %vm4528, %v3468, 0.0
  %v4602 = vsel %vm4529, %v3470, 0.0
  %v4603 = vsel %vm4530, %v3472, 0.0
  %v4604 = vsel %vm4531, %v3474, 0.0
  %v4605 = vsel %vm4532, %v3476, 0.0
  %v4606 = vsel %vm4533, %v3478, 0.0
  %v4607 = vsel %vm4534, %v3480, 0.0
  %v4608 = vsel %vm4535, %v3482, 0.0
  %v4609 = vsel %vm4536, %v3484, 0.0
  %v4610 = vsel %vm4537, %v3486, 0.0
  %v4611 = vsel %vm4538, %v3488, 0.0
  %v4612 = vsel %vm4539, %v3490, 0.0
  %v4613 = vsel %vm4540, %v3492, 0.0
  %v4614 = vsel %vm4541, %v3494, 0.0
  %v4615 = vsel %vm4542, %v3496, 0.0
  %v4616 = vsel %vm4543, %v3498, 0.0
  %v4617 = vsel %vm4544, %v3500, 0.0
  %v4618 = vsel %vm4545, %v3502, 0.0
  %v4619 = vsel %vm4546, %v3504, 0.0
  %v4620 = vsel %vm4547, %v3506, 0.0
  %v4621 = vsel %vm4548, %v3508, 0.0
  %v4622 = vsel %vm4549, %v3510, 0.0
  %v4623 = vsel %vm4550, %v3512, 0.0
  %v4624 = vsel %vm4551, %v3514, 0.0
  %v4625 = vsel %vm4552, %v3516, 0.0
  %v4626 = vsel %vm4553, %v3518, 0.0
  %v4627 = vsel %vm4554, %v3520, 0.0
  %v4628 = vsel %vm4555, %v3522, 0.0
  %v4629 = vsel %vm4556, %v3524, 0.0
  %v4630 = vsel %vm4557, %v3526, 0.0
  %v4631 = vsel %vm4558, %v3528, 0.0
  %v4632 = vsel %vm4559, %v3530, 0.0
  %v4633 = vsel %vm4560, %v3532, 0.0
  %v4634 = vsel %vm4561, %v3534, 0.0
  %v4635 = vsel %vm4562, %v3536, 0.0
  %v4636 = vsel %vm4563, %v3538, 0.0
  %v4637 = vsel %vm4564, %v3540, 0.0
  %v4638 = vsel %vm4565, %v4569, 0.0
  %v4639 = vsel %vm4566, %v4571, 0.0
  %v4640 = vpack.c.bf16 %v4575, %v4574
  %v4641 = vpack.c.bf16 %v4577, %v4576
  %v4642 = vpack.c.bf16 %v4579, %v4578
  %v4643 = vpack.c.bf16 %v4581, %v4580
  %v4644 = vpack.c.bf16 %v4583, %v4582
  %v4645 = vpack.c.bf16 %v4585, %v4584
  %v4646 = vpack.c.bf16 %v4587, %v4586
  %v4647 = vpack.c.bf16 %v4589, %v4588
  %v4648 = vpack.c.bf16 %v4591, %v4590
  %v4649 = vpack.c.bf16 %v4593, %v4592
  %v4650 = vpack.c.bf16 %v4595, %v4594
  %v4651 = vpack.c.bf16 %v4597, %v4596
  %v4652 = vpack.c.bf16 %v4599, %v4598
  %v4653 = vpack.c.bf16 %v4601, %v4600
  %v4654 = vpack.c.bf16 %v4603, %v4602
  %v4655 = vpack.c.bf16 %v4605, %v4604
  %v4656 = vpack.c.bf16 %v4607, %v4606
  %v4657 = vpack.c.bf16 %v4609, %v4608
  %v4658 = vpack.c.bf16 %v4611, %v4610
  %v4659 = vpack.c.bf16 %v4613, %v4612
  %v4660 = vpack.c.bf16 %v4615, %v4614
  %v4661 = vpack.c.bf16 %v4617, %v4616
  %v4662 = vpack.c.bf16 %v4619, %v4618
  %v4663 = vpack.c.bf16 %v4621, %v4620
  %v4664 = vpack.c.bf16 %v4623, %v4622
  %v4665 = vpack.c.bf16 %v4625, %v4624
  %v4666 = vpack.c.bf16 %v4627, %v4626
  %v4667 = vpack.c.bf16 %v4629, %v4628
  %v4668 = vpack.c.bf16 %v4631, %v4630
  %v4669 = vpack.c.bf16 %v4633, %v4632
  %v4670 = vpack.c.bf16 %v4635, %v4634
  %v4671 = vpack.c.bf16 %v4637, %v4636
  %v4672 = vpack.c.bf16 %v4639, %v4638
  %v4673 = vpack.c.bf16 %v1091, %v1090
  %v4674 = vpack.c.bf16 %v1093, %v1092
  %v4675 = vpack.c.bf16 %v1095, %v1094
  %v4676 = vpack.c.bf16 %v1097, %v1096
  %v4677 = vpack.c.bf16 %v1099, %v1098
  %v4678 = vpack.c.bf16 %v1101, %v1100
  %v4679 = vpack.c.bf16 %v1103, %v1102
  %v4680 = vpack.c.bf16 %v1105, %v1104
  %v4681 = vpack.c.bf16 %v1107, %v1106
  %v4682 = vpack.c.bf16 %v1109, %v1108
  %v4683 = vpack.c.bf16 %v1111, %v1110
  %v4684 = vpack.c.bf16 %v1113, %v1112
  %v4685 = vpack.c.bf16 %v1115, %v1114
  %v4686 = vpack.c.bf16 %v1117, %v1116
  %v4687 = vpack.c.bf16 %v1119, %v1118
  %v4688 = vpack.c.bf16 %v1121, %v1120
  %v4689 = vpack.c.bf16 %v1123, %v1122
  %v4690 = vpack.c.bf16 %v1125, %v1124
  %v4691 = vpack.c.bf16 %v1127, %v1126
  %v4692 = vpack.c.bf16 %v1129, %v1128
  %v4693 = vpack.c.bf16 %v1131, %v1130
  %v4694 = vpack.c.bf16 %v1133, %v1132
  %v4695 = vpack.c.bf16 %v1135, %v1134
  %v4696 = vpack.c.bf16 %v1137, %v1136
  %v4697 = vpack.c.bf16 %v1139, %v1138
  %v4698 = vpack.c.bf16 %v1141, %v1140
  %v4699 = vpack.c.bf16 %v1143, %v1142
  %v4700 = vpack.c.bf16 %v1145, %v1144
  %v4701 = vpack.c.bf16 %v1147, %v1146
  %v4702 = vpack.c.bf16 %v1149, %v1148
  %v4703 = vpack.c.bf16 %v1151, %v1150
  %v4704 = vpack.c.bf16 %v1153, %v1152
  %v4705 = vpack.c.bf16 %v1155, %v1154
  %v4706 = vsel %vm3076, 1, 0
  %v4707 = vsel %vm3077, 1, 0
  %v4708 = vsel %vm3078, 1, 0
  %v4709 = vsel %vm3079, 1, 0
  %v4710 = vsel %vm3080, 1, 0
  %v4711 = vsel %vm3081, 1, 0
  %v4712 = vsel %vm3082, 1, 0
  %v4713 = vsel %vm3083, 1, 0
  %v4714 = vsel %vm3084, 1, 0
  %v4715 = vsel %vm3085, 1, 0
  %v4716 = vsel %vm3086, 1, 0
  %v4717 = vsel %vm3087, 1, 0
  %v4718 = vsel %vm3088, 1, 0
  %v4719 = vsel %vm3089, 1, 0
  %v4720 = vsel %vm3090, 1, 0
  %v4721 = vsel %vm3091, 1, 0
  %v4722 = vsel %vm3092, 1, 0
  %v4723 = vsel %vm3093, 1, 0
  %v4724 = vsel %vm3094, 1, 0
  %v4725 = vsel %vm3095, 1, 0
  %v4726 = vsel %vm3096, 1, 0
  %v4727 = vsel %vm3097, 1, 0
  %v4728 = vsel %vm3098, 1, 0
  %v4729 = vsel %vm3099, 1, 0
  %v4730 = vsel %vm3100, 1, 0
  %v4731 = vsel %vm3101, 1, 0
  %v4732 = vsel %vm3102, 1, 0
  %v4733 = vsel %vm3103, 1, 0
  %v4734 = vsel %vm3104, 1, 0
  %v4735 = vsel %vm3105, 1, 0
  %v4736 = vsel %vm3106, 1, 0
  %v4737 = vsel %vm3107, 1, 0
  %v4738 = vsel %vm3108, 1, 0
  %v4739 = vsel %vm3109, 1, 0
  %v4740 = vsel %vm3110, 1, 0
  %v4741 = vsel %vm3111, 1, 0
  %v4742 = vsel %vm3112, 1, 0
  %v4743 = vsel %vm3113, 1, 0
  %v4744 = vsel %vm3114, 1, 0
  %v4745 = vsel %vm3115, 1, 0
  %v4746 = vsel %vm3116, 1, 0
  %v4747 = vsel %vm3117, 1, 0
  %v4748 = vsel %vm3118, 1, 0
  %v4749 = vsel %vm3119, 1, 0
  %v4750 = vsel %vm3120, 1, 0
  %v4751 = vsel %vm3121, 1, 0
  %v4752 = vsel %vm3122, 1, 0
  %v4753 = vsel %vm3123, 1, 0
  %v4754 = vsel %vm3124, 1, 0
  %v4755 = vsel %vm3125, 1, 0
  %v4756 = vsel %vm3126, 1, 0
  %v4757 = vsel %vm3127, 1, 0
  %v4758 = vsel %vm3128, 1, 0
  %v4759 = vsel %vm3129, 1, 0
  %v4760 = vsel %vm3130, 1, 0
  %v4761 = vsel %vm3131, 1, 0
  %v4762 = vsel %vm3132, 1, 0
  %v4763 = vsel %vm3133, 1, 0
  %v4764 = vsel %vm3134, 1, 0
  %v4765 = vsel %vm3135, 1, 0
  %v4766 = vsel %vm3136, 1, 0
  %v4767 = vsel %vm3137, 1, 0
  %v4768 = vsel %vm3138, 1, 0
  %v4769 = vsel %vm3139, 1, 0
  %v4770 = vsel %vm3140, 1, 0
  %v4771 = vsel %vm3141, 1, 0
  %vm4772 = vcmp.eq.s32.totalorder %v4706, 1
  %vm4773 = vcmp.eq.s32.totalorder %v4707, 1
  %vm4774 = vcmp.eq.s32.totalorder %v4708, 1
  %vm4775 = vcmp.eq.s32.totalorder %v4709, 1
  %vm4776 = vcmp.eq.s32.totalorder %v4710, 1
  %vm4777 = vcmp.eq.s32.totalorder %v4711, 1
  %vm4778 = vcmp.eq.s32.totalorder %v4712, 1
  %vm4779 = vcmp.eq.s32.totalorder %v4713, 1
  %vm4780 = vcmp.eq.s32.totalorder %v4714, 1
  %vm4781 = vcmp.eq.s32.totalorder %v4715, 1
  %vm4782 = vcmp.eq.s32.totalorder %v4716, 1
  %vm4783 = vcmp.eq.s32.totalorder %v4717, 1
  %vm4784 = vcmp.eq.s32.totalorder %v4718, 1
  %vm4785 = vcmp.eq.s32.totalorder %v4719, 1
  %vm4786 = vcmp.eq.s32.totalorder %v4720, 1
  %vm4787 = vcmp.eq.s32.totalorder %v4721, 1
  %vm4788 = vcmp.eq.s32.totalorder %v4722, 1
  %vm4789 = vcmp.eq.s32.totalorder %v4723, 1
  %vm4790 = vcmp.eq.s32.totalorder %v4724, 1
  %vm4791 = vcmp.eq.s32.totalorder %v4725, 1
  %vm4792 = vcmp.eq.s32.totalorder %v4726, 1
  %vm4793 = vcmp.eq.s32.totalorder %v4727, 1
  %vm4794 = vcmp.eq.s32.totalorder %v4728, 1
  %vm4795 = vcmp.eq.s32.totalorder %v4729, 1
  %vm4796 = vcmp.eq.s32.totalorder %v4730, 1
  %vm4797 = vcmp.eq.s32.totalorder %v4731, 1
  %vm4798 = vcmp.eq.s32.totalorder %v4732, 1
  %vm4799 = vcmp.eq.s32.totalorder %v4733, 1
  %vm4800 = vcmp.eq.s32.totalorder %v4734, 1
  %vm4801 = vcmp.eq.s32.totalorder %v4735, 1
  %vm4802 = vcmp.eq.s32.totalorder %v4736, 1
  %vm4803 = vcmp.eq.s32.totalorder %v4737, 1
  %vm4804 = vcmp.eq.s32.totalorder %v4738, 1
  %vm4805 = vcmp.eq.s32.totalorder %v4739, 1
  %vm4806 = vcmp.eq.s32.totalorder %v4740, 1
  %vm4807 = vcmp.eq.s32.totalorder %v4741, 1
  %vm4808 = vcmp.eq.s32.totalorder %v4742, 1
  %vm4809 = vcmp.eq.s32.totalorder %v4743, 1
  %vm4810 = vcmp.eq.s32.totalorder %v4744, 1
  %vm4811 = vcmp.eq.s32.totalorder %v4745, 1
  %vm4812 = vcmp.eq.s32.totalorder %v4746, 1
  %vm4813 = vcmp.eq.s32.totalorder %v4747, 1
  %vm4814 = vcmp.eq.s32.totalorder %v4748, 1
  %vm4815 = vcmp.eq.s32.totalorder %v4749, 1
  %vm4816 = vcmp.eq.s32.totalorder %v4750, 1
  %vm4817 = vcmp.eq.s32.totalorder %v4751, 1
  %vm4818 = vcmp.eq.s32.totalorder %v4752, 1
  %vm4819 = vcmp.eq.s32.totalorder %v4753, 1
  %vm4820 = vcmp.eq.s32.totalorder %v4754, 1
  %vm4821 = vcmp.eq.s32.totalorder %v4755, 1
  %vm4822 = vcmp.eq.s32.totalorder %v4756, 1
  %vm4823 = vcmp.eq.s32.totalorder %v4757, 1
  %vm4824 = vcmp.eq.s32.totalorder %v4758, 1
  %vm4825 = vcmp.eq.s32.totalorder %v4759, 1
  %vm4826 = vcmp.eq.s32.totalorder %v4760, 1
  %vm4827 = vcmp.eq.s32.totalorder %v4761, 1
  %vm4828 = vcmp.eq.s32.totalorder %v4762, 1
  %vm4829 = vcmp.eq.s32.totalorder %v4763, 1
  %vm4830 = vcmp.eq.s32.totalorder %v4764, 1
  %vm4831 = vcmp.eq.s32.totalorder %v4765, 1
  %vm4832 = vcmp.eq.s32.totalorder %v4766, 1
  %vm4833 = vcmp.eq.s32.totalorder %v4767, 1
  %vm4834 = vcmp.eq.s32.totalorder %v4768, 1
  %vm4835 = vcmp.eq.s32.totalorder %v4769, 1
  %vm4836 = vcmp.eq.s32.totalorder %v4770, 1
  %vm4837 = vcmp.eq.s32.totalorder %v4771, 1
  %v4839 = vrot.slane %v1155, 1
  %v4840 = vsel %vm4136, %v4268, %v4839
  %v4841 = vrot.slane %v1156, 1
  %v4842 = vsel %vm4136, %v4839, %v4841
  %v4845 = vsel %vm4772, %v4143, 0.0
  %v4846 = vsel %vm4773, %v4145, 0.0
  %v4847 = vsel %vm4774, %v4147, 0.0
  %v4848 = vsel %vm4775, %v4149, 0.0
  %v4849 = vsel %vm4776, %v4151, 0.0
  %v4850 = vsel %vm4777, %v4153, 0.0
  %v4851 = vsel %vm4778, %v4155, 0.0
  %v4852 = vsel %vm4779, %v4157, 0.0
  %v4853 = vsel %vm4780, %v4159, 0.0
  %v4854 = vsel %vm4781, %v4161, 0.0
  %v4855 = vsel %vm4782, %v4163, 0.0
  %v4856 = vsel %vm4783, %v4165, 0.0
  %v4857 = vsel %vm4784, %v4167, 0.0
  %v4858 = vsel %vm4785, %v4169, 0.0
  %v4859 = vsel %vm4786, %v4171, 0.0
  %v4860 = vsel %vm4787, %v4173, 0.0
  %v4861 = vsel %vm4788, %v4175, 0.0
  %v4862 = vsel %vm4789, %v4177, 0.0
  %v4863 = vsel %vm4790, %v4179, 0.0
  %v4864 = vsel %vm4791, %v4181, 0.0
  %v4865 = vsel %vm4792, %v4183, 0.0
  %v4866 = vsel %vm4793, %v4185, 0.0
  %v4867 = vsel %vm4794, %v4187, 0.0
  %v4868 = vsel %vm4795, %v4189, 0.0
  %v4869 = vsel %vm4796, %v4191, 0.0
  %v4870 = vsel %vm4797, %v4193, 0.0
  %v4871 = vsel %vm4798, %v4195, 0.0
  %v4872 = vsel %vm4799, %v4197, 0.0
  %v4873 = vsel %vm4800, %v4199, 0.0
  %v4874 = vsel %vm4801, %v4201, 0.0
  %v4875 = vsel %vm4802, %v4203, 0.0
  %v4876 = vsel %vm4803, %v4205, 0.0
  %v4877 = vsel %vm4804, %v4207, 0.0
  %v4878 = vsel %vm4805, %v4209, 0.0
  %v4879 = vsel %vm4806, %v4211, 0.0
  %v4880 = vsel %vm4807, %v4213, 0.0
  %v4881 = vsel %vm4808, %v4215, 0.0
  %v4882 = vsel %vm4809, %v4217, 0.0
  %v4883 = vsel %vm4810, %v4219, 0.0
  %v4884 = vsel %vm4811, %v4221, 0.0
  %v4885 = vsel %vm4812, %v4223, 0.0
  %v4886 = vsel %vm4813, %v4225, 0.0
  %v4887 = vsel %vm4814, %v4227, 0.0
  %v4888 = vsel %vm4815, %v4229, 0.0
  %v4889 = vsel %vm4816, %v4231, 0.0
  %v4890 = vsel %vm4817, %v4233, 0.0
  %v4891 = vsel %vm4818, %v4235, 0.0
  %v4892 = vsel %vm4819, %v4237, 0.0
  %v4893 = vsel %vm4820, %v4239, 0.0
  %v4894 = vsel %vm4821, %v4241, 0.0
  %v4895 = vsel %vm4822, %v4243, 0.0
  %v4896 = vsel %vm4823, %v4245, 0.0
  %v4897 = vsel %vm4824, %v4247, 0.0
  %v4898 = vsel %vm4825, %v4249, 0.0
  %v4899 = vsel %vm4826, %v4251, 0.0
  %v4900 = vsel %vm4827, %v4253, 0.0
  %v4901 = vsel %vm4828, %v4255, 0.0
  %v4902 = vsel %vm4829, %v4257, 0.0
  %v4903 = vsel %vm4830, %v4259, 0.0
  %v4904 = vsel %vm4831, %v4261, 0.0
  %v4905 = vsel %vm4832, %v4263, 0.0
  %v4906 = vsel %vm4833, %v4265, 0.0
  %v4907 = vsel %vm4834, %v4267, 0.0
  %v4908 = vsel %vm4835, %v4269, 0.0
  %v4909 = vsel %vm4836, %v4840, 0.0
  %v4910 = vsel %vm4837, %v4842, 0.0
  %v4911 = vpack.c.bf16 %v4846, %v4845
  %v4912 = vpack.c.bf16 %v4848, %v4847
  %v4913 = vpack.c.bf16 %v4850, %v4849
  %v4914 = vpack.c.bf16 %v4852, %v4851
  %v4915 = vpack.c.bf16 %v4854, %v4853
  %v4916 = vpack.c.bf16 %v4856, %v4855
  %v4917 = vpack.c.bf16 %v4858, %v4857
  %v4918 = vpack.c.bf16 %v4860, %v4859
  %v4919 = vpack.c.bf16 %v4862, %v4861
  %v4920 = vpack.c.bf16 %v4864, %v4863
  %v4921 = vpack.c.bf16 %v4866, %v4865
  %v4922 = vpack.c.bf16 %v4868, %v4867
  %v4923 = vpack.c.bf16 %v4870, %v4869
  %v4924 = vpack.c.bf16 %v4872, %v4871
  %v4925 = vpack.c.bf16 %v4874, %v4873
  %v4926 = vpack.c.bf16 %v4876, %v4875
  %v4927 = vpack.c.bf16 %v4878, %v4877
  %v4928 = vpack.c.bf16 %v4880, %v4879
  %v4929 = vpack.c.bf16 %v4882, %v4881
  %v4930 = vpack.c.bf16 %v4884, %v4883
  %v4931 = vpack.c.bf16 %v4886, %v4885
  %v4932 = vpack.c.bf16 %v4888, %v4887
  %v4933 = vpack.c.bf16 %v4890, %v4889
  %v4934 = vpack.c.bf16 %v4892, %v4891
  %v4935 = vpack.c.bf16 %v4894, %v4893
  %v4936 = vpack.c.bf16 %v4896, %v4895
  %v4937 = vpack.c.bf16 %v4898, %v4897
  %v4938 = vpack.c.bf16 %v4900, %v4899
  %v4939 = vpack.c.bf16 %v4902, %v4901
  %v4940 = vpack.c.bf16 %v4904, %v4903
  %v4941 = vpack.c.bf16 %v4906, %v4905
  %v4942 = vpack.c.bf16 %v4908, %v4907
  %v4943 = vpack.c.bf16 %v4910, %v4909
  %vm4944 = vmand %vm2944, %vm3010
  %vm4945 = vmand %vm2945, %vm3011
  %vm4946 = vmand %vm2946, %vm3012
  %vm4947 = vmand %vm2947, %vm3013
  %vm4948 = vmand %vm2948, %vm3014
  %vm4949 = vmand %vm2949, %vm3015
  %vm4950 = vmand %vm2950, %vm3016
  %vm4951 = vmand %vm2951, %vm3017
  %vm4952 = vmand %vm2952, %vm3018
  %vm4953 = vmand %vm2953, %vm3019
  %vm4954 = vmand %vm2954, %vm3020
  %vm4955 = vmand %vm2955, %vm3021
  %vm4956 = vmand %vm2956, %vm3022
  %vm4957 = vmand %vm2957, %vm3023
  %vm4958 = vmand %vm2958, %vm3024
  %vm4959 = vmand %vm2959, %vm3025
  %vm4960 = vmand %vm2960, %vm3026
  %vm4961 = vmand %vm2961, %vm3027
  %vm4962 = vmand %vm2962, %vm3028
  %vm4963 = vmand %vm2963, %vm3029
  %vm4964 = vmand %vm2964, %vm3030
  %vm4965 = vmand %vm2965, %vm3031
  %vm4966 = vmand %vm2966, %vm3032
  %vm4967 = vmand %vm2967, %vm3033
  %vm4968 = vmand %vm2968, %vm3034
  %vm4969 = vmand %vm2969, %vm3035
  %vm4970 = vmand %vm2970, %vm3036
  %vm4971 = vmand %vm2971, %vm3037
  %vm4972 = vmand %vm2972, %vm3038
  %vm4973 = vmand %vm2973, %vm3039
  %vm4974 = vmand %vm2974, %vm3040
  %vm4975 = vmand %vm2975, %vm3041
  %vm4976 = vmand %vm2976, %vm3042
  %vm4977 = vmand %vm2977, %vm3043
  %vm4978 = vmand %vm2978, %vm3044
  %vm4979 = vmand %vm2979, %vm3045
  %vm4980 = vmand %vm2980, %vm3046
  %vm4981 = vmand %vm2981, %vm3047
  %vm4982 = vmand %vm2982, %vm3048
  %vm4983 = vmand %vm2983, %vm3049
  %vm4984 = vmand %vm2984, %vm3050
  %vm4985 = vmand %vm2985, %vm3051
  %vm4986 = vmand %vm2986, %vm3052
  %vm4987 = vmand %vm2987, %vm3053
  %vm4988 = vmand %vm2988, %vm3054
  %vm4989 = vmand %vm2989, %vm3055
  %vm4990 = vmand %vm2990, %vm3056
  %vm4991 = vmand %vm2991, %vm3057
  %vm4992 = vmand %vm2992, %vm3058
  %vm4993 = vmand %vm2993, %vm3059
  %vm4994 = vmand %vm2994, %vm3060
  %vm4995 = vmand %vm2995, %vm3061
  %vm4996 = vmand %vm2996, %vm3062
  %vm4997 = vmand %vm2997, %vm3063
  %vm4998 = vmand %vm2998, %vm3064
  %vm4999 = vmand %vm2999, %vm3065
  %vm5000 = vmand %vm3000, %vm3066
  %vm5001 = vmand %vm3001, %vm3067
  %vm5002 = vmand %vm3002, %vm3068
  %vm5003 = vmand %vm3003, %vm3069
  %vm5004 = vmand %vm3004, %vm3070
  %vm5005 = vmand %vm3005, %vm3071
  %vm5006 = vmand %vm3006, %vm3072
  %vm5007 = vmand %vm3007, %vm3073
  %vm5008 = vmand %vm3008, %vm3074
  %vm5009 = vmand %vm3009, %vm3075
  %v5010 = vsel %vm4944, 1, 0
  %v5011 = vsel %vm4945, 1, 0
  %v5012 = vsel %vm4946, 1, 0
  %v5013 = vsel %vm4947, 1, 0
  %v5014 = vsel %vm4948, 1, 0
  %v5015 = vsel %vm4949, 1, 0
  %v5016 = vsel %vm4950, 1, 0
  %v5017 = vsel %vm4951, 1, 0
  %v5018 = vsel %vm4952, 1, 0
  %v5019 = vsel %vm4953, 1, 0
  %v5020 = vsel %vm4954, 1, 0
  %v5021 = vsel %vm4955, 1, 0
  %v5022 = vsel %vm4956, 1, 0
  %v5023 = vsel %vm4957, 1, 0
  %v5024 = vsel %vm4958, 1, 0
  %v5025 = vsel %vm4959, 1, 0
  %v5026 = vsel %vm4960, 1, 0
  %v5027 = vsel %vm4961, 1, 0
  %v5028 = vsel %vm4962, 1, 0
  %v5029 = vsel %vm4963, 1, 0
  %v5030 = vsel %vm4964, 1, 0
  %v5031 = vsel %vm4965, 1, 0
  %v5032 = vsel %vm4966, 1, 0
  %v5033 = vsel %vm4967, 1, 0
  %v5034 = vsel %vm4968, 1, 0
  %v5035 = vsel %vm4969, 1, 0
  %v5036 = vsel %vm4970, 1, 0
  %v5037 = vsel %vm4971, 1, 0
  %v5038 = vsel %vm4972, 1, 0
  %v5039 = vsel %vm4973, 1, 0
  %v5040 = vsel %vm4974, 1, 0
  %v5041 = vsel %vm4975, 1, 0
  %v5042 = vsel %vm4976, 1, 0
  %v5043 = vsel %vm4977, 1, 0
  %v5044 = vsel %vm4978, 1, 0
  %v5045 = vsel %vm4979, 1, 0
  %v5046 = vsel %vm4980, 1, 0
  %v5047 = vsel %vm4981, 1, 0
  %v5048 = vsel %vm4982, 1, 0
  %v5049 = vsel %vm4983, 1, 0
  %v5050 = vsel %vm4984, 1, 0
  %v5051 = vsel %vm4985, 1, 0
  %v5052 = vsel %vm4986, 1, 0
  %v5053 = vsel %vm4987, 1, 0
  %v5054 = vsel %vm4988, 1, 0
  %v5055 = vsel %vm4989, 1, 0
  %v5056 = vsel %vm4990, 1, 0
  %v5057 = vsel %vm4991, 1, 0
  %v5058 = vsel %vm4992, 1, 0
  %v5059 = vsel %vm4993, 1, 0
  %v5060 = vsel %vm4994, 1, 0
  %v5061 = vsel %vm4995, 1, 0
  %v5062 = vsel %vm4996, 1, 0
  %v5063 = vsel %vm4997, 1, 0
  %v5064 = vsel %vm4998, 1, 0
  %v5065 = vsel %vm4999, 1, 0
  %v5066 = vsel %vm5000, 1, 0
  %v5067 = vsel %vm5001, 1, 0
  %v5068 = vsel %vm5002, 1, 0
  %v5069 = vsel %vm5003, 1, 0
  %v5070 = vsel %vm5004, 1, 0
  %v5071 = vsel %vm5005, 1, 0
  %v5072 = vsel %vm5006, 1, 0
  %v5073 = vsel %vm5007, 1, 0
  %v5074 = vsel %vm5008, 1, 0
  %v5075 = vsel %vm5009, 1, 0
  %vm5076 = vcmp.eq.s32.totalorder %v5010, 1
  %vm5077 = vcmp.eq.s32.totalorder %v5011, 1
  %vm5078 = vcmp.eq.s32.totalorder %v5012, 1
  %vm5079 = vcmp.eq.s32.totalorder %v5013, 1
  %vm5080 = vcmp.eq.s32.totalorder %v5014, 1
  %vm5081 = vcmp.eq.s32.totalorder %v5015, 1
  %vm5082 = vcmp.eq.s32.totalorder %v5016, 1
  %vm5083 = vcmp.eq.s32.totalorder %v5017, 1
  %vm5084 = vcmp.eq.s32.totalorder %v5018, 1
  %vm5085 = vcmp.eq.s32.totalorder %v5019, 1
  %vm5086 = vcmp.eq.s32.totalorder %v5020, 1
  %vm5087 = vcmp.eq.s32.totalorder %v5021, 1
  %vm5088 = vcmp.eq.s32.totalorder %v5022, 1
  %vm5089 = vcmp.eq.s32.totalorder %v5023, 1
  %vm5090 = vcmp.eq.s32.totalorder %v5024, 1
  %vm5091 = vcmp.eq.s32.totalorder %v5025, 1
  %vm5092 = vcmp.eq.s32.totalorder %v5026, 1
  %vm5093 = vcmp.eq.s32.totalorder %v5027, 1
  %vm5094 = vcmp.eq.s32.totalorder %v5028, 1
  %vm5095 = vcmp.eq.s32.totalorder %v5029, 1
  %vm5096 = vcmp.eq.s32.totalorder %v5030, 1
  %vm5097 = vcmp.eq.s32.totalorder %v5031, 1
  %vm5098 = vcmp.eq.s32.totalorder %v5032, 1
  %vm5099 = vcmp.eq.s32.totalorder %v5033, 1
  %vm5100 = vcmp.eq.s32.totalorder %v5034, 1
  %vm5101 = vcmp.eq.s32.totalorder %v5035, 1
  %vm5102 = vcmp.eq.s32.totalorder %v5036, 1
  %vm5103 = vcmp.eq.s32.totalorder %v5037, 1
  %vm5104 = vcmp.eq.s32.totalorder %v5038, 1
  %vm5105 = vcmp.eq.s32.totalorder %v5039, 1
  %vm5106 = vcmp.eq.s32.totalorder %v5040, 1
  %vm5107 = vcmp.eq.s32.totalorder %v5041, 1
  %vm5108 = vcmp.eq.s32.totalorder %v5042, 1
  %vm5109 = vcmp.eq.s32.totalorder %v5043, 1
  %vm5110 = vcmp.eq.s32.totalorder %v5044, 1
  %vm5111 = vcmp.eq.s32.totalorder %v5045, 1
  %vm5112 = vcmp.eq.s32.totalorder %v5046, 1
  %vm5113 = vcmp.eq.s32.totalorder %v5047, 1
  %vm5114 = vcmp.eq.s32.totalorder %v5048, 1
  %vm5115 = vcmp.eq.s32.totalorder %v5049, 1
  %vm5116 = vcmp.eq.s32.totalorder %v5050, 1
  %vm5117 = vcmp.eq.s32.totalorder %v5051, 1
  %vm5118 = vcmp.eq.s32.totalorder %v5052, 1
  %vm5119 = vcmp.eq.s32.totalorder %v5053, 1
  %vm5120 = vcmp.eq.s32.totalorder %v5054, 1
  %vm5121 = vcmp.eq.s32.totalorder %v5055, 1
  %vm5122 = vcmp.eq.s32.totalorder %v5056, 1
  %vm5123 = vcmp.eq.s32.totalorder %v5057, 1
  %vm5124 = vcmp.eq.s32.totalorder %v5058, 1
  %vm5125 = vcmp.eq.s32.totalorder %v5059, 1
  %vm5126 = vcmp.eq.s32.totalorder %v5060, 1
  %vm5127 = vcmp.eq.s32.totalorder %v5061, 1
  %vm5128 = vcmp.eq.s32.totalorder %v5062, 1
  %vm5129 = vcmp.eq.s32.totalorder %v5063, 1
  %vm5130 = vcmp.eq.s32.totalorder %v5064, 1
  %vm5131 = vcmp.eq.s32.totalorder %v5065, 1
  %vm5132 = vcmp.eq.s32.totalorder %v5066, 1
  %vm5133 = vcmp.eq.s32.totalorder %v5067, 1
  %vm5134 = vcmp.eq.s32.totalorder %v5068, 1
  %vm5135 = vcmp.eq.s32.totalorder %v5069, 1
  %vm5136 = vcmp.eq.s32.totalorder %v5070, 1
  %vm5137 = vcmp.eq.s32.totalorder %v5071, 1
  %vm5138 = vcmp.eq.s32.totalorder %v5072, 1
  %vm5139 = vcmp.eq.s32.totalorder %v5073, 1
  %vm5140 = vcmp.eq.s32.totalorder %v5074, 1
  %vm5141 = vcmp.eq.s32.totalorder %v5075, 1
  %v5143 = vrot.slane %v1156, 7
  %v5144 = vsel %vm3407, %v4570, %v5143
  %v5145 = vrot.slane %v1157, 7
  %v5146 = vsel %vm3407, %v5143, %v5145
  %v5149 = vsel %vm5076, %v3418, 0.0
  %v5150 = vsel %vm5077, %v3420, 0.0
  %v5151 = vsel %vm5078, %v3422, 0.0
  %v5152 = vsel %vm5079, %v3424, 0.0
  %v5153 = vsel %vm5080, %v3426, 0.0
  %v5154 = vsel %vm5081, %v3428, 0.0
  %v5155 = vsel %vm5082, %v3430, 0.0
  %v5156 = vsel %vm5083, %v3432, 0.0
  %v5157 = vsel %vm5084, %v3434, 0.0
  %v5158 = vsel %vm5085, %v3436, 0.0
  %v5159 = vsel %vm5086, %v3438, 0.0
  %v5160 = vsel %vm5087, %v3440, 0.0
  %v5161 = vsel %vm5088, %v3442, 0.0
  %v5162 = vsel %vm5089, %v3444, 0.0
  %v5163 = vsel %vm5090, %v3446, 0.0
  %v5164 = vsel %vm5091, %v3448, 0.0
  %v5165 = vsel %vm5092, %v3450, 0.0
  %v5166 = vsel %vm5093, %v3452, 0.0
  %v5167 = vsel %vm5094, %v3454, 0.0
  %v5168 = vsel %vm5095, %v3456, 0.0
  %v5169 = vsel %vm5096, %v3458, 0.0
  %v5170 = vsel %vm5097, %v3460, 0.0
  %v5171 = vsel %vm5098, %v3462, 0.0
  %v5172 = vsel %vm5099, %v3464, 0.0
  %v5173 = vsel %vm5100, %v3466, 0.0
  %v5174 = vsel %vm5101, %v3468, 0.0
  %v5175 = vsel %vm5102, %v3470, 0.0
  %v5176 = vsel %vm5103, %v3472, 0.0
  %v5177 = vsel %vm5104, %v3474, 0.0
  %v5178 = vsel %vm5105, %v3476, 0.0
  %v5179 = vsel %vm5106, %v3478, 0.0
  %v5180 = vsel %vm5107, %v3480, 0.0
  %v5181 = vsel %vm5108, %v3482, 0.0
  %v5182 = vsel %vm5109, %v3484, 0.0
  %v5183 = vsel %vm5110, %v3486, 0.0
  %v5184 = vsel %vm5111, %v3488, 0.0
  %v5185 = vsel %vm5112, %v3490, 0.0
  %v5186 = vsel %vm5113, %v3492, 0.0
  %v5187 = vsel %vm5114, %v3494, 0.0
  %v5188 = vsel %vm5115, %v3496, 0.0
  %v5189 = vsel %vm5116, %v3498, 0.0
  %v5190 = vsel %vm5117, %v3500, 0.0
  %v5191 = vsel %vm5118, %v3502, 0.0
  %v5192 = vsel %vm5119, %v3504, 0.0
  %v5193 = vsel %vm5120, %v3506, 0.0
  %v5194 = vsel %vm5121, %v3508, 0.0
  %v5195 = vsel %vm5122, %v3510, 0.0
  %v5196 = vsel %vm5123, %v3512, 0.0
  %v5197 = vsel %vm5124, %v3514, 0.0
  %v5198 = vsel %vm5125, %v3516, 0.0
  %v5199 = vsel %vm5126, %v3518, 0.0
  %v5200 = vsel %vm5127, %v3520, 0.0
  %v5201 = vsel %vm5128, %v3522, 0.0
  %v5202 = vsel %vm5129, %v3524, 0.0
  %v5203 = vsel %vm5130, %v3526, 0.0
  %v5204 = vsel %vm5131, %v3528, 0.0
  %v5205 = vsel %vm5132, %v3530, 0.0
  %v5206 = vsel %vm5133, %v3532, 0.0
  %v5207 = vsel %vm5134, %v3534, 0.0
  %v5208 = vsel %vm5135, %v3536, 0.0
  %v5209 = vsel %vm5136, %v3538, 0.0
  %v5210 = vsel %vm5137, %v3540, 0.0
  %v5211 = vsel %vm5138, %v4569, 0.0
  %v5212 = vsel %vm5139, %v4571, 0.0
  %v5213 = vsel %vm5140, %v5144, 0.0
  %v5214 = vsel %vm5141, %v5146, 0.0
  %v5215 = vpack.c.bf16 %v5150, %v5149
  %v5216 = vpack.c.bf16 %v5152, %v5151
  %v5217 = vpack.c.bf16 %v5154, %v5153
  %v5218 = vpack.c.bf16 %v5156, %v5155
  %v5219 = vpack.c.bf16 %v5158, %v5157
  %v5220 = vpack.c.bf16 %v5160, %v5159
  %v5221 = vpack.c.bf16 %v5162, %v5161
  %v5222 = vpack.c.bf16 %v5164, %v5163
  %v5223 = vpack.c.bf16 %v5166, %v5165
  %v5224 = vpack.c.bf16 %v5168, %v5167
  %v5225 = vpack.c.bf16 %v5170, %v5169
  %v5226 = vpack.c.bf16 %v5172, %v5171
  %v5227 = vpack.c.bf16 %v5174, %v5173
  %v5228 = vpack.c.bf16 %v5176, %v5175
  %v5229 = vpack.c.bf16 %v5178, %v5177
  %v5230 = vpack.c.bf16 %v5180, %v5179
  %v5231 = vpack.c.bf16 %v5182, %v5181
  %v5232 = vpack.c.bf16 %v5184, %v5183
  %v5233 = vpack.c.bf16 %v5186, %v5185
  %v5234 = vpack.c.bf16 %v5188, %v5187
  %v5235 = vpack.c.bf16 %v5190, %v5189
  %v5236 = vpack.c.bf16 %v5192, %v5191
  %v5237 = vpack.c.bf16 %v5194, %v5193
  %v5238 = vpack.c.bf16 %v5196, %v5195
  %v5239 = vpack.c.bf16 %v5198, %v5197
  %v5240 = vpack.c.bf16 %v5200, %v5199
  %v5241 = vpack.c.bf16 %v5202, %v5201
  %v5242 = vpack.c.bf16 %v5204, %v5203
  %v5243 = vpack.c.bf16 %v5206, %v5205
  %v5244 = vpack.c.bf16 %v5208, %v5207
  %v5245 = vpack.c.bf16 %v5210, %v5209
  %v5246 = vpack.c.bf16 %v5212, %v5211
  %v5247 = vpack.c.bf16 %v5214, %v5213
  %v5248 = vsel %vm2944, 1, 0
  %v5249 = vsel %vm2945, 1, 0
  %v5250 = vsel %vm2946, 1, 0
  %v5251 = vsel %vm2947, 1, 0
  %v5252 = vsel %vm2948, 1, 0
  %v5253 = vsel %vm2949, 1, 0
  %v5254 = vsel %vm2950, 1, 0
  %v5255 = vsel %vm2951, 1, 0
  %v5256 = vsel %vm2952, 1, 0
  %v5257 = vsel %vm2953, 1, 0
  %v5258 = vsel %vm2954, 1, 0
  %v5259 = vsel %vm2955, 1, 0
  %v5260 = vsel %vm2956, 1, 0
  %v5261 = vsel %vm2957, 1, 0
  %v5262 = vsel %vm2958, 1, 0
  %v5263 = vsel %vm2959, 1, 0
  %v5264 = vsel %vm2960, 1, 0
  %v5265 = vsel %vm2961, 1, 0
  %v5266 = vsel %vm2962, 1, 0
  %v5267 = vsel %vm2963, 1, 0
  %v5268 = vsel %vm2964, 1, 0
  %v5269 = vsel %vm2965, 1, 0
  %v5270 = vsel %vm2966, 1, 0
  %v5271 = vsel %vm2967, 1, 0
  %v5272 = vsel %vm2968, 1, 0
  %v5273 = vsel %vm2969, 1, 0
  %v5274 = vsel %vm2970, 1, 0
  %v5275 = vsel %vm2971, 1, 0
  %v5276 = vsel %vm2972, 1, 0
  %v5277 = vsel %vm2973, 1, 0
  %v5278 = vsel %vm2974, 1, 0
  %v5279 = vsel %vm2975, 1, 0
  %v5280 = vsel %vm2976, 1, 0
  %v5281 = vsel %vm2977, 1, 0
  %v5282 = vsel %vm2978, 1, 0
  %v5283 = vsel %vm2979, 1, 0
  %v5284 = vsel %vm2980, 1, 0
  %v5285 = vsel %vm2981, 1, 0
  %v5286 = vsel %vm2982, 1, 0
  %v5287 = vsel %vm2983, 1, 0
  %v5288 = vsel %vm2984, 1, 0
  %v5289 = vsel %vm2985, 1, 0
  %v5290 = vsel %vm2986, 1, 0
  %v5291 = vsel %vm2987, 1, 0
  %v5292 = vsel %vm2988, 1, 0
  %v5293 = vsel %vm2989, 1, 0
  %v5294 = vsel %vm2990, 1, 0
  %v5295 = vsel %vm2991, 1, 0
  %v5296 = vsel %vm2992, 1, 0
  %v5297 = vsel %vm2993, 1, 0
  %v5298 = vsel %vm2994, 1, 0
  %v5299 = vsel %vm2995, 1, 0
  %v5300 = vsel %vm2996, 1, 0
  %v5301 = vsel %vm2997, 1, 0
  %v5302 = vsel %vm2998, 1, 0
  %v5303 = vsel %vm2999, 1, 0
  %v5304 = vsel %vm3000, 1, 0
  %v5305 = vsel %vm3001, 1, 0
  %v5306 = vsel %vm3002, 1, 0
  %v5307 = vsel %vm3003, 1, 0
  %v5308 = vsel %vm3004, 1, 0
  %v5309 = vsel %vm3005, 1, 0
  %v5310 = vsel %vm3006, 1, 0
  %v5311 = vsel %vm3007, 1, 0
  %v5312 = vsel %vm3008, 1, 0
  %v5313 = vsel %vm3009, 1, 0
  %vm5314 = vcmp.eq.s32.totalorder %v5248, 1
  %vm5315 = vcmp.eq.s32.totalorder %v5249, 1
  %vm5316 = vcmp.eq.s32.totalorder %v5250, 1
  %vm5317 = vcmp.eq.s32.totalorder %v5251, 1
  %vm5318 = vcmp.eq.s32.totalorder %v5252, 1
  %vm5319 = vcmp.eq.s32.totalorder %v5253, 1
  %vm5320 = vcmp.eq.s32.totalorder %v5254, 1
  %vm5321 = vcmp.eq.s32.totalorder %v5255, 1
  %vm5322 = vcmp.eq.s32.totalorder %v5256, 1
  %vm5323 = vcmp.eq.s32.totalorder %v5257, 1
  %vm5324 = vcmp.eq.s32.totalorder %v5258, 1
  %vm5325 = vcmp.eq.s32.totalorder %v5259, 1
  %vm5326 = vcmp.eq.s32.totalorder %v5260, 1
  %vm5327 = vcmp.eq.s32.totalorder %v5261, 1
  %vm5328 = vcmp.eq.s32.totalorder %v5262, 1
  %vm5329 = vcmp.eq.s32.totalorder %v5263, 1
  %vm5330 = vcmp.eq.s32.totalorder %v5264, 1
  %vm5331 = vcmp.eq.s32.totalorder %v5265, 1
  %vm5332 = vcmp.eq.s32.totalorder %v5266, 1
  %vm5333 = vcmp.eq.s32.totalorder %v5267, 1
  %vm5334 = vcmp.eq.s32.totalorder %v5268, 1
  %vm5335 = vcmp.eq.s32.totalorder %v5269, 1
  %vm5336 = vcmp.eq.s32.totalorder %v5270, 1
  %vm5337 = vcmp.eq.s32.totalorder %v5271, 1
  %vm5338 = vcmp.eq.s32.totalorder %v5272, 1
  %vm5339 = vcmp.eq.s32.totalorder %v5273, 1
  %vm5340 = vcmp.eq.s32.totalorder %v5274, 1
  %vm5341 = vcmp.eq.s32.totalorder %v5275, 1
  %vm5342 = vcmp.eq.s32.totalorder %v5276, 1
  %vm5343 = vcmp.eq.s32.totalorder %v5277, 1
  %vm5344 = vcmp.eq.s32.totalorder %v5278, 1
  %vm5345 = vcmp.eq.s32.totalorder %v5279, 1
  %vm5346 = vcmp.eq.s32.totalorder %v5280, 1
  %vm5347 = vcmp.eq.s32.totalorder %v5281, 1
  %vm5348 = vcmp.eq.s32.totalorder %v5282, 1
  %vm5349 = vcmp.eq.s32.totalorder %v5283, 1
  %vm5350 = vcmp.eq.s32.totalorder %v5284, 1
  %vm5351 = vcmp.eq.s32.totalorder %v5285, 1
  %vm5352 = vcmp.eq.s32.totalorder %v5286, 1
  %vm5353 = vcmp.eq.s32.totalorder %v5287, 1
  %vm5354 = vcmp.eq.s32.totalorder %v5288, 1
  %vm5355 = vcmp.eq.s32.totalorder %v5289, 1
  %vm5356 = vcmp.eq.s32.totalorder %v5290, 1
  %vm5357 = vcmp.eq.s32.totalorder %v5291, 1
  %vm5358 = vcmp.eq.s32.totalorder %v5292, 1
  %vm5359 = vcmp.eq.s32.totalorder %v5293, 1
  %vm5360 = vcmp.eq.s32.totalorder %v5294, 1
  %vm5361 = vcmp.eq.s32.totalorder %v5295, 1
  %vm5362 = vcmp.eq.s32.totalorder %v5296, 1
  %vm5363 = vcmp.eq.s32.totalorder %v5297, 1
  %vm5364 = vcmp.eq.s32.totalorder %v5298, 1
  %vm5365 = vcmp.eq.s32.totalorder %v5299, 1
  %vm5366 = vcmp.eq.s32.totalorder %v5300, 1
  %vm5367 = vcmp.eq.s32.totalorder %v5301, 1
  %vm5368 = vcmp.eq.s32.totalorder %v5302, 1
  %vm5369 = vcmp.eq.s32.totalorder %v5303, 1
  %vm5370 = vcmp.eq.s32.totalorder %v5304, 1
  %vm5371 = vcmp.eq.s32.totalorder %v5305, 1
  %vm5372 = vcmp.eq.s32.totalorder %v5306, 1
  %vm5373 = vcmp.eq.s32.totalorder %v5307, 1
  %vm5374 = vcmp.eq.s32.totalorder %v5308, 1
  %vm5375 = vcmp.eq.s32.totalorder %v5309, 1
  %vm5376 = vcmp.eq.s32.totalorder %v5310, 1
  %vm5377 = vcmp.eq.s32.totalorder %v5311, 1
  %vm5378 = vcmp.eq.s32.totalorder %v5312, 1
  %vm5379 = vcmp.eq.s32.totalorder %v5313, 1
  %v5380 = vsel %vm5314, %v1092, 0.0
  %v5381 = vsel %vm5315, %v1093, 0.0
  %v5382 = vsel %vm5316, %v1094, 0.0
  %v5383 = vsel %vm5317, %v1095, 0.0
  %v5384 = vsel %vm5318, %v1096, 0.0
  %v5385 = vsel %vm5319, %v1097, 0.0
  %v5386 = vsel %vm5320, %v1098, 0.0
  %v5387 = vsel %vm5321, %v1099, 0.0
  %v5388 = vsel %vm5322, %v1100, 0.0
  %v5389 = vsel %vm5323, %v1101, 0.0
  %v5390 = vsel %vm5324, %v1102, 0.0
  %v5391 = vsel %vm5325, %v1103, 0.0
  %v5392 = vsel %vm5326, %v1104, 0.0
  %v5393 = vsel %vm5327, %v1105, 0.0
  %v5394 = vsel %vm5328, %v1106, 0.0
  %v5395 = vsel %vm5329, %v1107, 0.0
  %v5396 = vsel %vm5330, %v1108, 0.0
  %v5397 = vsel %vm5331, %v1109, 0.0
  %v5398 = vsel %vm5332, %v1110, 0.0
  %v5399 = vsel %vm5333, %v1111, 0.0
  %v5400 = vsel %vm5334, %v1112, 0.0
  %v5401 = vsel %vm5335, %v1113, 0.0
  %v5402 = vsel %vm5336, %v1114, 0.0
  %v5403 = vsel %vm5337, %v1115, 0.0
  %v5404 = vsel %vm5338, %v1116, 0.0
  %v5405 = vsel %vm5339, %v1117, 0.0
  %v5406 = vsel %vm5340, %v1118, 0.0
  %v5407 = vsel %vm5341, %v1119, 0.0
  %v5408 = vsel %vm5342, %v1120, 0.0
  %v5409 = vsel %vm5343, %v1121, 0.0
  %v5410 = vsel %vm5344, %v1122, 0.0
  %v5411 = vsel %vm5345, %v1123, 0.0
  %v5412 = vsel %vm5346, %v1124, 0.0
  %v5413 = vsel %vm5347, %v1125, 0.0
  %v5414 = vsel %vm5348, %v1126, 0.0
  %v5415 = vsel %vm5349, %v1127, 0.0
  %v5416 = vsel %vm5350, %v1128, 0.0
  %v5417 = vsel %vm5351, %v1129, 0.0
  %v5418 = vsel %vm5352, %v1130, 0.0
  %v5419 = vsel %vm5353, %v1131, 0.0
  %v5420 = vsel %vm5354, %v1132, 0.0
  %v5421 = vsel %vm5355, %v1133, 0.0
  %v5422 = vsel %vm5356, %v1134, 0.0
  %v5423 = vsel %vm5357, %v1135, 0.0
  %v5424 = vsel %vm5358, %v1136, 0.0
  %v5425 = vsel %vm5359, %v1137, 0.0
  %v5426 = vsel %vm5360, %v1138, 0.0
  %v5427 = vsel %vm5361, %v1139, 0.0
  %v5428 = vsel %vm5362, %v1140, 0.0
  %v5429 = vsel %vm5363, %v1141, 0.0
  %v5430 = vsel %vm5364, %v1142, 0.0
  %v5431 = vsel %vm5365, %v1143, 0.0
  %v5432 = vsel %vm5366, %v1144, 0.0
  %v5433 = vsel %vm5367, %v1145, 0.0
  %v5434 = vsel %vm5368, %v1146, 0.0
  %v5435 = vsel %vm5369, %v1147, 0.0
  %v5436 = vsel %vm5370, %v1148, 0.0
  %v5437 = vsel %vm5371, %v1149, 0.0
  %v5438 = vsel %vm5372, %v1150, 0.0
  %v5439 = vsel %vm5373, %v1151, 0.0
  %v5440 = vsel %vm5374, %v1152, 0.0
  %v5441 = vsel %vm5375, %v1153, 0.0
  %v5442 = vsel %vm5376, %v1154, 0.0
  %v5443 = vsel %vm5377, %v1155, 0.0
  %v5444 = vsel %vm5378, %v1156, 0.0
  %v5445 = vsel %vm5379, %v1157, 0.0
  %v5446 = vpack.c.bf16 %v5381, %v5380
  %v5447 = vpack.c.bf16 %v5383, %v5382
  %v5448 = vpack.c.bf16 %v5385, %v5384
  %v5449 = vpack.c.bf16 %v5387, %v5386
  %v5450 = vpack.c.bf16 %v5389, %v5388
  %v5451 = vpack.c.bf16 %v5391, %v5390
  %v5452 = vpack.c.bf16 %v5393, %v5392
  %v5453 = vpack.c.bf16 %v5395, %v5394
  %v5454 = vpack.c.bf16 %v5397, %v5396
  %v5455 = vpack.c.bf16 %v5399, %v5398
  %v5456 = vpack.c.bf16 %v5401, %v5400
  %v5457 = vpack.c.bf16 %v5403, %v5402
  %v5458 = vpack.c.bf16 %v5405, %v5404
  %v5459 = vpack.c.bf16 %v5407, %v5406
  %v5460 = vpack.c.bf16 %v5409, %v5408
  %v5461 = vpack.c.bf16 %v5411, %v5410
  %v5462 = vpack.c.bf16 %v5413, %v5412
  %v5463 = vpack.c.bf16 %v5415, %v5414
  %v5464 = vpack.c.bf16 %v5417, %v5416
  %v5465 = vpack.c.bf16 %v5419, %v5418
  %v5466 = vpack.c.bf16 %v5421, %v5420
  %v5467 = vpack.c.bf16 %v5423, %v5422
  %v5468 = vpack.c.bf16 %v5425, %v5424
  %v5469 = vpack.c.bf16 %v5427, %v5426
  %v5470 = vpack.c.bf16 %v5429, %v5428
  %v5471 = vpack.c.bf16 %v5431, %v5430
  %v5472 = vpack.c.bf16 %v5433, %v5432
  %v5473 = vpack.c.bf16 %v5435, %v5434
  %v5474 = vpack.c.bf16 %v5437, %v5436
  %v5475 = vpack.c.bf16 %v5439, %v5438
  %v5476 = vpack.c.bf16 %v5441, %v5440
  %v5477 = vpack.c.bf16 %v5443, %v5442
  %v5478 = vpack.c.bf16 %v5445, %v5444
  %vm5479 = vmand %vm2944, %vm3076
  %vm5480 = vmand %vm2945, %vm3077
  %vm5481 = vmand %vm2946, %vm3078
  %vm5482 = vmand %vm2947, %vm3079
  %vm5483 = vmand %vm2948, %vm3080
  %vm5484 = vmand %vm2949, %vm3081
  %vm5485 = vmand %vm2950, %vm3082
  %vm5486 = vmand %vm2951, %vm3083
  %vm5487 = vmand %vm2952, %vm3084
  %vm5488 = vmand %vm2953, %vm3085
  %vm5489 = vmand %vm2954, %vm3086
  %vm5490 = vmand %vm2955, %vm3087
  %vm5491 = vmand %vm2956, %vm3088
  %vm5492 = vmand %vm2957, %vm3089
  %vm5493 = vmand %vm2958, %vm3090
  %vm5494 = vmand %vm2959, %vm3091
  %vm5495 = vmand %vm2960, %vm3092
  %vm5496 = vmand %vm2961, %vm3093
  %vm5497 = vmand %vm2962, %vm3094
  %vm5498 = vmand %vm2963, %vm3095
  %vm5499 = vmand %vm2964, %vm3096
  %vm5500 = vmand %vm2965, %vm3097
  %vm5501 = vmand %vm2966, %vm3098
  %vm5502 = vmand %vm2967, %vm3099
  %vm5503 = vmand %vm2968, %vm3100
  %vm5504 = vmand %vm2969, %vm3101
  %vm5505 = vmand %vm2970, %vm3102
  %vm5506 = vmand %vm2971, %vm3103
  %vm5507 = vmand %vm2972, %vm3104
  %vm5508 = vmand %vm2973, %vm3105
  %vm5509 = vmand %vm2974, %vm3106
  %vm5510 = vmand %vm2975, %vm3107
  %vm5511 = vmand %vm2976, %vm3108
  %vm5512 = vmand %vm2977, %vm3109
  %vm5513 = vmand %vm2978, %vm3110
  %vm5514 = vmand %vm2979, %vm3111
  %vm5515 = vmand %vm2980, %vm3112
  %vm5516 = vmand %vm2981, %vm3113
  %vm5517 = vmand %vm2982, %vm3114
  %vm5518 = vmand %vm2983, %vm3115
  %vm5519 = vmand %vm2984, %vm3116
  %vm5520 = vmand %vm2985, %vm3117
  %vm5521 = vmand %vm2986, %vm3118
  %vm5522 = vmand %vm2987, %vm3119
  %vm5523 = vmand %vm2988, %vm3120
  %vm5524 = vmand %vm2989, %vm3121
  %vm5525 = vmand %vm2990, %vm3122
  %vm5526 = vmand %vm2991, %vm3123
  %vm5527 = vmand %vm2992, %vm3124
  %vm5528 = vmand %vm2993, %vm3125
  %vm5529 = vmand %vm2994, %vm3126
  %vm5530 = vmand %vm2995, %vm3127
  %vm5531 = vmand %vm2996, %vm3128
  %vm5532 = vmand %vm2997, %vm3129
  %vm5533 = vmand %vm2998, %vm3130
  %vm5534 = vmand %vm2999, %vm3131
  %vm5535 = vmand %vm3000, %vm3132
  %vm5536 = vmand %vm3001, %vm3133
  %vm5537 = vmand %vm3002, %vm3134
  %vm5538 = vmand %vm3003, %vm3135
  %vm5539 = vmand %vm3004, %vm3136
  %vm5540 = vmand %vm3005, %vm3137
  %vm5541 = vmand %vm3006, %vm3138
  %vm5542 = vmand %vm3007, %vm3139
  %vm5543 = vmand %vm3008, %vm3140
  %vm5544 = vmand %vm3009, %vm3141
  %v5545 = vsel %vm5479, 1, 0
  %v5546 = vsel %vm5480, 1, 0
  %v5547 = vsel %vm5481, 1, 0
  %v5548 = vsel %vm5482, 1, 0
  %v5549 = vsel %vm5483, 1, 0
  %v5550 = vsel %vm5484, 1, 0
  %v5551 = vsel %vm5485, 1, 0
  %v5552 = vsel %vm5486, 1, 0
  %v5553 = vsel %vm5487, 1, 0
  %v5554 = vsel %vm5488, 1, 0
  %v5555 = vsel %vm5489, 1, 0
  %v5556 = vsel %vm5490, 1, 0
  %v5557 = vsel %vm5491, 1, 0
  %v5558 = vsel %vm5492, 1, 0
  %v5559 = vsel %vm5493, 1, 0
  %v5560 = vsel %vm5494, 1, 0
  %v5561 = vsel %vm5495, 1, 0
  %v5562 = vsel %vm5496, 1, 0
  %v5563 = vsel %vm5497, 1, 0
  %v5564 = vsel %vm5498, 1, 0
  %v5565 = vsel %vm5499, 1, 0
  %v5566 = vsel %vm5500, 1, 0
  %v5567 = vsel %vm5501, 1, 0
  %v5568 = vsel %vm5502, 1, 0
  %v5569 = vsel %vm5503, 1, 0
  %v5570 = vsel %vm5504, 1, 0
  %v5571 = vsel %vm5505, 1, 0
  %v5572 = vsel %vm5506, 1, 0
  %v5573 = vsel %vm5507, 1, 0
  %v5574 = vsel %vm5508, 1, 0
  %v5575 = vsel %vm5509, 1, 0
  %v5576 = vsel %vm5510, 1, 0
  %v5577 = vsel %vm5511, 1, 0
  %v5578 = vsel %vm5512, 1, 0
  %v5579 = vsel %vm5513, 1, 0
  %v5580 = vsel %vm5514, 1, 0
  %v5581 = vsel %vm5515, 1, 0
  %v5582 = vsel %vm5516, 1, 0
  %v5583 = vsel %vm5517, 1, 0
  %v5584 = vsel %vm5518, 1, 0
  %v5585 = vsel %vm5519, 1, 0
  %v5586 = vsel %vm5520, 1, 0
  %v5587 = vsel %vm5521, 1, 0
  %v5588 = vsel %vm5522, 1, 0
  %v5589 = vsel %vm5523, 1, 0
  %v5590 = vsel %vm5524, 1, 0
  %v5591 = vsel %vm5525, 1, 0
  %v5592 = vsel %vm5526, 1, 0
  %v5593 = vsel %vm5527, 1, 0
  %v5594 = vsel %vm5528, 1, 0
  %v5595 = vsel %vm5529, 1, 0
  %v5596 = vsel %vm5530, 1, 0
  %v5597 = vsel %vm5531, 1, 0
  %v5598 = vsel %vm5532, 1, 0
  %v5599 = vsel %vm5533, 1, 0
  %v5600 = vsel %vm5534, 1, 0
  %v5601 = vsel %vm5535, 1, 0
  %v5602 = vsel %vm5536, 1, 0
  %v5603 = vsel %vm5537, 1, 0
  %v5604 = vsel %vm5538, 1, 0
  %v5605 = vsel %vm5539, 1, 0
  %v5606 = vsel %vm5540, 1, 0
  %v5607 = vsel %vm5541, 1, 0
  %v5608 = vsel %vm5542, 1, 0
  %v5609 = vsel %vm5543, 1, 0
  %v5610 = vsel %vm5544, 1, 0
  %vm5611 = vcmp.eq.s32.totalorder %v5545, 1
  %vm5612 = vcmp.eq.s32.totalorder %v5546, 1
  %vm5613 = vcmp.eq.s32.totalorder %v5547, 1
  %vm5614 = vcmp.eq.s32.totalorder %v5548, 1
  %vm5615 = vcmp.eq.s32.totalorder %v5549, 1
  %vm5616 = vcmp.eq.s32.totalorder %v5550, 1
  %vm5617 = vcmp.eq.s32.totalorder %v5551, 1
  %vm5618 = vcmp.eq.s32.totalorder %v5552, 1
  %vm5619 = vcmp.eq.s32.totalorder %v5553, 1
  %vm5620 = vcmp.eq.s32.totalorder %v5554, 1
  %vm5621 = vcmp.eq.s32.totalorder %v5555, 1
  %vm5622 = vcmp.eq.s32.totalorder %v5556, 1
  %vm5623 = vcmp.eq.s32.totalorder %v5557, 1
  %vm5624 = vcmp.eq.s32.totalorder %v5558, 1
  %vm5625 = vcmp.eq.s32.totalorder %v5559, 1
  %vm5626 = vcmp.eq.s32.totalorder %v5560, 1
  %vm5627 = vcmp.eq.s32.totalorder %v5561, 1
  %vm5628 = vcmp.eq.s32.totalorder %v5562, 1
  %vm5629 = vcmp.eq.s32.totalorder %v5563, 1
  %vm5630 = vcmp.eq.s32.totalorder %v5564, 1
  %vm5631 = vcmp.eq.s32.totalorder %v5565, 1
  %vm5632 = vcmp.eq.s32.totalorder %v5566, 1
  %vm5633 = vcmp.eq.s32.totalorder %v5567, 1
  %vm5634 = vcmp.eq.s32.totalorder %v5568, 1
  %vm5635 = vcmp.eq.s32.totalorder %v5569, 1
  %vm5636 = vcmp.eq.s32.totalorder %v5570, 1
  %vm5637 = vcmp.eq.s32.totalorder %v5571, 1
  %vm5638 = vcmp.eq.s32.totalorder %v5572, 1
  %vm5639 = vcmp.eq.s32.totalorder %v5573, 1
  %vm5640 = vcmp.eq.s32.totalorder %v5574, 1
  %vm5641 = vcmp.eq.s32.totalorder %v5575, 1
  %vm5642 = vcmp.eq.s32.totalorder %v5576, 1
  %vm5643 = vcmp.eq.s32.totalorder %v5577, 1
  %vm5644 = vcmp.eq.s32.totalorder %v5578, 1
  %vm5645 = vcmp.eq.s32.totalorder %v5579, 1
  %vm5646 = vcmp.eq.s32.totalorder %v5580, 1
  %vm5647 = vcmp.eq.s32.totalorder %v5581, 1
  %vm5648 = vcmp.eq.s32.totalorder %v5582, 1
  %vm5649 = vcmp.eq.s32.totalorder %v5583, 1
  %vm5650 = vcmp.eq.s32.totalorder %v5584, 1
  %vm5651 = vcmp.eq.s32.totalorder %v5585, 1
  %vm5652 = vcmp.eq.s32.totalorder %v5586, 1
  %vm5653 = vcmp.eq.s32.totalorder %v5587, 1
  %vm5654 = vcmp.eq.s32.totalorder %v5588, 1
  %vm5655 = vcmp.eq.s32.totalorder %v5589, 1
  %vm5656 = vcmp.eq.s32.totalorder %v5590, 1
  %vm5657 = vcmp.eq.s32.totalorder %v5591, 1
  %vm5658 = vcmp.eq.s32.totalorder %v5592, 1
  %vm5659 = vcmp.eq.s32.totalorder %v5593, 1
  %vm5660 = vcmp.eq.s32.totalorder %v5594, 1
  %vm5661 = vcmp.eq.s32.totalorder %v5595, 1
  %vm5662 = vcmp.eq.s32.totalorder %v5596, 1
  %vm5663 = vcmp.eq.s32.totalorder %v5597, 1
  %vm5664 = vcmp.eq.s32.totalorder %v5598, 1
  %vm5665 = vcmp.eq.s32.totalorder %v5599, 1
  %vm5666 = vcmp.eq.s32.totalorder %v5600, 1
  %vm5667 = vcmp.eq.s32.totalorder %v5601, 1
  %vm5668 = vcmp.eq.s32.totalorder %v5602, 1
  %vm5669 = vcmp.eq.s32.totalorder %v5603, 1
  %vm5670 = vcmp.eq.s32.totalorder %v5604, 1
  %vm5671 = vcmp.eq.s32.totalorder %v5605, 1
  %vm5672 = vcmp.eq.s32.totalorder %v5606, 1
  %vm5673 = vcmp.eq.s32.totalorder %v5607, 1
  %vm5674 = vcmp.eq.s32.totalorder %v5608, 1
  %vm5675 = vcmp.eq.s32.totalorder %v5609, 1
  %vm5676 = vcmp.eq.s32.totalorder %v5610, 1
  %v5678 = vrot.slane %v1157, 1
  %v5679 = vsel %vm4136, %v4841, %v5678
  %v5680 = vrot.slane %v1158, 1
  %v5681 = vsel %vm4136, %v5678, %v5680
  %v5684 = vsel %vm5611, %v4147, 0.0
  %v5685 = vsel %vm5612, %v4149, 0.0
  %v5686 = vsel %vm5613, %v4151, 0.0
  %v5687 = vsel %vm5614, %v4153, 0.0
  %v5688 = vsel %vm5615, %v4155, 0.0
  %v5689 = vsel %vm5616, %v4157, 0.0
  %v5690 = vsel %vm5617, %v4159, 0.0
  %v5691 = vsel %vm5618, %v4161, 0.0
  %v5692 = vsel %vm5619, %v4163, 0.0
  %v5693 = vsel %vm5620, %v4165, 0.0
  %v5694 = vsel %vm5621, %v4167, 0.0
  %v5695 = vsel %vm5622, %v4169, 0.0
  %v5696 = vsel %vm5623, %v4171, 0.0
  %v5697 = vsel %vm5624, %v4173, 0.0
  %v5698 = vsel %vm5625, %v4175, 0.0
  %v5699 = vsel %vm5626, %v4177, 0.0
  %v5700 = vsel %vm5627, %v4179, 0.0
  %v5701 = vsel %vm5628, %v4181, 0.0
  %v5702 = vsel %vm5629, %v4183, 0.0
  %v5703 = vsel %vm5630, %v4185, 0.0
  %v5704 = vsel %vm5631, %v4187, 0.0
  %v5705 = vsel %vm5632, %v4189, 0.0
  %v5706 = vsel %vm5633, %v4191, 0.0
  %v5707 = vsel %vm5634, %v4193, 0.0
  %v5708 = vsel %vm5635, %v4195, 0.0
  %v5709 = vsel %vm5636, %v4197, 0.0
  %v5710 = vsel %vm5637, %v4199, 0.0
  %v5711 = vsel %vm5638, %v4201, 0.0
  %v5712 = vsel %vm5639, %v4203, 0.0
  %v5713 = vsel %vm5640, %v4205, 0.0
  %v5714 = vsel %vm5641, %v4207, 0.0
  %v5715 = vsel %vm5642, %v4209, 0.0
  %v5716 = vsel %vm5643, %v4211, 0.0
  %v5717 = vsel %vm5644, %v4213, 0.0
  %v5718 = vsel %vm5645, %v4215, 0.0
  %v5719 = vsel %vm5646, %v4217, 0.0
  %v5720 = vsel %vm5647, %v4219, 0.0
  %v5721 = vsel %vm5648, %v4221, 0.0
  %v5722 = vsel %vm5649, %v4223, 0.0
  %v5723 = vsel %vm5650, %v4225, 0.0
  %v5724 = vsel %vm5651, %v4227, 0.0
  %v5725 = vsel %vm5652, %v4229, 0.0
  %v5726 = vsel %vm5653, %v4231, 0.0
  %v5727 = vsel %vm5654, %v4233, 0.0
  %v5728 = vsel %vm5655, %v4235, 0.0
  %v5729 = vsel %vm5656, %v4237, 0.0
  %v5730 = vsel %vm5657, %v4239, 0.0
  %v5731 = vsel %vm5658, %v4241, 0.0
  %v5732 = vsel %vm5659, %v4243, 0.0
  %v5733 = vsel %vm5660, %v4245, 0.0
  %v5734 = vsel %vm5661, %v4247, 0.0
  %v5735 = vsel %vm5662, %v4249, 0.0
  %v5736 = vsel %vm5663, %v4251, 0.0
  %v5737 = vsel %vm5664, %v4253, 0.0
  %v5738 = vsel %vm5665, %v4255, 0.0
  %v5739 = vsel %vm5666, %v4257, 0.0
  %v5740 = vsel %vm5667, %v4259, 0.0
  %v5741 = vsel %vm5668, %v4261, 0.0
  %v5742 = vsel %vm5669, %v4263, 0.0
  %v5743 = vsel %vm5670, %v4265, 0.0
  %v5744 = vsel %vm5671, %v4267, 0.0
  %v5745 = vsel %vm5672, %v4269, 0.0
  %v5746 = vsel %vm5673, %v4840, 0.0
  %v5747 = vsel %vm5674, %v4842, 0.0
  %v5748 = vsel %vm5675, %v5679, 0.0
  %v5749 = vsel %vm5676, %v5681, 0.0
  %v5750 = vpack.c.bf16 %v5685, %v5684
  %v5751 = vpack.c.bf16 %v5687, %v5686
  %v5752 = vpack.c.bf16 %v5689, %v5688
  %v5753 = vpack.c.bf16 %v5691, %v5690
  %v5754 = vpack.c.bf16 %v5693, %v5692
  %v5755 = vpack.c.bf16 %v5695, %v5694
  %v5756 = vpack.c.bf16 %v5697, %v5696
  %v5757 = vpack.c.bf16 %v5699, %v5698
  %v5758 = vpack.c.bf16 %v5701, %v5700
  %v5759 = vpack.c.bf16 %v5703, %v5702
  %v5760 = vpack.c.bf16 %v5705, %v5704
  %v5761 = vpack.c.bf16 %v5707, %v5706
  %v5762 = vpack.c.bf16 %v5709, %v5708
  %v5763 = vpack.c.bf16 %v5711, %v5710
  %v5764 = vpack.c.bf16 %v5713, %v5712
  %v5765 = vpack.c.bf16 %v5715, %v5714
  %v5766 = vpack.c.bf16 %v5717, %v5716
  %v5767 = vpack.c.bf16 %v5719, %v5718
  %v5768 = vpack.c.bf16 %v5721, %v5720
  %v5769 = vpack.c.bf16 %v5723, %v5722
  %v5770 = vpack.c.bf16 %v5725, %v5724
  %v5771 = vpack.c.bf16 %v5727, %v5726
  %v5772 = vpack.c.bf16 %v5729, %v5728
  %v5773 = vpack.c.bf16 %v5731, %v5730
  %v5774 = vpack.c.bf16 %v5733, %v5732
  %v5775 = vpack.c.bf16 %v5735, %v5734
  %v5776 = vpack.c.bf16 %v5737, %v5736
  %v5777 = vpack.c.bf16 %v5739, %v5738
  %v5778 = vpack.c.bf16 %v5741, %v5740
  %v5779 = vpack.c.bf16 %v5743, %v5742
  %v5780 = vpack.c.bf16 %v5745, %v5744
  %v5781 = vpack.c.bf16 %v5747, %v5746
  %v5782 = vpack.c.bf16 %v5749, %v5748
  %v5783 = vld [vmem:[%s6] sm:$0xf]
  %v5784 = vld [vmem:[%s6 + $0x4] sm:$0xf]
  %v5785 = vld [vmem:[%s6 + $0x8] sm:$0xf]
  %v5786 = vld [vmem:[%s6 + $0xc] sm:$0xf]
  %v5787 = vld [vmem:[%s6 + $0x10] sm:$0xf]
  %v5788 = vld [vmem:[%s6 + $0x14] sm:$0xf]
  %v5789 = vld [vmem:[%s6 + $0x18] sm:$0xf]
  %v5790 = vld [vmem:[%s6 + $0x1c] sm:$0xf]
  %v5791 = vld [vmem:[%s6 + $0x20] sm:$0xf]
  %v5792 = vld [vmem:[%s6 + $0x24] sm:$0xf]
  %v5793 = vld [vmem:[%s6 + $0x28] sm:$0xf]
  %v5794 = vld [vmem:[%s6 + $0x2c] sm:$0xf]
  %v5795 = vld [vmem:[%s6 + $0x30] sm:$0xf]
  %v5796 = vld [vmem:[%s6 + $0x34] sm:$0xf]
  %v5797 = vld [vmem:[%s6 + $0x38] sm:$0xf]
  %v5798 = vld [vmem:[%s6 + $0x3c] sm:$0xf]
  %v5799 = vld [vmem:[%s6 + $0x40] sm:$0xf]
  %v5800 = vld [vmem:[%s6 + $0x44] sm:$0xf]
  %v5801 = vld [vmem:[%s6 + $0x48] sm:$0xf]
  %v5802 = vld [vmem:[%s6 + $0x4c] sm:$0xf]
  %v5803 = vld [vmem:[%s6 + $0x50] sm:$0xf]
  %v5804 = vld [vmem:[%s6 + $0x54] sm:$0xf]
  %v5805 = vld [vmem:[%s6 + $0x58] sm:$0xf]
  %v5806 = vld [vmem:[%s6 + $0x5c] sm:$0xf]
  %v5807 = vld [vmem:[%s6 + $0x60] sm:$0xf]
  %v5808 = vld [vmem:[%s6 + $0x64] sm:$0xf]
  %v5809 = vld [vmem:[%s6 + $0x68] sm:$0xf]
  %v5810 = vld [vmem:[%s6 + $0x6c] sm:$0xf]
  %v5811 = vld [vmem:[%s6 + $0x70] sm:$0xf]
  %v5812 = vld [vmem:[%s6 + $0x74] sm:$0xf]
  %v5813 = vld [vmem:[%s6 + $0x78] sm:$0xf]
  %v5814 = vld [vmem:[%s6 + $0x7c] sm:$0xf]
  %v5815 = vld [vmem:[%s6 + $0x80] sm:$0xf]
  %v5816 = vld [vmem:[%s6 + $0x84] sm:$0xf]
  %v5817 = vld [vmem:[%s6 + $0x88] sm:$0xf]
  %v5818 = vld [vmem:[%s6 + $0x8c] sm:$0xf]
  %v5819 = vld [vmem:[%s6 + $0x90] sm:$0xf]
  %v5820 = vld [vmem:[%s6 + $0x94] sm:$0xf]
  %v5821 = vld [vmem:[%s6 + $0x98] sm:$0xf]
  %v5822 = vld [vmem:[%s6 + $0x9c] sm:$0xf]
  %v5823 = vld [vmem:[%s6 + $0xa0] sm:$0xf]
  %v5824 = vld [vmem:[%s6 + $0xa4] sm:$0xf]
  %v5825 = vld [vmem:[%s6 + $0xa8] sm:$0xf]
  %v5826 = vld [vmem:[%s6 + $0xac] sm:$0xf]
  %v5827 = vld [vmem:[%s6 + $0xb0] sm:$0xf]
  %v5828 = vld [vmem:[%s6 + $0xb4] sm:$0xf]
  %v5829 = vld [vmem:[%s6 + $0xb8] sm:$0xf]
  %v5830 = vld [vmem:[%s6 + $0xbc] sm:$0xf]
  %v5831 = vld [vmem:[%s6 + $0xc0] sm:$0xf]
  %v5832 = vld [vmem:[%s6 + $0xc4] sm:$0xf]
  %v5833 = vld [vmem:[%s6 + $0xc8] sm:$0xf]
  %v5834 = vld [vmem:[%s6 + $0xcc] sm:$0xf]
  %v5835 = vld [vmem:[%s6 + $0xd0] sm:$0xf]
  %v5836 = vld [vmem:[%s6 + $0xd4] sm:$0xf]
  %v5837 = vld [vmem:[%s6 + $0xd8] sm:$0xf]
  %v5838 = vld [vmem:[%s6 + $0xdc] sm:$0xf]
  %v5839 = vld [vmem:[%s6 + $0xe0] sm:$0xf]
  %v5840 = vld [vmem:[%s6 + $0xe4] sm:$0xf]
  %v5841 = vld [vmem:[%s6 + $0xe8] sm:$0xf]
  %v5842 = vld [vmem:[%s6 + $0xec] sm:$0xf]
  %v5843 = vld [vmem:[%s6 + $0xf0] sm:$0xf]
  %v5844 = vld [vmem:[%s6 + $0xf4] sm:$0xf]
  %v5845 = vld [vmem:[%s6 + $0xf8] sm:$0xf]
  %v5846 = vld [vmem:[%s6 + $0xfc] sm:$0xf]
  %v5847 = vld [vmem:[%s6 + $0x100] sm:$0xf]
  %v5848 = vld [vmem:[%s6 + $0x104] sm:$0xf]
  %v5849 = vld [vmem:[%s6 + $0x108] sm:$0xf]
  %v5850 = vld [vmem:[%s6 + $0x10c] sm:$0xf]
  %v5851 = vld [vmem:[%s6 + $0x110] sm:$0xf]
  %v5852 = vld [vmem:[%s6 + $0x114] sm:$0xf]
  %v5853 = vld [vmem:[%s6 + $0x118] sm:$0xf]
  %v5854 = vld [vmem:[%s6 + $0x11c] sm:$0xf]
  %v5855 = vld [vmem:[%s6 + $0x120] sm:$0xf]
  %v5856 = vld [vmem:[%s6 + $0x124] sm:$0xf]
  %v5857 = vld [vmem:[%s6 + $0x128] sm:$0xf]
  %v5858 = vld [vmem:[%s6 + $0x12c] sm:$0xf]
  %v5859 = vld [vmem:[%s6 + $0x130] sm:$0xf]
  %v5860 = vld [vmem:[%s6 + $0x134] sm:$0xf]
  %v5861 = vld [vmem:[%s6 + $0x138] sm:$0xf]
  %v5862 = vld [vmem:[%s6 + $0x13c] sm:$0xf]
  %v5863 = vld [vmem:[%s6 + $0x140] sm:$0xf]
  %v5864 = vld [vmem:[%s6 + $0x144] sm:$0xf]
  %v5865 = vld [vmem:[%s6 + $0x148] sm:$0xf]
  %v5866 = vld [vmem:[%s6 + $0x14c] sm:$0xf]
  %v5867 = vld [vmem:[%s6 + $0x150] sm:$0xf]
  %v5868 = vld [vmem:[%s6 + $0x154] sm:$0xf]
  %v5869 = vld [vmem:[%s6 + $0x158] sm:$0xf]
  %v5870 = vld [vmem:[%s6 + $0x15c] sm:$0xf]
  %v5871 = vld [vmem:[%s6 + $0x160] sm:$0xf]
  %v5872 = vld [vmem:[%s6 + $0x164] sm:$0xf]
  %v5873 = vld [vmem:[%s6 + $0x168] sm:$0xf]
  %v5874 = vld [vmem:[%s6 + $0x16c] sm:$0xf]
  %v5875 = vld [vmem:[%s6 + $0x170] sm:$0xf]
  %v5876 = vld [vmem:[%s6 + $0x174] sm:$0xf]
  %v5877 = vld [vmem:[%s6 + $0x178] sm:$0xf]
  %v5878 = vld [vmem:[%s6 + $0x17c] sm:$0xf]
  %v5879 = vld [vmem:[%s6 + $0x180] sm:$0xf]
  %v5880 = vld [vmem:[%s6 + $0x184] sm:$0xf]
  %v5881 = vld [vmem:[%s6 + $0x188] sm:$0xf]
  %v5882 = vld [vmem:[%s6 + $0x18c] sm:$0xf]
  %v5883 = vld [vmem:[%s6 + $0x190] sm:$0xf]
  %v5884 = vld [vmem:[%s6 + $0x194] sm:$0xf]
  %v5885 = vld [vmem:[%s6 + $0x198] sm:$0xf]
  %v5886 = vld [vmem:[%s6 + $0x19c] sm:$0xf]
  %v5887 = vld [vmem:[%s6 + $0x1a0] sm:$0xf]
  %v5888 = vld [vmem:[%s6 + $0x1a4] sm:$0xf]
  %v5889 = vld [vmem:[%s6 + $0x1a8] sm:$0xf]
  %v5890 = vld [vmem:[%s6 + $0x1ac] sm:$0xf]
  %v5891 = vld [vmem:[%s6 + $0x1b0] sm:$0xf]
  %v5892 = vld [vmem:[%s6 + $0x1b4] sm:$0xf]
  %v5893 = vld [vmem:[%s6 + $0x1b8] sm:$0xf]
  %v5894 = vld [vmem:[%s6 + $0x1bc] sm:$0xf]
  %v5895 = vld [vmem:[%s6 + $0x1c0] sm:$0xf]
  %v5896 = vld [vmem:[%s6 + $0x1c4] sm:$0xf]
  %v5897 = vld [vmem:[%s6 + $0x1c8] sm:$0xf]
  %v5898 = vld [vmem:[%s6 + $0x1cc] sm:$0xf]
  %v5899 = vld [vmem:[%s6 + $0x1d0] sm:$0xf]
  %v5900 = vld [vmem:[%s6 + $0x1d4] sm:$0xf]
  %v5901 = vld [vmem:[%s6 + $0x1d8] sm:$0xf]
  %v5902 = vld [vmem:[%s6 + $0x1dc] sm:$0xf]
  %v5903 = vld [vmem:[%s6 + $0x1e0] sm:$0xf]
  %v5904 = vld [vmem:[%s6 + $0x1e4] sm:$0xf]
  %v5905 = vld [vmem:[%s6 + $0x1e8] sm:$0xf]
  %v5906 = vld [vmem:[%s6 + $0x1ec] sm:$0xf]
  %v5907 = vld [vmem:[%s6 + $0x1f0] sm:$0xf]
  %v5908 = vld [vmem:[%s6 + $0x1f4] sm:$0xf]
  %v5909 = vld [vmem:[%s6 + $0x1f8] sm:$0xf]
  %v5910 = vld [vmem:[%s6 + $0x1fc] sm:$0xf]
  %v5911 = vld [vmem:[%s6 + $0x200] sm:$0xf]
  %v5912 = vld [vmem:[%s6 + $0x204] sm:$0xf]
  %v5913 = vld [vmem:[%s6 + $0x208] sm:$0xf]
  %v5914 = vld [vmem:[%s6 + $0x20c] sm:$0xf]
  %v5915 = vld [vmem:[%s6 + $0x210] sm:$0xf]
  %v5916 = vld [vmem:[%s6 + $0x214] sm:$0xf]
  %v5917 = vld [vmem:[%s6 + $0x218] sm:$0xf]
  %v5918 = vld [vmem:[%s6 + $0x21c] sm:$0xf]
  %v5919 = vld [vmem:[%s6 + $0x220] sm:$0xf]
  %v5920 = vld [vmem:[%s6 + $0x224] sm:$0xf]
  %v5921 = vld [vmem:[%s6 + $0x228] sm:$0xf]
  %v5922 = vld [vmem:[%s6 + $0x22c] sm:$0xf]
  %v5923 = vld [vmem:[%s6 + $0x230] sm:$0xf]
  %v5924 = vld [vmem:[%s6 + $0x234] sm:$0xf]
  %v5925 = vld [vmem:[%s6 + $0x238] sm:$0xf]
  %v5926 = vld [vmem:[%s6 + $0x23c] sm:$0xf]
  %v6071 = vunpack.c.l.b16 %v5783
  %v6072 = vunpack.c.l.b16 %v5784
  %v6073 = vunpack.c.l.b16 %v5785
  %v6074 = vunpack.c.l.b16 %v5786
  %v6075 = vunpack.c.l.b16 %v5787
  %v6076 = vunpack.c.l.b16 %v5788
  %v6077 = vunpack.c.l.b16 %v5789
  %v6078 = vunpack.c.l.b16 %v5790
  %v6079 = vunpack.c.l.b16 %v5791
  %v6080 = vunpack.c.l.b16 %v5792
  %v6081 = vunpack.c.l.b16 %v5793
  %v6082 = vunpack.c.l.b16 %v5794
  %v6083 = vunpack.c.l.b16 %v5795
  %v6084 = vunpack.c.l.b16 %v5796
  %v6085 = vunpack.c.l.b16 %v5797
  %v6086 = vunpack.c.l.b16 %v5798
  %v6087 = vunpack.c.l.b16 %v5799
  %v6088 = vunpack.c.l.b16 %v5800
  %v6089 = vunpack.c.l.b16 %v5801
  %v6090 = vunpack.c.l.b16 %v5802
  %v6091 = vunpack.c.l.b16 %v5803
  %v6092 = vunpack.c.l.b16 %v5804
  %v6093 = vunpack.c.l.b16 %v5805
  %v6094 = vunpack.c.l.b16 %v5806
  %v6095 = vunpack.c.l.b16 %v5807
  %v6096 = vunpack.c.l.b16 %v5808
  %v6097 = vunpack.c.l.b16 %v5809
  %v6098 = vunpack.c.l.b16 %v5810
  %v6099 = vunpack.c.l.b16 %v5811
  %v6100 = vunpack.c.l.b16 %v5812
  %v6101 = vunpack.c.l.b16 %v5813
  %v6102 = vunpack.c.l.b16 %v5814
  %v6103 = vunpack.c.l.b16 %v5815
  %v6104 = vunpack.c.l.b16 %v5816
  %v6105 = vunpack.c.l.b16 %v5817
  %v6106 = vunpack.c.l.b16 %v5818
  %v6107 = vunpack.c.l.b16 %v5819
  %v6108 = vunpack.c.l.b16 %v5820
  %v6109 = vunpack.c.l.b16 %v5821
  %v6110 = vunpack.c.l.b16 %v5822
  %v6111 = vunpack.c.l.b16 %v5823
  %v6112 = vunpack.c.l.b16 %v5824
  %v6113 = vunpack.c.l.b16 %v5825
  %v6114 = vunpack.c.l.b16 %v5826
  %v6115 = vunpack.c.l.b16 %v5827
  %v6116 = vunpack.c.l.b16 %v5828
  %v6117 = vunpack.c.l.b16 %v5829
  %v6118 = vunpack.c.l.b16 %v5830
  %v6119 = vunpack.c.l.b16 %v5831
  %v6120 = vunpack.c.l.b16 %v5832
  %v6121 = vunpack.c.l.b16 %v5833
  %v6122 = vunpack.c.l.b16 %v5834
  %v6123 = vunpack.c.l.b16 %v5835
  %v6124 = vunpack.c.l.b16 %v5836
  %v6125 = vunpack.c.l.b16 %v5837
  %v6126 = vunpack.c.l.b16 %v5838
  %v6127 = vunpack.c.l.b16 %v5839
  %v6128 = vunpack.c.l.b16 %v5840
  %v6129 = vunpack.c.l.b16 %v5841
  %v6130 = vunpack.c.l.b16 %v5842
  %v6131 = vunpack.c.l.b16 %v5843
  %v6132 = vunpack.c.l.b16 %v5844
  %v6133 = vunpack.c.l.b16 %v5845
  %v6134 = vunpack.c.l.b16 %v5846
  %v6135 = vunpack.c.l.b16 %v5847
  %v6136 = vunpack.c.l.b16 %v5848
  %v6137 = vunpack.c.l.b16 %v5849
  %v6138 = vunpack.c.l.b16 %v5850
  %v6139 = vunpack.c.l.b16 %v5851
  %v6140 = vunpack.c.l.b16 %v5852
  %v6141 = vunpack.c.l.b16 %v5853
  %v6142 = vunpack.c.l.b16 %v5854
  %v6143 = vunpack.c.l.b16 %v5855
  %v6144 = vunpack.c.l.b16 %v5856
  %v6145 = vunpack.c.l.b16 %v5857
  %v6146 = vunpack.c.l.b16 %v5858
  %v6147 = vunpack.c.l.b16 %v5859
  %v6148 = vunpack.c.l.b16 %v5860
  %v6149 = vunpack.c.l.b16 %v5861
  %v6150 = vunpack.c.l.b16 %v5862
  %v6151 = vunpack.c.l.b16 %v5863
  %v6152 = vunpack.c.l.b16 %v5864
  %v6153 = vunpack.c.l.b16 %v5865
  %v6154 = vunpack.c.l.b16 %v5866
  %v6155 = vunpack.c.l.b16 %v5867
  %v6156 = vunpack.c.l.b16 %v5868
  %v6157 = vunpack.c.l.b16 %v5869
  %v6158 = vunpack.c.l.b16 %v5870
  %v6159 = vunpack.c.l.b16 %v5871
  %v6160 = vunpack.c.l.b16 %v5872
  %v6161 = vunpack.c.l.b16 %v5873
  %v6162 = vunpack.c.l.b16 %v5874
  %v6163 = vunpack.c.l.b16 %v5875
  %v6164 = vunpack.c.l.b16 %v5876
  %v6165 = vunpack.c.l.b16 %v5877
  %v6166 = vunpack.c.l.b16 %v5878
  %v6167 = vunpack.c.l.b16 %v5879
  %v6168 = vunpack.c.l.b16 %v5880
  %v6169 = vunpack.c.l.b16 %v5881
  %v6170 = vunpack.c.l.b16 %v5882
  %v6171 = vunpack.c.l.b16 %v5883
  %v6172 = vunpack.c.l.b16 %v5884
  %v6173 = vunpack.c.l.b16 %v5885
  %v6174 = vunpack.c.l.b16 %v5886
  %v6175 = vunpack.c.l.b16 %v5887
  %v6176 = vunpack.c.l.b16 %v5888
  %v6177 = vunpack.c.l.b16 %v5889
  %v6178 = vunpack.c.l.b16 %v5890
  %v6179 = vunpack.c.l.b16 %v5891
  %v6180 = vunpack.c.l.b16 %v5892
  %v6181 = vunpack.c.l.b16 %v5893
  %v6182 = vunpack.c.l.b16 %v5894
  %v6183 = vunpack.c.l.b16 %v5895
  %v6184 = vunpack.c.l.b16 %v5896
  %v6185 = vunpack.c.l.b16 %v5897
  %v6186 = vunpack.c.l.b16 %v5898
  %v6187 = vunpack.c.l.b16 %v5899
  %v6188 = vunpack.c.l.b16 %v5900
  %v6189 = vunpack.c.l.b16 %v5901
  %v6190 = vunpack.c.l.b16 %v5902
  %v6191 = vunpack.c.l.b16 %v5903
  %v6192 = vunpack.c.l.b16 %v5904
  %v6193 = vunpack.c.l.b16 %v5905
  %v6194 = vunpack.c.l.b16 %v5906
  %v6195 = vunpack.c.l.b16 %v5907
  %v6196 = vunpack.c.l.b16 %v5908
  %v6197 = vunpack.c.l.b16 %v5909
  %v6198 = vunpack.c.l.b16 %v5910
  %v6199 = vunpack.c.l.b16 %v5911
  %v6200 = vunpack.c.l.b16 %v5912
  %v6201 = vunpack.c.l.b16 %v5913
  %v6202 = vunpack.c.l.b16 %v5914
  %v6203 = vunpack.c.l.b16 %v5915
  %v6204 = vunpack.c.l.b16 %v5916
  %v6205 = vunpack.c.l.b16 %v5917
  %v6206 = vunpack.c.l.b16 %v5918
  %v6207 = vunpack.c.l.b16 %v5919
  %v6208 = vunpack.c.l.b16 %v5920
  %v6209 = vunpack.c.l.b16 %v5921
  %v6210 = vunpack.c.l.b16 %v5922
  %v6211 = vunpack.c.l.b16 %v5923
  %v6212 = vunpack.c.l.b16 %v5924
  %v6213 = vunpack.c.l.b16 %v5925
  %v6214 = vunpack.c.l.b16 %v5926
  %v6215 = vpack.c.b16 %v6072, %v6071
  %v6216 = vpack.c.b16 %v6074, %v6073
  %v6217 = vpack.c.b16 %v6076, %v6075
  %v6218 = vpack.c.b16 %v6078, %v6077
  %v6219 = vpack.c.b16 %v6080, %v6079
  %v6220 = vpack.c.b16 %v6082, %v6081
  %v6221 = vpack.c.b16 %v6084, %v6083
  %v6222 = vpack.c.b16 %v6086, %v6085
  %v6223 = vpack.c.b16 %v6088, %v6087
  %v6224 = vpack.c.b16 %v6090, %v6089
  %v6225 = vpack.c.b16 %v6092, %v6091
  %v6226 = vpack.c.b16 %v6094, %v6093
  %v6227 = vpack.c.b16 %v6096, %v6095
  %v6228 = vpack.c.b16 %v6098, %v6097
  %v6229 = vpack.c.b16 %v6100, %v6099
  %v6230 = vpack.c.b16 %v6102, %v6101
  %v6231 = vpack.c.b16 %v6104, %v6103
  %v6232 = vpack.c.b16 %v6106, %v6105
  %v6233 = vpack.c.b16 %v6108, %v6107
  %v6234 = vpack.c.b16 %v6110, %v6109
  %v6235 = vpack.c.b16 %v6112, %v6111
  %v6236 = vpack.c.b16 %v6114, %v6113
  %v6237 = vpack.c.b16 %v6116, %v6115
  %v6238 = vpack.c.b16 %v6118, %v6117
  %v6239 = vpack.c.b16 %v6120, %v6119
  %v6240 = vpack.c.b16 %v6122, %v6121
  %v6241 = vpack.c.b16 %v6124, %v6123
  %v6242 = vpack.c.b16 %v6126, %v6125
  %v6243 = vpack.c.b16 %v6128, %v6127
  %v6244 = vpack.c.b16 %v6130, %v6129
  %v6245 = vpack.c.b16 %v6132, %v6131
  %v6246 = vpack.c.b16 %v6134, %v6133
  %v6247 = vpack.c.b16 %v6136, %v6135
  %v6248 = vpack.c.b16 %v6138, %v6137
  %v6249 = vpack.c.b16 %v6140, %v6139
  %v6250 = vpack.c.b16 %v6142, %v6141
  %v6251 = vpack.c.b16 %v6144, %v6143
  %v6252 = vpack.c.b16 %v6146, %v6145
  %v6253 = vpack.c.b16 %v6148, %v6147
  %v6254 = vpack.c.b16 %v6150, %v6149
  %v6255 = vpack.c.b16 %v6152, %v6151
  %v6256 = vpack.c.b16 %v6154, %v6153
  %v6257 = vpack.c.b16 %v6156, %v6155
  %v6258 = vpack.c.b16 %v6158, %v6157
  %v6259 = vpack.c.b16 %v6160, %v6159
  %v6260 = vpack.c.b16 %v6162, %v6161
  %v6261 = vpack.c.b16 %v6164, %v6163
  %v6262 = vpack.c.b16 %v6166, %v6165
  %v6263 = vpack.c.b16 %v6168, %v6167
  %v6264 = vpack.c.b16 %v6170, %v6169
  %v6265 = vpack.c.b16 %v6172, %v6171
  %v6266 = vpack.c.b16 %v6174, %v6173
  %v6267 = vpack.c.b16 %v6176, %v6175
  %v6268 = vpack.c.b16 %v6178, %v6177
  %v6269 = vpack.c.b16 %v6180, %v6179
  %v6270 = vpack.c.b16 %v6182, %v6181
  %v6271 = vpack.c.b16 %v6184, %v6183
  %v6272 = vpack.c.b16 %v6186, %v6185
  %v6273 = vpack.c.b16 %v6188, %v6187
  %v6274 = vpack.c.b16 %v6190, %v6189
  %v6275 = vpack.c.b16 %v6192, %v6191
  %v6276 = vpack.c.b16 %v6194, %v6193
  %v6277 = vpack.c.b16 %v6196, %v6195
  %v6278 = vpack.c.b16 %v6198, %v6197
  %v6279 = vpack.c.b16 %v6200, %v6199
  %v6280 = vpack.c.b16 %v6202, %v6201
  %v6281 = vpack.c.b16 %v6204, %v6203
  %v6282 = vpack.c.b16 %v6206, %v6205
  %v6283 = vpack.c.b16 %v6208, %v6207
  %v6284 = vpack.c.b16 %v6210, %v6209
  %v6285 = vpack.c.b16 %v6212, %v6211
  %v6286 = vpack.c.b16 %v6214, %v6213
  %6359 = vmatprep.subr.bf16.mxu0 0
  %6360 = vmatpush1.bf16.msra.mxu0 %v6222
  %6361 = vmatprep.subr.bf16.mxu0 0
  %6362 = vmatpush1.bf16.msra.mxu0 %v6221
  %6363 = vmatprep.subr.bf16.mxu0 0
  %6364 = vmatpush1.bf16.msra.mxu0 %v6220
  %6365 = vmatprep.subr.bf16.mxu0 0
  %6366 = vmatpush1.bf16.msra.mxu0 %v6219
  %6367 = vmatprep.subr.bf16.mxu0 0
  %6368 = vmatpush1.bf16.msra.mxu0 %v6218
  %6369 = vmatprep.subr.bf16.mxu0 0
  %6370 = vmatpush1.bf16.msra.mxu0 %v6217
  %6371 = vmatprep.subr.bf16.mxu0 0
  %6372 = vmatpush1.bf16.msra.mxu0 %v6216
  %6373 = vmatprep.subr.bf16.mxu0 0
  %6374 = vmatpush1.bf16.msra.mxu0 %v6215
  %6375 = vmatprep.subr.bf16.mxu0 0
  %6376 = vmatpush2.bf16.msra.mxu0 %v6230
  %6377 = vmatprep.subr.bf16.mxu0 0
  %6378 = vmatpush2.bf16.msra.mxu0 %v6229
  %6379 = vmatprep.subr.bf16.mxu0 0
  %6380 = vmatpush2.bf16.msra.mxu0 %v6228
  %6381 = vmatprep.subr.bf16.mxu0 0
  %6382 = vmatpush2.bf16.msra.mxu0 %v6227
  %6383 = vmatprep.subr.bf16.mxu0 0
  %6384 = vmatpush2.bf16.msra.mxu0 %v6226
  %6385 = vmatprep.subr.bf16.mxu0 0
  %6386 = vmatpush2.bf16.msra.mxu0 %v6225
  %6387 = vmatprep.subr.bf16.mxu0 0
  %6388 = vmatpush2.bf16.msra.mxu0 %v6224
  %6389 = vmatprep.subr.bf16.mxu0 0
  %6390 = vmatpush2.bf16.msra.mxu0 %v6223
  %6391 = vmatprep.mubr.bf16.mxu0 %v3904
  %6392 = vmatmul.mubr.bf16.gmra.mxu0 %v3673
  %v6393 = vpop.f32.mrf.mxu0
  %v6394 = vadd.f32 0.0, %v6393
  %v6395 = vpop.f32.mrf.mxu0
  %v6396 = vpop.f32.mrf.mxu0
  %v6397 = vadd.f32 0.0, %v6396
  %v6398 = vpop.f32.mrf.mxu0
  %6399 = vmatprep.mubr.bf16.mxu0 %v3905
  %6400 = vmatmul.mubr.bf16.gmra.mxu0 %v3674
  %v6401 = vpop.f32.mrf.mxu0
  %v6402 = vadd.f32 0.0, %v6401
  %v6403 = vpop.f32.mrf.mxu0
  %v6404 = vpop.f32.mrf.mxu0
  %v6405 = vadd.f32 0.0, %v6404
  %v6406 = vpop.f32.mrf.mxu0
  %6407 = vmatprep.mubr.bf16.mxu0 %v3906
  %6408 = vmatmul.mubr.bf16.gmra.mxu0 %v3675
  %v6409 = vpop.f32.mrf.mxu0
  %v6410 = vadd.f32 0.0, %v6409
  %v6411 = vpop.f32.mrf.mxu0
  %v6412 = vpop.f32.mrf.mxu0
  %v6413 = vadd.f32 0.0, %v6412
  %v6414 = vpop.f32.mrf.mxu0
  %6415 = vmatprep.mubr.bf16.mxu0 %v3907
  %6416 = vmatmul.mubr.bf16.gmra.mxu0 %v3676
  %v6417 = vpop.f32.mrf.mxu0
  %v6418 = vadd.f32 0.0, %v6417
  %v6419 = vpop.f32.mrf.mxu0
  %v6420 = vpop.f32.mrf.mxu0
  %v6421 = vadd.f32 0.0, %v6420
  %v6422 = vpop.f32.mrf.mxu0
  %6423 = vmatprep.mubr.bf16.mxu0 %v3908
  %6424 = vmatmul.mubr.bf16.gmra.mxu0 %v3677
  %v6425 = vpop.f32.mrf.mxu0
  %v6426 = vadd.f32 0.0, %v6425
  %v6427 = vpop.f32.mrf.mxu0
  %v6428 = vpop.f32.mrf.mxu0
  %v6429 = vadd.f32 0.0, %v6428
  %v6430 = vpop.f32.mrf.mxu0
  %6431 = vmatprep.mubr.bf16.mxu0 %v3909
  %6432 = vmatmul.mubr.bf16.gmra.mxu0 %v3678
  %v6433 = vpop.f32.mrf.mxu0
  %v6434 = vadd.f32 0.0, %v6433
  %v6435 = vpop.f32.mrf.mxu0
  %v6436 = vpop.f32.mrf.mxu0
  %v6437 = vadd.f32 0.0, %v6436
  %v6438 = vpop.f32.mrf.mxu0
  %6439 = vmatprep.mubr.bf16.mxu0 %v3910
  %6440 = vmatmul.mubr.bf16.gmra.mxu0 %v3679
  %v6441 = vpop.f32.mrf.mxu0
  %v6442 = vadd.f32 0.0, %v6441
  %v6443 = vpop.f32.mrf.mxu0
  %v6444 = vpop.f32.mrf.mxu0
  %v6445 = vadd.f32 0.0, %v6444
  %v6446 = vpop.f32.mrf.mxu0
  %6447 = vmatprep.mubr.bf16.mxu0 %v3911
  %6448 = vmatmul.mubr.bf16.gmra.mxu0 %v3680
  %v6449 = vpop.f32.mrf.mxu0
  %v6450 = vadd.f32 0.0, %v6449
  %v6451 = vpop.f32.mrf.mxu0
  %v6452 = vpop.f32.mrf.mxu0
  %v6453 = vadd.f32 0.0, %v6452
  %v6454 = vpop.f32.mrf.mxu0
  %6455 = vmatprep.mubr.bf16.mxu0 %v3912
  %6456 = vmatmul.mubr.bf16.gmra.mxu0 %v3681
  %v6457 = vpop.f32.mrf.mxu0
  %v6458 = vadd.f32 0.0, %v6457
  %v6459 = vpop.f32.mrf.mxu0
  %v6460 = vpop.f32.mrf.mxu0
  %v6461 = vadd.f32 0.0, %v6460
  %v6462 = vpop.f32.mrf.mxu0
  %6463 = vmatprep.mubr.bf16.mxu0 %v3913
  %6464 = vmatmul.mubr.bf16.gmra.mxu0 %v3682
  %v6465 = vpop.f32.mrf.mxu0
  %v6466 = vadd.f32 0.0, %v6465
  %v6467 = vpop.f32.mrf.mxu0
  %v6468 = vpop.f32.mrf.mxu0
  %v6469 = vadd.f32 0.0, %v6468
  %v6470 = vpop.f32.mrf.mxu0
  %6471 = vmatprep.mubr.bf16.mxu0 %v3914
  %6472 = vmatmul.mubr.bf16.gmra.mxu0 %v3683
  %v6473 = vpop.f32.mrf.mxu0
  %v6474 = vadd.f32 0.0, %v6473
  %v6475 = vpop.f32.mrf.mxu0
  %v6476 = vpop.f32.mrf.mxu0
  %v6477 = vadd.f32 0.0, %v6476
  %v6478 = vpop.f32.mrf.mxu0
  %6479 = vmatprep.mubr.bf16.mxu0 %v3915
  %6480 = vmatmul.mubr.bf16.gmra.mxu0 %v3684
  %v6481 = vpop.f32.mrf.mxu0
  %v6482 = vadd.f32 0.0, %v6481
  %v6483 = vpop.f32.mrf.mxu0
  %v6484 = vpop.f32.mrf.mxu0
  %v6485 = vadd.f32 0.0, %v6484
  %v6486 = vpop.f32.mrf.mxu0
  %6487 = vmatprep.mubr.bf16.mxu0 %v3916
  %6488 = vmatmul.mubr.bf16.gmra.mxu0 %v3685
  %v6489 = vpop.f32.mrf.mxu0
  %v6490 = vadd.f32 0.0, %v6489
  %v6491 = vpop.f32.mrf.mxu0
  %v6492 = vpop.f32.mrf.mxu0
  %v6493 = vadd.f32 0.0, %v6492
  %v6494 = vpop.f32.mrf.mxu0
  %6495 = vmatprep.mubr.bf16.mxu0 %v3917
  %6496 = vmatmul.mubr.bf16.gmra.mxu0 %v3686
  %v6497 = vpop.f32.mrf.mxu0
  %v6498 = vadd.f32 0.0, %v6497
  %v6499 = vpop.f32.mrf.mxu0
  %v6500 = vpop.f32.mrf.mxu0
  %v6501 = vadd.f32 0.0, %v6500
  %v6502 = vpop.f32.mrf.mxu0
  %6503 = vmatprep.mubr.bf16.mxu0 %v3918
  %6504 = vmatmul.mubr.bf16.gmra.mxu0 %v3687
  %v6505 = vpop.f32.mrf.mxu0
  %v6506 = vadd.f32 0.0, %v6505
  %v6507 = vpop.f32.mrf.mxu0
  %v6508 = vpop.f32.mrf.mxu0
  %v6509 = vadd.f32 0.0, %v6508
  %v6510 = vpop.f32.mrf.mxu0
  %6511 = vmatprep.mubr.bf16.mxu0 %v3919
  %6512 = vmatmul.mubr.bf16.gmra.mxu0 %v3688
  %v6513 = vpop.f32.mrf.mxu0
  %v6514 = vadd.f32 0.0, %v6513
  %v6515 = vpop.f32.mrf.mxu0
  %v6516 = vpop.f32.mrf.mxu0
  %v6517 = vadd.f32 0.0, %v6516
  %v6518 = vpop.f32.mrf.mxu0
  %6519 = vmatprep.mubr.bf16.mxu0 %v3920
  %6520 = vmatmul.mubr.bf16.gmra.mxu0 %v3689
  %v6521 = vpop.f32.mrf.mxu0
  %v6522 = vadd.f32 0.0, %v6521
  %v6523 = vpop.f32.mrf.mxu0
  %v6524 = vpop.f32.mrf.mxu0
  %v6525 = vadd.f32 0.0, %v6524
  %v6526 = vpop.f32.mrf.mxu0
  %6527 = vmatprep.mubr.bf16.mxu0 %v3921
  %6528 = vmatmul.mubr.bf16.gmra.mxu0 %v3690
  %v6529 = vpop.f32.mrf.mxu0
  %v6530 = vadd.f32 0.0, %v6529
  %v6531 = vpop.f32.mrf.mxu0
  %v6532 = vpop.f32.mrf.mxu0
  %v6533 = vadd.f32 0.0, %v6532
  %v6534 = vpop.f32.mrf.mxu0
  %6535 = vmatprep.mubr.bf16.mxu0 %v3922
  %6536 = vmatmul.mubr.bf16.gmra.mxu0 %v3691
  %v6537 = vpop.f32.mrf.mxu0
  %v6538 = vadd.f32 0.0, %v6537
  %v6539 = vpop.f32.mrf.mxu0
  %v6540 = vpop.f32.mrf.mxu0
  %v6541 = vadd.f32 0.0, %v6540
  %v6542 = vpop.f32.mrf.mxu0
  %6543 = vmatprep.mubr.bf16.mxu0 %v3923
  %6544 = vmatmul.mubr.bf16.gmra.mxu0 %v3692
  %v6545 = vpop.f32.mrf.mxu0
  %v6546 = vadd.f32 0.0, %v6545
  %v6547 = vpop.f32.mrf.mxu0
  %v6548 = vpop.f32.mrf.mxu0
  %v6549 = vadd.f32 0.0, %v6548
  %v6550 = vpop.f32.mrf.mxu0
  %6551 = vmatprep.mubr.bf16.mxu0 %v3924
  %6552 = vmatmul.mubr.bf16.gmra.mxu0 %v3693
  %v6553 = vpop.f32.mrf.mxu0
  %v6554 = vadd.f32 0.0, %v6553
  %v6555 = vpop.f32.mrf.mxu0
  %v6556 = vpop.f32.mrf.mxu0
  %v6557 = vadd.f32 0.0, %v6556
  %v6558 = vpop.f32.mrf.mxu0
  %6559 = vmatprep.mubr.bf16.mxu0 %v3925
  %6560 = vmatmul.mubr.bf16.gmra.mxu0 %v3694
  %v6561 = vpop.f32.mrf.mxu0
  %v6562 = vadd.f32 0.0, %v6561
  %v6563 = vpop.f32.mrf.mxu0
  %v6564 = vpop.f32.mrf.mxu0
  %v6565 = vadd.f32 0.0, %v6564
  %v6566 = vpop.f32.mrf.mxu0
  %6567 = vmatprep.mubr.bf16.mxu0 %v3926
  %6568 = vmatmul.mubr.bf16.gmra.mxu0 %v3695
  %v6569 = vpop.f32.mrf.mxu0
  %v6570 = vadd.f32 0.0, %v6569
  %v6571 = vpop.f32.mrf.mxu0
  %v6572 = vpop.f32.mrf.mxu0
  %v6573 = vadd.f32 0.0, %v6572
  %v6574 = vpop.f32.mrf.mxu0
  %6575 = vmatprep.mubr.bf16.mxu0 %v3927
  %6576 = vmatmul.mubr.bf16.gmra.mxu0 %v3696
  %v6577 = vpop.f32.mrf.mxu0
  %v6578 = vadd.f32 0.0, %v6577
  %v6579 = vpop.f32.mrf.mxu0
  %v6580 = vpop.f32.mrf.mxu0
  %v6581 = vadd.f32 0.0, %v6580
  %v6582 = vpop.f32.mrf.mxu0
  %6583 = vmatprep.mubr.bf16.mxu0 %v3928
  %6584 = vmatmul.mubr.bf16.gmra.mxu0 %v3697
  %v6585 = vpop.f32.mrf.mxu0
  %v6586 = vadd.f32 0.0, %v6585
  %v6587 = vpop.f32.mrf.mxu0
  %v6588 = vpop.f32.mrf.mxu0
  %v6589 = vadd.f32 0.0, %v6588
  %v6590 = vpop.f32.mrf.mxu0
  %6591 = vmatprep.mubr.bf16.mxu0 %v3929
  %6592 = vmatmul.mubr.bf16.gmra.mxu0 %v3698
  %v6593 = vpop.f32.mrf.mxu0
  %v6594 = vadd.f32 0.0, %v6593
  %v6595 = vpop.f32.mrf.mxu0
  %v6596 = vpop.f32.mrf.mxu0
  %v6597 = vadd.f32 0.0, %v6596
  %v6598 = vpop.f32.mrf.mxu0
  %6599 = vmatprep.mubr.bf16.mxu0 %v3930
  %6600 = vmatmul.mubr.bf16.gmra.mxu0 %v3699
  %v6601 = vpop.f32.mrf.mxu0
  %v6602 = vadd.f32 0.0, %v6601
  %v6603 = vpop.f32.mrf.mxu0
  %v6604 = vpop.f32.mrf.mxu0
  %v6605 = vadd.f32 0.0, %v6604
  %v6606 = vpop.f32.mrf.mxu0
  %6607 = vmatprep.mubr.bf16.mxu0 %v3931
  %6608 = vmatmul.mubr.bf16.gmra.mxu0 %v3700
  %v6609 = vpop.f32.mrf.mxu0
  %v6610 = vadd.f32 0.0, %v6609
  %v6611 = vpop.f32.mrf.mxu0
  %v6612 = vpop.f32.mrf.mxu0
  %v6613 = vadd.f32 0.0, %v6612
  %v6614 = vpop.f32.mrf.mxu0
  %6615 = vmatprep.mubr.bf16.mxu0 %v3932
  %6616 = vmatmul.mubr.bf16.gmra.mxu0 %v3701
  %v6617 = vpop.f32.mrf.mxu0
  %v6618 = vadd.f32 0.0, %v6617
  %v6619 = vpop.f32.mrf.mxu0
  %v6620 = vpop.f32.mrf.mxu0
  %v6621 = vadd.f32 0.0, %v6620
  %v6622 = vpop.f32.mrf.mxu0
  %6623 = vmatprep.mubr.bf16.mxu0 %v3933
  %6624 = vmatmul.mubr.bf16.gmra.mxu0 %v3702
  %v6625 = vpop.f32.mrf.mxu0
  %v6626 = vadd.f32 0.0, %v6625
  %v6627 = vpop.f32.mrf.mxu0
  %v6628 = vpop.f32.mrf.mxu0
  %v6629 = vadd.f32 0.0, %v6628
  %v6630 = vpop.f32.mrf.mxu0
  %6631 = vmatprep.mubr.bf16.mxu0 %v3934
  %6632 = vmatmul.mubr.bf16.gmra.mxu0 %v3703
  %v6633 = vpop.f32.mrf.mxu0
  %v6634 = vadd.f32 0.0, %v6633
  %v6635 = vpop.f32.mrf.mxu0
  %v6636 = vpop.f32.mrf.mxu0
  %v6637 = vadd.f32 0.0, %v6636
  %v6638 = vpop.f32.mrf.mxu0
  %6639 = vmatprep.mubr.bf16.mxu0 %v3935
  %6640 = vmatmul.mubr.bf16.gmra.mxu0 %v3704
  %v6641 = vpop.f32.mrf.mxu0
  %v6642 = vadd.f32 0.0, %v6641
  %v6643 = vpop.f32.mrf.mxu0
  %v6644 = vpop.f32.mrf.mxu0
  %v6645 = vadd.f32 0.0, %v6644
  %v6646 = vpop.f32.mrf.mxu0
  %6647 = vmatprep.mubr.bf16.mxu0 %v3936
  %6648 = vmatmul.mubr.bf16.gmra.mxu0 %v3705
  %v6649 = vpop.f32.mrf.mxu0
  %v6650 = vadd.f32 0.0, %v6649
  %v6651 = vpop.f32.mrf.mxu0
  %v6652 = vpop.f32.mrf.mxu0
  %v6653 = vadd.f32 0.0, %v6652
  %v6654 = vpop.f32.mrf.mxu0
  %6655 = vdwg.mxu0
  %6656 = vmatprep.subr.bf16.mxu0 0
  %6657 = vmatpush1.bf16.msra.mxu0 %v6238
  %6658 = vmatprep.subr.bf16.mxu0 0
  %6659 = vmatpush1.bf16.msra.mxu0 %v6237
  %6660 = vmatprep.subr.bf16.mxu0 0
  %6661 = vmatpush1.bf16.msra.mxu0 %v6236
  %6662 = vmatprep.subr.bf16.mxu0 0
  %6663 = vmatpush1.bf16.msra.mxu0 %v6235
  %6664 = vmatprep.subr.bf16.mxu0 0
  %6665 = vmatpush1.bf16.msra.mxu0 %v6234
  %6666 = vmatprep.subr.bf16.mxu0 0
  %6667 = vmatpush1.bf16.msra.mxu0 %v6233
  %6668 = vmatprep.subr.bf16.mxu0 0
  %6669 = vmatpush1.bf16.msra.mxu0 %v6232
  %6670 = vmatprep.subr.bf16.mxu0 0
  %6671 = vmatpush1.bf16.msra.mxu0 %v6231
  %6672 = vmatprep.subr.bf16.mxu0 0
  %6673 = vmatpush2.bf16.msra.mxu0 %v6246
  %6674 = vmatprep.subr.bf16.mxu0 0
  %6675 = vmatpush2.bf16.msra.mxu0 %v6245
  %6676 = vmatprep.subr.bf16.mxu0 0
  %6677 = vmatpush2.bf16.msra.mxu0 %v6244
  %6678 = vmatprep.subr.bf16.mxu0 0
  %6679 = vmatpush2.bf16.msra.mxu0 %v6243
  %6680 = vmatprep.subr.bf16.mxu0 0
  %6681 = vmatpush2.bf16.msra.mxu0 %v6242
  %6682 = vmatprep.subr.bf16.mxu0 0
  %6683 = vmatpush2.bf16.msra.mxu0 %v6241
  %6684 = vmatprep.subr.bf16.mxu0 0
  %6685 = vmatpush2.bf16.msra.mxu0 %v6240
  %6686 = vmatprep.subr.bf16.mxu0 0
  %6687 = vmatpush2.bf16.msra.mxu0 %v6239
  %6688 = vmatprep.mubr.bf16.mxu0 %v4640
  %6689 = vmatmul.mubr.bf16.gmra.mxu0 %v4402
  %v6690 = vpop.f32.mrf.mxu0
  %v6691 = vadd.f32 %v6394, %v6690
  %v6692 = vpop.f32.mrf.mxu0
  %v6693 = vpop.f32.mrf.mxu0
  %v6694 = vadd.f32 %v6397, %v6693
  %v6695 = vpop.f32.mrf.mxu0
  %6696 = vmatprep.mubr.bf16.mxu0 %v4641
  %6697 = vmatmul.mubr.bf16.gmra.mxu0 %v4403
  %v6698 = vpop.f32.mrf.mxu0
  %v6699 = vadd.f32 %v6402, %v6698
  %v6700 = vpop.f32.mrf.mxu0
  %v6701 = vpop.f32.mrf.mxu0
  %v6702 = vadd.f32 %v6405, %v6701
  %v6703 = vpop.f32.mrf.mxu0
  %6704 = vmatprep.mubr.bf16.mxu0 %v4642
  %6705 = vmatmul.mubr.bf16.gmra.mxu0 %v4404
  %v6706 = vpop.f32.mrf.mxu0
  %v6707 = vadd.f32 %v6410, %v6706
  %v6708 = vpop.f32.mrf.mxu0
  %v6709 = vpop.f32.mrf.mxu0
  %v6710 = vadd.f32 %v6413, %v6709
  %v6711 = vpop.f32.mrf.mxu0
  %6712 = vmatprep.mubr.bf16.mxu0 %v4643
  %6713 = vmatmul.mubr.bf16.gmra.mxu0 %v4405
  %v6714 = vpop.f32.mrf.mxu0
  %v6715 = vadd.f32 %v6418, %v6714
  %v6716 = vpop.f32.mrf.mxu0
  %v6717 = vpop.f32.mrf.mxu0
  %v6718 = vadd.f32 %v6421, %v6717
  %v6719 = vpop.f32.mrf.mxu0
  %6720 = vmatprep.mubr.bf16.mxu0 %v4644
  %6721 = vmatmul.mubr.bf16.gmra.mxu0 %v4406
  %v6722 = vpop.f32.mrf.mxu0
  %v6723 = vadd.f32 %v6426, %v6722
  %v6724 = vpop.f32.mrf.mxu0
  %v6725 = vpop.f32.mrf.mxu0
  %v6726 = vadd.f32 %v6429, %v6725
  %v6727 = vpop.f32.mrf.mxu0
  %6728 = vmatprep.mubr.bf16.mxu0 %v4645
  %6729 = vmatmul.mubr.bf16.gmra.mxu0 %v4407
  %v6730 = vpop.f32.mrf.mxu0
  %v6731 = vadd.f32 %v6434, %v6730
  %v6732 = vpop.f32.mrf.mxu0
  %v6733 = vpop.f32.mrf.mxu0
  %v6734 = vadd.f32 %v6437, %v6733
  %v6735 = vpop.f32.mrf.mxu0
  %6736 = vmatprep.mubr.bf16.mxu0 %v4646
  %6737 = vmatmul.mubr.bf16.gmra.mxu0 %v4408
  %v6738 = vpop.f32.mrf.mxu0
  %v6739 = vadd.f32 %v6442, %v6738
  %v6740 = vpop.f32.mrf.mxu0
  %v6741 = vpop.f32.mrf.mxu0
  %v6742 = vadd.f32 %v6445, %v6741
  %v6743 = vpop.f32.mrf.mxu0
  %6744 = vmatprep.mubr.bf16.mxu0 %v4647
  %6745 = vmatmul.mubr.bf16.gmra.mxu0 %v4409
  %v6746 = vpop.f32.mrf.mxu0
  %v6747 = vadd.f32 %v6450, %v6746
  %v6748 = vpop.f32.mrf.mxu0
  %v6749 = vpop.f32.mrf.mxu0
  %v6750 = vadd.f32 %v6453, %v6749
  %v6751 = vpop.f32.mrf.mxu0
  %6752 = vmatprep.mubr.bf16.mxu0 %v4648
  %6753 = vmatmul.mubr.bf16.gmra.mxu0 %v4410
  %v6754 = vpop.f32.mrf.mxu0
  %v6755 = vadd.f32 %v6458, %v6754
  %v6756 = vpop.f32.mrf.mxu0
  %v6757 = vpop.f32.mrf.mxu0
  %v6758 = vadd.f32 %v6461, %v6757
  %v6759 = vpop.f32.mrf.mxu0
  %6760 = vmatprep.mubr.bf16.mxu0 %v4649
  %6761 = vmatmul.mubr.bf16.gmra.mxu0 %v4411
  %v6762 = vpop.f32.mrf.mxu0
  %v6763 = vadd.f32 %v6466, %v6762
  %v6764 = vpop.f32.mrf.mxu0
  %v6765 = vpop.f32.mrf.mxu0
  %v6766 = vadd.f32 %v6469, %v6765
  %v6767 = vpop.f32.mrf.mxu0
  %6768 = vmatprep.mubr.bf16.mxu0 %v4650
  %6769 = vmatmul.mubr.bf16.gmra.mxu0 %v4412
  %v6770 = vpop.f32.mrf.mxu0
  %v6771 = vadd.f32 %v6474, %v6770
  %v6772 = vpop.f32.mrf.mxu0
  %v6773 = vpop.f32.mrf.mxu0
  %v6774 = vadd.f32 %v6477, %v6773
  %v6775 = vpop.f32.mrf.mxu0
  %6776 = vmatprep.mubr.bf16.mxu0 %v4651
  %6777 = vmatmul.mubr.bf16.gmra.mxu0 %v4413
  %v6778 = vpop.f32.mrf.mxu0
  %v6779 = vadd.f32 %v6482, %v6778
  %v6780 = vpop.f32.mrf.mxu0
  %v6781 = vpop.f32.mrf.mxu0
  %v6782 = vadd.f32 %v6485, %v6781
  %v6783 = vpop.f32.mrf.mxu0
  %6784 = vmatprep.mubr.bf16.mxu0 %v4652
  %6785 = vmatmul.mubr.bf16.gmra.mxu0 %v4414
  %v6786 = vpop.f32.mrf.mxu0
  %v6787 = vadd.f32 %v6490, %v6786
  %v6788 = vpop.f32.mrf.mxu0
  %v6789 = vpop.f32.mrf.mxu0
  %v6790 = vadd.f32 %v6493, %v6789
  %v6791 = vpop.f32.mrf.mxu0
  %6792 = vmatprep.mubr.bf16.mxu0 %v4653
  %6793 = vmatmul.mubr.bf16.gmra.mxu0 %v4415
  %v6794 = vpop.f32.mrf.mxu0
  %v6795 = vadd.f32 %v6498, %v6794
  %v6796 = vpop.f32.mrf.mxu0
  %v6797 = vpop.f32.mrf.mxu0
  %v6798 = vadd.f32 %v6501, %v6797
  %v6799 = vpop.f32.mrf.mxu0
  %6800 = vmatprep.mubr.bf16.mxu0 %v4654
  %6801 = vmatmul.mubr.bf16.gmra.mxu0 %v4416
  %v6802 = vpop.f32.mrf.mxu0
  %v6803 = vadd.f32 %v6506, %v6802
  %v6804 = vpop.f32.mrf.mxu0
  %v6805 = vpop.f32.mrf.mxu0
  %v6806 = vadd.f32 %v6509, %v6805
  %v6807 = vpop.f32.mrf.mxu0
  %6808 = vmatprep.mubr.bf16.mxu0 %v4655
  %6809 = vmatmul.mubr.bf16.gmra.mxu0 %v4417
  %v6810 = vpop.f32.mrf.mxu0
  %v6811 = vadd.f32 %v6514, %v6810
  %v6812 = vpop.f32.mrf.mxu0
  %v6813 = vpop.f32.mrf.mxu0
  %v6814 = vadd.f32 %v6517, %v6813
  %v6815 = vpop.f32.mrf.mxu0
  %6816 = vmatprep.mubr.bf16.mxu0 %v4656
  %6817 = vmatmul.mubr.bf16.gmra.mxu0 %v4418
  %v6818 = vpop.f32.mrf.mxu0
  %v6819 = vadd.f32 %v6522, %v6818
  %v6820 = vpop.f32.mrf.mxu0
  %v6821 = vpop.f32.mrf.mxu0
  %v6822 = vadd.f32 %v6525, %v6821
  %v6823 = vpop.f32.mrf.mxu0
  %6824 = vmatprep.mubr.bf16.mxu0 %v4657
  %6825 = vmatmul.mubr.bf16.gmra.mxu0 %v4419
  %v6826 = vpop.f32.mrf.mxu0
  %v6827 = vadd.f32 %v6530, %v6826
  %v6828 = vpop.f32.mrf.mxu0
  %v6829 = vpop.f32.mrf.mxu0
  %v6830 = vadd.f32 %v6533, %v6829
  %v6831 = vpop.f32.mrf.mxu0
  %6832 = vmatprep.mubr.bf16.mxu0 %v4658
  %6833 = vmatmul.mubr.bf16.gmra.mxu0 %v4420
  %v6834 = vpop.f32.mrf.mxu0
  %v6835 = vadd.f32 %v6538, %v6834
  %v6836 = vpop.f32.mrf.mxu0
  %v6837 = vpop.f32.mrf.mxu0
  %v6838 = vadd.f32 %v6541, %v6837
  %v6839 = vpop.f32.mrf.mxu0
  %6840 = vmatprep.mubr.bf16.mxu0 %v4659
  %6841 = vmatmul.mubr.bf16.gmra.mxu0 %v4421
  %v6842 = vpop.f32.mrf.mxu0
  %v6843 = vadd.f32 %v6546, %v6842
  %v6844 = vpop.f32.mrf.mxu0
  %v6845 = vpop.f32.mrf.mxu0
  %v6846 = vadd.f32 %v6549, %v6845
  %v6847 = vpop.f32.mrf.mxu0
  %6848 = vmatprep.mubr.bf16.mxu0 %v4660
  %6849 = vmatmul.mubr.bf16.gmra.mxu0 %v4422
  %v6850 = vpop.f32.mrf.mxu0
  %v6851 = vadd.f32 %v6554, %v6850
  %v6852 = vpop.f32.mrf.mxu0
  %v6853 = vpop.f32.mrf.mxu0
  %v6854 = vadd.f32 %v6557, %v6853
  %v6855 = vpop.f32.mrf.mxu0
  %6856 = vmatprep.mubr.bf16.mxu0 %v4661
  %6857 = vmatmul.mubr.bf16.gmra.mxu0 %v4423
  %v6858 = vpop.f32.mrf.mxu0
  %v6859 = vadd.f32 %v6562, %v6858
  %v6860 = vpop.f32.mrf.mxu0
  %v6861 = vpop.f32.mrf.mxu0
  %v6862 = vadd.f32 %v6565, %v6861
  %v6863 = vpop.f32.mrf.mxu0
  %6864 = vmatprep.mubr.bf16.mxu0 %v4662
  %6865 = vmatmul.mubr.bf16.gmra.mxu0 %v4424
  %v6866 = vpop.f32.mrf.mxu0
  %v6867 = vadd.f32 %v6570, %v6866
  %v6868 = vpop.f32.mrf.mxu0
  %v6869 = vpop.f32.mrf.mxu0
  %v6870 = vadd.f32 %v6573, %v6869
  %v6871 = vpop.f32.mrf.mxu0
  %6872 = vmatprep.mubr.bf16.mxu0 %v4663
  %6873 = vmatmul.mubr.bf16.gmra.mxu0 %v4425
  %v6874 = vpop.f32.mrf.mxu0
  %v6875 = vadd.f32 %v6578, %v6874
  %v6876 = vpop.f32.mrf.mxu0
  %v6877 = vpop.f32.mrf.mxu0
  %v6878 = vadd.f32 %v6581, %v6877
  %v6879 = vpop.f32.mrf.mxu0
  %6880 = vmatprep.mubr.bf16.mxu0 %v4664
  %6881 = vmatmul.mubr.bf16.gmra.mxu0 %v4426
  %v6882 = vpop.f32.mrf.mxu0
  %v6883 = vadd.f32 %v6586, %v6882
  %v6884 = vpop.f32.mrf.mxu0
  %v6885 = vpop.f32.mrf.mxu0
  %v6886 = vadd.f32 %v6589, %v6885
  %v6887 = vpop.f32.mrf.mxu0
  %6888 = vmatprep.mubr.bf16.mxu0 %v4665
  %6889 = vmatmul.mubr.bf16.gmra.mxu0 %v4427
  %v6890 = vpop.f32.mrf.mxu0
  %v6891 = vadd.f32 %v6594, %v6890
  %v6892 = vpop.f32.mrf.mxu0
  %v6893 = vpop.f32.mrf.mxu0
  %v6894 = vadd.f32 %v6597, %v6893
  %v6895 = vpop.f32.mrf.mxu0
  %6896 = vmatprep.mubr.bf16.mxu0 %v4666
  %6897 = vmatmul.mubr.bf16.gmra.mxu0 %v4428
  %v6898 = vpop.f32.mrf.mxu0
  %v6899 = vadd.f32 %v6602, %v6898
  %v6900 = vpop.f32.mrf.mxu0
  %v6901 = vpop.f32.mrf.mxu0
  %v6902 = vadd.f32 %v6605, %v6901
  %v6903 = vpop.f32.mrf.mxu0
  %6904 = vmatprep.mubr.bf16.mxu0 %v4667
  %6905 = vmatmul.mubr.bf16.gmra.mxu0 %v4429
  %v6906 = vpop.f32.mrf.mxu0
  %v6907 = vadd.f32 %v6610, %v6906
  %v6908 = vpop.f32.mrf.mxu0
  %v6909 = vpop.f32.mrf.mxu0
  %v6910 = vadd.f32 %v6613, %v6909
  %v6911 = vpop.f32.mrf.mxu0
  %6912 = vmatprep.mubr.bf16.mxu0 %v4668
  %6913 = vmatmul.mubr.bf16.gmra.mxu0 %v4430
  %v6914 = vpop.f32.mrf.mxu0
  %v6915 = vadd.f32 %v6618, %v6914
  %v6916 = vpop.f32.mrf.mxu0
  %v6917 = vpop.f32.mrf.mxu0
  %v6918 = vadd.f32 %v6621, %v6917
  %v6919 = vpop.f32.mrf.mxu0
  %6920 = vmatprep.mubr.bf16.mxu0 %v4669
  %6921 = vmatmul.mubr.bf16.gmra.mxu0 %v4431
  %v6922 = vpop.f32.mrf.mxu0
  %v6923 = vadd.f32 %v6626, %v6922
  %v6924 = vpop.f32.mrf.mxu0
  %v6925 = vpop.f32.mrf.mxu0
  %v6926 = vadd.f32 %v6629, %v6925
  %v6927 = vpop.f32.mrf.mxu0
  %6928 = vmatprep.mubr.bf16.mxu0 %v4670
  %6929 = vmatmul.mubr.bf16.gmra.mxu0 %v4432
  %v6930 = vpop.f32.mrf.mxu0
  %v6931 = vadd.f32 %v6634, %v6930
  %v6932 = vpop.f32.mrf.mxu0
  %v6933 = vpop.f32.mrf.mxu0
  %v6934 = vadd.f32 %v6637, %v6933
  %v6935 = vpop.f32.mrf.mxu0
  %6936 = vmatprep.mubr.bf16.mxu0 %v4671
  %6937 = vmatmul.mubr.bf16.gmra.mxu0 %v4433
  %v6938 = vpop.f32.mrf.mxu0
  %v6939 = vadd.f32 %v6642, %v6938
  %v6940 = vpop.f32.mrf.mxu0
  %v6941 = vpop.f32.mrf.mxu0
  %v6942 = vadd.f32 %v6645, %v6941
  %v6943 = vpop.f32.mrf.mxu0
  %6944 = vmatprep.mubr.bf16.mxu0 %v4672
  %6945 = vmatmul.mubr.bf16.gmra.mxu0 %v4434
  %v6946 = vpop.f32.mrf.mxu0
  %v6947 = vadd.f32 %v6650, %v6946
  %v6948 = vpop.f32.mrf.mxu0
  %v6949 = vpop.f32.mrf.mxu0
  %v6950 = vadd.f32 %v6653, %v6949
  %v6951 = vpop.f32.mrf.mxu0
  %6952 = vdwg.mxu0
  %6953 = vmatprep.subr.bf16.mxu0 0
  %6954 = vmatpush1.bf16.msra.mxu0 %v6254
  %6955 = vmatprep.subr.bf16.mxu0 0
  %6956 = vmatpush1.bf16.msra.mxu0 %v6253
  %6957 = vmatprep.subr.bf16.mxu0 0
  %6958 = vmatpush1.bf16.msra.mxu0 %v6252
  %6959 = vmatprep.subr.bf16.mxu0 0
  %6960 = vmatpush1.bf16.msra.mxu0 %v6251
  %6961 = vmatprep.subr.bf16.mxu0 0
  %6962 = vmatpush1.bf16.msra.mxu0 %v6250
  %6963 = vmatprep.subr.bf16.mxu0 0
  %6964 = vmatpush1.bf16.msra.mxu0 %v6249
  %6965 = vmatprep.subr.bf16.mxu0 0
  %6966 = vmatpush1.bf16.msra.mxu0 %v6248
  %6967 = vmatprep.subr.bf16.mxu0 0
  %6968 = vmatpush1.bf16.msra.mxu0 %v6247
  %6969 = vmatprep.subr.bf16.mxu0 0
  %6970 = vmatpush2.bf16.msra.mxu0 %v6262
  %6971 = vmatprep.subr.bf16.mxu0 0
  %6972 = vmatpush2.bf16.msra.mxu0 %v6261
  %6973 = vmatprep.subr.bf16.mxu0 0
  %6974 = vmatpush2.bf16.msra.mxu0 %v6260
  %6975 = vmatprep.subr.bf16.mxu0 0
  %6976 = vmatpush2.bf16.msra.mxu0 %v6259
  %6977 = vmatprep.subr.bf16.mxu0 0
  %6978 = vmatpush2.bf16.msra.mxu0 %v6258
  %6979 = vmatprep.subr.bf16.mxu0 0
  %6980 = vmatpush2.bf16.msra.mxu0 %v6257
  %6981 = vmatprep.subr.bf16.mxu0 0
  %6982 = vmatpush2.bf16.msra.mxu0 %v6256
  %6983 = vmatprep.subr.bf16.mxu0 0
  %6984 = vmatpush2.bf16.msra.mxu0 %v6255
  %6985 = vmatprep.mubr.bf16.mxu0 %v4911
  %6986 = vmatmul.mubr.bf16.gmra.mxu0 %v4673
  %v6987 = vpop.f32.mrf.mxu0
  %v6988 = vadd.f32 %v6691, %v6987
  %v6989 = vpop.f32.mrf.mxu0
  %v6990 = vpop.f32.mrf.mxu0
  %v6991 = vadd.f32 %v6694, %v6990
  %v6992 = vpop.f32.mrf.mxu0
  %6993 = vmatprep.mubr.bf16.mxu0 %v4912
  %6994 = vmatmul.mubr.bf16.gmra.mxu0 %v4674
  %v6995 = vpop.f32.mrf.mxu0
  %v6996 = vadd.f32 %v6699, %v6995
  %v6997 = vpop.f32.mrf.mxu0
  %v6998 = vpop.f32.mrf.mxu0
  %v6999 = vadd.f32 %v6702, %v6998
  %v7000 = vpop.f32.mrf.mxu0
  %7001 = vmatprep.mubr.bf16.mxu0 %v4913
  %7002 = vmatmul.mubr.bf16.gmra.mxu0 %v4675
  %v7003 = vpop.f32.mrf.mxu0
  %v7004 = vadd.f32 %v6707, %v7003
  %v7005 = vpop.f32.mrf.mxu0
  %v7006 = vpop.f32.mrf.mxu0
  %v7007 = vadd.f32 %v6710, %v7006
  %v7008 = vpop.f32.mrf.mxu0
  %7009 = vmatprep.mubr.bf16.mxu0 %v4914
  %7010 = vmatmul.mubr.bf16.gmra.mxu0 %v4676
  %v7011 = vpop.f32.mrf.mxu0
  %v7012 = vadd.f32 %v6715, %v7011
  %v7013 = vpop.f32.mrf.mxu0
  %v7014 = vpop.f32.mrf.mxu0
  %v7015 = vadd.f32 %v6718, %v7014
  %v7016 = vpop.f32.mrf.mxu0
  %7017 = vmatprep.mubr.bf16.mxu0 %v4915
  %7018 = vmatmul.mubr.bf16.gmra.mxu0 %v4677
  %v7019 = vpop.f32.mrf.mxu0
  %v7020 = vadd.f32 %v6723, %v7019
  %v7021 = vpop.f32.mrf.mxu0
  %v7022 = vpop.f32.mrf.mxu0
  %v7023 = vadd.f32 %v6726, %v7022
  %v7024 = vpop.f32.mrf.mxu0
  %7025 = vmatprep.mubr.bf16.mxu0 %v4916
  %7026 = vmatmul.mubr.bf16.gmra.mxu0 %v4678
  %v7027 = vpop.f32.mrf.mxu0
  %v7028 = vadd.f32 %v6731, %v7027
  %v7029 = vpop.f32.mrf.mxu0
  %v7030 = vpop.f32.mrf.mxu0
  %v7031 = vadd.f32 %v6734, %v7030
  %v7032 = vpop.f32.mrf.mxu0
  %7033 = vmatprep.mubr.bf16.mxu0 %v4917
  %7034 = vmatmul.mubr.bf16.gmra.mxu0 %v4679
  %v7035 = vpop.f32.mrf.mxu0
  %v7036 = vadd.f32 %v6739, %v7035
  %v7037 = vpop.f32.mrf.mxu0
  %v7038 = vpop.f32.mrf.mxu0
  %v7039 = vadd.f32 %v6742, %v7038
  %v7040 = vpop.f32.mrf.mxu0
  %7041 = vmatprep.mubr.bf16.mxu0 %v4918
  %7042 = vmatmul.mubr.bf16.gmra.mxu0 %v4680
  %v7043 = vpop.f32.mrf.mxu0
  %v7044 = vadd.f32 %v6747, %v7043
  %v7045 = vpop.f32.mrf.mxu0
  %v7046 = vpop.f32.mrf.mxu0
  %v7047 = vadd.f32 %v6750, %v7046
  %v7048 = vpop.f32.mrf.mxu0
  %7049 = vmatprep.mubr.bf16.mxu0 %v4919
  %7050 = vmatmul.mubr.bf16.gmra.mxu0 %v4681
  %v7051 = vpop.f32.mrf.mxu0
  %v7052 = vadd.f32 %v6755, %v7051
  %v7053 = vpop.f32.mrf.mxu0
  %v7054 = vpop.f32.mrf.mxu0
  %v7055 = vadd.f32 %v6758, %v7054
  %v7056 = vpop.f32.mrf.mxu0
  %7057 = vmatprep.mubr.bf16.mxu0 %v4920
  %7058 = vmatmul.mubr.bf16.gmra.mxu0 %v4682
  %v7059 = vpop.f32.mrf.mxu0
  %v7060 = vadd.f32 %v6763, %v7059
  %v7061 = vpop.f32.mrf.mxu0
  %v7062 = vpop.f32.mrf.mxu0
  %v7063 = vadd.f32 %v6766, %v7062
  %v7064 = vpop.f32.mrf.mxu0
  %7065 = vmatprep.mubr.bf16.mxu0 %v4921
  %7066 = vmatmul.mubr.bf16.gmra.mxu0 %v4683
  %v7067 = vpop.f32.mrf.mxu0
  %v7068 = vadd.f32 %v6771, %v7067
  %v7069 = vpop.f32.mrf.mxu0
  %v7070 = vpop.f32.mrf.mxu0
  %v7071 = vadd.f32 %v6774, %v7070
  %v7072 = vpop.f32.mrf.mxu0
  %7073 = vmatprep.mubr.bf16.mxu0 %v4922
  %7074 = vmatmul.mubr.bf16.gmra.mxu0 %v4684
  %v7075 = vpop.f32.mrf.mxu0
  %v7076 = vadd.f32 %v6779, %v7075
  %v7077 = vpop.f32.mrf.mxu0
  %v7078 = vpop.f32.mrf.mxu0
  %v7079 = vadd.f32 %v6782, %v7078
  %v7080 = vpop.f32.mrf.mxu0
  %7081 = vmatprep.mubr.bf16.mxu0 %v4923
  %7082 = vmatmul.mubr.bf16.gmra.mxu0 %v4685
  %v7083 = vpop.f32.mrf.mxu0
  %v7084 = vadd.f32 %v6787, %v7083
  %v7085 = vpop.f32.mrf.mxu0
  %v7086 = vpop.f32.mrf.mxu0
  %v7087 = vadd.f32 %v6790, %v7086
  %v7088 = vpop.f32.mrf.mxu0
  %7089 = vmatprep.mubr.bf16.mxu0 %v4924
  %7090 = vmatmul.mubr.bf16.gmra.mxu0 %v4686
  %v7091 = vpop.f32.mrf.mxu0
  %v7092 = vadd.f32 %v6795, %v7091
  %v7093 = vpop.f32.mrf.mxu0
  %v7094 = vpop.f32.mrf.mxu0
  %v7095 = vadd.f32 %v6798, %v7094
  %v7096 = vpop.f32.mrf.mxu0
  %7097 = vmatprep.mubr.bf16.mxu0 %v4925
  %7098 = vmatmul.mubr.bf16.gmra.mxu0 %v4687
  %v7099 = vpop.f32.mrf.mxu0
  %v7100 = vadd.f32 %v6803, %v7099
  %v7101 = vpop.f32.mrf.mxu0
  %v7102 = vpop.f32.mrf.mxu0
  %v7103 = vadd.f32 %v6806, %v7102
  %v7104 = vpop.f32.mrf.mxu0
  %7105 = vmatprep.mubr.bf16.mxu0 %v4926
  %7106 = vmatmul.mubr.bf16.gmra.mxu0 %v4688
  %v7107 = vpop.f32.mrf.mxu0
  %v7108 = vadd.f32 %v6811, %v7107
  %v7109 = vpop.f32.mrf.mxu0
  %v7110 = vpop.f32.mrf.mxu0
  %v7111 = vadd.f32 %v6814, %v7110
  %v7112 = vpop.f32.mrf.mxu0
  %7113 = vmatprep.mubr.bf16.mxu0 %v4927
  %7114 = vmatmul.mubr.bf16.gmra.mxu0 %v4689
  %v7115 = vpop.f32.mrf.mxu0
  %v7116 = vadd.f32 %v6819, %v7115
  %v7117 = vpop.f32.mrf.mxu0
  %v7118 = vpop.f32.mrf.mxu0
  %v7119 = vadd.f32 %v6822, %v7118
  %v7120 = vpop.f32.mrf.mxu0
  %7121 = vmatprep.mubr.bf16.mxu0 %v4928
  %7122 = vmatmul.mubr.bf16.gmra.mxu0 %v4690
  %v7123 = vpop.f32.mrf.mxu0
  %v7124 = vadd.f32 %v6827, %v7123
  %v7125 = vpop.f32.mrf.mxu0
  %v7126 = vpop.f32.mrf.mxu0
  %v7127 = vadd.f32 %v6830, %v7126
  %v7128 = vpop.f32.mrf.mxu0
  %7129 = vmatprep.mubr.bf16.mxu0 %v4929
  %7130 = vmatmul.mubr.bf16.gmra.mxu0 %v4691
  %v7131 = vpop.f32.mrf.mxu0
  %v7132 = vadd.f32 %v6835, %v7131
  %v7133 = vpop.f32.mrf.mxu0
  %v7134 = vpop.f32.mrf.mxu0
  %v7135 = vadd.f32 %v6838, %v7134
  %v7136 = vpop.f32.mrf.mxu0
  %7137 = vmatprep.mubr.bf16.mxu0 %v4930
  %7138 = vmatmul.mubr.bf16.gmra.mxu0 %v4692
  %v7139 = vpop.f32.mrf.mxu0
  %v7140 = vadd.f32 %v6843, %v7139
  %v7141 = vpop.f32.mrf.mxu0
  %v7142 = vpop.f32.mrf.mxu0
  %v7143 = vadd.f32 %v6846, %v7142
  %v7144 = vpop.f32.mrf.mxu0
  %7145 = vmatprep.mubr.bf16.mxu0 %v4931
  %7146 = vmatmul.mubr.bf16.gmra.mxu0 %v4693
  %v7147 = vpop.f32.mrf.mxu0
  %v7148 = vadd.f32 %v6851, %v7147
  %v7149 = vpop.f32.mrf.mxu0
  %v7150 = vpop.f32.mrf.mxu0
  %v7151 = vadd.f32 %v6854, %v7150
  %v7152 = vpop.f32.mrf.mxu0
  %7153 = vmatprep.mubr.bf16.mxu0 %v4932
  %7154 = vmatmul.mubr.bf16.gmra.mxu0 %v4694
  %v7155 = vpop.f32.mrf.mxu0
  %v7156 = vadd.f32 %v6859, %v7155
  %v7157 = vpop.f32.mrf.mxu0
  %v7158 = vpop.f32.mrf.mxu0
  %v7159 = vadd.f32 %v6862, %v7158
  %v7160 = vpop.f32.mrf.mxu0
  %7161 = vmatprep.mubr.bf16.mxu0 %v4933
  %7162 = vmatmul.mubr.bf16.gmra.mxu0 %v4695
  %v7163 = vpop.f32.mrf.mxu0
  %v7164 = vadd.f32 %v6867, %v7163
  %v7165 = vpop.f32.mrf.mxu0
  %v7166 = vpop.f32.mrf.mxu0
  %v7167 = vadd.f32 %v6870, %v7166
  %v7168 = vpop.f32.mrf.mxu0
  %7169 = vmatprep.mubr.bf16.mxu0 %v4934
  %7170 = vmatmul.mubr.bf16.gmra.mxu0 %v4696
  %v7171 = vpop.f32.mrf.mxu0
  %v7172 = vadd.f32 %v6875, %v7171
  %v7173 = vpop.f32.mrf.mxu0
  %v7174 = vpop.f32.mrf.mxu0
  %v7175 = vadd.f32 %v6878, %v7174
  %v7176 = vpop.f32.mrf.mxu0
  %7177 = vmatprep.mubr.bf16.mxu0 %v4935
  %7178 = vmatmul.mubr.bf16.gmra.mxu0 %v4697
  %v7179 = vpop.f32.mrf.mxu0
  %v7180 = vadd.f32 %v6883, %v7179
  %v7181 = vpop.f32.mrf.mxu0
  %v7182 = vpop.f32.mrf.mxu0
  %v7183 = vadd.f32 %v6886, %v7182
  %v7184 = vpop.f32.mrf.mxu0
  %7185 = vmatprep.mubr.bf16.mxu0 %v4936
  %7186 = vmatmul.mubr.bf16.gmra.mxu0 %v4698
  %v7187 = vpop.f32.mrf.mxu0
  %v7188 = vadd.f32 %v6891, %v7187
  %v7189 = vpop.f32.mrf.mxu0
  %v7190 = vpop.f32.mrf.mxu0
  %v7191 = vadd.f32 %v6894, %v7190
  %v7192 = vpop.f32.mrf.mxu0
  %7193 = vmatprep.mubr.bf16.mxu0 %v4937
  %7194 = vmatmul.mubr.bf16.gmra.mxu0 %v4699
  %v7195 = vpop.f32.mrf.mxu0
  %v7196 = vadd.f32 %v6899, %v7195
  %v7197 = vpop.f32.mrf.mxu0
  %v7198 = vpop.f32.mrf.mxu0
  %v7199 = vadd.f32 %v6902, %v7198
  %v7200 = vpop.f32.mrf.mxu0
  %7201 = vmatprep.mubr.bf16.mxu0 %v4938
  %7202 = vmatmul.mubr.bf16.gmra.mxu0 %v4700
  %v7203 = vpop.f32.mrf.mxu0
  %v7204 = vadd.f32 %v6907, %v7203
  %v7205 = vpop.f32.mrf.mxu0
  %v7206 = vpop.f32.mrf.mxu0
  %v7207 = vadd.f32 %v6910, %v7206
  %v7208 = vpop.f32.mrf.mxu0
  %7209 = vmatprep.mubr.bf16.mxu0 %v4939
  %7210 = vmatmul.mubr.bf16.gmra.mxu0 %v4701
  %v7211 = vpop.f32.mrf.mxu0
  %v7212 = vadd.f32 %v6915, %v7211
  %v7213 = vpop.f32.mrf.mxu0
  %v7214 = vpop.f32.mrf.mxu0
  %v7215 = vadd.f32 %v6918, %v7214
  %v7216 = vpop.f32.mrf.mxu0
  %7217 = vmatprep.mubr.bf16.mxu0 %v4940
  %7218 = vmatmul.mubr.bf16.gmra.mxu0 %v4702
  %v7219 = vpop.f32.mrf.mxu0
  %v7220 = vadd.f32 %v6923, %v7219
  %v7221 = vpop.f32.mrf.mxu0
  %v7222 = vpop.f32.mrf.mxu0
  %v7223 = vadd.f32 %v6926, %v7222
  %v7224 = vpop.f32.mrf.mxu0
  %7225 = vmatprep.mubr.bf16.mxu0 %v4941
  %7226 = vmatmul.mubr.bf16.gmra.mxu0 %v4703
  %v7227 = vpop.f32.mrf.mxu0
  %v7228 = vadd.f32 %v6931, %v7227
  %v7229 = vpop.f32.mrf.mxu0
  %v7230 = vpop.f32.mrf.mxu0
  %v7231 = vadd.f32 %v6934, %v7230
  %v7232 = vpop.f32.mrf.mxu0
  %7233 = vmatprep.mubr.bf16.mxu0 %v4942
  %7234 = vmatmul.mubr.bf16.gmra.mxu0 %v4704
  %v7235 = vpop.f32.mrf.mxu0
  %v7236 = vadd.f32 %v6939, %v7235
  %v7237 = vpop.f32.mrf.mxu0
  %v7238 = vpop.f32.mrf.mxu0
  %v7239 = vadd.f32 %v6942, %v7238
  %v7240 = vpop.f32.mrf.mxu0
  %7241 = vmatprep.mubr.bf16.mxu0 %v4943
  %7242 = vmatmul.mubr.bf16.gmra.mxu0 %v4705
  %v7243 = vpop.f32.mrf.mxu0
  %v7244 = vadd.f32 %v6947, %v7243
  %v7245 = vpop.f32.mrf.mxu0
  %v7246 = vpop.f32.mrf.mxu0
  %v7247 = vadd.f32 %v6950, %v7246
  %v7248 = vpop.f32.mrf.mxu0
  %7249 = vdwg.mxu0
  %7250 = vmatprep.subr.bf16.mxu0 0
  %7251 = vmatpush1.bf16.msra.mxu0 %v6270
  %7252 = vmatprep.subr.bf16.mxu0 0
  %7253 = vmatpush1.bf16.msra.mxu0 %v6269
  %7254 = vmatprep.subr.bf16.mxu0 0
  %7255 = vmatpush1.bf16.msra.mxu0 %v6268
  %7256 = vmatprep.subr.bf16.mxu0 0
  %7257 = vmatpush1.bf16.msra.mxu0 %v6267
  %7258 = vmatprep.subr.bf16.mxu0 0
  %7259 = vmatpush1.bf16.msra.mxu0 %v6266
  %7260 = vmatprep.subr.bf16.mxu0 0
  %7261 = vmatpush1.bf16.msra.mxu0 %v6265
  %7262 = vmatprep.subr.bf16.mxu0 0
  %7263 = vmatpush1.bf16.msra.mxu0 %v6264
  %7264 = vmatprep.subr.bf16.mxu0 0
  %7265 = vmatpush1.bf16.msra.mxu0 %v6263
  %7266 = vmatprep.subr.bf16.mxu0 0
  %7267 = vmatpush2.bf16.msra.mxu0 %v6278
  %7268 = vmatprep.subr.bf16.mxu0 0
  %7269 = vmatpush2.bf16.msra.mxu0 %v6277
  %7270 = vmatprep.subr.bf16.mxu0 0
  %7271 = vmatpush2.bf16.msra.mxu0 %v6276
  %7272 = vmatprep.subr.bf16.mxu0 0
  %7273 = vmatpush2.bf16.msra.mxu0 %v6275
  %7274 = vmatprep.subr.bf16.mxu0 0
  %7275 = vmatpush2.bf16.msra.mxu0 %v6274
  %7276 = vmatprep.subr.bf16.mxu0 0
  %7277 = vmatpush2.bf16.msra.mxu0 %v6273
  %7278 = vmatprep.subr.bf16.mxu0 0
  %7279 = vmatpush2.bf16.msra.mxu0 %v6272
  %7280 = vmatprep.subr.bf16.mxu0 0
  %7281 = vmatpush2.bf16.msra.mxu0 %v6271
  %7282 = vmatprep.mubr.bf16.mxu0 %v5446
  %7283 = vmatmul.mubr.bf16.gmra.mxu0 %v5215
  %v7284 = vpop.f32.mrf.mxu0
  %v7285 = vadd.f32 %v6988, %v7284
  %v7286 = vpop.f32.mrf.mxu0
  %v7287 = vpop.f32.mrf.mxu0
  %v7288 = vadd.f32 %v6991, %v7287
  %v7289 = vpop.f32.mrf.mxu0
  %7290 = vmatprep.mubr.bf16.mxu0 %v5447
  %7291 = vmatmul.mubr.bf16.gmra.mxu0 %v5216
  %v7292 = vpop.f32.mrf.mxu0
  %v7293 = vadd.f32 %v6996, %v7292
  %v7294 = vpop.f32.mrf.mxu0
  %v7295 = vpop.f32.mrf.mxu0
  %v7296 = vadd.f32 %v6999, %v7295
  %v7297 = vpop.f32.mrf.mxu0
  %7298 = vmatprep.mubr.bf16.mxu0 %v5448
  %7299 = vmatmul.mubr.bf16.gmra.mxu0 %v5217
  %v7300 = vpop.f32.mrf.mxu0
  %v7301 = vadd.f32 %v7004, %v7300
  %v7302 = vpop.f32.mrf.mxu0
  %v7303 = vpop.f32.mrf.mxu0
  %v7304 = vadd.f32 %v7007, %v7303
  %v7305 = vpop.f32.mrf.mxu0
  %7306 = vmatprep.mubr.bf16.mxu0 %v5449
  %7307 = vmatmul.mubr.bf16.gmra.mxu0 %v5218
  %v7308 = vpop.f32.mrf.mxu0
  %v7309 = vadd.f32 %v7012, %v7308
  %v7310 = vpop.f32.mrf.mxu0
  %v7311 = vpop.f32.mrf.mxu0
  %v7312 = vadd.f32 %v7015, %v7311
  %v7313 = vpop.f32.mrf.mxu0
  %7314 = vmatprep.mubr.bf16.mxu0 %v5450
  %7315 = vmatmul.mubr.bf16.gmra.mxu0 %v5219
  %v7316 = vpop.f32.mrf.mxu0
  %v7317 = vadd.f32 %v7020, %v7316
  %v7318 = vpop.f32.mrf.mxu0
  %v7319 = vpop.f32.mrf.mxu0
  %v7320 = vadd.f32 %v7023, %v7319
  %v7321 = vpop.f32.mrf.mxu0
  %7322 = vmatprep.mubr.bf16.mxu0 %v5451
  %7323 = vmatmul.mubr.bf16.gmra.mxu0 %v5220
  %v7324 = vpop.f32.mrf.mxu0
  %v7325 = vadd.f32 %v7028, %v7324
  %v7326 = vpop.f32.mrf.mxu0
  %v7327 = vpop.f32.mrf.mxu0
  %v7328 = vadd.f32 %v7031, %v7327
  %v7329 = vpop.f32.mrf.mxu0
  %7330 = vmatprep.mubr.bf16.mxu0 %v5452
  %7331 = vmatmul.mubr.bf16.gmra.mxu0 %v5221
  %v7332 = vpop.f32.mrf.mxu0
  %v7333 = vadd.f32 %v7036, %v7332
  %v7334 = vpop.f32.mrf.mxu0
  %v7335 = vpop.f32.mrf.mxu0
  %v7336 = vadd.f32 %v7039, %v7335
  %v7337 = vpop.f32.mrf.mxu0
  %7338 = vmatprep.mubr.bf16.mxu0 %v5453
  %7339 = vmatmul.mubr.bf16.gmra.mxu0 %v5222
  %v7340 = vpop.f32.mrf.mxu0
  %v7341 = vadd.f32 %v7044, %v7340
  %v7342 = vpop.f32.mrf.mxu0
  %v7343 = vpop.f32.mrf.mxu0
  %v7344 = vadd.f32 %v7047, %v7343
  %v7345 = vpop.f32.mrf.mxu0
  %7346 = vmatprep.mubr.bf16.mxu0 %v5454
  %7347 = vmatmul.mubr.bf16.gmra.mxu0 %v5223
  %v7348 = vpop.f32.mrf.mxu0
  %v7349 = vadd.f32 %v7052, %v7348
  %v7350 = vpop.f32.mrf.mxu0
  %v7351 = vpop.f32.mrf.mxu0
  %v7352 = vadd.f32 %v7055, %v7351
  %v7353 = vpop.f32.mrf.mxu0
  %7354 = vmatprep.mubr.bf16.mxu0 %v5455
  %7355 = vmatmul.mubr.bf16.gmra.mxu0 %v5224
  %v7356 = vpop.f32.mrf.mxu0
  %v7357 = vadd.f32 %v7060, %v7356
  %v7358 = vpop.f32.mrf.mxu0
  %v7359 = vpop.f32.mrf.mxu0
  %v7360 = vadd.f32 %v7063, %v7359
  %v7361 = vpop.f32.mrf.mxu0
  %7362 = vmatprep.mubr.bf16.mxu0 %v5456
  %7363 = vmatmul.mubr.bf16.gmra.mxu0 %v5225
  %v7364 = vpop.f32.mrf.mxu0
  %v7365 = vadd.f32 %v7068, %v7364
  %v7366 = vpop.f32.mrf.mxu0
  %v7367 = vpop.f32.mrf.mxu0
  %v7368 = vadd.f32 %v7071, %v7367
  %v7369 = vpop.f32.mrf.mxu0
  %7370 = vmatprep.mubr.bf16.mxu0 %v5457
  %7371 = vmatmul.mubr.bf16.gmra.mxu0 %v5226
  %v7372 = vpop.f32.mrf.mxu0
  %v7373 = vadd.f32 %v7076, %v7372
  %v7374 = vpop.f32.mrf.mxu0
  %v7375 = vpop.f32.mrf.mxu0
  %v7376 = vadd.f32 %v7079, %v7375
  %v7377 = vpop.f32.mrf.mxu0
  %7378 = vmatprep.mubr.bf16.mxu0 %v5458
  %7379 = vmatmul.mubr.bf16.gmra.mxu0 %v5227
  %v7380 = vpop.f32.mrf.mxu0
  %v7381 = vadd.f32 %v7084, %v7380
  %v7382 = vpop.f32.mrf.mxu0
  %v7383 = vpop.f32.mrf.mxu0
  %v7384 = vadd.f32 %v7087, %v7383
  %v7385 = vpop.f32.mrf.mxu0
  %7386 = vmatprep.mubr.bf16.mxu0 %v5459
  %7387 = vmatmul.mubr.bf16.gmra.mxu0 %v5228
  %v7388 = vpop.f32.mrf.mxu0
  %v7389 = vadd.f32 %v7092, %v7388
  %v7390 = vpop.f32.mrf.mxu0
  %v7391 = vpop.f32.mrf.mxu0
  %v7392 = vadd.f32 %v7095, %v7391
  %v7393 = vpop.f32.mrf.mxu0
  %7394 = vmatprep.mubr.bf16.mxu0 %v5460
  %7395 = vmatmul.mubr.bf16.gmra.mxu0 %v5229
  %v7396 = vpop.f32.mrf.mxu0
  %v7397 = vadd.f32 %v7100, %v7396
  %v7398 = vpop.f32.mrf.mxu0
  %v7399 = vpop.f32.mrf.mxu0
  %v7400 = vadd.f32 %v7103, %v7399
  %v7401 = vpop.f32.mrf.mxu0
  %7402 = vmatprep.mubr.bf16.mxu0 %v5461
  %7403 = vmatmul.mubr.bf16.gmra.mxu0 %v5230
  %v7404 = vpop.f32.mrf.mxu0
  %v7405 = vadd.f32 %v7108, %v7404
  %v7406 = vpop.f32.mrf.mxu0
  %v7407 = vpop.f32.mrf.mxu0
  %v7408 = vadd.f32 %v7111, %v7407
  %v7409 = vpop.f32.mrf.mxu0
  %7410 = vmatprep.mubr.bf16.mxu0 %v5462
  %7411 = vmatmul.mubr.bf16.gmra.mxu0 %v5231
  %v7412 = vpop.f32.mrf.mxu0
  %v7413 = vadd.f32 %v7116, %v7412
  %v7414 = vpop.f32.mrf.mxu0
  %v7415 = vpop.f32.mrf.mxu0
  %v7416 = vadd.f32 %v7119, %v7415
  %v7417 = vpop.f32.mrf.mxu0
  %7418 = vmatprep.mubr.bf16.mxu0 %v5463
  %7419 = vmatmul.mubr.bf16.gmra.mxu0 %v5232
  %v7420 = vpop.f32.mrf.mxu0
  %v7421 = vadd.f32 %v7124, %v7420
  %v7422 = vpop.f32.mrf.mxu0
  %v7423 = vpop.f32.mrf.mxu0
  %v7424 = vadd.f32 %v7127, %v7423
  %v7425 = vpop.f32.mrf.mxu0
  %7426 = vmatprep.mubr.bf16.mxu0 %v5464
  %7427 = vmatmul.mubr.bf16.gmra.mxu0 %v5233
  %v7428 = vpop.f32.mrf.mxu0
  %v7429 = vadd.f32 %v7132, %v7428
  %v7430 = vpop.f32.mrf.mxu0
  %v7431 = vpop.f32.mrf.mxu0
  %v7432 = vadd.f32 %v7135, %v7431
  %v7433 = vpop.f32.mrf.mxu0
  %7434 = vmatprep.mubr.bf16.mxu0 %v5465
  %7435 = vmatmul.mubr.bf16.gmra.mxu0 %v5234
  %v7436 = vpop.f32.mrf.mxu0
  %v7437 = vadd.f32 %v7140, %v7436
  %v7438 = vpop.f32.mrf.mxu0
  %v7439 = vpop.f32.mrf.mxu0
  %v7440 = vadd.f32 %v7143, %v7439
  %v7441 = vpop.f32.mrf.mxu0
  %7442 = vmatprep.mubr.bf16.mxu0 %v5466
  %7443 = vmatmul.mubr.bf16.gmra.mxu0 %v5235
  %v7444 = vpop.f32.mrf.mxu0
  %v7445 = vadd.f32 %v7148, %v7444
  %v7446 = vpop.f32.mrf.mxu0
  %v7447 = vpop.f32.mrf.mxu0
  %v7448 = vadd.f32 %v7151, %v7447
  %v7449 = vpop.f32.mrf.mxu0
  %7450 = vmatprep.mubr.bf16.mxu0 %v5467
  %7451 = vmatmul.mubr.bf16.gmra.mxu0 %v5236
  %v7452 = vpop.f32.mrf.mxu0
  %v7453 = vadd.f32 %v7156, %v7452
  %v7454 = vpop.f32.mrf.mxu0
  %v7455 = vpop.f32.mrf.mxu0
  %v7456 = vadd.f32 %v7159, %v7455
  %v7457 = vpop.f32.mrf.mxu0
  %7458 = vmatprep.mubr.bf16.mxu0 %v5468
  %7459 = vmatmul.mubr.bf16.gmra.mxu0 %v5237
  %v7460 = vpop.f32.mrf.mxu0
  %v7461 = vadd.f32 %v7164, %v7460
  %v7462 = vpop.f32.mrf.mxu0
  %v7463 = vpop.f32.mrf.mxu0
  %v7464 = vadd.f32 %v7167, %v7463
  %v7465 = vpop.f32.mrf.mxu0
  %7466 = vmatprep.mubr.bf16.mxu0 %v5469
  %7467 = vmatmul.mubr.bf16.gmra.mxu0 %v5238
  %v7468 = vpop.f32.mrf.mxu0
  %v7469 = vadd.f32 %v7172, %v7468
  %v7470 = vpop.f32.mrf.mxu0
  %v7471 = vpop.f32.mrf.mxu0
  %v7472 = vadd.f32 %v7175, %v7471
  %v7473 = vpop.f32.mrf.mxu0
  %7474 = vmatprep.mubr.bf16.mxu0 %v5470
  %7475 = vmatmul.mubr.bf16.gmra.mxu0 %v5239
  %v7476 = vpop.f32.mrf.mxu0
  %v7477 = vadd.f32 %v7180, %v7476
  %v7478 = vpop.f32.mrf.mxu0
  %v7479 = vpop.f32.mrf.mxu0
  %v7480 = vadd.f32 %v7183, %v7479
  %v7481 = vpop.f32.mrf.mxu0
  %7482 = vmatprep.mubr.bf16.mxu0 %v5471
  %7483 = vmatmul.mubr.bf16.gmra.mxu0 %v5240
  %v7484 = vpop.f32.mrf.mxu0
  %v7485 = vadd.f32 %v7188, %v7484
  %v7486 = vpop.f32.mrf.mxu0
  %v7487 = vpop.f32.mrf.mxu0
  %v7488 = vadd.f32 %v7191, %v7487
  %v7489 = vpop.f32.mrf.mxu0
  %7490 = vmatprep.mubr.bf16.mxu0 %v5472
  %7491 = vmatmul.mubr.bf16.gmra.mxu0 %v5241
  %v7492 = vpop.f32.mrf.mxu0
  %v7493 = vadd.f32 %v7196, %v7492
  %v7494 = vpop.f32.mrf.mxu0
  %v7495 = vpop.f32.mrf.mxu0
  %v7496 = vadd.f32 %v7199, %v7495
  %v7497 = vpop.f32.mrf.mxu0
  %7498 = vmatprep.mubr.bf16.mxu0 %v5473
  %7499 = vmatmul.mubr.bf16.gmra.mxu0 %v5242
  %v7500 = vpop.f32.mrf.mxu0
  %v7501 = vadd.f32 %v7204, %v7500
  %v7502 = vpop.f32.mrf.mxu0
  %v7503 = vpop.f32.mrf.mxu0
  %v7504 = vadd.f32 %v7207, %v7503
  %v7505 = vpop.f32.mrf.mxu0
  %7506 = vmatprep.mubr.bf16.mxu0 %v5474
  %7507 = vmatmul.mubr.bf16.gmra.mxu0 %v5243
  %v7508 = vpop.f32.mrf.mxu0
  %v7509 = vadd.f32 %v7212, %v7508
  %v7510 = vpop.f32.mrf.mxu0
  %v7511 = vpop.f32.mrf.mxu0
  %v7512 = vadd.f32 %v7215, %v7511
  %v7513 = vpop.f32.mrf.mxu0
  %7514 = vmatprep.mubr.bf16.mxu0 %v5475
  %7515 = vmatmul.mubr.bf16.gmra.mxu0 %v5244
  %v7516 = vpop.f32.mrf.mxu0
  %v7517 = vadd.f32 %v7220, %v7516
  %v7518 = vpop.f32.mrf.mxu0
  %v7519 = vpop.f32.mrf.mxu0
  %v7520 = vadd.f32 %v7223, %v7519
  %v7521 = vpop.f32.mrf.mxu0
  %7522 = vmatprep.mubr.bf16.mxu0 %v5476
  %7523 = vmatmul.mubr.bf16.gmra.mxu0 %v5245
  %v7524 = vpop.f32.mrf.mxu0
  %v7525 = vadd.f32 %v7228, %v7524
  %v7526 = vpop.f32.mrf.mxu0
  %v7527 = vpop.f32.mrf.mxu0
  %v7528 = vadd.f32 %v7231, %v7527
  %v7529 = vpop.f32.mrf.mxu0
  %7530 = vmatprep.mubr.bf16.mxu0 %v5477
  %7531 = vmatmul.mubr.bf16.gmra.mxu0 %v5246
  %v7532 = vpop.f32.mrf.mxu0
  %v7533 = vadd.f32 %v7236, %v7532
  %v7534 = vpop.f32.mrf.mxu0
  %v7535 = vpop.f32.mrf.mxu0
  %v7536 = vadd.f32 %v7239, %v7535
  %v7537 = vpop.f32.mrf.mxu0
  %7538 = vmatprep.mubr.bf16.mxu0 %v5478
  %7539 = vmatmul.mubr.bf16.gmra.mxu0 %v5247
  %v7540 = vpop.f32.mrf.mxu0
  %v7541 = vadd.f32 %v7244, %v7540
  %v7542 = vpop.f32.mrf.mxu0
  %v7543 = vpop.f32.mrf.mxu0
  %v7544 = vadd.f32 %v7247, %v7543
  %v7545 = vpop.f32.mrf.mxu0
  %7546 = vdwg.mxu0
  %7547 = vmatprep.subr.bf16.mxu0 0
  %7548 = vmatpush1.bf16.msra.mxu0 %v6286
  %7549 = vmatprep.subr.bf16.mxu0 0
  %7550 = vmatpush1.bf16.msra.mxu0 %v6285
  %7551 = vmatprep.subr.bf16.mxu0 0
  %7552 = vmatpush1.bf16.msra.mxu0 %v6284
  %7553 = vmatprep.subr.bf16.mxu0 0
  %7554 = vmatpush1.bf16.msra.mxu0 %v6283
  %7555 = vmatprep.subr.bf16.mxu0 0
  %7556 = vmatpush1.bf16.msra.mxu0 %v6282
  %7557 = vmatprep.subr.bf16.mxu0 0
  %7558 = vmatpush1.bf16.msra.mxu0 %v6281
  %7559 = vmatprep.subr.bf16.mxu0 0
  %7560 = vmatpush1.bf16.msra.mxu0 %v6280
  %7561 = vmatprep.subr.bf16.mxu0 0
  %7562 = vmatpush1.bf16.msra.mxu0 %v6279
  %7563 = vmatprep.subr.bf16.mxu0 0
  %7564 = vmatpush2.bf16.msra.mxu0 0
  %7565 = vmatprep.subr.bf16.mxu0 0
  %7566 = vmatpush2.bf16.msra.mxu0 0
  %7567 = vmatprep.subr.bf16.mxu0 0
  %7568 = vmatpush2.bf16.msra.mxu0 0
  %7569 = vmatprep.subr.bf16.mxu0 0
  %7570 = vmatpush2.bf16.msra.mxu0 0
  %7571 = vmatprep.subr.bf16.mxu0 0
  %7572 = vmatpush2.bf16.msra.mxu0 0
  %7573 = vmatprep.subr.bf16.mxu0 0
  %7574 = vmatpush2.bf16.msra.mxu0 0
  %7575 = vmatprep.subr.bf16.mxu0 0
  %7576 = vmatpush2.bf16.msra.mxu0 0
  %7577 = vmatprep.subr.bf16.mxu0 0
  %7578 = vmatpush2.bf16.msra.mxu0 0
  %7579 = vmatprep.mubr.bf16.mxu0 0
  %7580 = vmatmul.mubr.bf16.gmra.mxu0 %v5750
  %v7581 = vpop.f32.mrf.mxu0
  %v7582 = vadd.f32 %v7285, %v7581
  %v7583 = vpop.f32.mrf.mxu0
  %v7584 = vpop.f32.mrf.mxu0
  %v7585 = vadd.f32 %v7288, %v7584
  %v7586 = vpop.f32.mrf.mxu0
  %7587 = vmatprep.mubr.bf16.mxu0 0
  %7588 = vmatmul.mubr.bf16.gmra.mxu0 %v5751
  %v7589 = vpop.f32.mrf.mxu0
  %v7590 = vadd.f32 %v7293, %v7589
  %v7591 = vpop.f32.mrf.mxu0
  %v7592 = vpop.f32.mrf.mxu0
  %v7593 = vadd.f32 %v7296, %v7592
  %v7594 = vpop.f32.mrf.mxu0
  %7595 = vmatprep.mubr.bf16.mxu0 0
  %7596 = vmatmul.mubr.bf16.gmra.mxu0 %v5752
  %v7597 = vpop.f32.mrf.mxu0
  %v7598 = vadd.f32 %v7301, %v7597
  %v7599 = vpop.f32.mrf.mxu0
  %v7600 = vpop.f32.mrf.mxu0
  %v7601 = vadd.f32 %v7304, %v7600
  %v7602 = vpop.f32.mrf.mxu0
  %7603 = vmatprep.mubr.bf16.mxu0 0
  %7604 = vmatmul.mubr.bf16.gmra.mxu0 %v5753
  %v7605 = vpop.f32.mrf.mxu0
  %v7606 = vadd.f32 %v7309, %v7605
  %v7607 = vpop.f32.mrf.mxu0
  %v7608 = vpop.f32.mrf.mxu0
  %v7609 = vadd.f32 %v7312, %v7608
  %v7610 = vpop.f32.mrf.mxu0
  %7611 = vmatprep.mubr.bf16.mxu0 0
  %7612 = vmatmul.mubr.bf16.gmra.mxu0 %v5754
  %v7613 = vpop.f32.mrf.mxu0
  %v7614 = vadd.f32 %v7317, %v7613
  %v7615 = vpop.f32.mrf.mxu0
  %v7616 = vpop.f32.mrf.mxu0
  %v7617 = vadd.f32 %v7320, %v7616
  %v7618 = vpop.f32.mrf.mxu0
  %7619 = vmatprep.mubr.bf16.mxu0 0
  %7620 = vmatmul.mubr.bf16.gmra.mxu0 %v5755
  %v7621 = vpop.f32.mrf.mxu0
  %v7622 = vadd.f32 %v7325, %v7621
  %v7623 = vpop.f32.mrf.mxu0
  %v7624 = vpop.f32.mrf.mxu0
  %v7625 = vadd.f32 %v7328, %v7624
  %v7626 = vpop.f32.mrf.mxu0
  %7627 = vmatprep.mubr.bf16.mxu0 0
  %7628 = vmatmul.mubr.bf16.gmra.mxu0 %v5756
  %v7629 = vpop.f32.mrf.mxu0
  %v7630 = vadd.f32 %v7333, %v7629
  %v7631 = vpop.f32.mrf.mxu0
  %v7632 = vpop.f32.mrf.mxu0
  %v7633 = vadd.f32 %v7336, %v7632
  %v7634 = vpop.f32.mrf.mxu0
  %7635 = vmatprep.mubr.bf16.mxu0 0
  %7636 = vmatmul.mubr.bf16.gmra.mxu0 %v5757
  %v7637 = vpop.f32.mrf.mxu0
  %v7638 = vadd.f32 %v7341, %v7637
  %v7639 = vpop.f32.mrf.mxu0
  %v7640 = vpop.f32.mrf.mxu0
  %v7641 = vadd.f32 %v7344, %v7640
  %v7642 = vpop.f32.mrf.mxu0
  %7643 = vmatprep.mubr.bf16.mxu0 0
  %7644 = vmatmul.mubr.bf16.gmra.mxu0 %v5758
  %v7645 = vpop.f32.mrf.mxu0
  %v7646 = vadd.f32 %v7349, %v7645
  %v7647 = vpop.f32.mrf.mxu0
  %v7648 = vpop.f32.mrf.mxu0
  %v7649 = vadd.f32 %v7352, %v7648
  %v7650 = vpop.f32.mrf.mxu0
  %7651 = vmatprep.mubr.bf16.mxu0 0
  %7652 = vmatmul.mubr.bf16.gmra.mxu0 %v5759
  %v7653 = vpop.f32.mrf.mxu0
  %v7654 = vadd.f32 %v7357, %v7653
  %v7655 = vpop.f32.mrf.mxu0
  %v7656 = vpop.f32.mrf.mxu0
  %v7657 = vadd.f32 %v7360, %v7656
  %v7658 = vpop.f32.mrf.mxu0
  %7659 = vmatprep.mubr.bf16.mxu0 0
  %7660 = vmatmul.mubr.bf16.gmra.mxu0 %v5760
  %v7661 = vpop.f32.mrf.mxu0
  %v7662 = vadd.f32 %v7365, %v7661
  %v7663 = vpop.f32.mrf.mxu0
  %v7664 = vpop.f32.mrf.mxu0
  %v7665 = vadd.f32 %v7368, %v7664
  %v7666 = vpop.f32.mrf.mxu0
  %7667 = vmatprep.mubr.bf16.mxu0 0
  %7668 = vmatmul.mubr.bf16.gmra.mxu0 %v5761
  %v7669 = vpop.f32.mrf.mxu0
  %v7670 = vadd.f32 %v7373, %v7669
  %v7671 = vpop.f32.mrf.mxu0
  %v7672 = vpop.f32.mrf.mxu0
  %v7673 = vadd.f32 %v7376, %v7672
  %v7674 = vpop.f32.mrf.mxu0
  %7675 = vmatprep.mubr.bf16.mxu0 0
  %7676 = vmatmul.mubr.bf16.gmra.mxu0 %v5762
  %v7677 = vpop.f32.mrf.mxu0
  %v7678 = vadd.f32 %v7381, %v7677
  %v7679 = vpop.f32.mrf.mxu0
  %v7680 = vpop.f32.mrf.mxu0
  %v7681 = vadd.f32 %v7384, %v7680
  %v7682 = vpop.f32.mrf.mxu0
  %7683 = vmatprep.mubr.bf16.mxu0 0
  %7684 = vmatmul.mubr.bf16.gmra.mxu0 %v5763
  %v7685 = vpop.f32.mrf.mxu0
  %v7686 = vadd.f32 %v7389, %v7685
  %v7687 = vpop.f32.mrf.mxu0
  %v7688 = vpop.f32.mrf.mxu0
  %v7689 = vadd.f32 %v7392, %v7688
  %v7690 = vpop.f32.mrf.mxu0
  %7691 = vmatprep.mubr.bf16.mxu0 0
  %7692 = vmatmul.mubr.bf16.gmra.mxu0 %v5764
  %v7693 = vpop.f32.mrf.mxu0
  %v7694 = vadd.f32 %v7397, %v7693
  %v7695 = vpop.f32.mrf.mxu0
  %v7696 = vpop.f32.mrf.mxu0
  %v7697 = vadd.f32 %v7400, %v7696
  %v7698 = vpop.f32.mrf.mxu0
  %7699 = vmatprep.mubr.bf16.mxu0 0
  %7700 = vmatmul.mubr.bf16.gmra.mxu0 %v5765
  %v7701 = vpop.f32.mrf.mxu0
  %v7702 = vadd.f32 %v7405, %v7701
  %v7703 = vpop.f32.mrf.mxu0
  %v7704 = vpop.f32.mrf.mxu0
  %v7705 = vadd.f32 %v7408, %v7704
  %v7706 = vpop.f32.mrf.mxu0
  %7707 = vmatprep.mubr.bf16.mxu0 0
  %7708 = vmatmul.mubr.bf16.gmra.mxu0 %v5766
  %v7709 = vpop.f32.mrf.mxu0
  %v7710 = vadd.f32 %v7413, %v7709
  %v7711 = vpop.f32.mrf.mxu0
  %v7712 = vpop.f32.mrf.mxu0
  %v7713 = vadd.f32 %v7416, %v7712
  %v7714 = vpop.f32.mrf.mxu0
  %7715 = vmatprep.mubr.bf16.mxu0 0
  %7716 = vmatmul.mubr.bf16.gmra.mxu0 %v5767
  %v7717 = vpop.f32.mrf.mxu0
  %v7718 = vadd.f32 %v7421, %v7717
  %v7719 = vpop.f32.mrf.mxu0
  %v7720 = vpop.f32.mrf.mxu0
  %v7721 = vadd.f32 %v7424, %v7720
  %v7722 = vpop.f32.mrf.mxu0
  %7723 = vmatprep.mubr.bf16.mxu0 0
  %7724 = vmatmul.mubr.bf16.gmra.mxu0 %v5768
  %v7725 = vpop.f32.mrf.mxu0
  %v7726 = vadd.f32 %v7429, %v7725
  %v7727 = vpop.f32.mrf.mxu0
  %v7728 = vpop.f32.mrf.mxu0
  %v7729 = vadd.f32 %v7432, %v7728
  %v7730 = vpop.f32.mrf.mxu0
  %7731 = vmatprep.mubr.bf16.mxu0 0
  %7732 = vmatmul.mubr.bf16.gmra.mxu0 %v5769
  %v7733 = vpop.f32.mrf.mxu0
  %v7734 = vadd.f32 %v7437, %v7733
  %v7735 = vpop.f32.mrf.mxu0
  %v7736 = vpop.f32.mrf.mxu0
  %v7737 = vadd.f32 %v7440, %v7736
  %v7738 = vpop.f32.mrf.mxu0
  %7739 = vmatprep.mubr.bf16.mxu0 0
  %7740 = vmatmul.mubr.bf16.gmra.mxu0 %v5770
  %v7741 = vpop.f32.mrf.mxu0
  %v7742 = vadd.f32 %v7445, %v7741
  %v7743 = vpop.f32.mrf.mxu0
  %v7744 = vpop.f32.mrf.mxu0
  %v7745 = vadd.f32 %v7448, %v7744
  %v7746 = vpop.f32.mrf.mxu0
  %7747 = vmatprep.mubr.bf16.mxu0 0
  %7748 = vmatmul.mubr.bf16.gmra.mxu0 %v5771
  %v7749 = vpop.f32.mrf.mxu0
  %v7750 = vadd.f32 %v7453, %v7749
  %v7751 = vpop.f32.mrf.mxu0
  %v7752 = vpop.f32.mrf.mxu0
  %v7753 = vadd.f32 %v7456, %v7752
  %v7754 = vpop.f32.mrf.mxu0
  %7755 = vmatprep.mubr.bf16.mxu0 0
  %7756 = vmatmul.mubr.bf16.gmra.mxu0 %v5772
  %v7757 = vpop.f32.mrf.mxu0
  %v7758 = vadd.f32 %v7461, %v7757
  %v7759 = vpop.f32.mrf.mxu0
  %v7760 = vpop.f32.mrf.mxu0
  %v7761 = vadd.f32 %v7464, %v7760
  %v7762 = vpop.f32.mrf.mxu0
  %7763 = vmatprep.mubr.bf16.mxu0 0
  %7764 = vmatmul.mubr.bf16.gmra.mxu0 %v5773
  %v7765 = vpop.f32.mrf.mxu0
  %v7766 = vadd.f32 %v7469, %v7765
  %v7767 = vpop.f32.mrf.mxu0
  %v7768 = vpop.f32.mrf.mxu0
  %v7769 = vadd.f32 %v7472, %v7768
  %v7770 = vpop.f32.mrf.mxu0
  %7771 = vmatprep.mubr.bf16.mxu0 0
  %7772 = vmatmul.mubr.bf16.gmra.mxu0 %v5774
  %v7773 = vpop.f32.mrf.mxu0
  %v7774 = vadd.f32 %v7477, %v7773
  %v7775 = vpop.f32.mrf.mxu0
  %v7776 = vpop.f32.mrf.mxu0
  %v7777 = vadd.f32 %v7480, %v7776
  %v7778 = vpop.f32.mrf.mxu0
  %7779 = vmatprep.mubr.bf16.mxu0 0
  %7780 = vmatmul.mubr.bf16.gmra.mxu0 %v5775
  %v7781 = vpop.f32.mrf.mxu0
  %v7782 = vadd.f32 %v7485, %v7781
  %v7783 = vpop.f32.mrf.mxu0
  %v7784 = vpop.f32.mrf.mxu0
  %v7785 = vadd.f32 %v7488, %v7784
  %v7786 = vpop.f32.mrf.mxu0
  %7787 = vmatprep.mubr.bf16.mxu0 0
  %7788 = vmatmul.mubr.bf16.gmra.mxu0 %v5776
  %v7789 = vpop.f32.mrf.mxu0
  %v7790 = vadd.f32 %v7493, %v7789
  %v7791 = vpop.f32.mrf.mxu0
  %v7792 = vpop.f32.mrf.mxu0
  %v7793 = vadd.f32 %v7496, %v7792
  %v7794 = vpop.f32.mrf.mxu0
  %7795 = vmatprep.mubr.bf16.mxu0 0
  %7796 = vmatmul.mubr.bf16.gmra.mxu0 %v5777
  %v7797 = vpop.f32.mrf.mxu0
  %v7798 = vadd.f32 %v7501, %v7797
  %v7799 = vpop.f32.mrf.mxu0
  %v7800 = vpop.f32.mrf.mxu0
  %v7801 = vadd.f32 %v7504, %v7800
  %v7802 = vpop.f32.mrf.mxu0
  %7803 = vmatprep.mubr.bf16.mxu0 0
  %7804 = vmatmul.mubr.bf16.gmra.mxu0 %v5778
  %v7805 = vpop.f32.mrf.mxu0
  %v7806 = vadd.f32 %v7509, %v7805
  %v7807 = vpop.f32.mrf.mxu0
  %v7808 = vpop.f32.mrf.mxu0
  %v7809 = vadd.f32 %v7512, %v7808
  %v7810 = vpop.f32.mrf.mxu0
  %7811 = vmatprep.mubr.bf16.mxu0 0
  %7812 = vmatmul.mubr.bf16.gmra.mxu0 %v5779
  %v7813 = vpop.f32.mrf.mxu0
  %v7814 = vadd.f32 %v7517, %v7813
  %v7815 = vpop.f32.mrf.mxu0
  %v7816 = vpop.f32.mrf.mxu0
  %v7817 = vadd.f32 %v7520, %v7816
  %v7818 = vpop.f32.mrf.mxu0
  %7819 = vmatprep.mubr.bf16.mxu0 0
  %7820 = vmatmul.mubr.bf16.gmra.mxu0 %v5780
  %v7821 = vpop.f32.mrf.mxu0
  %v7822 = vadd.f32 %v7525, %v7821
  %v7823 = vpop.f32.mrf.mxu0
  %v7824 = vpop.f32.mrf.mxu0
  %v7825 = vadd.f32 %v7528, %v7824
  %v7826 = vpop.f32.mrf.mxu0
  %7827 = vmatprep.mubr.bf16.mxu0 0
  %7828 = vmatmul.mubr.bf16.gmra.mxu0 %v5781
  %v7829 = vpop.f32.mrf.mxu0
  %v7830 = vadd.f32 %v7533, %v7829
  %v7831 = vpop.f32.mrf.mxu0
  %v7832 = vpop.f32.mrf.mxu0
  %v7833 = vadd.f32 %v7536, %v7832
  %v7834 = vpop.f32.mrf.mxu0
  %7835 = vmatprep.mubr.bf16.mxu0 0
  %7836 = vmatmul.mubr.bf16.gmra.mxu0 %v5782
  %v7837 = vpop.f32.mrf.mxu0
  %v7838 = vadd.f32 %v7541, %v7837
  %v7839 = vpop.f32.mrf.mxu0
  %v7840 = vpop.f32.mrf.mxu0
  %v7841 = vadd.f32 %v7544, %v7840
  %v7842 = vpop.f32.mrf.mxu0
  %7843 = vdwg.mxu0
  %v7844 = vpack.c.bf16 %v7585, %v7582
  %v7845 = vpack.c.bf16 %v7593, %v7590
  %v7846 = vpack.c.bf16 %v7601, %v7598
  %v7847 = vpack.c.bf16 %v7609, %v7606
  %v7848 = vpack.c.bf16 %v7617, %v7614
  %v7849 = vpack.c.bf16 %v7625, %v7622
  %v7850 = vpack.c.bf16 %v7633, %v7630
  %v7851 = vpack.c.bf16 %v7641, %v7638
  %v7852 = vpack.c.bf16 %v7649, %v7646
  %v7853 = vpack.c.bf16 %v7657, %v7654
  %v7854 = vpack.c.bf16 %v7665, %v7662
  %v7855 = vpack.c.bf16 %v7673, %v7670
  %v7856 = vpack.c.bf16 %v7681, %v7678
  %v7857 = vpack.c.bf16 %v7689, %v7686
  %v7858 = vpack.c.bf16 %v7697, %v7694
  %v7859 = vpack.c.bf16 %v7705, %v7702
  %v7860 = vpack.c.bf16 %v7713, %v7710
  %v7861 = vpack.c.bf16 %v7721, %v7718
  %v7862 = vpack.c.bf16 %v7729, %v7726
  %v7863 = vpack.c.bf16 %v7737, %v7734
  %v7864 = vpack.c.bf16 %v7745, %v7742
  %v7865 = vpack.c.bf16 %v7753, %v7750
  %v7866 = vpack.c.bf16 %v7761, %v7758
  %v7867 = vpack.c.bf16 %v7769, %v7766
  %v7868 = vpack.c.bf16 %v7777, %v7774
  %v7869 = vpack.c.bf16 %v7785, %v7782
  %v7870 = vpack.c.bf16 %v7793, %v7790
  %v7871 = vpack.c.bf16 %v7801, %v7798
  %v7872 = vpack.c.bf16 %v7809, %v7806
  %v7873 = vpack.c.bf16 %v7817, %v7814
  %v7874 = vpack.c.bf16 %v7825, %v7822
  %v7875 = vpack.c.bf16 %v7833, %v7830
  %v7876 = vpack.c.bf16 %v7841, %v7838
  %v7910 = vunpack.c.l.b16 %v7844
  %v7911 = vunpack.c.h.b16 %v7844
  %v7912 = vunpack.c.l.b16 %v7845
  %v7913 = vunpack.c.h.b16 %v7845
  %v7914 = vunpack.c.l.b16 %v7846
  %v7915 = vunpack.c.h.b16 %v7846
  %v7916 = vunpack.c.l.b16 %v7847
  %v7917 = vunpack.c.h.b16 %v7847
  %v7918 = vunpack.c.l.b16 %v7848
  %v7919 = vunpack.c.h.b16 %v7848
  %v7920 = vunpack.c.l.b16 %v7849
  %v7921 = vunpack.c.h.b16 %v7849
  %v7922 = vunpack.c.l.b16 %v7850
  %v7923 = vunpack.c.h.b16 %v7850
  %v7924 = vunpack.c.l.b16 %v7851
  %v7925 = vunpack.c.h.b16 %v7851
  %v7926 = vunpack.c.l.b16 %v7852
  %v7927 = vunpack.c.h.b16 %v7852
  %v7928 = vunpack.c.l.b16 %v7853
  %v7929 = vunpack.c.h.b16 %v7853
  %v7930 = vunpack.c.l.b16 %v7854
  %v7931 = vunpack.c.h.b16 %v7854
  %v7932 = vunpack.c.l.b16 %v7855
  %v7933 = vunpack.c.h.b16 %v7855
  %v7934 = vunpack.c.l.b16 %v7856
  %v7935 = vunpack.c.h.b16 %v7856
  %v7936 = vunpack.c.l.b16 %v7857
  %v7937 = vunpack.c.h.b16 %v7857
  %v7938 = vunpack.c.l.b16 %v7858
  %v7939 = vunpack.c.h.b16 %v7858
  %v7940 = vunpack.c.l.b16 %v7859
  %v7941 = vunpack.c.h.b16 %v7859
  %v7942 = vunpack.c.l.b16 %v7860
  %v7943 = vunpack.c.h.b16 %v7860
  %v7944 = vunpack.c.l.b16 %v7861
  %v7945 = vunpack.c.h.b16 %v7861
  %v7946 = vunpack.c.l.b16 %v7862
  %v7947 = vunpack.c.h.b16 %v7862
  %v7948 = vunpack.c.l.b16 %v7863
  %v7949 = vunpack.c.h.b16 %v7863
  %v7950 = vunpack.c.l.b16 %v7864
  %v7951 = vunpack.c.h.b16 %v7864
  %v7952 = vunpack.c.l.b16 %v7865
  %v7953 = vunpack.c.h.b16 %v7865
  %v7954 = vunpack.c.l.b16 %v7866
  %v7955 = vunpack.c.h.b16 %v7866
  %v7956 = vunpack.c.l.b16 %v7867
  %v7957 = vunpack.c.h.b16 %v7867
  %v7958 = vunpack.c.l.b16 %v7868
  %v7959 = vunpack.c.h.b16 %v7868
  %v7960 = vunpack.c.l.b16 %v7869
  %v7961 = vunpack.c.h.b16 %v7869
  %v7962 = vunpack.c.l.b16 %v7870
  %v7963 = vunpack.c.h.b16 %v7870
  %v7964 = vunpack.c.l.b16 %v7871
  %v7965 = vunpack.c.h.b16 %v7871
  %v7966 = vunpack.c.l.b16 %v7872
  %v7967 = vunpack.c.h.b16 %v7872
  %v7968 = vunpack.c.l.b16 %v7873
  %v7969 = vunpack.c.h.b16 %v7873
  %v7970 = vunpack.c.l.b16 %v7874
  %v7971 = vunpack.c.h.b16 %v7874
  %v7972 = vunpack.c.l.b16 %v7875
  %v7973 = vunpack.c.h.b16 %v7875
  %v7974 = vunpack.c.l.b16 %v7876
  %v7975 = vunpack.c.h.b16 %v7876
  %v7976 = vpack.c.b16 %v7910, %v7910
  %v7977 = vpack.c.b16 %v7911, %v7911
  %v7978 = vpack.c.b16 %v7912, %v7912
  %v7979 = vpack.c.b16 %v7913, %v7913
  %v7980 = vpack.c.b16 %v7914, %v7914
  %v7981 = vpack.c.b16 %v7915, %v7915
  %v7982 = vpack.c.b16 %v7916, %v7916
  %v7983 = vpack.c.b16 %v7917, %v7917
  %v7984 = vpack.c.b16 %v7918, %v7918
  %v7985 = vpack.c.b16 %v7919, %v7919
  %v7986 = vpack.c.b16 %v7920, %v7920
  %v7987 = vpack.c.b16 %v7921, %v7921
  %v7988 = vpack.c.b16 %v7922, %v7922
  %v7989 = vpack.c.b16 %v7923, %v7923
  %v7990 = vpack.c.b16 %v7924, %v7924
  %v7991 = vpack.c.b16 %v7925, %v7925
  %v7992 = vpack.c.b16 %v7926, %v7926
  %v7993 = vpack.c.b16 %v7927, %v7927
  %v7994 = vpack.c.b16 %v7928, %v7928
  %v7995 = vpack.c.b16 %v7929, %v7929
  %v7996 = vpack.c.b16 %v7930, %v7930
  %v7997 = vpack.c.b16 %v7931, %v7931
  %v7998 = vpack.c.b16 %v7932, %v7932
  %v7999 = vpack.c.b16 %v7933, %v7933
  %v8000 = vpack.c.b16 %v7934, %v7934
  %v8001 = vpack.c.b16 %v7935, %v7935
  %v8002 = vpack.c.b16 %v7936, %v7936
  %v8003 = vpack.c.b16 %v7937, %v7937
  %v8004 = vpack.c.b16 %v7938, %v7938
  %v8005 = vpack.c.b16 %v7939, %v7939
  %v8006 = vpack.c.b16 %v7940, %v7940
  %v8007 = vpack.c.b16 %v7941, %v7941
  %v8008 = vpack.c.b16 %v7942, %v7942
  %v8009 = vpack.c.b16 %v7943, %v7943
  %v8010 = vpack.c.b16 %v7944, %v7944
  %v8011 = vpack.c.b16 %v7945, %v7945
  %v8012 = vpack.c.b16 %v7946, %v7946
  %v8013 = vpack.c.b16 %v7947, %v7947
  %v8014 = vpack.c.b16 %v7948, %v7948
  %v8015 = vpack.c.b16 %v7949, %v7949
  %v8016 = vpack.c.b16 %v7950, %v7950
  %v8017 = vpack.c.b16 %v7951, %v7951
  %v8018 = vpack.c.b16 %v7952, %v7952
  %v8019 = vpack.c.b16 %v7953, %v7953
  %v8020 = vpack.c.b16 %v7954, %v7954
  %v8021 = vpack.c.b16 %v7955, %v7955
  %v8022 = vpack.c.b16 %v7956, %v7956
  %v8023 = vpack.c.b16 %v7957, %v7957
  %v8024 = vpack.c.b16 %v7958, %v7958
  %v8025 = vpack.c.b16 %v7959, %v7959
  %v8026 = vpack.c.b16 %v7960, %v7960
  %v8027 = vpack.c.b16 %v7961, %v7961
  %v8028 = vpack.c.b16 %v7962, %v7962
  %v8029 = vpack.c.b16 %v7963, %v7963
  %v8030 = vpack.c.b16 %v7964, %v7964
  %v8031 = vpack.c.b16 %v7965, %v7965
  %v8032 = vpack.c.b16 %v7966, %v7966
  %v8033 = vpack.c.b16 %v7967, %v7967
  %v8034 = vpack.c.b16 %v7968, %v7968
  %v8035 = vpack.c.b16 %v7969, %v7969
  %v8036 = vpack.c.b16 %v7970, %v7970
  %v8037 = vpack.c.b16 %v7971, %v7971
  %v8038 = vpack.c.b16 %v7972, %v7972
  %v8039 = vpack.c.b16 %v7973, %v7973
  %v8040 = vpack.c.b16 %v7974, %v7974
  %v8041 = vpack.c.b16 %v7975, %v7975
  %8108 = vst [vmem:[%s7] sm:$0xf] %v7976
  %8109 = vst [vmem:[%s7 + $0x4] sm:$0xf] %v7977
  %8110 = vst [vmem:[%s7 + $0x8] sm:$0xf] %v7978
  %8111 = vst [vmem:[%s7 + $0xc] sm:$0xf] %v7979
  %8112 = vst [vmem:[%s7 + $0x10] sm:$0xf] %v7980
  %8113 = vst [vmem:[%s7 + $0x14] sm:$0xf] %v7981
  %8114 = vst [vmem:[%s7 + $0x18] sm:$0xf] %v7982
  %8115 = vst [vmem:[%s7 + $0x1c] sm:$0xf] %v7983
  %8116 = vst [vmem:[%s7 + $0x20] sm:$0xf] %v7984
  %8117 = vst [vmem:[%s7 + $0x24] sm:$0xf] %v7985
  %8118 = vst [vmem:[%s7 + $0x28] sm:$0xf] %v7986
  %8119 = vst [vmem:[%s7 + $0x2c] sm:$0xf] %v7987
  %8120 = vst [vmem:[%s7 + $0x30] sm:$0xf] %v7988
  %8121 = vst [vmem:[%s7 + $0x34] sm:$0xf] %v7989
  %8122 = vst [vmem:[%s7 + $0x38] sm:$0xf] %v7990
  %8123 = vst [vmem:[%s7 + $0x3c] sm:$0xf] %v7991
  %8124 = vst [vmem:[%s7 + $0x40] sm:$0xf] %v7992
  %8125 = vst [vmem:[%s7 + $0x44] sm:$0xf] %v7993
  %8126 = vst [vmem:[%s7 + $0x48] sm:$0xf] %v7994
  %8127 = vst [vmem:[%s7 + $0x4c] sm:$0xf] %v7995
  %8128 = vst [vmem:[%s7 + $0x50] sm:$0xf] %v7996
  %8129 = vst [vmem:[%s7 + $0x54] sm:$0xf] %v7997
  %8130 = vst [vmem:[%s7 + $0x58] sm:$0xf] %v7998
  %8131 = vst [vmem:[%s7 + $0x5c] sm:$0xf] %v7999
  %8132 = vst [vmem:[%s7 + $0x60] sm:$0xf] %v8000
  %8133 = vst [vmem:[%s7 + $0x64] sm:$0xf] %v8001
  %8134 = vst [vmem:[%s7 + $0x68] sm:$0xf] %v8002
  %8135 = vst [vmem:[%s7 + $0x6c] sm:$0xf] %v8003
  %8136 = vst [vmem:[%s7 + $0x70] sm:$0xf] %v8004
  %8137 = vst [vmem:[%s7 + $0x74] sm:$0xf] %v8005
  %8138 = vst [vmem:[%s7 + $0x78] sm:$0xf] %v8006
  %8139 = vst [vmem:[%s7 + $0x7c] sm:$0xf] %v8007
  %8140 = vst [vmem:[%s7 + $0x80] sm:$0xf] %v8008
  %8141 = vst [vmem:[%s7 + $0x84] sm:$0xf] %v8009
  %8142 = vst [vmem:[%s7 + $0x88] sm:$0xf] %v8010
  %8143 = vst [vmem:[%s7 + $0x8c] sm:$0xf] %v8011
  %8144 = vst [vmem:[%s7 + $0x90] sm:$0xf] %v8012
  %8145 = vst [vmem:[%s7 + $0x94] sm:$0xf] %v8013
  %8146 = vst [vmem:[%s7 + $0x98] sm:$0xf] %v8014
  %8147 = vst [vmem:[%s7 + $0x9c] sm:$0xf] %v8015
  %8148 = vst [vmem:[%s7 + $0xa0] sm:$0xf] %v8016
  %8149 = vst [vmem:[%s7 + $0xa4] sm:$0xf] %v8017
  %8150 = vst [vmem:[%s7 + $0xa8] sm:$0xf] %v8018
  %8151 = vst [vmem:[%s7 + $0xac] sm:$0xf] %v8019
  %8152 = vst [vmem:[%s7 + $0xb0] sm:$0xf] %v8020
  %8153 = vst [vmem:[%s7 + $0xb4] sm:$0xf] %v8021
  %8154 = vst [vmem:[%s7 + $0xb8] sm:$0xf] %v8022
  %8155 = vst [vmem:[%s7 + $0xbc] sm:$0xf] %v8023
  %8156 = vst [vmem:[%s7 + $0xc0] sm:$0xf] %v8024
  %8157 = vst [vmem:[%s7 + $0xc4] sm:$0xf] %v8025
  %8158 = vst [vmem:[%s7 + $0xc8] sm:$0xf] %v8026
  %8159 = vst [vmem:[%s7 + $0xcc] sm:$0xf] %v8027
  %8160 = vst [vmem:[%s7 + $0xd0] sm:$0xf] %v8028
  %8161 = vst [vmem:[%s7 + $0xd4] sm:$0xf] %v8029
  %8162 = vst [vmem:[%s7 + $0xd8] sm:$0xf] %v8030
  %8163 = vst [vmem:[%s7 + $0xdc] sm:$0xf] %v8031
  %8164 = vst [vmem:[%s7 + $0xe0] sm:$0xf] %v8032
  %8165 = vst [vmem:[%s7 + $0xe4] sm:$0xf] %v8033
  %8166 = vst [vmem:[%s7 + $0xe8] sm:$0xf] %v8034
  %8167 = vst [vmem:[%s7 + $0xec] sm:$0xf] %v8035
  %8168 = vst [vmem:[%s7 + $0xf0] sm:$0xf] %v8036
  %8169 = vst [vmem:[%s7 + $0xf4] sm:$0xf] %v8037
  %8170 = vst [vmem:[%s7 + $0xf8] sm:$0xf] %v8038
  %8171 = vst [vmem:[%s7 + $0xfc] sm:$0xf] %v8039
  %8172 = vst [vmem:[%s7 + $0x100] sm:$0xf] %v8040
  %8173 = vst [vmem:[%s7 + $0x104] sm:$0xf] %v8041
  %vm8174 = vcmp.lt.s32.totalorder %v1228, 512
  %vm8175 = vcmp.lt.s32.totalorder %v1229, 512
  %vm8176 = vcmp.lt.s32.totalorder %v1230, 512
  %vm8177 = vcmp.lt.s32.totalorder %v1231, 512
  %vm8178 = vcmp.lt.s32.totalorder %v1232, 512
  %vm8179 = vcmp.lt.s32.totalorder %v1233, 512
  %vm8180 = vcmp.lt.s32.totalorder %v1234, 512
  %vm8181 = vcmp.lt.s32.totalorder %v1235, 512
  %vm8182 = vcmp.lt.s32.totalorder %v1236, 512
  %vm8183 = vcmp.lt.s32.totalorder %v1237, 512
  %vm8184 = vcmp.lt.s32.totalorder %v1238, 512
  %vm8185 = vcmp.lt.s32.totalorder %v1239, 512
  %vm8186 = vcmp.lt.s32.totalorder %v1240, 512
  %vm8187 = vcmp.lt.s32.totalorder %v1241, 512
  %vm8188 = vcmp.lt.s32.totalorder %v1242, 512
  %vm8189 = vcmp.lt.s32.totalorder %v1243, 512
  %vm8190 = vcmp.lt.s32.totalorder %v1244, 512
  %vm8191 = vcmp.lt.s32.totalorder %v1245, 512
  %vm8192 = vcmp.lt.s32.totalorder %v1246, 512
  %vm8193 = vcmp.lt.s32.totalorder %v1247, 512
  %vm8194 = vcmp.lt.s32.totalorder %v1248, 512
  %vm8195 = vcmp.lt.s32.totalorder %v1249, 512
  %vm8196 = vcmp.lt.s32.totalorder %v1250, 512
  %vm8197 = vcmp.lt.s32.totalorder %v1251, 512
  %vm8198 = vcmp.lt.s32.totalorder %v1252, 512
  %vm8199 = vcmp.lt.s32.totalorder %v1253, 512
  %vm8200 = vcmp.lt.s32.totalorder %v1254, 512
  %vm8201 = vcmp.lt.s32.totalorder %v1255, 512
  %vm8202 = vcmp.lt.s32.totalorder %v1256, 512
  %vm8203 = vcmp.lt.s32.totalorder %v1257, 512
  %vm8204 = vcmp.lt.s32.totalorder %v1258, 512
  %vm8205 = vcmp.lt.s32.totalorder %v1259, 512
  %vm8206 = vcmp.lt.s32.totalorder %v1260, 512
  %vm8207 = vcmp.lt.s32.totalorder %v1261, 512
  %vm8208 = vcmp.lt.s32.totalorder %v1262, 512
  %vm8209 = vcmp.lt.s32.totalorder %v1263, 512
  %vm8210 = vcmp.lt.s32.totalorder %v1264, 512
  %vm8211 = vcmp.lt.s32.totalorder %v1265, 512
  %vm8212 = vcmp.lt.s32.totalorder %v1266, 512
  %vm8213 = vcmp.lt.s32.totalorder %v1267, 512
  %vm8214 = vcmp.lt.s32.totalorder %v1268, 512
  %vm8215 = vcmp.lt.s32.totalorder %v1269, 512
  %vm8216 = vcmp.lt.s32.totalorder %v1270, 512
  %vm8217 = vcmp.lt.s32.totalorder %v1271, 512
  %vm8218 = vcmp.lt.s32.totalorder %v1272, 512
  %vm8219 = vcmp.lt.s32.totalorder %v1273, 512
  %vm8220 = vcmp.lt.s32.totalorder %v1274, 512
  %vm8221 = vcmp.lt.s32.totalorder %v1275, 512
  %vm8222 = vcmp.lt.s32.totalorder %v1276, 512
  %vm8223 = vcmp.lt.s32.totalorder %v1277, 512
  %vm8224 = vcmp.lt.s32.totalorder %v1278, 512
  %vm8225 = vcmp.lt.s32.totalorder %v1279, 512
  %vm8226 = vcmp.lt.s32.totalorder %v1280, 512
  %vm8227 = vcmp.lt.s32.totalorder %v1281, 512
  %vm8228 = vcmp.lt.s32.totalorder %v1282, 512
  %vm8229 = vcmp.lt.s32.totalorder %v1283, 512
  %vm8230 = vcmp.lt.s32.totalorder %v1284, 512
  %vm8231 = vcmp.lt.s32.totalorder %v1285, 512
  %vm8232 = vcmp.lt.s32.totalorder %v1286, 512
  %vm8233 = vcmp.lt.s32.totalorder %v1287, 512
  %vm8234 = vcmp.lt.s32.totalorder %v1288, 512
  %vm8235 = vcmp.lt.s32.totalorder %v1289, 512
  %vm8236 = vcmp.lt.s32.totalorder %v1290, 512
  %vm8237 = vcmp.lt.s32.totalorder %v1291, 512
  %vm8238 = vcmp.lt.s32.totalorder %v1292, 512
  %vm8239 = vcmp.lt.s32.totalorder %v1293, 512
  %v8240 = vsel %vm8174, 1, 0
  %v8241 = vsel %vm8175, 1, 0
  %v8242 = vsel %vm8176, 1, 0
  %v8243 = vsel %vm8177, 1, 0
  %v8244 = vsel %vm8178, 1, 0
  %v8245 = vsel %vm8179, 1, 0
  %v8246 = vsel %vm8180, 1, 0
  %v8247 = vsel %vm8181, 1, 0
  %v8248 = vsel %vm8182, 1, 0
  %v8249 = vsel %vm8183, 1, 0
  %v8250 = vsel %vm8184, 1, 0
  %v8251 = vsel %vm8185, 1, 0
  %v8252 = vsel %vm8186, 1, 0
  %v8253 = vsel %vm8187, 1, 0
  %v8254 = vsel %vm8188, 1, 0
  %v8255 = vsel %vm8189, 1, 0
  %v8256 = vsel %vm8190, 1, 0
  %v8257 = vsel %vm8191, 1, 0
  %v8258 = vsel %vm8192, 1, 0
  %v8259 = vsel %vm8193, 1, 0
  %v8260 = vsel %vm8194, 1, 0
  %v8261 = vsel %vm8195, 1, 0
  %v8262 = vsel %vm8196, 1, 0
  %v8263 = vsel %vm8197, 1, 0
  %v8264 = vsel %vm8198, 1, 0
  %v8265 = vsel %vm8199, 1, 0
  %v8266 = vsel %vm8200, 1, 0
  %v8267 = vsel %vm8201, 1, 0
  %v8268 = vsel %vm8202, 1, 0
  %v8269 = vsel %vm8203, 1, 0
  %v8270 = vsel %vm8204, 1, 0
  %v8271 = vsel %vm8205, 1, 0
  %v8272 = vsel %vm8206, 1, 0
  %v8273 = vsel %vm8207, 1, 0
  %v8274 = vsel %vm8208, 1, 0
  %v8275 = vsel %vm8209, 1, 0
  %v8276 = vsel %vm8210, 1, 0
  %v8277 = vsel %vm8211, 1, 0
  %v8278 = vsel %vm8212, 1, 0
  %v8279 = vsel %vm8213, 1, 0
  %v8280 = vsel %vm8214, 1, 0
  %v8281 = vsel %vm8215, 1, 0
  %v8282 = vsel %vm8216, 1, 0
  %v8283 = vsel %vm8217, 1, 0
  %v8284 = vsel %vm8218, 1, 0
  %v8285 = vsel %vm8219, 1, 0
  %v8286 = vsel %vm8220, 1, 0
  %v8287 = vsel %vm8221, 1, 0
  %v8288 = vsel %vm8222, 1, 0
  %v8289 = vsel %vm8223, 1, 0
  %v8290 = vsel %vm8224, 1, 0
  %v8291 = vsel %vm8225, 1, 0
  %v8292 = vsel %vm8226, 1, 0
  %v8293 = vsel %vm8227, 1, 0
  %v8294 = vsel %vm8228, 1, 0
  %v8295 = vsel %vm8229, 1, 0
  %v8296 = vsel %vm8230, 1, 0
  %v8297 = vsel %vm8231, 1, 0
  %v8298 = vsel %vm8232, 1, 0
  %v8299 = vsel %vm8233, 1, 0
  %v8300 = vsel %vm8234, 1, 0
  %v8301 = vsel %vm8235, 1, 0
  %v8302 = vsel %vm8236, 1, 0
  %v8303 = vsel %vm8237, 1, 0
  %v8304 = vsel %vm8238, 1, 0
  %v8305 = vsel %vm8239, 1, 0
  %vm8306 = vcmp.eq.s32.totalorder %v8240, 1
  %vm8307 = vcmp.eq.s32.totalorder %v8241, 1
  %vm8308 = vcmp.eq.s32.totalorder %v8242, 1
  %vm8309 = vcmp.eq.s32.totalorder %v8243, 1
  %vm8310 = vcmp.eq.s32.totalorder %v8244, 1
  %vm8311 = vcmp.eq.s32.totalorder %v8245, 1
  %vm8312 = vcmp.eq.s32.totalorder %v8246, 1
  %vm8313 = vcmp.eq.s32.totalorder %v8247, 1
  %vm8314 = vcmp.eq.s32.totalorder %v8248, 1
  %vm8315 = vcmp.eq.s32.totalorder %v8249, 1
  %vm8316 = vcmp.eq.s32.totalorder %v8250, 1
  %vm8317 = vcmp.eq.s32.totalorder %v8251, 1
  %vm8318 = vcmp.eq.s32.totalorder %v8252, 1
  %vm8319 = vcmp.eq.s32.totalorder %v8253, 1
  %vm8320 = vcmp.eq.s32.totalorder %v8254, 1
  %vm8321 = vcmp.eq.s32.totalorder %v8255, 1
  %vm8322 = vcmp.eq.s32.totalorder %v8256, 1
  %vm8323 = vcmp.eq.s32.totalorder %v8257, 1
  %vm8324 = vcmp.eq.s32.totalorder %v8258, 1
  %vm8325 = vcmp.eq.s32.totalorder %v8259, 1
  %vm8326 = vcmp.eq.s32.totalorder %v8260, 1
  %vm8327 = vcmp.eq.s32.totalorder %v8261, 1
  %vm8328 = vcmp.eq.s32.totalorder %v8262, 1
  %vm8329 = vcmp.eq.s32.totalorder %v8263, 1
  %vm8330 = vcmp.eq.s32.totalorder %v8264, 1
  %vm8331 = vcmp.eq.s32.totalorder %v8265, 1
  %vm8332 = vcmp.eq.s32.totalorder %v8266, 1
  %vm8333 = vcmp.eq.s32.totalorder %v8267, 1
  %vm8334 = vcmp.eq.s32.totalorder %v8268, 1
  %vm8335 = vcmp.eq.s32.totalorder %v8269, 1
  %vm8336 = vcmp.eq.s32.totalorder %v8270, 1
  %vm8337 = vcmp.eq.s32.totalorder %v8271, 1
  %vm8338 = vcmp.eq.s32.totalorder %v8272, 1
  %vm8339 = vcmp.eq.s32.totalorder %v8273, 1
  %vm8340 = vcmp.eq.s32.totalorder %v8274, 1
  %vm8341 = vcmp.eq.s32.totalorder %v8275, 1
  %vm8342 = vcmp.eq.s32.totalorder %v8276, 1
  %vm8343 = vcmp.eq.s32.totalorder %v8277, 1
  %vm8344 = vcmp.eq.s32.totalorder %v8278, 1
  %vm8345 = vcmp.eq.s32.totalorder %v8279, 1
  %vm8346 = vcmp.eq.s32.totalorder %v8280, 1
  %vm8347 = vcmp.eq.s32.totalorder %v8281, 1
  %vm8348 = vcmp.eq.s32.totalorder %v8282, 1
  %vm8349 = vcmp.eq.s32.totalorder %v8283, 1
  %vm8350 = vcmp.eq.s32.totalorder %v8284, 1
  %vm8351 = vcmp.eq.s32.totalorder %v8285, 1
  %vm8352 = vcmp.eq.s32.totalorder %v8286, 1
  %vm8353 = vcmp.eq.s32.totalorder %v8287, 1
  %vm8354 = vcmp.eq.s32.totalorder %v8288, 1
  %vm8355 = vcmp.eq.s32.totalorder %v8289, 1
  %vm8356 = vcmp.eq.s32.totalorder %v8290, 1
  %vm8357 = vcmp.eq.s32.totalorder %v8291, 1
  %vm8358 = vcmp.eq.s32.totalorder %v8292, 1
  %vm8359 = vcmp.eq.s32.totalorder %v8293, 1
  %vm8360 = vcmp.eq.s32.totalorder %v8294, 1
  %vm8361 = vcmp.eq.s32.totalorder %v8295, 1
  %vm8362 = vcmp.eq.s32.totalorder %v8296, 1
  %vm8363 = vcmp.eq.s32.totalorder %v8297, 1
  %vm8364 = vcmp.eq.s32.totalorder %v8298, 1
  %vm8365 = vcmp.eq.s32.totalorder %v8299, 1
  %vm8366 = vcmp.eq.s32.totalorder %v8300, 1
  %vm8367 = vcmp.eq.s32.totalorder %v8301, 1
  %vm8368 = vcmp.eq.s32.totalorder %v8302, 1
  %vm8369 = vcmp.eq.s32.totalorder %v8303, 1
  %vm8370 = vcmp.eq.s32.totalorder %v8304, 1
  %vm8371 = vcmp.eq.s32.totalorder %v8305, 1
  %v8372 = vsel %vm8306, %v7582, 0.0
  %v8373 = vsel %vm8307, %v7585, 0.0
  %v8374 = vsel %vm8308, %v7590, 0.0
  %v8375 = vsel %vm8309, %v7593, 0.0
  %v8376 = vsel %vm8310, %v7598, 0.0
  %v8377 = vsel %vm8311, %v7601, 0.0
  %v8378 = vsel %vm8312, %v7606, 0.0
  %v8379 = vsel %vm8313, %v7609, 0.0
  %v8380 = vsel %vm8314, %v7614, 0.0
  %v8381 = vsel %vm8315, %v7617, 0.0
  %v8382 = vsel %vm8316, %v7622, 0.0
  %v8383 = vsel %vm8317, %v7625, 0.0
  %v8384 = vsel %vm8318, %v7630, 0.0
  %v8385 = vsel %vm8319, %v7633, 0.0
  %v8386 = vsel %vm8320, %v7638, 0.0
  %v8387 = vsel %vm8321, %v7641, 0.0
  %v8388 = vsel %vm8322, %v7646, 0.0
  %v8389 = vsel %vm8323, %v7649, 0.0
  %v8390 = vsel %vm8324, %v7654, 0.0
  %v8391 = vsel %vm8325, %v7657, 0.0
  %v8392 = vsel %vm8326, %v7662, 0.0
  %v8393 = vsel %vm8327, %v7665, 0.0
  %v8394 = vsel %vm8328, %v7670, 0.0
  %v8395 = vsel %vm8329, %v7673, 0.0
  %v8396 = vsel %vm8330, %v7678, 0.0
  %v8397 = vsel %vm8331, %v7681, 0.0
  %v8398 = vsel %vm8332, %v7686, 0.0
  %v8399 = vsel %vm8333, %v7689, 0.0
  %v8400 = vsel %vm8334, %v7694, 0.0
  %v8401 = vsel %vm8335, %v7697, 0.0
  %v8402 = vsel %vm8336, %v7702, 0.0
  %v8403 = vsel %vm8337, %v7705, 0.0
  %v8404 = vsel %vm8338, %v7710, 0.0
  %v8405 = vsel %vm8339, %v7713, 0.0
  %v8406 = vsel %vm8340, %v7718, 0.0
  %v8407 = vsel %vm8341, %v7721, 0.0
  %v8408 = vsel %vm8342, %v7726, 0.0
  %v8409 = vsel %vm8343, %v7729, 0.0
  %v8410 = vsel %vm8344, %v7734, 0.0
  %v8411 = vsel %vm8345, %v7737, 0.0
  %v8412 = vsel %vm8346, %v7742, 0.0
  %v8413 = vsel %vm8347, %v7745, 0.0
  %v8414 = vsel %vm8348, %v7750, 0.0
  %v8415 = vsel %vm8349, %v7753, 0.0
  %v8416 = vsel %vm8350, %v7758, 0.0
  %v8417 = vsel %vm8351, %v7761, 0.0
  %v8418 = vsel %vm8352, %v7766, 0.0
  %v8419 = vsel %vm8353, %v7769, 0.0
  %v8420 = vsel %vm8354, %v7774, 0.0
  %v8421 = vsel %vm8355, %v7777, 0.0
  %v8422 = vsel %vm8356, %v7782, 0.0
  %v8423 = vsel %vm8357, %v7785, 0.0
  %v8424 = vsel %vm8358, %v7790, 0.0
  %v8425 = vsel %vm8359, %v7793, 0.0
  %v8426 = vsel %vm8360, %v7798, 0.0
  %v8427 = vsel %vm8361, %v7801, 0.0
  %v8428 = vsel %vm8362, %v7806, 0.0
  %v8429 = vsel %vm8363, %v7809, 0.0
  %v8430 = vsel %vm8364, %v7814, 0.0
  %v8431 = vsel %vm8365, %v7817, 0.0
  %v8432 = vsel %vm8366, %v7822, 0.0
  %v8433 = vsel %vm8367, %v7825, 0.0
  %v8434 = vsel %vm8368, %v7830, 0.0
  %v8435 = vsel %vm8369, %v7833, 0.0
  %v8436 = vsel %vm8370, %v7838, 0.0
  %v8437 = vsel %vm8371, %v7841, 0.0
  %v8438 = vadd.f32 %v8372, %v8373
  %v8439 = vadd.f32 %v8438, %v8374
  %v8440 = vadd.f32 %v8439, %v8375
  %v8441 = vadd.f32 %v8440, %v8376
  %v8442 = vadd.f32 %v8441, %v8377
  %v8443 = vadd.f32 %v8442, %v8378
  %v8444 = vadd.f32 %v8443, %v8379
  %v8445 = vadd.f32 %v8444, %v8380
  %v8446 = vadd.f32 %v8445, %v8381
  %v8447 = vadd.f32 %v8446, %v8382
  %v8448 = vadd.f32 %v8447, %v8383
  %v8449 = vadd.f32 %v8448, %v8384
  %v8450 = vadd.f32 %v8449, %v8385
  %v8451 = vadd.f32 %v8450, %v8386
  %v8452 = vadd.f32 %v8451, %v8387
  %v8453 = vadd.f32 %v8452, %v8388
  %v8454 = vadd.f32 %v8453, %v8389
  %v8455 = vadd.f32 %v8454, %v8390
  %v8456 = vadd.f32 %v8455, %v8391
  %v8457 = vadd.f32 %v8456, %v8392
  %v8458 = vadd.f32 %v8457, %v8393
  %v8459 = vadd.f32 %v8458, %v8394
  %v8460 = vadd.f32 %v8459, %v8395
  %v8461 = vadd.f32 %v8460, %v8396
  %v8462 = vadd.f32 %v8461, %v8397
  %v8463 = vadd.f32 %v8462, %v8398
  %v8464 = vadd.f32 %v8463, %v8399
  %v8465 = vadd.f32 %v8464, %v8400
  %v8466 = vadd.f32 %v8465, %v8401
  %v8467 = vadd.f32 %v8466, %v8402
  %v8468 = vadd.f32 %v8467, %v8403
  %v8469 = vadd.f32 %v8468, %v8404
  %v8470 = vadd.f32 %v8469, %v8405
  %v8471 = vadd.f32 %v8470, %v8406
  %v8472 = vadd.f32 %v8471, %v8407
  %v8473 = vadd.f32 %v8472, %v8408
  %v8474 = vadd.f32 %v8473, %v8409
  %v8475 = vadd.f32 %v8474, %v8410
  %v8476 = vadd.f32 %v8475, %v8411
  %v8477 = vadd.f32 %v8476, %v8412
  %v8478 = vadd.f32 %v8477, %v8413
  %v8479 = vadd.f32 %v8478, %v8414
  %v8480 = vadd.f32 %v8479, %v8415
  %v8481 = vadd.f32 %v8480, %v8416
  %v8482 = vadd.f32 %v8481, %v8417
  %v8483 = vadd.f32 %v8482, %v8418
  %v8484 = vadd.f32 %v8483, %v8419
  %v8485 = vadd.f32 %v8484, %v8420
  %v8486 = vadd.f32 %v8485, %v8421
  %v8487 = vadd.f32 %v8486, %v8422
  %v8488 = vadd.f32 %v8487, %v8423
  %v8489 = vadd.f32 %v8488, %v8424
  %v8490 = vadd.f32 %v8489, %v8425
  %v8491 = vadd.f32 %v8490, %v8426
  %v8492 = vadd.f32 %v8491, %v8427
  %v8493 = vadd.f32 %v8492, %v8428
  %v8494 = vadd.f32 %v8493, %v8429
  %v8495 = vadd.f32 %v8494, %v8430
  %v8496 = vadd.f32 %v8495, %v8431
  %v8497 = vadd.f32 %v8496, %v8432
  %v8498 = vadd.f32 %v8497, %v8433
  %v8499 = vadd.f32 %v8498, %v8434
  %v8500 = vadd.f32 %v8499, %v8435
  %v8501 = vadd.f32 %v8500, %v8436
  %v8502 = vadd.f32 %v8501, %v8437
  %v8503 = vrot.slane %v8502, 4
  %v8504 = vadd.f32 %v8502, %v8503
  %v8505 = vrot.slane %v8504, 2
  %v8506 = vadd.f32 %v8504, %v8505
  %v8507 = vrot.slane %v8506, 1
  %v8508 = vadd.f32 %v8506, %v8507
  %v8509 = vmul.f32 %v8372, %v8372
  %v8510 = vmul.f32 %v8373, %v8373
  %v8511 = vmul.f32 %v8374, %v8374
  %v8512 = vmul.f32 %v8375, %v8375
  %v8513 = vmul.f32 %v8376, %v8376
  %v8514 = vmul.f32 %v8377, %v8377
  %v8515 = vmul.f32 %v8378, %v8378
  %v8516 = vmul.f32 %v8379, %v8379
  %v8517 = vmul.f32 %v8380, %v8380
  %v8518 = vmul.f32 %v8381, %v8381
  %v8519 = vmul.f32 %v8382, %v8382
  %v8520 = vmul.f32 %v8383, %v8383
  %v8521 = vmul.f32 %v8384, %v8384
  %v8522 = vmul.f32 %v8385, %v8385
  %v8523 = vmul.f32 %v8386, %v8386
  %v8524 = vmul.f32 %v8387, %v8387
  %v8525 = vmul.f32 %v8388, %v8388
  %v8526 = vmul.f32 %v8389, %v8389
  %v8527 = vmul.f32 %v8390, %v8390
  %v8528 = vmul.f32 %v8391, %v8391
  %v8529 = vmul.f32 %v8392, %v8392
  %v8530 = vmul.f32 %v8393, %v8393
  %v8531 = vmul.f32 %v8394, %v8394
  %v8532 = vmul.f32 %v8395, %v8395
  %v8533 = vmul.f32 %v8396, %v8396
  %v8534 = vmul.f32 %v8397, %v8397
  %v8535 = vmul.f32 %v8398, %v8398
  %v8536 = vmul.f32 %v8399, %v8399
  %v8537 = vmul.f32 %v8400, %v8400
  %v8538 = vmul.f32 %v8401, %v8401
  %v8539 = vmul.f32 %v8402, %v8402
  %v8540 = vmul.f32 %v8403, %v8403
  %v8541 = vmul.f32 %v8404, %v8404
  %v8542 = vmul.f32 %v8405, %v8405
  %v8543 = vmul.f32 %v8406, %v8406
  %v8544 = vmul.f32 %v8407, %v8407
  %v8545 = vmul.f32 %v8408, %v8408
  %v8546 = vmul.f32 %v8409, %v8409
  %v8547 = vmul.f32 %v8410, %v8410
  %v8548 = vmul.f32 %v8411, %v8411
  %v8549 = vmul.f32 %v8412, %v8412
  %v8550 = vmul.f32 %v8413, %v8413
  %v8551 = vmul.f32 %v8414, %v8414
  %v8552 = vmul.f32 %v8415, %v8415
  %v8553 = vmul.f32 %v8416, %v8416
  %v8554 = vmul.f32 %v8417, %v8417
  %v8555 = vmul.f32 %v8418, %v8418
  %v8556 = vmul.f32 %v8419, %v8419
  %v8557 = vmul.f32 %v8420, %v8420
  %v8558 = vmul.f32 %v8421, %v8421
  %v8559 = vmul.f32 %v8422, %v8422
  %v8560 = vmul.f32 %v8423, %v8423
  %v8561 = vmul.f32 %v8424, %v8424
  %v8562 = vmul.f32 %v8425, %v8425
  %v8563 = vmul.f32 %v8426, %v8426
  %v8564 = vmul.f32 %v8427, %v8427
  %v8565 = vmul.f32 %v8428, %v8428
  %v8566 = vmul.f32 %v8429, %v8429
  %v8567 = vmul.f32 %v8430, %v8430
  %v8568 = vmul.f32 %v8431, %v8431
  %v8569 = vmul.f32 %v8432, %v8432
  %v8570 = vmul.f32 %v8433, %v8433
  %v8571 = vmul.f32 %v8434, %v8434
  %v8572 = vmul.f32 %v8435, %v8435
  %v8573 = vmul.f32 %v8436, %v8436
  %v8574 = vmul.f32 %v8437, %v8437
  %v8575 = vadd.f32 %v8509, %v8510
  %v8576 = vadd.f32 %v8575, %v8511
  %v8577 = vadd.f32 %v8576, %v8512
  %v8578 = vadd.f32 %v8577, %v8513
  %v8579 = vadd.f32 %v8578, %v8514
  %v8580 = vadd.f32 %v8579, %v8515
  %v8581 = vadd.f32 %v8580, %v8516
  %v8582 = vadd.f32 %v8581, %v8517
  %v8583 = vadd.f32 %v8582, %v8518
  %v8584 = vadd.f32 %v8583, %v8519
  %v8585 = vadd.f32 %v8584, %v8520
  %v8586 = vadd.f32 %v8585, %v8521
  %v8587 = vadd.f32 %v8586, %v8522
  %v8588 = vadd.f32 %v8587, %v8523
  %v8589 = vadd.f32 %v8588, %v8524
  %v8590 = vadd.f32 %v8589, %v8525
  %v8591 = vadd.f32 %v8590, %v8526
  %v8592 = vadd.f32 %v8591, %v8527
  %v8593 = vadd.f32 %v8592, %v8528
  %v8594 = vadd.f32 %v8593, %v8529
  %v8595 = vadd.f32 %v8594, %v8530
  %v8596 = vadd.f32 %v8595, %v8531
  %v8597 = vadd.f32 %v8596, %v8532
  %v8598 = vadd.f32 %v8597, %v8533
  %v8599 = vadd.f32 %v8598, %v8534
  %v8600 = vadd.f32 %v8599, %v8535
  %v8601 = vadd.f32 %v8600, %v8536
  %v8602 = vadd.f32 %v8601, %v8537
  %v8603 = vadd.f32 %v8602, %v8538
  %v8604 = vadd.f32 %v8603, %v8539
  %v8605 = vadd.f32 %v8604, %v8540
  %v8606 = vadd.f32 %v8605, %v8541
  %v8607 = vadd.f32 %v8606, %v8542
  %v8608 = vadd.f32 %v8607, %v8543
  %v8609 = vadd.f32 %v8608, %v8544
  %v8610 = vadd.f32 %v8609, %v8545
  %v8611 = vadd.f32 %v8610, %v8546
  %v8612 = vadd.f32 %v8611, %v8547
  %v8613 = vadd.f32 %v8612, %v8548
  %v8614 = vadd.f32 %v8613, %v8549
  %v8615 = vadd.f32 %v8614, %v8550
  %v8616 = vadd.f32 %v8615, %v8551
  %v8617 = vadd.f32 %v8616, %v8552
  %v8618 = vadd.f32 %v8617, %v8553
  %v8619 = vadd.f32 %v8618, %v8554
  %v8620 = vadd.f32 %v8619, %v8555
  %v8621 = vadd.f32 %v8620, %v8556
  %v8622 = vadd.f32 %v8621, %v8557
  %v8623 = vadd.f32 %v8622, %v8558
  %v8624 = vadd.f32 %v8623, %v8559
  %v8625 = vadd.f32 %v8624, %v8560
  %v8626 = vadd.f32 %v8625, %v8561
  %v8627 = vadd.f32 %v8626, %v8562
  %v8628 = vadd.f32 %v8627, %v8563
  %v8629 = vadd.f32 %v8628, %v8564
  %v8630 = vadd.f32 %v8629, %v8565
  %v8631 = vadd.f32 %v8630, %v8566
  %v8632 = vadd.f32 %v8631, %v8567
  %v8633 = vadd.f32 %v8632, %v8568
  %v8634 = vadd.f32 %v8633, %v8569
  %v8635 = vadd.f32 %v8634, %v8570
  %v8636 = vadd.f32 %v8635, %v8571
  %v8637 = vadd.f32 %v8636, %v8572
  %v8638 = vadd.f32 %v8637, %v8573
  %v8639 = vadd.f32 %v8638, %v8574
  %v8640 = vrot.slane %v8639, 4
  %v8641 = vadd.f32 %v8639, %v8640
  %v8642 = vrot.slane %v8641, 2
  %v8643 = vadd.f32 %v8641, %v8642
  %v8644 = vrot.slane %v8643, 1
  %v8645 = vadd.f32 %v8643, %v8644
  %v8646 = vsel %vm3407, %v8508, %v8645
  %8647 = vst [vmem:[%s8] sm:$0x3] %v8646
  // Predicated region
  $region30: #{shortcut_block.4} parent=0 // pred_check
    _
  $region31: #{shortcut_block.4} parent=0 // pred_check_branch
    %8649 = sbr.rel (0) target = $region33
  $region32: #{shortcut_block.4} parent=0 // pred_region
    _
  $region33: #{shortcut_block.4} parent=0 // pred_fallthru
    _
  // Predicated region
  $region34: #{shortcut_block.4} parent=0 // pred_check
    _
  $region35: #{shortcut_block.4} parent=0 // pred_check_branch
    %8651 = sbr.rel (0) target = $region37
  $region36: #{shortcut_block.4} parent=0 // pred_region
    _
  $region37: #{shortcut_block.4} parent=0 // pred_fallthru
    _
  // Predicated region
  $region38: #{shortcut_block.4} parent=0 // pred_check
    _
  $region39: #{shortcut_block.4} parent=0 // pred_check_branch
    %8653 = sbr.rel (0) target = $region41
  $region40: #{shortcut_block.4} parent=0 // pred_region
    _
  $region41: #{shortcut_block.4} parent=0 // pred_fallthru
    _
  // Predicated region
  $region42: #{shortcut_block.4} parent=0 // pred_check
    _
  $region43: #{shortcut_block.4} parent=0 // pred_check_branch
    %8655 = sbr.rel (0) target = $region45
  $region44: #{shortcut_block.4} parent=0 // pred_region
    _
  $region45: #{shortcut_block.4} parent=0 // pred_fallthru
    _

</llo_original>
